<compile_context>
chip_gen: v7x
topology: tpu7x:2x2x1
jax: 0.10.0
libtpu: 0.0.40
codegen_flags: <defaults>
</compile_context>

<pallas_src>
import functools

import jax
import jax.numpy as jnp
from jax.experimental import pallas as pl
from jax.experimental.pallas import tpu as pltpu


# ----------------------------------------------------------------------------
# Pallas kernels
# ----------------------------------------------------------------------------

def _dual_gemm_kernel(a_ref, w1_ref, b1_ref, w2_ref, b2_ref, y_ref, i_ref):
    """y = relu(a@w1 + b1); idt = a@w2 + b2  (conv1 + downsample share A)."""
    a = a_ref[...]
    main = jnp.dot(a, w1_ref[...], preferred_element_type=jnp.float32) + b1_ref[...]
    short = jnp.dot(a, w2_ref[...], preferred_element_type=jnp.float32) + b2_ref[...]
    y_ref[...] = jnp.maximum(main, 0.0).astype(y_ref.dtype)
    i_ref[...] = short.astype(i_ref.dtype)


def _conv2_res_kernel(a_ref, w_ref, b_ref, idt_ref, o_ref):
    """o = relu(a@w + b + idt)   (conv2 + BN + residual + ReLU)."""
    acc = jnp.dot(a_ref[...], w_ref[...], preferred_element_type=jnp.float32)
    acc = acc + b_ref[...] + idt_ref[...]
    o_ref[...] = jnp.maximum(acc, 0.0).astype(o_ref.dtype)


def _conv2_res_pool_kernel(a_ref, w_ref, b_ref, idt_ref, p_ref, o_ref):
    """o = P @ relu(a@w + b + idt)   (conv2 + residual + ReLU + spatial mean)."""
    acc = jnp.dot(a_ref[...], w_ref[...], preferred_element_type=jnp.float32)
    acc = jnp.maximum(acc + b_ref[...] + idt_ref[...], 0.0)
    o_ref[...] = jnp.dot(p_ref[...], acc,
                         preferred_element_type=jnp.float32).astype(o_ref.dtype)


def _tf_encoder_cls_kernel(x_ref, win_ref, bin_ref, wout_ref, bout_ref,
                           hsum_ref, hexp_ref, ln1g_ref, ln1b_ref,
                           w1_ref, b1_ref, w2_ref, b2_ref, ln2g_ref, ln2b_ref,
                           wc_ref, bc_ref, out_ref, *, nhead, eps):
    """Whole post-norm TransformerEncoderLayer (GELU) + classifier on the cls row.

    x_ref: (S, Nb, E) with S = attention (sequence) axis, Nb = batch axis
    (PyTorch batch_first=False convention).  Heads are handled with 0/1
    head-sum (E, Hp) / head-expand (Hp, E) matrices, so everything stays 2-D.
    """
    S, Nb, E = x_ref.shape
    hd = E // nhead
    scale = 1.0 / (float(hd) ** 0.5)

    win = win_ref[...]
    bin_ = bin_ref[...]
    hsum = hsum_ref[...]
    hexp = hexp_ref[...]
    wout = wout_ref[...]
    bout = bout_ref[...]
    ln1g = ln1g_ref[...]
    ln1b = ln1b_ref[...]
    w1 = w1_ref[...]
    b1 = b1_ref[...]
    w2 = w2_ref[...]
    b2 = b2_ref[...]
    ln2g = ln2g_ref[...]
    ln2b = ln2b_ref[...]
    wc = wc_ref[...]
    bc = bc_ref[...]

    def ln(v, g, b):
        mu = jnp.mean(v, axis=-1, keepdims=True)
        var = jnp.mean((v - mu) ** 2, axis=-1, keepdims=True)
        return (v - mu) * jax.lax.rsqrt(var + eps) * g + b

    # qkv projection per sequence position (S is small & static -> unrolled)
    xs, qs, ks, vs = [], [], [], []
    for s in range(S):
        xv = x_ref[s]                                                 # (Nb, E)
        qkv = jnp.dot(xv.astype(jnp.bfloat16), win,
                      preferred_element_type=jnp.float32) + bin_      # (Nb, 3E)
        xs.append(xv)
        qs.append(qkv[:, :E])
        ks.append(qkv[:, E:2 * E])
        vs.append(qkv[:, 2 * E:])

    for i in range(S):
        # per-head scores of query position i vs every key position
        sc = [jnp.dot(qs[i] * ks[j], hsum,
                      preferred_element_type=jnp.float32) * scale     # (Nb, Hp)
              for j in range(S)]
        m = sc[0]
        for j in range(1, S):
            m = jnp.maximum(m, sc[j])
        p = [jnp.exp(sc[j] - m) for j in range(S)]
        denom = p[0]
        for j in range(1, S):
            denom = denom + p[j]
        inv = 1.0 / denom                                             # (Nb, Hp)
        attn = jnp.dot(p[0] * inv, hexp,
                       preferred_element_type=jnp.float32) * vs[0]    # (Nb, E)
        for j in range(1, S):
            attn = attn + jnp.dot(p[j] * inv, hexp,
                                  preferred_element_type=jnp.float32) * vs[j]

        proj = jnp.dot(attn.astype(jnp.bfloat16), wout,
                       preferred_element_type=jnp.float32) + bout
        x1 = ln(xs[i] + proj, ln1g, ln1b)

        h = jnp.dot(x1.astype(jnp.bfloat16), w1,
                    preferred_element_type=jnp.float32) + b1
        h = 0.5 * h * (1.0 + jax.lax.erf(h * 0.7071067811865476))     # exact GELU
        ffo = jnp.dot(h.astype(jnp.bfloat16), w2,
                      preferred_element_type=jnp.float32) + b2
        x2 = ln(x1 + ffo, ln2g, ln2b)

        logits = jnp.dot(x2.astype(jnp.bfloat16), wc,
                         preferred_element_type=jnp.float32) + bc     # (Nb, NC)
        out_ref[i] = logits[0:1, :]                                   # cls row only


# ----------------------------------------------------------------------------
# pallas_call wrappers
# ----------------------------------------------------------------------------

def dual_conv_gemm(cols, w1, b1, w2, b2):
    """(relu(cols@w1+b1), cols@w2+b2) with cols shared between the two GEMMs."""
    M, K = cols.shape
    N = w1.shape[1]
    ms = 2 if (M % 2 == 0 and (M // 2) % 8 == 0) else 1
    tm = M // ms
    ce = pl.CostEstimate(
        flops=int(2 * 2 * M * K * N), transcendentals=0,
        bytes_accessed=int(cols.size * 2 + 2 * (K * N * 2 + N * 4) + M * N * 6))
    return pl.pallas_call(
        _dual_gemm_kernel,
        out_shape=(jax.ShapeDtypeStruct((M, N), jnp.bfloat16),
                   jax.ShapeDtypeStruct((M, N), jnp.float32)),
        grid_spec=pltpu.PrefetchScalarGridSpec(
            num_scalar_prefetch=0, grid=(ms,),
            in_specs=[pl.BlockSpec((tm, K), lambda i: (i, 0)),
                      pl.BlockSpec((K, N), lambda i: (0, 0)),
                      pl.BlockSpec((1, N), lambda i: (0, 0)),
                      pl.BlockSpec((K, N), lambda i: (0, 0)),
                      pl.BlockSpec((1, N), lambda i: (0, 0))],
            out_specs=(pl.BlockSpec((tm, N), lambda i: (i, 0)),
                       pl.BlockSpec((tm, N), lambda i: (i, 0)))),
        compiler_params=pltpu.CompilerParams(dimension_semantics=("parallel",)),
        cost_estimate=ce,
    )(cols, w1, b1, w2, b2)


def conv2_residual(cols, w, b, idt, pool_mat=None, out_dtype=jnp.bfloat16):
    M, K = cols.shape
    N = w.shape[1]
    if pool_mat is None:
        ms = 2 if (M % 2 == 0 and (M // 2) % 8 == 0) else 1
        tm = M // ms
        ce = pl.CostEstimate(
            flops=int(2 * M * K * N), transcendentals=0,
            bytes_accessed=int(cols.size * 2 + K * N * 2 + idt.size * 4 + M * N * 2))
        return pl.pallas_call(
            _conv2_res_kernel,
            out_shape=jax.ShapeDtypeStruct((M, N), out_dtype),
            grid_spec=pltpu.PrefetchScalarGridSpec(
                num_scalar_prefetch=0, grid=(ms,),
                in_specs=[pl.BlockSpec((tm, K), lambda i: (i, 0)),
                          pl.BlockSpec((K, N), lambda i: (0, 0)),
                          pl.BlockSpec((1, N), lambda i: (0, 0)),
                          pl.BlockSpec((tm, N), lambda i: (i, 0))],
                out_specs=pl.BlockSpec((tm, N), lambda i: (i, 0))),
            compiler_params=pltpu.CompilerParams(dimension_semantics=("parallel",)),
            cost_estimate=ce,
        )(cols, w, b, idt)

    Nf = pool_mat.shape[0]
    L = M // Nf
    ms = 1
    if (M % 2 == 0 and (M // 2) % 8 == 0 and (M // 2) % L == 0
            and Nf % 2 == 0 and (Nf // 2) % 8 == 0):
        ms = 2
    tm = M // ms
    nf_t = Nf // ms
    ce = pl.CostEstimate(
        flops=int(2 * M * K * N + 2 * Nf * M * N), transcendentals=0,
        bytes_accessed=int(cols.size * 2 + K * N * 2 + idt.size * 4 + Nf * N * 4))
    return pl.pallas_call(
        _conv2_res_pool_kernel,
        out_shape=jax.ShapeDtypeStruct((Nf, N), jnp.float32),
        grid_spec=pltpu.PrefetchScalarGridSpec(
            num_scalar_prefetch=0, grid=(ms,),
            in_specs=[pl.BlockSpec((tm, K), lambda i: (i, 0)),
                      pl.BlockSpec((K, N), lambda i: (0, 0)),
                      pl.BlockSpec((1, N), lambda i: (0, 0)),
                      pl.BlockSpec((tm, N), lambda i: (i, 0)),
                      pl.BlockSpec((nf_t, tm), lambda i: (i, i))],
            out_specs=pl.BlockSpec((nf_t, N), lambda i: (i, 0))),
        compiler_params=pltpu.CompilerParams(dimension_semantics=("parallel",)),
        cost_estimate=ce,
    )(cols, w, b, idt, pool_mat)


def transformer_encoder_cls(x3, tp, nhead):
    """x3: (S, Nb, E) -> logits (S, num_classes)."""
    S, Nb, E = x3.shape
    NC = tp["wc_t"].shape[1]
    out = pl.pallas_call(
        functools.partial(_tf_encoder_cls_kernel, nhead=nhead, eps=1e-5),
        out_shape=jax.ShapeDtypeStruct((S, 1, NC), jnp.float32),
    )(x3, tp["win_t"], tp["bin"], tp["wout_t"], tp["bout"],
      tp["hsum"], tp["hexp"], tp["ln1g"], tp["ln1b"],
      tp["w1_t"], tp["b1"], tp["w2_t"], tp["b2"], tp["ln2g"], tp["ln2b"],
      tp["wc_t"], tp["bc"])
    return out.reshape(S, NC)


# ----------------------------------------------------------------------------
# Model glue (im2col + block/layer composition)
# ----------------------------------------------------------------------------

def im2col(x, kh, kw, stride, pad):
    """x: (N, H, W, C) -> ((N*Ho*Wo, kh*kw*C), Ho, Wo); reduce order (kh,kw,C)."""
    N, H, W, C = x.shape
    xp = jnp.pad(x, ((0, 0), (pad, pad), (pad, pad), (0, 0)))
    Ho = (H + 2 * pad - kh) // stride + 1
    Wo = (W + 2 * pad - kw) // stride + 1
    taps = []
    for i in range(kh):
        for j in range(kw):
            taps.append(xp[:, i:i + stride * Ho:stride, j:j + stride * Wo:stride, :])
    cols = jnp.stack(taps, axis=3)                        # (N, Ho, Wo, kh*kw, C)
    return cols.reshape(N * Ho * Wo, kh * kw * C), Ho, Wo


def basic_block(x_nhwc, bp, stride, pool_mat=None):
    N = x_nhwc.shape[0]
    cols, Ho, Wo = im2col(x_nhwc, 3, 3, stride, 1)
    y, idt = dual_conv_gemm(cols, bp["w1"], bp["b1"], bp["wd"], bp["bd"])
    Cout = bp["w1"].shape[1]
    cols2, _, _ = im2col(y.reshape(N, Ho, Wo, Cout), 3, 3, 1, 1)
    if pool_mat is None:
        out = conv2_residual(cols2, bp["w2"], bp["b2"], idt)
        return out.reshape(N, Ho, Wo, Cout)
    return conv2_residual(cols2, bp["w2"], bp["b2"], idt, pool_mat=pool_mat)


def baseline_forward(x, prep, nhead=4):
    B, T, H, W = x.shape
    xr = x.reshape(B * T, H, W, 1).astype(jnp.bfloat16)   # '(b t) 1 a d' as NHWC

    h1 = basic_block(xr, prep["block1"], stride=2)        # (B*T, H/2, W/2, 64)
    _, Ho, Wo, _ = h1.shape
    Ho2 = (Ho + 2 - 3) // 2 + 1
    Wo2 = (Wo + 2 - 3) // 2 + 1
    L = Ho2 * Wo2
    pool = jnp.repeat(jnp.eye(B * T, dtype=jnp.float32), L, axis=1) / float(L)
    feat = basic_block(h1, prep["block2"], stride=2, pool_mat=pool)  # (B*T, 128) f32

    C = feat.shape[1]
    feat = feat.reshape(B, T, C)
    cls = jnp.broadcast_to(prep["cls_token"], (B, 1, C)).astype(jnp.float32)
    seq = jnp.concatenate([cls, feat], axis=1)            # (B, T+1, C)

    # nn.TransformerEncoderLayer default batch_first=False: dim 0 (B) is the
    # sequence axis, dim 1 (T+1) is the batch axis.  Reproduced exactly.
    return transformer_encoder_cls(seq, prep["tf"], nhead)  # (B, num_classes)


# ----------------------------------------------------------------------------
# Parameter preparation (BN folding, weight pre-transposition, bf16 cast)
# ----------------------------------------------------------------------------

def prepare_params(params, nhead=4):
    def fold(w, bn):
        Cout, Cin, kh, kw = w.shape
        scale = bn["gamma"] * jax.lax.rsqrt(bn["var"] + 1e-5)
        wm = jnp.transpose(w, (2, 3, 1, 0)).reshape(kh * kw * Cin, Cout) * scale[None, :]
        bias = bn["beta"] - bn["mean"] * scale
        return wm.astype(jnp.bfloat16), bias.reshape(1, Cout).astype(jnp.float32)

    def block(bp):
        w1, b1 = fold(bp["conv1_w"], bp["bn1"])
        w2, b2 = fold(bp["conv2_w"], bp["bn2"])
        wd, bd = fold(bp["down_w"], bp["down_bn"])
        return dict(w1=w1, b1=b1, w2=w2, b2=b2, wd=wd, bd=bd)

    tfp = params["tf"]
    E = tfp["ln1_g"].shape[0]
    hd = E // nhead
    hp = max(nhead, 8)  # pad head count to a sublane-aligned 8; extra heads are all-zero
    hsum = jnp.repeat(jnp.eye(nhead, hp, dtype=jnp.float32), hd, axis=0)  # (E, hp)
    tf = dict(
        win_t=tfp["in_proj_w"].T.astype(jnp.bfloat16),
        bin=tfp["in_proj_b"].reshape(1, -1).astype(jnp.float32),
        wout_t=tfp["out_proj_w"].T.astype(jnp.bfloat16),
        bout=tfp["out_proj_b"].reshape(1, -1).astype(jnp.float32),
        hsum=hsum, hexp=hsum.T,
        ln1g=tfp["ln1_g"].reshape(1, -1).astype(jnp.float32),
        ln1b=tfp["ln1_b"].reshape(1, -1).astype(jnp.float32),
        w1_t=tfp["lin1_w"].T.astype(jnp.bfloat16),
        b1=tfp["lin1_b"].reshape(1, -1).astype(jnp.float32),
        w2_t=tfp["lin2_w"].T.astype(jnp.bfloat16),
        b2=tfp["lin2_b"].reshape(1, -1).astype(jnp.float32),
        ln2g=tfp["ln2_g"].reshape(1, -1).astype(jnp.float32),
        ln2b=tfp["ln2_b"].reshape(1, -1).astype(jnp.float32),
        wc_t=params["cls_w"].T.astype(jnp.bfloat16),
        bc=params["cls_b"].reshape(1, -1).astype(jnp.float32),
    )
    return dict(block1=block(params["block1"]), block2=block(params["block2"]),
                tf=tf, cls_token=params["cls_token"].astype(jnp.float32))


# ----------------------------------------------------------------------------
# Deterministic parameter initialization (shapes from the PyTorch __init__)
# ----------------------------------------------------------------------------

def init_params(key, num_classes, d_model=128, nhead=4, ff_factor=2):
    keys = iter(jax.random.split(key, 80))

    def nrm(shape, s=0.05):
        return jax.random.normal(next(keys), shape, jnp.float32) * s

    def bn(c):
        return dict(
            gamma=1.0 + 0.1 * jax.random.normal(next(keys), (c,), jnp.float32),
            beta=0.1 * jax.random.normal(next(keys), (c,), jnp.float32),
            mean=0.1 * jax.random.normal(next(keys), (c,), jnp.float32),
            var=jnp.abs(jax.random.normal(next(keys), (c,), jnp.float32)) + 0.5,
        )

    block1 = dict(conv1_w=nrm((64, 1, 3, 3)), bn1=bn(64),
                  conv2_w=nrm((64, 64, 3, 3)), bn2=bn(64),
                  down_w=nrm((64, 1, 3, 3)), down_bn=bn(64))
    block2 = dict(conv1_w=nrm((128, 64, 3, 3)), bn1=bn(128),
                  conv2_w=nrm((128, 128, 3, 3)), bn2=bn(128),
                  down_w=nrm((128, 64, 3, 3)), down_bn=bn(128))
    ff = d_model * ff_factor
    tf = dict(in_proj_w=nrm((3 * d_model, d_model)), in_proj_b=nrm((3 * d_model,)),
              out_proj_w=nrm((d_model, d_model)), out_proj_b=nrm((d_model,)),
              lin1_w=nrm((ff, d_model)), lin1_b=nrm((ff,)),
              lin2_w=nrm((d_model, ff)), lin2_b=nrm((d_model,)),
              ln1_g=jnp.ones((d_model,), jnp.float32), ln1_b=jnp.zeros((d_model,), jnp.float32),
              ln2_g=jnp.ones((d_model,), jnp.float32), ln2_b=jnp.zeros((d_model,), jnp.float32))
    return dict(block1=block1, block2=block2, tf=tf,
                cls_token=nrm((1, 1, d_model)),
                cls_w=nrm((num_classes, d_model)), cls_b=nrm((num_classes,)))


if __name__ == "__main__":
    B, T, H, W = 2, 8, 16, 16
    num_classes = 5

    key = jax.random.PRNGKey(0)
    k_x, k_p = jax.random.split(key)
    x = jax.random.normal(k_x, (B, T, H, W), jnp.float32)
    params = init_params(k_p, num_classes)
    prep = prepare_params(params, nhead=4)   # BN folding / transposes done once

    fwd = jax.jit(functools.partial(baseline_forward, nhead=4))
    logits = jax.block_until_ready(fwd(x, prep))
    assert logits.shape == (B, num_classes), logits.shape
    print("KERNEL_OK")
</pallas_src>

<mosaic_0001>
module attributes {stable_mosaic.version = 11 : i64} {
  func.func @_dual_gemm_kernel(%arg0: i32, %arg1: memref<512x9xbf16, #tpu.memory_space<vmem>>, %arg2: memref<9x64xbf16, #tpu.memory_space<vmem>>, %arg3: memref<1x64xf32, #tpu.memory_space<vmem>>, %arg4: memref<9x64xbf16, #tpu.memory_space<vmem>>, %arg5: memref<1x64xf32, #tpu.memory_space<vmem>>, %arg6: memref<512x64xbf16, #tpu.memory_space<vmem>>, %arg7: memref<512x64xf32, #tpu.memory_space<vmem>>) attributes {dimension_semantics = [#tpu.dimension_semantics<parallel>], iteration_bounds = array<i64: 2>, scalar_prefetch = 0 : i64, scratch_operands = 0 : i64, tpu.core_type = #tpu.core_type<tc>, window_params = [{transform_indices = @transform_0, window_bounds = array<i64: 512, 9>}, {pipeline_mode = #tpu.pipeline_mode<synchronous>, transform_indices = @transform_1, window_bounds = array<i64: 9, 64>}, {pipeline_mode = #tpu.pipeline_mode<synchronous>, transform_indices = @transform_2, window_bounds = array<i64: 1, 64>}, {pipeline_mode = #tpu.pipeline_mode<synchronous>, transform_indices = @transform_3, window_bounds = array<i64: 9, 64>}, {pipeline_mode = #tpu.pipeline_mode<synchronous>, transform_indices = @transform_4, window_bounds = array<i64: 1, 64>}, {transform_indices = @transform_5, window_bounds = array<i64: 512, 64>}, {transform_indices = @transform_6, window_bounds = array<i64: 512, 64>}]} {
    %c0 = arith.constant 0 : index
    %c0_0 = arith.constant 0 : index
    %0 = vector.load %arg1[%c0, %c0_0] : memref<512x9xbf16, #tpu.memory_space<vmem>>, vector<512x9xbf16>
    %c0_1 = arith.constant 0 : index
    %c0_2 = arith.constant 0 : index
    %1 = vector.load %arg2[%c0_1, %c0_2] : memref<9x64xbf16, #tpu.memory_space<vmem>>, vector<9x64xbf16>
    %cst = arith.constant dense<0.000000e+00> : vector<512x64xf32>
    %2 = tpu.matmul %0, %1, %cst {dimension_numbers = #tpu.dot_dimension_numbers<[1], [0], [0], [1], [0, 0, 1, 1], [], []>} : vector<512x9xbf16>, vector<9x64xbf16>, vector<512x64xf32> -> vector<512x64xf32>
    %c0_3 = arith.constant 0 : index
    %c0_4 = arith.constant 0 : index
    %3 = vector.load %arg3[%c0_3, %c0_4] : memref<1x64xf32, #tpu.memory_space<vmem>>, vector<1x64xf32>
    %4 = vector.broadcast %3 : vector<1x64xf32> to vector<512x64xf32>
    %5 = arith.addf %2, %4 : vector<512x64xf32>
    %c0_5 = arith.constant 0 : index
    %c0_6 = arith.constant 0 : index
    %6 = vector.load %arg4[%c0_5, %c0_6] : memref<9x64xbf16, #tpu.memory_space<vmem>>, vector<9x64xbf16>
    %cst_7 = arith.constant dense<0.000000e+00> : vector<512x64xf32>
    %7 = tpu.matmul %0, %6, %cst_7 {dimension_numbers = #tpu.dot_dimension_numbers<[1], [0], [0], [1], [0, 0, 1, 1], [], []>} : vector<512x9xbf16>, vector<9x64xbf16>, vector<512x64xf32> -> vector<512x64xf32>
    %c0_8 = arith.constant 0 : index
    %c0_9 = arith.constant 0 : index
    %8 = vector.load %arg5[%c0_8, %c0_9] : memref<1x64xf32, #tpu.memory_space<vmem>>, vector<1x64xf32>
    %9 = vector.broadcast %8 : vector<1x64xf32> to vector<512x64xf32>
    %10 = arith.addf %7, %9 : vector<512x64xf32>
    %cst_10 = arith.constant 0.000000e+00 : f32
    %11 = vector.broadcast %cst_10 : f32 to vector<512x64xf32>
    %12 = arith.maximumf %5, %11 : vector<512x64xf32>
    %13 = arith.truncf %12 : vector<512x64xf32> to vector<512x64xbf16>
    %c0_11 = arith.constant 0 : index
    %c0_12 = arith.constant 0 : index
    %14 = vector.load %arg6[%c0_11, %c0_12] : memref<512x64xbf16, #tpu.memory_space<vmem>>, vector<512x64xbf16>
    tpu.vector_store %arg6[%c0_11, %c0_12], %13 {strides = array<i32>} : memref<512x64xbf16, #tpu.memory_space<vmem>>, vector<512x64xbf16>,
    %c0_13 = arith.constant 0 : index
    %c0_14 = arith.constant 0 : index
    %15 = vector.load %arg7[%c0_13, %c0_14] : memref<512x64xf32, #tpu.memory_space<vmem>>, vector<512x64xf32>
    tpu.vector_store %arg7[%c0_13, %c0_14], %10 {strides = array<i32>} : memref<512x64xf32, #tpu.memory_space<vmem>>, vector<512x64xf32>,
    return
  }
  func.func @transform_0(%arg0: i32) -> (i32, i32) {
    %c0_i32 = arith.constant 0 : i32
    %c0_i32_0 = arith.constant 0 : i32
    return %arg0, %c0_i32 : i32, i32
  }
  func.func @transform_1(%arg0: i32) -> (i32, i32) {
    %c0_i32 = arith.constant 0 : i32
    %c0_i32_0 = arith.constant 0 : i32
    %c0_i32_1 = arith.constant 0 : i32
    return %c0_i32, %c0_i32_0 : i32, i32
  }
  func.func @transform_2(%arg0: i32) -> (i32, i32) {
    %c0_i32 = arith.constant 0 : i32
    %c0_i32_0 = arith.constant 0 : i32
    %c0_i32_1 = arith.constant 0 : i32
    return %c0_i32, %c0_i32_0 : i32, i32
  }
  func.func @transform_3(%arg0: i32) -> (i32, i32) {
    %c0_i32 = arith.constant 0 : i32
    %c0_i32_0 = arith.constant 0 : i32
    %c0_i32_1 = arith.constant 0 : i32
    return %c0_i32, %c0_i32_0 : i32, i32
  }
  func.func @transform_4(%arg0: i32) -> (i32, i32) {
    %c0_i32 = arith.constant 0 : i32
    %c0_i32_0 = arith.constant 0 : i32
    %c0_i32_1 = arith.constant 0 : i32
    return %c0_i32, %c0_i32_0 : i32, i32
  }
  func.func @transform_5(%arg0: i32) -> (i32, i32) {
    %c0_i32 = arith.constant 0 : i32
    %c0_i32_0 = arith.constant 0 : i32
    return %arg0, %c0_i32 : i32, i32
  }
  func.func @transform_6(%arg0: i32) -> (i32, i32) {
    %c0_i32 = arith.constant 0 : i32
    %c0_i32_0 = arith.constant 0 : i32
    return %arg0, %c0_i32 : i32, i32
  }
}

module attributes {stable_mosaic.version = 11 : i64} {
  func.func @_conv2_res_kernel(%arg0: i32, %arg1: memref<512x576xbf16, #tpu.memory_space<vmem>>, %arg2: memref<576x64xbf16, #tpu.memory_space<vmem>>, %arg3: memref<1x64xf32, #tpu.memory_space<vmem>>, %arg4: memref<512x64xf32, #tpu.memory_space<vmem>>, %arg5: memref<512x64xbf16, #tpu.memory_space<vmem>>) attributes {dimension_semantics = [#tpu.dimension_semantics<parallel>], iteration_bounds = array<i64: 2>, scalar_prefetch = 0 : i64, scratch_operands = 0 : i64, tpu.core_type = #tpu.core_type<tc>, window_params = [{transform_indices = @transform_0, window_bounds = array<i64: 512, 576>}, {pipeline_mode = #tpu.pipeline_mode<synchronous>, transform_indices = @transform_1, window_bounds = array<i64: 576, 64>}, {pipeline_mode = #tpu.pipeline_mode<synchronous>, transform_indices = @transform_2, window_bounds = array<i64: 1, 64>}, {transform_indices = @transform_3, window_bounds = array<i64: 512, 64>}, {transform_indices = @transform_4, window_bounds = array<i64: 512, 64>}]} {
    %c0 = arith.constant 0 : index
    %c0_0 = arith.constant 0 : index
    %0 = vector.load %arg1[%c0, %c0_0] : memref<512x576xbf16, #tpu.memory_space<vmem>>, vector<512x576xbf16>
    %c0_1 = arith.constant 0 : index
    %c0_2 = arith.constant 0 : index
    %1 = vector.load %arg2[%c0_1, %c0_2] : memref<576x64xbf16, #tpu.memory_space<vmem>>, vector<576x64xbf16>
    %cst = arith.constant dense<0.000000e+00> : vector<512x64xf32>
    %2 = tpu.matmul %0, %1, %cst {dimension_numbers = #tpu.dot_dimension_numbers<[1], [0], [0], [1], [0, 0, 1, 1], [], []>} : vector<512x576xbf16>, vector<576x64xbf16>, vector<512x64xf32> -> vector<512x64xf32>
    %c0_3 = arith.constant 0 : index
    %c0_4 = arith.constant 0 : index
    %3 = vector.load %arg3[%c0_3, %c0_4] : memref<1x64xf32, #tpu.memory_space<vmem>>, vector<1x64xf32>
    %4 = vector.broadcast %3 : vector<1x64xf32> to vector<512x64xf32>
    %5 = arith.addf %2, %4 : vector<512x64xf32>
    %c0_5 = arith.constant 0 : index
    %c0_6 = arith.constant 0 : index
    %6 = vector.load %arg4[%c0_5, %c0_6] : memref<512x64xf32, #tpu.memory_space<vmem>>, vector<512x64xf32>
    %7 = arith.addf %5, %6 : vector<512x64xf32>
    %cst_7 = arith.constant 0.000000e+00 : f32
    %8 = vector.broadcast %cst_7 : f32 to vector<512x64xf32>
    %9 = arith.maximumf %7, %8 : vector<512x64xf32>
    %10 = arith.truncf %9 : vector<512x64xf32> to vector<512x64xbf16>
    %c0_8 = arith.constant 0 : index
    %c0_9 = arith.constant 0 : index
    %11 = vector.load %arg5[%c0_8, %c0_9] : memref<512x64xbf16, #tpu.memory_space<vmem>>, vector<512x64xbf16>
    tpu.vector_store %arg5[%c0_8, %c0_9], %10 {strides = array<i32>} : memref<512x64xbf16, #tpu.memory_space<vmem>>, vector<512x64xbf16>,
    return
  }
  func.func @transform_0(%arg0: i32) -> (i32, i32) {
    %c0_i32 = arith.constant 0 : i32
    %c0_i32_0 = arith.constant 0 : i32
    return %arg0, %c0_i32 : i32, i32
  }
  func.func @transform_1(%arg0: i32) -> (i32, i32) {
    %c0_i32 = arith.constant 0 : i32
    %c0_i32_0 = arith.constant 0 : i32
    %c0_i32_1 = arith.constant 0 : i32
    return %c0_i32, %c0_i32_0 : i32, i32
  }
  func.func @transform_2(%arg0: i32) -> (i32, i32) {
    %c0_i32 = arith.constant 0 : i32
    %c0_i32_0 = arith.constant 0 : i32
    %c0_i32_1 = arith.constant 0 : i32
    return %c0_i32, %c0_i32_0 : i32, i32
  }
  func.func @transform_3(%arg0: i32) -> (i32, i32) {
    %c0_i32 = arith.constant 0 : i32
    %c0_i32_0 = arith.constant 0 : i32
    return %arg0, %c0_i32 : i32, i32
  }
  func.func @transform_4(%arg0: i32) -> (i32, i32) {
    %c0_i32 = arith.constant 0 : i32
    %c0_i32_0 = arith.constant 0 : i32
    return %arg0, %c0_i32 : i32, i32
  }
}

module attributes {stable_mosaic.version = 11 : i64} {
  func.func @_dual_gemm_kernel(%arg0: i32, %arg1: memref<128x576xbf16, #tpu.memory_space<vmem>>, %arg2: memref<576x128xbf16, #tpu.memory_space<vmem>>, %arg3: memref<1x128xf32, #tpu.memory_space<vmem>>, %arg4: memref<576x128xbf16, #tpu.memory_space<vmem>>, %arg5: memref<1x128xf32, #tpu.memory_space<vmem>>, %arg6: memref<128x128xbf16, #tpu.memory_space<vmem>>, %arg7: memref<128x128xf32, #tpu.memory_space<vmem>>) attributes {dimension_semantics = [#tpu.dimension_semantics<parallel>], iteration_bounds = array<i64: 2>, scalar_prefetch = 0 : i64, scratch_operands = 0 : i64, tpu.core_type = #tpu.core_type<tc>, window_params = [{transform_indices = @transform_0, window_bounds = array<i64: 128, 576>}, {pipeline_mode = #tpu.pipeline_mode<synchronous>, transform_indices = @transform_1, window_bounds = array<i64: 576, 128>}, {pipeline_mode = #tpu.pipeline_mode<synchronous>, transform_indices = @transform_2, window_bounds = array<i64: 1, 128>}, {pipeline_mode = #tpu.pipeline_mode<synchronous>, transform_indices = @transform_3, window_bounds = array<i64: 576, 128>}, {pipeline_mode = #tpu.pipeline_mode<synchronous>, transform_indices = @transform_4, window_bounds = array<i64: 1, 128>}, {transform_indices = @transform_5, window_bounds = array<i64: 128, 128>}, {transform_indices = @transform_6, window_bounds = array<i64: 128, 128>}]} {
    %c0 = arith.constant 0 : index
    %c0_0 = arith.constant 0 : index
    %0 = vector.load %arg1[%c0, %c0_0] : memref<128x576xbf16, #tpu.memory_space<vmem>>, vector<128x576xbf16>
    %c0_1 = arith.constant 0 : index
    %c0_2 = arith.constant 0 : index
    %1 = vector.load %arg2[%c0_1, %c0_2] : memref<576x128xbf16, #tpu.memory_space<vmem>>, vector<576x128xbf16>
    %cst = arith.constant dense<0.000000e+00> : vector<128x128xf32>
    %2 = tpu.matmul %0, %1, %cst {dimension_numbers = #tpu.dot_dimension_numbers<[1], [0], [0], [1], [0, 0, 1, 1], [], []>} : vector<128x576xbf16>, vector<576x128xbf16>, vector<128x128xf32> -> vector<128x128xf32>
    %c0_3 = arith.constant 0 : index
    %c0_4 = arith.constant 0 : index
    %3 = vector.load %arg3[%c0_3, %c0_4] : memref<1x128xf32, #tpu.memory_space<vmem>>, vector<1x128xf32>
    %4 = vector.broadcast %3 : vector<1x128xf32> to vector<128x128xf32>
    %5 = arith.addf %2, %4 : vector<128x128xf32>
    %c0_5 = arith.constant 0 : index
    %c0_6 = arith.constant 0 : index
    %6 = vector.load %arg4[%c0_5, %c0_6] : memref<576x128xbf16, #tpu.memory_space<vmem>>, vector<576x128xbf16>
    %cst_7 = arith.constant dense<0.000000e+00> : vector<128x128xf32>
    %7 = tpu.matmul %0, %6, %cst_7 {dimension_numbers = #tpu.dot_dimension_numbers<[1], [0], [0], [1], [0, 0, 1, 1], [], []>} : vector<128x576xbf16>, vector<576x128xbf16>, vector<128x128xf32> -> vector<128x128xf32>
    %c0_8 = arith.constant 0 : index
    %c0_9 = arith.constant 0 : index
    %8 = vector.load %arg5[%c0_8, %c0_9] : memref<1x128xf32, #tpu.memory_space<vmem>>, vector<1x128xf32>
    %9 = vector.broadcast %8 : vector<1x128xf32> to vector<128x128xf32>
    %10 = arith.addf %7, %9 : vector<128x128xf32>
    %cst_10 = arith.constant 0.000000e+00 : f32
    %11 = vector.broadcast %cst_10 : f32 to vector<128x128xf32>
    %12 = arith.maximumf %5, %11 : vector<128x128xf32>
    %13 = arith.truncf %12 : vector<128x128xf32> to vector<128x128xbf16>
    %c0_11 = arith.constant 0 : index
    %c0_12 = arith.constant 0 : index
    %14 = vector.load %arg6[%c0_11, %c0_12] : memref<128x128xbf16, #tpu.memory_space<vmem>>, vector<128x128xbf16>
    tpu.vector_store %arg6[%c0_11, %c0_12], %13 {strides = array<i32>} : memref<128x128xbf16, #tpu.memory_space<vmem>>, vector<128x128xbf16>,
    %c0_13 = arith.constant 0 : index
    %c0_14 = arith.constant 0 : index
    %15 = vector.load %arg7[%c0_13, %c0_14] : memref<128x128xf32, #tpu.memory_space<vmem>>, vector<128x128xf32>
    tpu.vector_store %arg7[%c0_13, %c0_14], %10 {strides = array<i32>} : memref<128x128xf32, #tpu.memory_space<vmem>>, vector<128x128xf32>,
    return
  }
  func.func @transform_0(%arg0: i32) -> (i32, i32) {
    %c0_i32 = arith.constant 0 : i32
    %c0_i32_0 = arith.constant 0 : i32
    return %arg0, %c0_i32 : i32, i32
  }
  func.func @transform_1(%arg0: i32) -> (i32, i32) {
    %c0_i32 = arith.constant 0 : i32
    %c0_i32_0 = arith.constant 0 : i32
    %c0_i32_1 = arith.constant 0 : i32
    return %c0_i32, %c0_i32_0 : i32, i32
  }
  func.func @transform_2(%arg0: i32) -> (i32, i32) {
    %c0_i32 = arith.constant 0 : i32
    %c0_i32_0 = arith.constant 0 : i32
    %c0_i32_1 = arith.constant 0 : i32
    return %c0_i32, %c0_i32_0 : i32, i32
  }
  func.func @transform_3(%arg0: i32) -> (i32, i32) {
    %c0_i32 = arith.constant 0 : i32
    %c0_i32_0 = arith.constant 0 : i32
    %c0_i32_1 = arith.constant 0 : i32
    return %c0_i32, %c0_i32_0 : i32, i32
  }
  func.func @transform_4(%arg0: i32) -> (i32, i32) {
    %c0_i32 = arith.constant 0 : i32
    %c0_i32_0 = arith.constant 0 : i32
    %c0_i32_1 = arith.constant 0 : i32
    return %c0_i32, %c0_i32_0 : i32, i32
  }
  func.func @transform_5(%arg0: i32) -> (i32, i32) {
    %c0_i32 = arith.constant 0 : i32
    %c0_i32_0 = arith.constant 0 : i32
    return %arg0, %c0_i32 : i32, i32
  }
  func.func @transform_6(%arg0: i32) -> (i32, i32) {
    %c0_i32 = arith.constant 0 : i32
    %c0_i32_0 = arith.constant 0 : i32
    return %arg0, %c0_i32 : i32, i32
  }
}

module attributes {stable_mosaic.version = 11 : i64} {
  func.func @_conv2_res_pool_kernel(%arg0: i32, %arg1: memref<128x1152xbf16, #tpu.memory_space<vmem>>, %arg2: memref<1152x128xbf16, #tpu.memory_space<vmem>>, %arg3: memref<1x128xf32, #tpu.memory_space<vmem>>, %arg4: memref<128x128xf32, #tpu.memory_space<vmem>>, %arg5: memref<8x128xf32, #tpu.memory_space<vmem>>, %arg6: memref<8x128xf32, #tpu.memory_space<vmem>>) attributes {dimension_semantics = [#tpu.dimension_semantics<parallel>], iteration_bounds = array<i64: 2>, scalar_prefetch = 0 : i64, scratch_operands = 0 : i64, tpu.core_type = #tpu.core_type<tc>, window_params = [{transform_indices = @transform_0, window_bounds = array<i64: 128, 1152>}, {pipeline_mode = #tpu.pipeline_mode<synchronous>, transform_indices = @transform_1, window_bounds = array<i64: 1152, 128>}, {pipeline_mode = #tpu.pipeline_mode<synchronous>, transform_indices = @transform_2, window_bounds = array<i64: 1, 128>}, {transform_indices = @transform_3, window_bounds = array<i64: 128, 128>}, {transform_indices = @transform_4, window_bounds = array<i64: 8, 128>}, {transform_indices = @transform_5, window_bounds = array<i64: 8, 128>}]} {
    %c0 = arith.constant 0 : index
    %c0_0 = arith.constant 0 : index
    %0 = vector.load %arg1[%c0, %c0_0] : memref<128x1152xbf16, #tpu.memory_space<vmem>>, vector<128x1152xbf16>
    %c0_1 = arith.constant 0 : index
    %c0_2 = arith.constant 0 : index
    %1 = vector.load %arg2[%c0_1, %c0_2] : memref<1152x128xbf16, #tpu.memory_space<vmem>>, vector<1152x128xbf16>
    %cst = arith.constant dense<0.000000e+00> : vector<128x128xf32>
    %2 = tpu.matmul %0, %1, %cst {dimension_numbers = #tpu.dot_dimension_numbers<[1], [0], [0], [1], [0, 0, 1, 1], [], []>} : vector<128x1152xbf16>, vector<1152x128xbf16>, vector<128x128xf32> -> vector<128x128xf32>
    %c0_3 = arith.constant 0 : index
    %c0_4 = arith.constant 0 : index
    %3 = vector.load %arg3[%c0_3, %c0_4] : memref<1x128xf32, #tpu.memory_space<vmem>>, vector<1x128xf32>
    %4 = vector.broadcast %3 : vector<1x128xf32> to vector<128x128xf32>
    %5 = arith.addf %2, %4 : vector<128x128xf32>
    %c0_5 = arith.constant 0 : index
    %c0_6 = arith.constant 0 : index
    %6 = vector.load %arg4[%c0_5, %c0_6] : memref<128x128xf32, #tpu.memory_space<vmem>>, vector<128x128xf32>
    %7 = arith.addf %5, %6 : vector<128x128xf32>
    %cst_7 = arith.constant 0.000000e+00 : f32
    %8 = vector.broadcast %cst_7 : f32 to vector<128x128xf32>
    %9 = arith.maximumf %7, %8 : vector<128x128xf32>
    %c0_8 = arith.constant 0 : index
    %c0_9 = arith.constant 0 : index
    %10 = vector.load %arg5[%c0_8, %c0_9] : memref<8x128xf32, #tpu.memory_space<vmem>>, vector<8x128xf32>
    %cst_10 = arith.constant dense<0.000000e+00> : vector<8x128xf32>
    %11 = tpu.matmul %10, %9, %cst_10 {dimension_numbers = #tpu.dot_dimension_numbers<[1], [0], [0], [1], [0, 0, 1, 1], [], []>} : vector<8x128xf32>, vector<128x128xf32>, vector<8x128xf32> -> vector<8x128xf32>
    %c0_11 = arith.constant 0 : index
    %c0_12 = arith.constant 0 : index
    %12 = vector.load %arg6[%c0_11, %c0_12] : memref<8x128xf32, #tpu.memory_space<vmem>>, vector<8x128xf32>
    tpu.vector_store %arg6[%c0_11, %c0_12], %11 {strides = array<i32>} : memref<8x128xf32, #tpu.memory_space<vmem>>, vector<8x128xf32>,
    return
  }
  func.func @transform_0(%arg0: i32) -> (i32, i32) {
    %c0_i32 = arith.constant 0 : i32
    %c0_i32_0 = arith.constant 0 : i32
    return %arg0, %c0_i32 : i32, i32
  }
  func.func @transform_1(%arg0: i32) -> (i32, i32) {
    %c0_i32 = arith.constant 0 : i32
    %c0_i32_0 = arith.constant 0 : i32
    %c0_i32_1 = arith.constant 0 : i32
    return %c0_i32, %c0_i32_0 : i32, i32
  }
  func.func @transform_2(%arg0: i32) -> (i32, i32) {
    %c0_i32 = arith.constant 0 : i32
    %c0_i32_0 = arith.constant 0 : i32
    %c0_i32_1 = arith.constant 0 : i32
    return %c0_i32, %c0_i32_0 : i32, i32
  }
  func.func @transform_3(%arg0: i32) -> (i32, i32) {
    %c0_i32 = arith.constant 0 : i32
    %c0_i32_0 = arith.constant 0 : i32
    return %arg0, %c0_i32 : i32, i32
  }
  func.func @transform_4(%arg0: i32) -> (i32, i32) {
    %c0_i32 = arith.constant 0 : i32
    return %arg0, %arg0 : i32, i32
  }
  func.func @transform_5(%arg0: i32) -> (i32, i32) {
    %c0_i32 = arith.constant 0 : i32
    %c0_i32_0 = arith.constant 0 : i32
    return %arg0, %c0_i32 : i32, i32
  }
}

module attributes {stable_mosaic.version = 11 : i64} {
  func.func @_tf_encoder_cls_kernel(%arg0: memref<2x9x128xf32, #tpu.memory_space<vmem>>, %arg1: memref<128x384xbf16, #tpu.memory_space<vmem>>, %arg2: memref<1x384xf32, #tpu.memory_space<vmem>>, %arg3: memref<128x128xbf16, #tpu.memory_space<vmem>>, %arg4: memref<1x128xf32, #tpu.memory_space<vmem>>, %arg5: memref<128x8xf32, #tpu.memory_space<vmem>>, %arg6: memref<8x128xf32, #tpu.memory_space<vmem>>, %arg7: memref<1x128xf32, #tpu.memory_space<vmem>>, %arg8: memref<1x128xf32, #tpu.memory_space<vmem>>, %arg9: memref<128x256xbf16, #tpu.memory_space<vmem>>, %arg10: memref<1x256xf32, #tpu.memory_space<vmem>>, %arg11: memref<256x128xbf16, #tpu.memory_space<vmem>>, %arg12: memref<1x128xf32, #tpu.memory_space<vmem>>, %arg13: memref<1x128xf32, #tpu.memory_space<vmem>>, %arg14: memref<1x128xf32, #tpu.memory_space<vmem>>, %arg15: memref<128x5xbf16, #tpu.memory_space<vmem>>, %arg16: memref<1x5xf32, #tpu.memory_space<vmem>>, %arg17: memref<2x1x5xf32, #tpu.memory_space<vmem>>) attributes {dimension_semantics = [], scalar_prefetch = 0 : i64, scratch_operands = 0 : i64, tpu.core_type = #tpu.core_type<tc>} {
    %c0 = arith.constant 0 : index
    %c0_0 = arith.constant 0 : index
    %0 = vector.load %arg1[%c0, %c0_0] : memref<128x384xbf16, #tpu.memory_space<vmem>>, vector<128x384xbf16>
    %c0_1 = arith.constant 0 : index
    %c0_2 = arith.constant 0 : index
    %1 = vector.load %arg2[%c0_1, %c0_2] : memref<1x384xf32, #tpu.memory_space<vmem>>, vector<1x384xf32>
    %c0_3 = arith.constant 0 : index
    %c0_4 = arith.constant 0 : index
    %2 = vector.load %arg5[%c0_3, %c0_4] : memref<128x8xf32, #tpu.memory_space<vmem>>, vector<128x8xf32>
    %c0_5 = arith.constant 0 : index
    %c0_6 = arith.constant 0 : index
    %3 = vector.load %arg6[%c0_5, %c0_6] : memref<8x128xf32, #tpu.memory_space<vmem>>, vector<8x128xf32>
    %c0_7 = arith.constant 0 : index
    %c0_8 = arith.constant 0 : index
    %4 = vector.load %arg3[%c0_7, %c0_8] : memref<128x128xbf16, #tpu.memory_space<vmem>>, vector<128x128xbf16>
    %c0_9 = arith.constant 0 : index
    %c0_10 = arith.constant 0 : index
    %5 = vector.load %arg4[%c0_9, %c0_10] : memref<1x128xf32, #tpu.memory_space<vmem>>, vector<1x128xf32>
    %c0_11 = arith.constant 0 : index
    %c0_12 = arith.constant 0 : index
    %6 = vector.load %arg7[%c0_11, %c0_12] : memref<1x128xf32, #tpu.memory_space<vmem>>, vector<1x128xf32>
    %c0_13 = arith.constant 0 : index
    %c0_14 = arith.constant 0 : index
    %7 = vector.load %arg8[%c0_13, %c0_14] : memref<1x128xf32, #tpu.memory_space<vmem>>, vector<1x128xf32>
    %c0_15 = arith.constant 0 : index
    %c0_16 = arith.constant 0 : index
    %8 = vector.load %arg9[%c0_15, %c0_16] : memref<128x256xbf16, #tpu.memory_space<vmem>>, vector<128x256xbf16>
    %c0_17 = arith.constant 0 : index
    %c0_18 = arith.constant 0 : index
    %9 = vector.load %arg10[%c0_17, %c0_18] : memref<1x256xf32, #tpu.memory_space<vmem>>, vector<1x256xf32>
    %c0_19 = arith.constant 0 : index
    %c0_20 = arith.constant 0 : index
    %10 = vector.load %arg11[%c0_19, %c0_20] : memref<256x128xbf16, #tpu.memory_space<vmem>>, vector<256x128xbf16>
    %c0_21 = arith.constant 0 : index
    %c0_22 = arith.constant 0 : index
    %11 = vector.load %arg12[%c0_21, %c0_22] : memref<1x128xf32, #tpu.memory_space<vmem>>, vector<1x128xf32>
    %c0_23 = arith.constant 0 : index
    %c0_24 = arith.constant 0 : index
    %12 = vector.load %arg13[%c0_23, %c0_24] : memref<1x128xf32, #tpu.memory_space<vmem>>, vector<1x128xf32>
    %c0_25 = arith.constant 0 : index
    %c0_26 = arith.constant 0 : index
    %13 = vector.load %arg14[%c0_25, %c0_26] : memref<1x128xf32, #tpu.memory_space<vmem>>, vector<1x128xf32>
    %c0_27 = arith.constant 0 : index
    %c0_28 = arith.constant 0 : index
    %14 = vector.load %arg15[%c0_27, %c0_28] : memref<128x5xbf16, #tpu.memory_space<vmem>>, vector<128x5xbf16>
    %c0_29 = arith.constant 0 : index
    %c0_30 = arith.constant 0 : index
    %15 = vector.load %arg16[%c0_29, %c0_30] : memref<1x5xf32, #tpu.memory_space<vmem>>, vector<1x5xf32>
    %c0_31 = arith.constant 0 : index
    %c0_32 = arith.constant 0 : index
    %c0_33 = arith.constant 0 : index
    %16 = vector.load %arg0[%c0_31, %c0_32, %c0_33] : memref<2x9x128xf32, #tpu.memory_space<vmem>>, vector<1x9x128xf32>
    %17 = vector.shape_cast %16 : vector<1x9x128xf32> to vector<9x128xf32>
    %18 = arith.truncf %17 : vector<9x128xf32> to vector<9x128xbf16>
    %cst = arith.constant dense<0.000000e+00> : vector<9x384xf32>
    %19 = tpu.matmul %18, %0, %cst {dimension_numbers = #tpu.dot_dimension_numbers<[1], [0], [0], [1], [0, 0, 1, 1], [], []>} : vector<9x128xbf16>, vector<128x384xbf16>, vector<9x384xf32> -> vector<9x384xf32>
    %20 = vector.broadcast %1 : vector<1x384xf32> to vector<9x384xf32>
    %21 = arith.addf %19, %20 : vector<9x384xf32>
    %22 = vector.extract_strided_slice %21 {offsets = [0, 0], sizes = [9, 128], strides = [1, 1]} : vector<9x384xf32> to vector<9x128xf32>
    %23 = vector.extract_strided_slice %21 {offsets = [0, 128], sizes = [9, 128], strides = [1, 1]} : vector<9x384xf32> to vector<9x128xf32>
    %24 = vector.extract_strided_slice %21 {offsets = [0, 256], sizes = [9, 128], strides = [1, 1]} : vector<9x384xf32> to vector<9x128xf32>
    %c1 = arith.constant 1 : index
    %c0_34 = arith.constant 0 : index
    %c0_35 = arith.constant 0 : index
    %25 = vector.load %arg0[%c1, %c0_34, %c0_35] : memref<2x9x128xf32, #tpu.memory_space<vmem>>, vector<1x9x128xf32>
    %26 = vector.shape_cast %25 : vector<1x9x128xf32> to vector<9x128xf32>
    %27 = arith.truncf %26 : vector<9x128xf32> to vector<9x128xbf16>
    %cst_36 = arith.constant dense<0.000000e+00> : vector<9x384xf32>
    %28 = tpu.matmul %27, %0, %cst_36 {dimension_numbers = #tpu.dot_dimension_numbers<[1], [0], [0], [1], [0, 0, 1, 1], [], []>} : vector<9x128xbf16>, vector<128x384xbf16>, vector<9x384xf32> -> vector<9x384xf32>
    %29 = vector.broadcast %1 : vector<1x384xf32> to vector<9x384xf32>
    %30 = arith.addf %28, %29 : vector<9x384xf32>
    %31 = vector.extract_strided_slice %30 {offsets = [0, 0], sizes = [9, 128], strides = [1, 1]} : vector<9x384xf32> to vector<9x128xf32>
    %32 = vector.extract_strided_slice %30 {offsets = [0, 128], sizes = [9, 128], strides = [1, 1]} : vector<9x384xf32> to vector<9x128xf32>
    %33 = vector.extract_strided_slice %30 {offsets = [0, 256], sizes = [9, 128], strides = [1, 1]} : vector<9x384xf32> to vector<9x128xf32>
    %34 = arith.mulf %22, %23 : vector<9x128xf32>
    %cst_37 = arith.constant dense<0.000000e+00> : vector<9x8xf32>
    %35 = tpu.matmul %34, %2, %cst_37 {dimension_numbers = #tpu.dot_dimension_numbers<[1], [0], [0], [1], [0, 0, 1, 1], [], []>} : vector<9x128xf32>, vector<128x8xf32>, vector<9x8xf32> -> vector<9x8xf32>
    %cst_38 = arith.constant 0.176776692 : f32
    %36 = vector.broadcast %cst_38 : f32 to vector<9x8xf32>
    %37 = arith.mulf %35, %36 : vector<9x8xf32>
    %38 = arith.mulf %22, %32 : vector<9x128xf32>
    %cst_39 = arith.constant dense<0.000000e+00> : vector<9x8xf32>
    %39 = tpu.matmul %38, %2, %cst_39 {dimension_numbers = #tpu.dot_dimension_numbers<[1], [0], [0], [1], [0, 0, 1, 1], [], []>} : vector<9x128xf32>, vector<128x8xf32>, vector<9x8xf32> -> vector<9x8xf32>
    %cst_40 = arith.constant 0.176776692 : f32
    %40 = vector.broadcast %cst_40 : f32 to vector<9x8xf32>
    %41 = arith.mulf %39, %40 : vector<9x8xf32>
    %42 = arith.maximumf %37, %41 : vector<9x8xf32>
    %43 = arith.subf %37, %42 : vector<9x8xf32>
    %44 = math.exp %43 : vector<9x8xf32>
    %45 = arith.subf %41, %42 : vector<9x8xf32>
    %46 = math.exp %45 : vector<9x8xf32>
    %47 = arith.addf %44, %46 : vector<9x8xf32>
    %cst_41 = arith.constant 1.000000e+00 : f32
    %48 = vector.broadcast %cst_41 : f32 to vector<9x8xf32>
    %49 = arith.divf %48, %47 : vector<9x8xf32>
    %50 = arith.mulf %44, %49 : vector<9x8xf32>
    %cst_42 = arith.constant dense<0.000000e+00> : vector<9x128xf32>
    %51 = tpu.matmul %50, %3, %cst_42 {dimension_numbers = #tpu.dot_dimension_numbers<[1], [0], [0], [1], [0, 0, 1, 1], [], []>} : vector<9x8xf32>, vector<8x128xf32>, vector<9x128xf32> -> vector<9x128xf32>
    %52 = arith.mulf %51, %24 : vector<9x128xf32>
    %53 = arith.mulf %46, %49 : vector<9x8xf32>
    %cst_43 = arith.constant dense<0.000000e+00> : vector<9x128xf32>
    %54 = tpu.matmul %53, %3, %cst_43 {dimension_numbers = #tpu.dot_dimension_numbers<[1], [0], [0], [1], [0, 0, 1, 1], [], []>} : vector<9x8xf32>, vector<8x128xf32>, vector<9x128xf32> -> vector<9x128xf32>
    %55 = arith.mulf %54, %33 : vector<9x128xf32>
    %56 = arith.addf %52, %55 : vector<9x128xf32>
    %57 = arith.truncf %56 : vector<9x128xf32> to vector<9x128xbf16>
    %cst_44 = arith.constant dense<0.000000e+00> : vector<9x128xf32>
    %58 = tpu.matmul %57, %4, %cst_44 {dimension_numbers = #tpu.dot_dimension_numbers<[1], [0], [0], [1], [0, 0, 1, 1], [], []>} : vector<9x128xbf16>, vector<128x128xbf16>, vector<9x128xf32> -> vector<9x128xf32>
    %59 = vector.broadcast %5 : vector<1x128xf32> to vector<9x128xf32>
    %60 = arith.addf %58, %59 : vector<9x128xf32>
    %61 = arith.addf %17, %60 : vector<9x128xf32>
    %cst_45 = arith.constant dense<0.000000e+00> : vector<9xf32>
    %62 = vector.multi_reduction <add>, %61, %cst_45 [1] : vector<9x128xf32> to vector<9xf32>
    %63 = vector.shape_cast %62 : vector<9xf32> to vector<9x1xf32>
    %cst_46 = arith.constant 1.280000e+02 : f32
    %64 = vector.broadcast %cst_46 : f32 to vector<9x1xf32>
    %65 = arith.divf %63, %64 : vector<9x1xf32>
    %66 = vector.broadcast %65 : vector<9x1xf32> to vector<9x128xf32>
    %67 = arith.subf %61, %66 : vector<9x128xf32>
    %68 = arith.mulf %67, %67 : vector<9x128xf32>
    %cst_47 = arith.constant dense<0.000000e+00> : vector<9xf32>
    %69 = vector.multi_reduction <add>, %68, %cst_47 [1] : vector<9x128xf32> to vector<9xf32>
    %70 = vector.shape_cast %69 : vector<9xf32> to vector<9x1xf32>
    %cst_48 = arith.constant 1.280000e+02 : f32
    %71 = vector.broadcast %cst_48 : f32 to vector<9x1xf32>
    %72 = arith.divf %70, %71 : vector<9x1xf32>
    %73 = vector.broadcast %65 : vector<9x1xf32> to vector<9x128xf32>
    %74 = arith.subf %61, %73 : vector<9x128xf32>
    %cst_49 = arith.constant 9.99999974E-6 : f32
    %75 = vector.broadcast %cst_49 : f32 to vector<9x1xf32>
    %76 = arith.addf %72, %75 : vector<9x1xf32>
    %77 = math.rsqrt %76 : vector<9x1xf32>
    %78 = vector.broadcast %77 : vector<9x1xf32> to vector<9x128xf32>
    %79 = arith.mulf %74, %78 : vector<9x128xf32>
    %80 = vector.broadcast %6 : vector<1x128xf32> to vector<9x128xf32>
    %81 = arith.mulf %79, %80 : vector<9x128xf32>
    %82 = vector.broadcast %7 : vector<1x128xf32> to vector<9x128xf32>
    %83 = arith.addf %81, %82 : vector<9x128xf32>
    %84 = arith.truncf %83 : vector<9x128xf32> to vector<9x128xbf16>
    %cst_50 = arith.constant dense<0.000000e+00> : vector<9x256xf32>
    %85 = tpu.matmul %84, %8, %cst_50 {dimension_numbers = #tpu.dot_dimension_numbers<[1], [0], [0], [1], [0, 0, 1, 1], [], []>} : vector<9x128xbf16>, vector<128x256xbf16>, vector<9x256xf32> -> vector<9x256xf32>
    %86 = vector.broadcast %9 : vector<1x256xf32> to vector<9x256xf32>
    %87 = arith.addf %85, %86 : vector<9x256xf32>
    %cst_51 = arith.constant 5.000000e-01 : f32
    %88 = vector.broadcast %cst_51 : f32 to vector<9x256xf32>
    %89 = arith.mulf %88, %87 : vector<9x256xf32>
    %cst_52 = arith.constant 0.707106769 : f32
    %90 = vector.broadcast %cst_52 : f32 to vector<9x256xf32>
    %91 = arith.mulf %87, %90 : vector<9x256xf32>
    %92 = math.erf %91 : vector<9x256xf32>
    %cst_53 = arith.constant 1.000000e+00 : f32
    %93 = vector.broadcast %cst_53 : f32 to vector<9x256xf32>
    %94 = arith.addf %93, %92 : vector<9x256xf32>
    %95 = arith.mulf %89, %94 : vector<9x256xf32>
    %96 = arith.truncf %95 : vector<9x256xf32> to vector<9x256xbf16>
    %cst_54 = arith.constant dense<0.000000e+00> : vector<9x128xf32>
    %97 = tpu.matmul %96, %10, %cst_54 {dimension_numbers = #tpu.dot_dimension_numbers<[1], [0], [0], [1], [0, 0, 1, 1], [], []>} : vector<9x256xbf16>, vector<256x128xbf16>, vector<9x128xf32> -> vector<9x128xf32>
    %98 = vector.broadcast %11 : vector<1x128xf32> to vector<9x128xf32>
    %99 = arith.addf %97, %98 : vector<9x128xf32>
    %100 = arith.addf %83, %99 : vector<9x128xf32>
    %cst_55 = arith.constant dense<0.000000e+00> : vector<9xf32>
    %101 = vector.multi_reduction <add>, %100, %cst_55 [1] : vector<9x128xf32> to vector<9xf32>
    %102 = vector.shape_cast %101 : vector<9xf32> to vector<9x1xf32>
    %cst_56 = arith.constant 1.280000e+02 : f32
    %103 = vector.broadcast %cst_56 : f32 to vector<9x1xf32>
    %104 = arith.divf %102, %103 : vector<9x1xf32>
    %105 = vector.broadcast %104 : vector<9x1xf32> to vector<9x128xf32>
    %106 = arith.subf %100, %105 : vector<9x128xf32>
    %107 = arith.mulf %106, %106 : vector<9x128xf32>
    %cst_57 = arith.constant dense<0.000000e+00> : vector<9xf32>
    %108 = vector.multi_reduction <add>, %107, %cst_57 [1] : vector<9x128xf32> to vector<9xf32>
    %109 = vector.shape_cast %108 : vector<9xf32> to vector<9x1xf32>
    %cst_58 = arith.constant 1.280000e+02 : f32
    %110 = vector.broadcast %cst_58 : f32 to vector<9x1xf32>
    %111 = arith.divf %109, %110 : vector<9x1xf32>
    %112 = vector.broadcast %104 : vector<9x1xf32> to vector<9x128xf32>
    %113 = arith.subf %100, %112 : vector<9x128xf32>
    %cst_59 = arith.constant 9.99999974E-6 : f32
    %114 = vector.broadcast %cst_59 : f32 to vector<9x1xf32>
    %115 = arith.addf %111, %114 : vector<9x1xf32>
    %116 = math.rsqrt %115 : vector<9x1xf32>
    %117 = vector.broadcast %116 : vector<9x1xf32> to vector<9x128xf32>
    %118 = arith.mulf %113, %117 : vector<9x128xf32>
    %119 = vector.broadcast %12 : vector<1x128xf32> to vector<9x128xf32>
    %120 = arith.mulf %118, %119 : vector<9x128xf32>
    %121 = vector.broadcast %13 : vector<1x128xf32> to vector<9x128xf32>
    %122 = arith.addf %120, %121 : vector<9x128xf32>
    %123 = arith.truncf %122 : vector<9x128xf32> to vector<9x128xbf16>
    %cst_60 = arith.constant dense<0.000000e+00> : vector<9x5xf32>
    %124 = tpu.matmul %123, %14, %cst_60 {dimension_numbers = #tpu.dot_dimension_numbers<[1], [0], [0], [1], [0, 0, 1, 1], [], []>} : vector<9x128xbf16>, vector<128x5xbf16>, vector<9x5xf32> -> vector<9x5xf32>
    %125 = vector.broadcast %15 : vector<1x5xf32> to vector<9x5xf32>
    %126 = arith.addf %124, %125 : vector<9x5xf32>
    %127 = vector.extract_strided_slice %126 {offsets = [0, 0], sizes = [1, 5], strides = [1, 1]} : vector<9x5xf32> to vector<1x5xf32>
    %c0_61 = arith.constant 0 : index
    %c0_62 = arith.constant 0 : index
    %c0_63 = arith.constant 0 : index
    %128 = vector.load %arg17[%c0_61, %c0_62, %c0_63] : memref<2x1x5xf32, #tpu.memory_space<vmem>>, vector<1x1x5xf32>
    %129 = vector.shape_cast %128 : vector<1x1x5xf32> to vector<1x5xf32>
    %130 = vector.shape_cast %127 : vector<1x5xf32> to vector<1x1x5xf32>
    tpu.vector_store %arg17[%c0_61, %c0_62, %c0_63], %130 {strides = array<i32>} : memref<2x1x5xf32, #tpu.memory_space<vmem>>, vector<1x1x5xf32>,
    %131 = arith.mulf %31, %23 : vector<9x128xf32>
    %cst_64 = arith.constant dense<0.000000e+00> : vector<9x8xf32>
    %132 = tpu.matmul %131, %2, %cst_64 {dimension_numbers = #tpu.dot_dimension_numbers<[1], [0], [0], [1], [0, 0, 1, 1], [], []>} : vector<9x128xf32>, vector<128x8xf32>, vector<9x8xf32> -> vector<9x8xf32>
    %cst_65 = arith.constant 0.176776692 : f32
    %133 = vector.broadcast %cst_65 : f32 to vector<9x8xf32>
    %134 = arith.mulf %132, %133 : vector<9x8xf32>
    %135 = arith.mulf %31, %32 : vector<9x128xf32>
    %cst_66 = arith.constant dense<0.000000e+00> : vector<9x8xf32>
    %136 = tpu.matmul %135, %2, %cst_66 {dimension_numbers = #tpu.dot_dimension_numbers<[1], [0], [0], [1], [0, 0, 1, 1], [], []>} : vector<9x128xf32>, vector<128x8xf32>, vector<9x8xf32> -> vector<9x8xf32>
    %cst_67 = arith.constant 0.176776692 : f32
    %137 = vector.broadcast %cst_67 : f32 to vector<9x8xf32>
    %138 = arith.mulf %136, %137 : vector<9x8xf32>
    %139 = arith.maximumf %134, %138 : vector<9x8xf32>
    %140 = arith.subf %134, %139 : vector<9x8xf32>
    %141 = math.exp %140 : vector<9x8xf32>
    %142 = arith.subf %138, %139 : vector<9x8xf32>
    %143 = math.exp %142 : vector<9x8xf32>
    %144 = arith.addf %141, %143 : vector<9x8xf32>
    %cst_68 = arith.constant 1.000000e+00 : f32
    %145 = vector.broadcast %cst_68 : f32 to vector<9x8xf32>
    %146 = arith.divf %145, %144 : vector<9x8xf32>
    %147 = arith.mulf %141, %146 : vector<9x8xf32>
    %cst_69 = arith.constant dense<0.000000e+00> : vector<9x128xf32>
    %148 = tpu.matmul %147, %3, %cst_69 {dimension_numbers = #tpu.dot_dimension_numbers<[1], [0], [0], [1], [0, 0, 1, 1], [], []>} : vector<9x8xf32>, vector<8x128xf32>, vector<9x128xf32> -> vector<9x128xf32>
    %149 = arith.mulf %148, %24 : vector<9x128xf32>
    %150 = arith.mulf %143, %146 : vector<9x8xf32>
    %cst_70 = arith.constant dense<0.000000e+00> : vector<9x128xf32>
    %151 = tpu.matmul %150, %3, %cst_70 {dimension_numbers = #tpu.dot_dimension_numbers<[1], [0], [0], [1], [0, 0, 1, 1], [], []>} : vector<9x8xf32>, vector<8x128xf32>, vector<9x128xf32> -> vector<9x128xf32>
    %152 = arith.mulf %151, %33 : vector<9x128xf32>
    %153 = arith.addf %149, %152 : vector<9x128xf32>
    %154 = arith.truncf %153 : vector<9x128xf32> to vector<9x128xbf16>
    %cst_71 = arith.constant dense<0.000000e+00> : vector<9x128xf32>
    %155 = tpu.matmul %154, %4, %cst_71 {dimension_numbers = #tpu.dot_dimension_numbers<[1], [0], [0], [1], [0, 0, 1, 1], [], []>} : vector<9x128xbf16>, vector<128x128xbf16>, vector<9x128xf32> -> vector<9x128xf32>
    %156 = vector.broadcast %5 : vector<1x128xf32> to vector<9x128xf32>
    %157 = arith.addf %155, %156 : vector<9x128xf32>
    %158 = arith.addf %26, %157 : vector<9x128xf32>
    %cst_72 = arith.constant dense<0.000000e+00> : vector<9xf32>
    %159 = vector.multi_reduction <add>, %158, %cst_72 [1] : vector<9x128xf32> to vector<9xf32>
    %160 = vector.shape_cast %159 : vector<9xf32> to vector<9x1xf32>
    %cst_73 = arith.constant 1.280000e+02 : f32
    %161 = vector.broadcast %cst_73 : f32 to vector<9x1xf32>
    %162 = arith.divf %160, %161 : vector<9x1xf32>
    %163 = vector.broadcast %162 : vector<9x1xf32> to vector<9x128xf32>
    %164 = arith.subf %158, %163 : vector<9x128xf32>
    %165 = arith.mulf %164, %164 : vector<9x128xf32>
    %cst_74 = arith.constant dense<0.000000e+00> : vector<9xf32>
    %166 = vector.multi_reduction <add>, %165, %cst_74 [1] : vector<9x128xf32> to vector<9xf32>
    %167 = vector.shape_cast %166 : vector<9xf32> to vector<9x1xf32>
    %cst_75 = arith.constant 1.280000e+02 : f32
    %168 = vector.broadcast %cst_75 : f32 to vector<9x1xf32>
    %169 = arith.divf %167, %168 : vector<9x1xf32>
    %170 = vector.broadcast %162 : vector<9x1xf32> to vector<9x128xf32>
    %171 = arith.subf %158, %170 : vector<9x128xf32>
    %cst_76 = arith.constant 9.99999974E-6 : f32
    %172 = vector.broadcast %cst_76 : f32 to vector<9x1xf32>
    %173 = arith.addf %169, %172 : vector<9x1xf32>
    %174 = math.rsqrt %173 : vector<9x1xf32>
    %175 = vector.broadcast %174 : vector<9x1xf32> to vector<9x128xf32>
    %176 = arith.mulf %171, %175 : vector<9x128xf32>
    %177 = vector.broadcast %6 : vector<1x128xf32> to vector<9x128xf32>
    %178 = arith.mulf %176, %177 : vector<9x128xf32>
    %179 = vector.broadcast %7 : vector<1x128xf32> to vector<9x128xf32>
    %180 = arith.addf %178, %179 : vector<9x128xf32>
    %181 = arith.truncf %180 : vector<9x128xf32> to vector<9x128xbf16>
    %cst_77 = arith.constant dense<0.000000e+00> : vector<9x256xf32>
    %182 = tpu.matmul %181, %8, %cst_77 {dimension_numbers = #tpu.dot_dimension_numbers<[1], [0], [0], [1], [0, 0, 1, 1], [], []>} : vector<9x128xbf16>, vector<128x256xbf16>, vector<9x256xf32> -> vector<9x256xf32>
    %183 = vector.broadcast %9 : vector<1x256xf32> to vector<9x256xf32>
    %184 = arith.addf %182, %183 : vector<9x256xf32>
    %cst_78 = arith.constant 5.000000e-01 : f32
    %185 = vector.broadcast %cst_78 : f32 to vector<9x256xf32>
    %186 = arith.mulf %185, %184 : vector<9x256xf32>
    %cst_79 = arith.constant 0.707106769 : f32
    %187 = vector.broadcast %cst_79 : f32 to vector<9x256xf32>
    %188 = arith.mulf %184, %187 : vector<9x256xf32>
    %189 = math.erf %188 : vector<9x256xf32>
    %cst_80 = arith.constant 1.000000e+00 : f32
    %190 = vector.broadcast %cst_80 : f32 to vector<9x256xf32>
    %191 = arith.addf %190, %189 : vector<9x256xf32>
    %192 = arith.mulf %186, %191 : vector<9x256xf32>
    %193 = arith.truncf %192 : vector<9x256xf32> to vector<9x256xbf16>
    %cst_81 = arith.constant dense<0.000000e+00> : vector<9x128xf32>
    %194 = tpu.matmul %193, %10, %cst_81 {dimension_numbers = #tpu.dot_dimension_numbers<[1], [0], [0], [1], [0, 0, 1, 1], [], []>} : vector<9x256xbf16>, vector<256x128xbf16>, vector<9x128xf32> -> vector<9x128xf32>
    %195 = vector.broadcast %11 : vector<1x128xf32> to vector<9x128xf32>
    %196 = arith.addf %194, %195 : vector<9x128xf32>
    %197 = arith.addf %180, %196 : vector<9x128xf32>
    %cst_82 = arith.constant dense<0.000000e+00> : vector<9xf32>
    %198 = vector.multi_reduction <add>, %197, %cst_82 [1] : vector<9x128xf32> to vector<9xf32>
    %199 = vector.shape_cast %198 : vector<9xf32> to vector<9x1xf32>
    %cst_83 = arith.constant 1.280000e+02 : f32
    %200 = vector.broadcast %cst_83 : f32 to vector<9x1xf32>
    %201 = arith.divf %199, %200 : vector<9x1xf32>
    %202 = vector.broadcast %201 : vector<9x1xf32> to vector<9x128xf32>
    %203 = arith.subf %197, %202 : vector<9x128xf32>
    %204 = arith.mulf %203, %203 : vector<9x128xf32>
    %cst_84 = arith.constant dense<0.000000e+00> : vector<9xf32>
    %205 = vector.multi_reduction <add>, %204, %cst_84 [1] : vector<9x128xf32> to vector<9xf32>
    %206 = vector.shape_cast %205 : vector<9xf32> to vector<9x1xf32>
    %cst_85 = arith.constant 1.280000e+02 : f32
    %207 = vector.broadcast %cst_85 : f32 to vector<9x1xf32>
    %208 = arith.divf %206, %207 : vector<9x1xf32>
    %209 = vector.broadcast %201 : vector<9x1xf32> to vector<9x128xf32>
    %210 = arith.subf %197, %209 : vector<9x128xf32>
    %cst_86 = arith.constant 9.99999974E-6 : f32
    %211 = vector.broadcast %cst_86 : f32 to vector<9x1xf32>
    %212 = arith.addf %208, %211 : vector<9x1xf32>
    %213 = math.rsqrt %212 : vector<9x1xf32>
    %214 = vector.broadcast %213 : vector<9x1xf32> to vector<9x128xf32>
    %215 = arith.mulf %210, %214 : vector<9x128xf32>
    %216 = vector.broadcast %12 : vector<1x128xf32> to vector<9x128xf32>
    %217 = arith.mulf %215, %216 : vector<9x128xf32>
    %218 = vector.broadcast %13 : vector<1x128xf32> to vector<9x128xf32>
    %219 = arith.addf %217, %218 : vector<9x128xf32>
    %220 = arith.truncf %219 : vector<9x128xf32> to vector<9x128xbf16>
    %cst_87 = arith.constant dense<0.000000e+00> : vector<9x5xf32>
    %221 = tpu.matmul %220, %14, %cst_87 {dimension_numbers = #tpu.dot_dimension_numbers<[1], [0], [0], [1], [0, 0, 1, 1], [], []>} : vector<9x128xbf16>, vector<128x5xbf16>, vector<9x5xf32> -> vector<9x5xf32>
    %222 = vector.broadcast %15 : vector<1x5xf32> to vector<9x5xf32>
    %223 = arith.addf %221, %222 : vector<9x5xf32>
    %224 = vector.extract_strided_slice %223 {offsets = [0, 0], sizes = [1, 5], strides = [1, 1]} : vector<9x5xf32> to vector<1x5xf32>
    %c1_88 = arith.constant 1 : index
    %c0_89 = arith.constant 0 : index
    %c0_90 = arith.constant 0 : index
    %225 = vector.load %arg17[%c1_88, %c0_89, %c0_90] : memref<2x1x5xf32, #tpu.memory_space<vmem>>, vector<1x1x5xf32>
    %226 = vector.shape_cast %225 : vector<1x1x5xf32> to vector<1x5xf32>
    %227 = vector.shape_cast %224 : vector<1x5xf32> to vector<1x1x5xf32>
    tpu.vector_store %arg17[%c1_88, %c0_89, %c0_90], %227 {strides = array<i32>} : memref<2x1x5xf32, #tpu.memory_space<vmem>>, vector<1x1x5xf32>,
    return
  }
}

</mosaic_0001>

<llo_original>
// kernel: baseline_forward.5
$region0: #{baseline_forward.5}
  #allocation0 [shape = 'u32[]', space=smem, size = 0x4, offset = 0x4, fixed_abs, tag = 'smem constant byte address 0x4 - core index']
  #allocation1 [shape = 'u32[144,128]{1,0:T(1,128)}', space=vmem, size = 0x12000, scoped, tag = 'internal scratch']
  %s0 = inlined_call_operand.vmem [shape: bf16[1024,9], index: 0, kind: input, shape index: {}]
  %s1 = inlined_call_operand.hbm [shape: bf16[9,64], index: 1, kind: input, shape index: {}]
  %s2 = inlined_call_operand.hbm [shape: f32[1,64], index: 2, kind: input, shape index: {}]
  %s3 = inlined_call_operand.hbm [shape: bf16[9,64], index: 3, kind: input, shape index: {}]
  %s4 = inlined_call_operand.hbm [shape: f32[1,64], index: 4, kind: input, shape index: {}]
  %s5 = inlined_call_operand.vmem [shape: bf16[1024,64], index: 5, kind: output, shape index: {0}]
  %s6 = inlined_call_operand.vmem [shape: f32[1024,64], index: 6, kind: output, shape index: {1}]
  %7 = xla_tuple %s5, %s6
  %s8 = sld [smem:[#allocation0]]
  $region77: #{baseline_forward.5} parent=0
    _
  %s10 = ssub.s32 1, %s8
  %s11 = scalar_select 0, %s10, %s8
  $region1: #{baseline_forward.5} parent=0
    #allocation2 [shape = 'u8[4096]{0}', space=vmem, size = 0x1000, scoped, tag = 'input window, operand 1, single buffered']
    #allocation3 [shape = 's32[2]{0}', space=sflag, size = 0x8, scoped, tag = 'scoped memory for baseline_forward.5']
    #allocation4 [shape = 'u8[512]{0}', space=vmem, size = 0x400, scoped, tag = 'input window, operand 2, single buffered']
    #allocation5 [shape = 's32[1]{0}', space=sflag, size = 0x4, scoped, tag = 'scoped memory for baseline_forward.5']
    #allocation6 [shape = 'u8[4096]{0}', space=vmem, size = 0x1000, scoped, tag = 'input window, operand 3, single buffered']
    #allocation7 [shape = 'u8[512]{0}', space=vmem, size = 0x400, scoped, tag = 'input window, operand 4, single buffered']
    #allocation8 [shape = 's32[1]{0}', space=sflag, size = 0x4, scoped, tag = 'scoped memory for baseline_forward.5']
    %12 = vsyncpa [#allocation3], 0
    %13 = vsyncpa [#allocation5], 0
    %14 = vsyncpa [#allocation8], 0
    loop: start=0, step=1, limit=4
    $region2: #{baseline_forward.5} parent=1 // loop_pre_header
      _
    $region3: #{baseline_forward.5} parent=1 // loop_header
      %s16 = sphi 0, %s20
      %p17 = scmp.ge.s32.totalorder %s16, 4
      %s26 = sphi 0, %s28
      %s29 = sphi 0, %s26
      %s30 = sphi 0, %s29
      %s46 = sphi 0, %s30
      %s50 = sphi 0, %s50
      %s52 = sphi 0, %s50
      %s53 = sphi 0, %s52
      %s67 = sphi 0, %s53
      %s71 = sphi 0, %s71
      %s73 = sphi 0, %s71
      %s74 = sphi 0, %s73
      %s88 = sphi 0, %s74
      %s92 = sphi 0, %s92
      %s94 = sphi 0, %s92
      %s95 = sphi 0, %s94
      %s109 = sphi 0, %s95
      %s113 = sphi 0, %s113
      %s115 = sphi 0, %s113
      %s116 = sphi 0, %s115
      %s130 = sphi 0, %s116
      %s136 = sphi 0, %s138
      %s139 = sphi 0, %s136
      %s140 = sphi 0, %s139
      %s156 = sphi 0, %s140
      %s162 = sphi 0, %s164
      %s165 = sphi 0, %s162
      %s166 = sphi 0, %s165
      %s182 = sphi 0, %s166
    $region4: #{baseline_forward.5} parent=1 // loop_header_branch
      %19 = sbr.rel (%p17) target = $region8
    $region5: #{baseline_forward.5} parent=1 // loop_body
      %s21 = ssub.s32 %s16, 1
      %s22 = ssub.s32 %s16, 2
      %s23 = sadd.s32 %s16, 1
      %s24 = ssub.s32 %s16, %s23
      %p25 = scmp.eq.s32.totalorder %s24, 0
      %s27 = sadd.s32 %s26, 1
      %s28 = scalar_select %p25, %s26, %s27
      %p31 = pneg %p25
      %p32 = scmp.eq.s32.totalorder %s16, 1
      %p33 = por %p31, %p32
      %p34 = scmp.ne.s32.totalorder %s26, %s29
      %p35 = scmp.eq.s32.totalorder %s16, 0
      %p36 = por %p34, %p35
      %p37 = scmp.ne.s32.totalorder %s26, %s29
      %p38 = scmp.eq.s32.totalorder %s21, 1
      %p39 = por %p37, %p38
      %p40 = scmp.ne.s32.totalorder %s29, %s30
      %p41 = scmp.eq.s32.totalorder %s21, 0
      %p42 = por %p40, %p41
      %p43 = scmp.ne.s32.totalorder %s29, %s30
      %p44 = scmp.eq.s32.totalorder %s22, 1
      %p45 = por %p43, %p44
      %p47 = scmp.ne.s32.totalorder %s30, %s46
      %p48 = scmp.eq.s32.totalorder %s22, 0
      %p49 = por %p47, %p48
      %s51 = sadd.s32 %s50, 1
      %p54 = scmp.eq.s32.totalorder %s16, 1
      %p55 = scmp.ne.s32.totalorder %s50, %s52
      %p56 = scmp.eq.s32.totalorder %s16, 0
      %p57 = por %p55, %p56
      %p58 = scmp.ne.s32.totalorder %s50, %s52
      %p59 = scmp.eq.s32.totalorder %s21, 1
      %p60 = por %p58, %p59
      %p61 = scmp.ne.s32.totalorder %s52, %s53
      %p62 = scmp.eq.s32.totalorder %s21, 0
      %p63 = por %p61, %p62
      %p64 = scmp.ne.s32.totalorder %s52, %s53
      %p65 = scmp.eq.s32.totalorder %s22, 1
      %p66 = por %p64, %p65
      %p68 = scmp.ne.s32.totalorder %s53, %s67
      %p69 = scmp.eq.s32.totalorder %s22, 0
      %p70 = por %p68, %p69
      %s72 = sadd.s32 %s71, 1
      %p75 = scmp.eq.s32.totalorder %s16, 1
      %p76 = scmp.ne.s32.totalorder %s71, %s73
      %p77 = scmp.eq.s32.totalorder %s16, 0
      %p78 = por %p76, %p77
      %p79 = scmp.ne.s32.totalorder %s71, %s73
      %p80 = scmp.eq.s32.totalorder %s21, 1
      %p81 = por %p79, %p80
      %p82 = scmp.ne.s32.totalorder %s73, %s74
      %p83 = scmp.eq.s32.totalorder %s21, 0
      %p84 = por %p82, %p83
      %p85 = scmp.ne.s32.totalorder %s73, %s74
      %p86 = scmp.eq.s32.totalorder %s22, 1
      %p87 = por %p85, %p86
      %p89 = scmp.ne.s32.totalorder %s74, %s88
      %p90 = scmp.eq.s32.totalorder %s22, 0
      %p91 = por %p89, %p90
      %s93 = sadd.s32 %s92, 1
      %p96 = scmp.eq.s32.totalorder %s16, 1
      %p97 = scmp.ne.s32.totalorder %s92, %s94
      %p98 = scmp.eq.s32.totalorder %s16, 0
      %p99 = por %p97, %p98
      %p100 = scmp.ne.s32.totalorder %s92, %s94
      %p101 = scmp.eq.s32.totalorder %s21, 1
      %p102 = por %p100, %p101
      %p103 = scmp.ne.s32.totalorder %s94, %s95
      %p104 = scmp.eq.s32.totalorder %s21, 0
      %p105 = por %p103, %p104
      %p106 = scmp.ne.s32.totalorder %s94, %s95
      %p107 = scmp.eq.s32.totalorder %s22, 1
      %p108 = por %p106, %p107
      %p110 = scmp.ne.s32.totalorder %s95, %s109
      %p111 = scmp.eq.s32.totalorder %s22, 0
      %p112 = por %p110, %p111
      %s114 = sadd.s32 %s113, 1
      %p117 = scmp.eq.s32.totalorder %s16, 1
      %p118 = scmp.ne.s32.totalorder %s113, %s115
      %p119 = scmp.eq.s32.totalorder %s16, 0
      %p120 = por %p118, %p119
      %p121 = scmp.ne.s32.totalorder %s113, %s115
      %p122 = scmp.eq.s32.totalorder %s21, 1
      %p123 = por %p121, %p122
      %p124 = scmp.ne.s32.totalorder %s115, %s116
      %p125 = scmp.eq.s32.totalorder %s21, 0
      %p126 = por %p124, %p125
      %p127 = scmp.ne.s32.totalorder %s115, %s116
      %p128 = scmp.eq.s32.totalorder %s22, 1
      %p129 = por %p127, %p128
      %p131 = scmp.ne.s32.totalorder %s116, %s130
      %p132 = scmp.eq.s32.totalorder %s22, 0
      %p133 = por %p131, %p132
      %s134 = ssub.s32 %s16, %s23
      %p135 = scmp.eq.s32.totalorder %s134, 0
      %s137 = sadd.s32 %s136, 1
      %s138 = scalar_select %p135, %s136, %s137
      %p141 = pneg %p135
      %p142 = scmp.eq.s32.totalorder %s16, 1
      %p143 = por %p141, %p142
      %p144 = scmp.ne.s32.totalorder %s136, %s139
      %p145 = scmp.eq.s32.totalorder %s16, 0
      %p146 = por %p144, %p145
      %p147 = scmp.ne.s32.totalorder %s136, %s139
      %p148 = scmp.eq.s32.totalorder %s21, 1
      %p149 = por %p147, %p148
      %p150 = scmp.ne.s32.totalorder %s139, %s140
      %p151 = scmp.eq.s32.totalorder %s21, 0
      %p152 = por %p150, %p151
      %p153 = scmp.ne.s32.totalorder %s139, %s140
      %p154 = scmp.eq.s32.totalorder %s22, 1
      %p155 = por %p153, %p154
      %p157 = scmp.ne.s32.totalorder %s140, %s156
      %p158 = scmp.eq.s32.totalorder %s22, 0
      %p159 = por %p157, %p158
      %s160 = ssub.s32 %s16, %s23
      %p161 = scmp.eq.s32.totalorder %s160, 0
      %s163 = sadd.s32 %s162, 1
      %s164 = scalar_select %p161, %s162, %s163
      %p167 = pneg %p161
      %p168 = scmp.eq.s32.totalorder %s16, 1
      %p169 = por %p167, %p168
      %p170 = scmp.ne.s32.totalorder %s162, %s165
      %p171 = scmp.eq.s32.totalorder %s16, 0
      %p172 = por %p170, %p171
      %p173 = scmp.ne.s32.totalorder %s162, %s165
      %p174 = scmp.eq.s32.totalorder %s21, 1
      %p175 = por %p173, %p174
      %p176 = scmp.ne.s32.totalorder %s165, %s166
      %p177 = scmp.eq.s32.totalorder %s21, 0
      %p178 = por %p176, %p177
      %p179 = scmp.ne.s32.totalorder %s165, %s166
      %p180 = scmp.eq.s32.totalorder %s22, 1
      %p181 = por %p179, %p180
      %p183 = scmp.ne.s32.totalorder %s166, %s182
      %p184 = scmp.eq.s32.totalorder %s22, 0
      %p185 = por %p183, %p184
      %p186 = scmp.le.s32.totalorder 1, %s16
      %p187 = scmp.lt.s32.totalorder %s16, 3
      %p188 = pnand %p186, %p187
      %p189 = pneg %p188
      // Predicated region
      $region9: #{baseline_forward.5} parent=5 // pred_check
        _
      $region10: #{baseline_forward.5} parent=5 // pred_check_branch
        %191 = sbr.rel (%p188) target = $region12
      $region11: #{baseline_forward.5} parent=5 // pred_region
        %s192 = ssub.s32 %s16, 1
        // Predicated region
        $region13: #{baseline_forward.5} parent=11 // pred_check
          %p193 = pneg %p63
        $region14: #{baseline_forward.5} parent=11 // pred_check_branch
          %195 = sbr.rel (%p193) target = $region16
        $region15: #{baseline_forward.5} parent=11 // pred_region
          %s197 = ssub.s32 128, 128
          %198 = vsyncadd [#allocation3], %s197
          %s199 = sshll.u32 [#allocation2], 4
          %s200 = int_to_ptr.vmem [resolvable:$true] %s199
          %205 = dma.hbm_to_vmem [thread:$0]  %s1, 128, %s200, [#allocation3], 64, 64, 4
        $region16: #{baseline_forward.5} parent=11 // pred_fallthru
          _
        // Predicated region
        $region17: #{baseline_forward.5} parent=11 // pred_check
          %p206 = pneg %p84
        $region18: #{baseline_forward.5} parent=11 // pred_check_branch
          %208 = sbr.rel (%p206) target = $region20
        $region19: #{baseline_forward.5} parent=11 // pred_region
          %s210 = ssub.s32 16, 16
          %211 = vsyncadd [#allocation5], %s210
          %s213 = sshll.u32 [#allocation4], 4
          %s214 = int_to_ptr.vmem [resolvable:$true] %s213
          %216 = dma.hbm_to_vmem [thread:$0]  %s2, 16, %s214, [#allocation5]
        $region20: #{baseline_forward.5} parent=11 // pred_fallthru
          _
        // Predicated region
        $region21: #{baseline_forward.5} parent=11 // pred_check
          %p217 = pneg %p105
        $region22: #{baseline_forward.5} parent=11 // pred_check_branch
          %219 = sbr.rel (%p217) target = $region24
        $region23: #{baseline_forward.5} parent=11 // pred_region
          %s221 = ssub.s32 128, 128
          %222 = vsyncadd [#allocation5], %s221
          %s223 = sshll.u32 [#allocation6], 4
          %s224 = int_to_ptr.vmem [resolvable:$true] %s223
          %229 = dma.hbm_to_vmem [thread:$0]  %s3, 128, %s224, [#allocation5], 64, 64, 4
        $region24: #{baseline_forward.5} parent=11 // pred_fallthru
          _
        // Predicated region
        $region25: #{baseline_forward.5} parent=11 // pred_check
          %p230 = pneg %p126
        $region26: #{baseline_forward.5} parent=11 // pred_check_branch
          %232 = sbr.rel (%p230) target = $region28
        $region27: #{baseline_forward.5} parent=11 // pred_region
          %s234 = ssub.s32 16, 16
          %235 = vsyncadd [#allocation8], %s234
          %s237 = sshll.u32 [#allocation7], 4
          %s238 = int_to_ptr.vmem [resolvable:$true] %s237
          %240 = dma.hbm_to_vmem [thread:$0]  %s4, 16, %s238, [#allocation8]
        $region28: #{baseline_forward.5} parent=11 // pred_fallthru
          _
      $region12: #{baseline_forward.5} parent=5 // pred_fallthru
        _
      %p241 = scmp.lt.s32.totalorder %s16, 2
      // Predicated region
      $region29: #{baseline_forward.5} parent=5 // pred_check
        %p242 = pneg %p241
      $region30: #{baseline_forward.5} parent=5 // pred_check_branch
        %244 = sbr.rel (%p242) target = $region32
      $region31: #{baseline_forward.5} parent=5 // pred_region
        // Predicated region
        $region33: #{baseline_forward.5} parent=31 // pred_check
          %p245 = pneg %p36
        $region34: #{baseline_forward.5} parent=31 // pred_check_branch
          %247 = sbr.rel (%p245) target = $region36
        $region35: #{baseline_forward.5} parent=31 // pred_region
          %s248 = smul.u32 64, %s16
          %p249 = scmp.lt.s32.totalorder %s248, 127
          %s250 = scalar_select %p249, %s248, 127
          %s251 = smul.addr %s250, 4
          %s252 = scalar_lea.vmem %s0, %s251
          %s253 = smul.u32 64, %s16
        $region36: #{baseline_forward.5} parent=31 // pred_fallthru
          _
      $region32: #{baseline_forward.5} parent=5 // pred_fallthru
        _
      %p254 = scmp.le.s32.totalorder 1, %s16
      %p255 = scmp.lt.s32.totalorder %s16, 3
      %p256 = pnand %p254, %p255
      %p257 = pneg %p256
      // Predicated region
      $region37: #{baseline_forward.5} parent=5 // pred_check
        _
      $region38: #{baseline_forward.5} parent=5 // pred_check_branch
        %259 = sbr.rel (%p256) target = $region40
      $region39: #{baseline_forward.5} parent=5 // pred_region
        %s260 = ssub.s32 %s16, 1
        // Predicated region
        $region41: #{baseline_forward.5} parent=39 // pred_check
          %p261 = pneg %p63
        $region42: #{baseline_forward.5} parent=39 // pred_check_branch
          %263 = sbr.rel (%p261) target = $region44
        $region43: #{baseline_forward.5} parent=39 // pred_region
          %264 = dma.done [#allocation3], 128
        $region44: #{baseline_forward.5} parent=39 // pred_fallthru
          _
        // Predicated region
        $region45: #{baseline_forward.5} parent=39 // pred_check
          %p265 = pneg %p84
        $region46: #{baseline_forward.5} parent=39 // pred_check_branch
          %267 = sbr.rel (%p265) target = $region48
        $region47: #{baseline_forward.5} parent=39 // pred_region
          %268 = dma.done [#allocation5], 16
        $region48: #{baseline_forward.5} parent=39 // pred_fallthru
          _
        // Predicated region
        $region49: #{baseline_forward.5} parent=39 // pred_check
          %p269 = pneg %p105
        $region50: #{baseline_forward.5} parent=39 // pred_check_branch
          %271 = sbr.rel (%p269) target = $region52
        $region51: #{baseline_forward.5} parent=39 // pred_region
          %272 = dma.done [#allocation5], 128
        $region52: #{baseline_forward.5} parent=39 // pred_fallthru
          _
        // Predicated region
        $region53: #{baseline_forward.5} parent=39 // pred_check
          %p273 = pneg %p126
        $region54: #{baseline_forward.5} parent=39 // pred_check_branch
          %275 = sbr.rel (%p273) target = $region56
        $region55: #{baseline_forward.5} parent=39 // pred_region
          %276 = dma.done [#allocation8], 16
        $region56: #{baseline_forward.5} parent=39 // pred_fallthru
          _
        %s277 = smul.u32 64, %s21
        %p278 = scmp.lt.s32.totalorder %s277, 127
        %s279 = scalar_select %p278, %s277, 127
        %s280 = smul.addr %s279, 4
        %s281 = scalar_lea.vmem %s0, %s280
        %p282 = pneg %p42
        %p283 = pneg %p39
        %p284 = pneg %p63
        %p285 = pneg %p60
        %p286 = pneg %p84
        %p287 = pneg %p81
        %p288 = pneg %p105
        %p289 = pneg %p102
        %p290 = pneg %p126
        %p291 = pneg %p123
        %p292 = pneg %p152
        %p293 = pneg %p149
        %s294 = smul.u32 64, %s21
        %p295 = scmp.lt.s32.totalorder %s294, 127
        %s296 = scalar_select %p295, %s294, 127
        %s297 = smul.addr %s296, 4
        %s298 = scalar_lea.vmem %s5, %s297
        %p299 = pneg %p178
        %p300 = pneg %p175
        %s301 = smul.u32 64, %s21
        %p302 = scmp.lt.s32.totalorder %s301, 127
        %s303 = scalar_select %p302, %s301, 127
        %s304 = smul.addr %s303, 8
        %s305 = scalar_lea.vmem %s6, %s304
        %s306 = smul.u32 64, %s21
        %p307 = scmp.lt.s32.totalorder %s306, 127
        %s308 = scalar_select %p307, %s306, 127
        %s309 = smul.addr %s308, 4
        %s310 = scalar_lea.vmem %s0, %s309
        %s311 = smul.u32 64, %s21
        %s312 = smul.u32 64, %s21
        %p313 = scmp.lt.s32.totalorder %s312, 127
        %s314 = scalar_select %p313, %s312, 127
        %s315 = smul.addr %s314, 4
        %s316 = scalar_lea.vmem %s5, %s315
        %s317 = smul.u32 64, %s21
        %s318 = smul.u32 64, %s21
        %p319 = scmp.lt.s32.totalorder %s318, 127
        %s320 = scalar_select %p319, %s318, 127
        %s321 = smul.addr %s320, 8
        %s322 = scalar_lea.vmem %s6, %s321
        %s323 = smul.u32 64, %s21
        %v325 = vld [vmem:[%s310] sm:$0xf]
        %v326 = vld [vmem:[%s310 + $0x4] sm:$0xf]
        %v327 = vld [vmem:[%s310 + $0x8] sm:$0xf]
        %v328 = vld [vmem:[%s310 + $0xc] sm:$0xf]
        %v329 = vld [vmem:[%s310 + $0x10] sm:$0xf]
        %v330 = vld [vmem:[%s310 + $0x14] sm:$0xf]
        %v331 = vld [vmem:[%s310 + $0x18] sm:$0xf]
        %v332 = vld [vmem:[%s310 + $0x1c] sm:$0xf]
        %v333 = vld [vmem:[%s310 + $0x20] sm:$0xf]
        %v334 = vld [vmem:[%s310 + $0x24] sm:$0xf]
        %v335 = vld [vmem:[%s310 + $0x28] sm:$0xf]
        %v336 = vld [vmem:[%s310 + $0x2c] sm:$0xf]
        %v337 = vld [vmem:[%s310 + $0x30] sm:$0xf]
        %v338 = vld [vmem:[%s310 + $0x34] sm:$0xf]
        %v339 = vld [vmem:[%s310 + $0x38] sm:$0xf]
        %v340 = vld [vmem:[%s310 + $0x3c] sm:$0xf]
        %v341 = vld [vmem:[%s310 + $0x40] sm:$0xf]
        %v342 = vld [vmem:[%s310 + $0x44] sm:$0xf]
        %v343 = vld [vmem:[%s310 + $0x48] sm:$0xf]
        %v344 = vld [vmem:[%s310 + $0x4c] sm:$0xf]
        %v345 = vld [vmem:[%s310 + $0x50] sm:$0xf]
        %v346 = vld [vmem:[%s310 + $0x54] sm:$0xf]
        %v347 = vld [vmem:[%s310 + $0x58] sm:$0xf]
        %v348 = vld [vmem:[%s310 + $0x5c] sm:$0xf]
        %v349 = vld [vmem:[%s310 + $0x60] sm:$0xf]
        %v350 = vld [vmem:[%s310 + $0x64] sm:$0xf]
        %v351 = vld [vmem:[%s310 + $0x68] sm:$0xf]
        %v352 = vld [vmem:[%s310 + $0x6c] sm:$0xf]
        %v353 = vld [vmem:[%s310 + $0x70] sm:$0xf]
        %v354 = vld [vmem:[%s310 + $0x74] sm:$0xf]
        %v355 = vld [vmem:[%s310 + $0x78] sm:$0xf]
        %v356 = vld [vmem:[%s310 + $0x7c] sm:$0xf]
        %v357 = vld [vmem:[%s310 + $0x80] sm:$0xf]
        %v358 = vld [vmem:[%s310 + $0x84] sm:$0xf]
        %v359 = vld [vmem:[%s310 + $0x88] sm:$0xf]
        %v360 = vld [vmem:[%s310 + $0x8c] sm:$0xf]
        %v361 = vld [vmem:[%s310 + $0x90] sm:$0xf]
        %v362 = vld [vmem:[%s310 + $0x94] sm:$0xf]
        %v363 = vld [vmem:[%s310 + $0x98] sm:$0xf]
        %v364 = vld [vmem:[%s310 + $0x9c] sm:$0xf]
        %v365 = vld [vmem:[%s310 + $0xa0] sm:$0xf]
        %v366 = vld [vmem:[%s310 + $0xa4] sm:$0xf]
        %v367 = vld [vmem:[%s310 + $0xa8] sm:$0xf]
        %v368 = vld [vmem:[%s310 + $0xac] sm:$0xf]
        %v369 = vld [vmem:[%s310 + $0xb0] sm:$0xf]
        %v370 = vld [vmem:[%s310 + $0xb4] sm:$0xf]
        %v371 = vld [vmem:[%s310 + $0xb8] sm:$0xf]
        %v372 = vld [vmem:[%s310 + $0xbc] sm:$0xf]
        %v373 = vld [vmem:[%s310 + $0xc0] sm:$0xf]
        %v374 = vld [vmem:[%s310 + $0xc4] sm:$0xf]
        %v375 = vld [vmem:[%s310 + $0xc8] sm:$0xf]
        %v376 = vld [vmem:[%s310 + $0xcc] sm:$0xf]
        %v377 = vld [vmem:[%s310 + $0xd0] sm:$0xf]
        %v378 = vld [vmem:[%s310 + $0xd4] sm:$0xf]
        %v379 = vld [vmem:[%s310 + $0xd8] sm:$0xf]
        %v380 = vld [vmem:[%s310 + $0xdc] sm:$0xf]
        %v381 = vld [vmem:[%s310 + $0xe0] sm:$0xf]
        %v382 = vld [vmem:[%s310 + $0xe4] sm:$0xf]
        %v383 = vld [vmem:[%s310 + $0xe8] sm:$0xf]
        %v384 = vld [vmem:[%s310 + $0xec] sm:$0xf]
        %v385 = vld [vmem:[%s310 + $0xf0] sm:$0xf]
        %v386 = vld [vmem:[%s310 + $0xf4] sm:$0xf]
        %v387 = vld [vmem:[%s310 + $0xf8] sm:$0xf]
        %v388 = vld [vmem:[%s310 + $0xfc] sm:$0xf]
        %v389 = vld [vmem:[#allocation2] sm:$0xf]
        %v390 = vld [vmem:[#allocation2 + $0x4] sm:$0x1]
        %v391 = vld [vmem:[#allocation4] sm:$0x1]
        %v393 = vlaneseq
        %v394 = vshrl.u32 %v393, 7
        %v395 = vsub.s32 0, %v394
        %v396 = vrot.slane %v391, %v395
        %v462 = vunpack.c.l.b16 %v325
        %v463 = vunpack.c.l.b16 %v326
        %v464 = vunpack.c.l.b16 %v327
        %v465 = vunpack.c.l.b16 %v328
        %v466 = vunpack.c.l.b16 %v329
        %v467 = vunpack.c.l.b16 %v330
        %v468 = vunpack.c.l.b16 %v331
        %v469 = vunpack.c.l.b16 %v332
        %v470 = vunpack.c.l.b16 %v333
        %v471 = vunpack.c.l.b16 %v334
        %v472 = vunpack.c.l.b16 %v335
        %v473 = vunpack.c.l.b16 %v336
        %v474 = vunpack.c.l.b16 %v337
        %v475 = vunpack.c.l.b16 %v338
        %v476 = vunpack.c.l.b16 %v339
        %v477 = vunpack.c.l.b16 %v340
        %v478 = vunpack.c.l.b16 %v341
        %v479 = vunpack.c.l.b16 %v342
        %v480 = vunpack.c.l.b16 %v343
        %v481 = vunpack.c.l.b16 %v344
        %v482 = vunpack.c.l.b16 %v345
        %v483 = vunpack.c.l.b16 %v346
        %v484 = vunpack.c.l.b16 %v347
        %v485 = vunpack.c.l.b16 %v348
        %v486 = vunpack.c.l.b16 %v349
        %v487 = vunpack.c.l.b16 %v350
        %v488 = vunpack.c.l.b16 %v351
        %v489 = vunpack.c.l.b16 %v352
        %v490 = vunpack.c.l.b16 %v353
        %v491 = vunpack.c.l.b16 %v354
        %v492 = vunpack.c.l.b16 %v355
        %v493 = vunpack.c.l.b16 %v356
        %v494 = vunpack.c.l.b16 %v357
        %v495 = vunpack.c.l.b16 %v358
        %v496 = vunpack.c.l.b16 %v359
        %v497 = vunpack.c.l.b16 %v360
        %v498 = vunpack.c.l.b16 %v361
        %v499 = vunpack.c.l.b16 %v362
        %v500 = vunpack.c.l.b16 %v363
        %v501 = vunpack.c.l.b16 %v364
        %v502 = vunpack.c.l.b16 %v365
        %v503 = vunpack.c.l.b16 %v366
        %v504 = vunpack.c.l.b16 %v367
        %v505 = vunpack.c.l.b16 %v368
        %v506 = vunpack.c.l.b16 %v369
        %v507 = vunpack.c.l.b16 %v370
        %v508 = vunpack.c.l.b16 %v371
        %v509 = vunpack.c.l.b16 %v372
        %v510 = vunpack.c.l.b16 %v373
        %v511 = vunpack.c.l.b16 %v374
        %v512 = vunpack.c.l.b16 %v375
        %v513 = vunpack.c.l.b16 %v376
        %v514 = vunpack.c.l.b16 %v377
        %v515 = vunpack.c.l.b16 %v378
        %v516 = vunpack.c.l.b16 %v379
        %v517 = vunpack.c.l.b16 %v380
        %v518 = vunpack.c.l.b16 %v381
        %v519 = vunpack.c.l.b16 %v382
        %v520 = vunpack.c.l.b16 %v383
        %v521 = vunpack.c.l.b16 %v384
        %v522 = vunpack.c.l.b16 %v385
        %v523 = vunpack.c.l.b16 %v386
        %v524 = vunpack.c.l.b16 %v387
        %v525 = vunpack.c.l.b16 %v388
        %v526 = vpack.c.b16 %v463, %v462
        %v527 = vpack.c.b16 %v465, %v464
        %v528 = vpack.c.b16 %v467, %v466
        %v529 = vpack.c.b16 %v469, %v468
        %v530 = vpack.c.b16 %v471, %v470
        %v531 = vpack.c.b16 %v473, %v472
        %v532 = vpack.c.b16 %v475, %v474
        %v533 = vpack.c.b16 %v477, %v476
        %v534 = vpack.c.b16 %v479, %v478
        %v535 = vpack.c.b16 %v481, %v480
        %v536 = vpack.c.b16 %v483, %v482
        %v537 = vpack.c.b16 %v485, %v484
        %v538 = vpack.c.b16 %v487, %v486
        %v539 = vpack.c.b16 %v489, %v488
        %v540 = vpack.c.b16 %v491, %v490
        %v541 = vpack.c.b16 %v493, %v492
        %v542 = vpack.c.b16 %v495, %v494
        %v543 = vpack.c.b16 %v497, %v496
        %v544 = vpack.c.b16 %v499, %v498
        %v545 = vpack.c.b16 %v501, %v500
        %v546 = vpack.c.b16 %v503, %v502
        %v547 = vpack.c.b16 %v505, %v504
        %v548 = vpack.c.b16 %v507, %v506
        %v549 = vpack.c.b16 %v509, %v508
        %v550 = vpack.c.b16 %v511, %v510
        %v551 = vpack.c.b16 %v513, %v512
        %v552 = vpack.c.b16 %v515, %v514
        %v553 = vpack.c.b16 %v517, %v516
        %v554 = vpack.c.b16 %v519, %v518
        %v555 = vpack.c.b16 %v521, %v520
        %v556 = vpack.c.b16 %v523, %v522
        %v557 = vpack.c.b16 %v525, %v524
        %v560 = vunpack.c.l.b16 %v389
        %v561 = vunpack.c.l.b16 %v390
        %v562 = vpack.c.b16 %v561, %v560
        %vm563 = vcmask 72704
        %v565 = vsel %vm563, %v526, 0
        %v568 = vsel %vm563, %v527, 0
        %v571 = vsel %vm563, %v528, 0
        %v574 = vsel %vm563, %v529, 0
        %v577 = vsel %vm563, %v530, 0
        %v580 = vsel %vm563, %v531, 0
        %v583 = vsel %vm563, %v532, 0
        %v586 = vsel %vm563, %v533, 0
        %v589 = vsel %vm563, %v534, 0
        %v592 = vsel %vm563, %v535, 0
        %v595 = vsel %vm563, %v536, 0
        %v598 = vsel %vm563, %v537, 0
        %v601 = vsel %vm563, %v538, 0
        %v604 = vsel %vm563, %v539, 0
        %v607 = vsel %vm563, %v540, 0
        %v610 = vsel %vm563, %v541, 0
        %v613 = vsel %vm563, %v542, 0
        %v616 = vsel %vm563, %v543, 0
        %v619 = vsel %vm563, %v544, 0
        %v622 = vsel %vm563, %v545, 0
        %v625 = vsel %vm563, %v546, 0
        %v628 = vsel %vm563, %v547, 0
        %v631 = vsel %vm563, %v548, 0
        %v634 = vsel %vm563, %v549, 0
        %v637 = vsel %vm563, %v550, 0
        %v640 = vsel %vm563, %v551, 0
        %v643 = vsel %vm563, %v552, 0
        %v646 = vsel %vm563, %v553, 0
        %v649 = vsel %vm563, %v554, 0
        %v652 = vsel %vm563, %v555, 0
        %v655 = vsel %vm563, %v556, 0
        %v658 = vsel %vm563, %v557, 0
        %vm660 = vcmask 1043456
        %vm661 = vcmask 1044480
        %v662 = vsel %vm660, 4294967295, 65535
        %v663 = vsel %vm661, %v662, 0
        %v665 = vand.u32 %v562, %v663
        %667 = vmatprep.subr.bf16.mxu0 0
        %668 = vmatpush1.bf16.msra.mxu0 %v665
        %669 = vmatprep.subr.bf16.mxu0 0
        %670 = vmatpush1.bf16.msra.mxu0 0
        %671 = vmatprep.subr.bf16.mxu0 0
        %672 = vmatpush1.bf16.msra.mxu0 0
        %673 = vmatprep.subr.bf16.mxu0 0
        %674 = vmatpush1.bf16.msra.mxu0 0
        %675 = vmatprep.subr.bf16.mxu0 0
        %676 = vmatpush1.bf16.msra.mxu0 0
        %677 = vmatprep.subr.bf16.mxu0 0
        %678 = vmatpush1.bf16.msra.mxu0 0
        %679 = vmatprep.subr.bf16.mxu0 0
        %680 = vmatpush1.bf16.msra.mxu0 0
        %681 = vmatprep.subr.bf16.mxu0 0
        %682 = vmatpush1.bf16.msra.mxu0 0
        %683 = vmatprep.subr.bf16.mxu0 0
        %684 = vmatpush1.bf16.msra.mxu0 0
        %685 = vmatprep.subr.bf16.mxu0 0
        %686 = vmatpush1.bf16.msra.mxu0 0
        %687 = vmatprep.subr.bf16.mxu0 0
        %688 = vmatpush1.bf16.msra.mxu0 0
        %689 = vmatprep.subr.bf16.mxu0 0
        %690 = vmatpush1.bf16.msra.mxu0 0
        %691 = vmatprep.subr.bf16.mxu0 0
        %692 = vmatpush1.bf16.msra.mxu0 0
        %693 = vmatprep.subr.bf16.mxu0 0
        %694 = vmatpush1.bf16.msra.mxu0 0
        %695 = vmatprep.subr.bf16.mxu0 0
        %696 = vmatpush1.bf16.msra.mxu0 0
        %697 = vmatprep.subr.bf16.mxu0 0
        %698 = vmatpush1.bf16.msra.mxu0 0
        %699 = vmatprep.mubr.bf16.mxu0 0
        %700 = vmatmul.mubr.bf16.gmra.mrb[0].mxu0 %v565
        %v701 = vpop.f32.mrb[0].mxu0
        %v702 = vadd.f32 %v396, %v701
        %v703 = vpop.f32.mrb[0].mxu0
        %v704 = vpop.f32.mrb[0].mxu0
        %v705 = vadd.f32 %v396, %v704
        %v706 = vpop.f32.mrb[0].mxu0
        %707 = vmatprep.mubr.bf16.mxu0 0
        %708 = vmatmul.mubr.bf16.gmra.mrb[0].mxu0 %v568
        %v709 = vpop.f32.mrb[0].mxu0
        %v710 = vadd.f32 %v396, %v709
        %v711 = vpop.f32.mrb[0].mxu0
        %v712 = vpop.f32.mrb[0].mxu0
        %v713 = vadd.f32 %v396, %v712
        %v714 = vpop.f32.mrb[0].mxu0
        %715 = vmatprep.mubr.bf16.mxu0 0
        %716 = vmatmul.mubr.bf16.gmra.mrb[0].mxu0 %v571
        %v717 = vpop.f32.mrb[0].mxu0
        %v718 = vadd.f32 %v396, %v717
        %v719 = vpop.f32.mrb[0].mxu0
        %v720 = vpop.f32.mrb[0].mxu0
        %v721 = vadd.f32 %v396, %v720
        %v722 = vpop.f32.mrb[0].mxu0
        %723 = vmatprep.mubr.bf16.mxu0 0
        %724 = vmatmul.mubr.bf16.gmra.mrb[0].mxu0 %v574
        %v725 = vpop.f32.mrb[0].mxu0
        %v726 = vadd.f32 %v396, %v725
        %v727 = vpop.f32.mrb[0].mxu0
        %v728 = vpop.f32.mrb[0].mxu0
        %v729 = vadd.f32 %v396, %v728
        %v730 = vpop.f32.mrb[0].mxu0
        %731 = vmatprep.mubr.bf16.mxu0 0
        %732 = vmatmul.mubr.bf16.gmra.mrb[0].mxu0 %v577
        %v733 = vpop.f32.mrb[0].mxu0
        %v734 = vadd.f32 %v396, %v733
        %v735 = vpop.f32.mrb[0].mxu0
        %v736 = vpop.f32.mrb[0].mxu0
        %v737 = vadd.f32 %v396, %v736
        %v738 = vpop.f32.mrb[0].mxu0
        %739 = vmatprep.mubr.bf16.mxu0 0
        %740 = vmatmul.mubr.bf16.gmra.mrb[0].mxu0 %v580
        %v741 = vpop.f32.mrb[0].mxu0
        %v742 = vadd.f32 %v396, %v741
        %v743 = vpop.f32.mrb[0].mxu0
        %v744 = vpop.f32.mrb[0].mxu0
        %v745 = vadd.f32 %v396, %v744
        %v746 = vpop.f32.mrb[0].mxu0
        %747 = vmatprep.mubr.bf16.mxu0 0
        %748 = vmatmul.mubr.bf16.gmra.mrb[0].mxu0 %v583
        %v749 = vpop.f32.mrb[0].mxu0
        %v750 = vadd.f32 %v396, %v749
        %v751 = vpop.f32.mrb[0].mxu0
        %v752 = vpop.f32.mrb[0].mxu0
        %v753 = vadd.f32 %v396, %v752
        %v754 = vpop.f32.mrb[0].mxu0
        %755 = vmatprep.mubr.bf16.mxu0 0
        %756 = vmatmul.mubr.bf16.gmra.mrb[0].mxu0 %v586
        %v757 = vpop.f32.mrb[0].mxu0
        %v758 = vadd.f32 %v396, %v757
        %v759 = vpop.f32.mrb[0].mxu0
        %v760 = vpop.f32.mrb[0].mxu0
        %v761 = vadd.f32 %v396, %v760
        %v762 = vpop.f32.mrb[0].mxu0
        %763 = vmatprep.mubr.bf16.mxu0 0
        %764 = vmatmul.mubr.bf16.gmra.mrb[0].mxu0 %v589
        %v765 = vpop.f32.mrb[0].mxu0
        %v766 = vadd.f32 %v396, %v765
        %v767 = vpop.f32.mrb[0].mxu0
        %v768 = vpop.f32.mrb[0].mxu0
        %v769 = vadd.f32 %v396, %v768
        %v770 = vpop.f32.mrb[0].mxu0
        %771 = vmatprep.mubr.bf16.mxu0 0
        %772 = vmatmul.mubr.bf16.gmra.mrb[0].mxu0 %v592
        %v773 = vpop.f32.mrb[0].mxu0
        %v774 = vadd.f32 %v396, %v773
        %v775 = vpop.f32.mrb[0].mxu0
        %v776 = vpop.f32.mrb[0].mxu0
        %v777 = vadd.f32 %v396, %v776
        %v778 = vpop.f32.mrb[0].mxu0
        %779 = vmatprep.mubr.bf16.mxu0 0
        %780 = vmatmul.mubr.bf16.gmra.mrb[0].mxu0 %v595
        %v781 = vpop.f32.mrb[0].mxu0
        %v782 = vadd.f32 %v396, %v781
        %v783 = vpop.f32.mrb[0].mxu0
        %v784 = vpop.f32.mrb[0].mxu0
        %v785 = vadd.f32 %v396, %v784
        %v786 = vpop.f32.mrb[0].mxu0
        %787 = vmatprep.mubr.bf16.mxu0 0
        %788 = vmatmul.mubr.bf16.gmra.mrb[0].mxu0 %v598
        %v789 = vpop.f32.mrb[0].mxu0
        %v790 = vadd.f32 %v396, %v789
        %v791 = vpop.f32.mrb[0].mxu0
        %v792 = vpop.f32.mrb[0].mxu0
        %v793 = vadd.f32 %v396, %v792
        %v794 = vpop.f32.mrb[0].mxu0
        %795 = vmatprep.mubr.bf16.mxu0 0
        %796 = vmatmul.mubr.bf16.gmra.mrb[0].mxu0 %v601
        %v797 = vpop.f32.mrb[0].mxu0
        %v798 = vadd.f32 %v396, %v797
        %v799 = vpop.f32.mrb[0].mxu0
        %v800 = vpop.f32.mrb[0].mxu0
        %v801 = vadd.f32 %v396, %v800
        %v802 = vpop.f32.mrb[0].mxu0
        %803 = vmatprep.mubr.bf16.mxu0 0
        %804 = vmatmul.mubr.bf16.gmra.mrb[0].mxu0 %v604
        %v805 = vpop.f32.mrb[0].mxu0
        %v806 = vadd.f32 %v396, %v805
        %v807 = vpop.f32.mrb[0].mxu0
        %v808 = vpop.f32.mrb[0].mxu0
        %v809 = vadd.f32 %v396, %v808
        %v810 = vpop.f32.mrb[0].mxu0
        %811 = vmatprep.mubr.bf16.mxu0 0
        %812 = vmatmul.mubr.bf16.gmra.mrb[0].mxu0 %v607
        %v813 = vpop.f32.mrb[0].mxu0
        %v814 = vadd.f32 %v396, %v813
        %v815 = vpop.f32.mrb[0].mxu0
        %v816 = vpop.f32.mrb[0].mxu0
        %v817 = vadd.f32 %v396, %v816
        %v818 = vpop.f32.mrb[0].mxu0
        %819 = vmatprep.mubr.bf16.mxu0 0
        %820 = vmatmul.mubr.bf16.gmra.mrb[0].mxu0 %v610
        %v821 = vpop.f32.mrb[0].mxu0
        %v822 = vadd.f32 %v396, %v821
        %v823 = vpop.f32.mrb[0].mxu0
        %v824 = vpop.f32.mrb[0].mxu0
        %v825 = vadd.f32 %v396, %v824
        %v826 = vpop.f32.mrb[0].mxu0
        %827 = vmatprep.mubr.bf16.mxu0 0
        %828 = vmatmul.mubr.bf16.gmra.mrb[0].mxu0 %v613
        %v829 = vpop.f32.mrb[0].mxu0
        %v830 = vadd.f32 %v396, %v829
        %v831 = vpop.f32.mrb[0].mxu0
        %v832 = vpop.f32.mrb[0].mxu0
        %v833 = vadd.f32 %v396, %v832
        %v834 = vpop.f32.mrb[0].mxu0
        %835 = vmatprep.mubr.bf16.mxu0 0
        %836 = vmatmul.mubr.bf16.gmra.mrb[0].mxu0 %v616
        %v837 = vpop.f32.mrb[0].mxu0
        %v838 = vadd.f32 %v396, %v837
        %v839 = vpop.f32.mrb[0].mxu0
        %v840 = vpop.f32.mrb[0].mxu0
        %v841 = vadd.f32 %v396, %v840
        %v842 = vpop.f32.mrb[0].mxu0
        %843 = vmatprep.mubr.bf16.mxu0 0
        %844 = vmatmul.mubr.bf16.gmra.mrb[0].mxu0 %v619
        %v845 = vpop.f32.mrb[0].mxu0
        %v846 = vadd.f32 %v396, %v845
        %v847 = vpop.f32.mrb[0].mxu0
        %v848 = vpop.f32.mrb[0].mxu0
        %v849 = vadd.f32 %v396, %v848
        %v850 = vpop.f32.mrb[0].mxu0
        %851 = vmatprep.mubr.bf16.mxu0 0
        %852 = vmatmul.mubr.bf16.gmra.mrb[0].mxu0 %v622
        %v853 = vpop.f32.mrb[0].mxu0
        %v854 = vadd.f32 %v396, %v853
        %v855 = vpop.f32.mrb[0].mxu0
        %v856 = vpop.f32.mrb[0].mxu0
        %v857 = vadd.f32 %v396, %v856
        %v858 = vpop.f32.mrb[0].mxu0
        %859 = vmatprep.mubr.bf16.mxu0 0
        %860 = vmatmul.mubr.bf16.gmra.mrb[0].mxu0 %v625
        %v861 = vpop.f32.mrb[0].mxu0
        %v862 = vadd.f32 %v396, %v861
        %v863 = vpop.f32.mrb[0].mxu0
        %v864 = vpop.f32.mrb[0].mxu0
        %v865 = vadd.f32 %v396, %v864
        %v866 = vpop.f32.mrb[0].mxu0
        %867 = vmatprep.mubr.bf16.mxu0 0
        %868 = vmatmul.mubr.bf16.gmra.mrb[0].mxu0 %v628
        %v869 = vpop.f32.mrb[0].mxu0
        %v870 = vadd.f32 %v396, %v869
        %v871 = vpop.f32.mrb[0].mxu0
        %v872 = vpop.f32.mrb[0].mxu0
        %v873 = vadd.f32 %v396, %v872
        %v874 = vpop.f32.mrb[0].mxu0
        %875 = vmatprep.mubr.bf16.mxu0 0
        %876 = vmatmul.mubr.bf16.gmra.mrb[0].mxu0 %v631
        %v877 = vpop.f32.mrb[0].mxu0
        %v878 = vadd.f32 %v396, %v877
        %v879 = vpop.f32.mrb[0].mxu0
        %v880 = vpop.f32.mrb[0].mxu0
        %v881 = vadd.f32 %v396, %v880
        %v882 = vpop.f32.mrb[0].mxu0
        %883 = vmatprep.mubr.bf16.mxu0 0
        %884 = vmatmul.mubr.bf16.gmra.mrb[0].mxu0 %v634
        %v885 = vpop.f32.mrb[0].mxu0
        %v886 = vadd.f32 %v396, %v885
        %v887 = vpop.f32.mrb[0].mxu0
        %v888 = vpop.f32.mrb[0].mxu0
        %v889 = vadd.f32 %v396, %v888
        %v890 = vpop.f32.mrb[0].mxu0
        %891 = vmatprep.mubr.bf16.mxu0 0
        %892 = vmatmul.mubr.bf16.gmra.mrb[0].mxu0 %v637
        %v893 = vpop.f32.mrb[0].mxu0
        %v894 = vadd.f32 %v396, %v893
        %v895 = vpop.f32.mrb[0].mxu0
        %v896 = vpop.f32.mrb[0].mxu0
        %v897 = vadd.f32 %v396, %v896
        %v898 = vpop.f32.mrb[0].mxu0
        %899 = vmatprep.mubr.bf16.mxu0 0
        %900 = vmatmul.mubr.bf16.gmra.mrb[0].mxu0 %v640
        %v901 = vpop.f32.mrb[0].mxu0
        %v902 = vadd.f32 %v396, %v901
        %v903 = vpop.f32.mrb[0].mxu0
        %v904 = vpop.f32.mrb[0].mxu0
        %v905 = vadd.f32 %v396, %v904
        %v906 = vpop.f32.mrb[0].mxu0
        %907 = vmatprep.mubr.bf16.mxu0 0
        %908 = vmatmul.mubr.bf16.gmra.mrb[0].mxu0 %v643
        %v909 = vpop.f32.mrb[0].mxu0
        %v910 = vadd.f32 %v396, %v909
        %v911 = vpop.f32.mrb[0].mxu0
        %v912 = vpop.f32.mrb[0].mxu0
        %v913 = vadd.f32 %v396, %v912
        %v914 = vpop.f32.mrb[0].mxu0
        %915 = vmatprep.mubr.bf16.mxu0 0
        %916 = vmatmul.mubr.bf16.gmra.mrb[0].mxu0 %v646
        %v917 = vpop.f32.mrb[0].mxu0
        %v918 = vadd.f32 %v396, %v917
        %v919 = vpop.f32.mrb[0].mxu0
        %v920 = vpop.f32.mrb[0].mxu0
        %v921 = vadd.f32 %v396, %v920
        %v922 = vpop.f32.mrb[0].mxu0
        %923 = vmatprep.mubr.bf16.mxu0 0
        %924 = vmatmul.mubr.bf16.gmra.mrb[0].mxu0 %v649
        %v925 = vpop.f32.mrb[0].mxu0
        %v926 = vadd.f32 %v396, %v925
        %v927 = vpop.f32.mrb[0].mxu0
        %v928 = vpop.f32.mrb[0].mxu0
        %v929 = vadd.f32 %v396, %v928
        %v930 = vpop.f32.mrb[0].mxu0
        %931 = vmatprep.mubr.bf16.mxu0 0
        %932 = vmatmul.mubr.bf16.gmra.mrb[0].mxu0 %v652
        %v933 = vpop.f32.mrb[0].mxu0
        %v934 = vadd.f32 %v396, %v933
        %v935 = vpop.f32.mrb[0].mxu0
        %v936 = vpop.f32.mrb[0].mxu0
        %v937 = vadd.f32 %v396, %v936
        %v938 = vpop.f32.mrb[0].mxu0
        %939 = vmatprep.mubr.bf16.mxu0 0
        %940 = vmatmul.mubr.bf16.gmra.mrb[0].mxu0 %v655
        %v941 = vpop.f32.mrb[0].mxu0
        %v942 = vadd.f32 %v396, %v941
        %v943 = vpop.f32.mrb[0].mxu0
        %v944 = vpop.f32.mrb[0].mxu0
        %v945 = vadd.f32 %v396, %v944
        %v946 = vpop.f32.mrb[0].mxu0
        %947 = vmatprep.mubr.bf16.mxu0 0
        %948 = vmatmul.mubr.bf16.gmra.mrb[0].mxu0 %v658
        %v949 = vpop.f32.mrb[0].mxu0
        %v950 = vadd.f32 %v396, %v949
        %v951 = vpop.f32.mrb[0].mxu0
        %v952 = vpop.f32.mrb[0].mxu0
        %v953 = vadd.f32 %v396, %v952
        %v954 = vpop.f32.mrb[0].mxu0
        %955 = vdwg.mxu0
        %v956 = vld [vmem:[#allocation6] sm:$0xf]
        %v957 = vld [vmem:[#allocation6 + $0x4] sm:$0x1]
        %v958 = vld [vmem:[#allocation7] sm:$0x1]
        %v960 = vlaneseq
        %v961 = vshrl.u32 %v960, 7
        %v962 = vsub.s32 0, %v961
        %v963 = vrot.slane %v958, %v962
        %v967 = vunpack.c.l.b16 %v956
        %v968 = vunpack.c.l.b16 %v957
        %v969 = vpack.c.b16 %v968, %v967
        %v971 = vand.u32 %v969, %v663
        %973 = vmatprep.subr.bf16.mxu0 0
        %974 = vmatpush1.bf16.msra.mxu0 %v971
        %975 = vmatprep.subr.bf16.mxu0 0
        %976 = vmatpush1.bf16.msra.mxu0 0
        %977 = vmatprep.subr.bf16.mxu0 0
        %978 = vmatpush1.bf16.msra.mxu0 0
        %979 = vmatprep.subr.bf16.mxu0 0
        %980 = vmatpush1.bf16.msra.mxu0 0
        %981 = vmatprep.subr.bf16.mxu0 0
        %982 = vmatpush1.bf16.msra.mxu0 0
        %983 = vmatprep.subr.bf16.mxu0 0
        %984 = vmatpush1.bf16.msra.mxu0 0
        %985 = vmatprep.subr.bf16.mxu0 0
        %986 = vmatpush1.bf16.msra.mxu0 0
        %987 = vmatprep.subr.bf16.mxu0 0
        %988 = vmatpush1.bf16.msra.mxu0 0
        %989 = vmatprep.subr.bf16.mxu0 0
        %990 = vmatpush1.bf16.msra.mxu0 0
        %991 = vmatprep.subr.bf16.mxu0 0
        %992 = vmatpush1.bf16.msra.mxu0 0
        %993 = vmatprep.subr.bf16.mxu0 0
        %994 = vmatpush1.bf16.msra.mxu0 0
        %995 = vmatprep.subr.bf16.mxu0 0
        %996 = vmatpush1.bf16.msra.mxu0 0
        %997 = vmatprep.subr.bf16.mxu0 0
        %998 = vmatpush1.bf16.msra.mxu0 0
        %999 = vmatprep.subr.bf16.mxu0 0
        %1000 = vmatpush1.bf16.msra.mxu0 0
        %1001 = vmatprep.subr.bf16.mxu0 0
        %1002 = vmatpush1.bf16.msra.mxu0 0
        %1003 = vmatprep.subr.bf16.mxu0 0
        %1004 = vmatpush1.bf16.msra.mxu0 0
        %1005 = vmatprep.mubr.bf16.mxu0 0
        %1006 = vmatmul.mubr.bf16.gmra.mrb[0].mxu0 %v565
        %v1007 = vpop.f32.mrb[0].mxu0
        %v1008 = vadd.f32 %v963, %v1007
        %v1009 = vpop.f32.mrb[0].mxu0
        %v1010 = vpop.f32.mrb[0].mxu0
        %v1011 = vadd.f32 %v963, %v1010
        %v1012 = vpop.f32.mrb[0].mxu0
        %1013 = vmatprep.mubr.bf16.mxu0 0
        %1014 = vmatmul.mubr.bf16.gmra.mrb[0].mxu0 %v568
        %v1015 = vpop.f32.mrb[0].mxu0
        %v1016 = vadd.f32 %v963, %v1015
        %v1017 = vpop.f32.mrb[0].mxu0
        %v1018 = vpop.f32.mrb[0].mxu0
        %v1019 = vadd.f32 %v963, %v1018
        %v1020 = vpop.f32.mrb[0].mxu0
        %1021 = vmatprep.mubr.bf16.mxu0 0
        %1022 = vmatmul.mubr.bf16.gmra.mrb[0].mxu0 %v571
        %v1023 = vpop.f32.mrb[0].mxu0
        %v1024 = vadd.f32 %v963, %v1023
        %v1025 = vpop.f32.mrb[0].mxu0
        %v1026 = vpop.f32.mrb[0].mxu0
        %v1027 = vadd.f32 %v963, %v1026
        %v1028 = vpop.f32.mrb[0].mxu0
        %1029 = vmatprep.mubr.bf16.mxu0 0
        %1030 = vmatmul.mubr.bf16.gmra.mrb[0].mxu0 %v574
        %v1031 = vpop.f32.mrb[0].mxu0
        %v1032 = vadd.f32 %v963, %v1031
        %v1033 = vpop.f32.mrb[0].mxu0
        %v1034 = vpop.f32.mrb[0].mxu0
        %v1035 = vadd.f32 %v963, %v1034
        %v1036 = vpop.f32.mrb[0].mxu0
        %1037 = vmatprep.mubr.bf16.mxu0 0
        %1038 = vmatmul.mubr.bf16.gmra.mrb[0].mxu0 %v577
        %v1039 = vpop.f32.mrb[0].mxu0
        %v1040 = vadd.f32 %v963, %v1039
        %v1041 = vpop.f32.mrb[0].mxu0
        %v1042 = vpop.f32.mrb[0].mxu0
        %v1043 = vadd.f32 %v963, %v1042
        %v1044 = vpop.f32.mrb[0].mxu0
        %1045 = vmatprep.mubr.bf16.mxu0 0
        %1046 = vmatmul.mubr.bf16.gmra.mrb[0].mxu0 %v580
        %v1047 = vpop.f32.mrb[0].mxu0
        %v1048 = vadd.f32 %v963, %v1047
        %v1049 = vpop.f32.mrb[0].mxu0
        %v1050 = vpop.f32.mrb[0].mxu0
        %v1051 = vadd.f32 %v963, %v1050
        %v1052 = vpop.f32.mrb[0].mxu0
        %1053 = vmatprep.mubr.bf16.mxu0 0
        %1054 = vmatmul.mubr.bf16.gmra.mrb[0].mxu0 %v583
        %v1055 = vpop.f32.mrb[0].mxu0
        %v1056 = vadd.f32 %v963, %v1055
        %v1057 = vpop.f32.mrb[0].mxu0
        %v1058 = vpop.f32.mrb[0].mxu0
        %v1059 = vadd.f32 %v963, %v1058
        %v1060 = vpop.f32.mrb[0].mxu0
        %1061 = vmatprep.mubr.bf16.mxu0 0
        %1062 = vmatmul.mubr.bf16.gmra.mrb[0].mxu0 %v586
        %v1063 = vpop.f32.mrb[0].mxu0
        %v1064 = vadd.f32 %v963, %v1063
        %v1065 = vpop.f32.mrb[0].mxu0
        %v1066 = vpop.f32.mrb[0].mxu0
        %v1067 = vadd.f32 %v963, %v1066
        %v1068 = vpop.f32.mrb[0].mxu0
        %1069 = vmatprep.mubr.bf16.mxu0 0
        %1070 = vmatmul.mubr.bf16.gmra.mrb[0].mxu0 %v589
        %v1071 = vpop.f32.mrb[0].mxu0
        %v1072 = vadd.f32 %v963, %v1071
        %v1073 = vpop.f32.mrb[0].mxu0
        %v1074 = vpop.f32.mrb[0].mxu0
        %v1075 = vadd.f32 %v963, %v1074
        %v1076 = vpop.f32.mrb[0].mxu0
        %1077 = vmatprep.mubr.bf16.mxu0 0
        %1078 = vmatmul.mubr.bf16.gmra.mrb[0].mxu0 %v592
        %v1079 = vpop.f32.mrb[0].mxu0
        %v1080 = vadd.f32 %v963, %v1079
        %v1081 = vpop.f32.mrb[0].mxu0
        %v1082 = vpop.f32.mrb[0].mxu0
        %v1083 = vadd.f32 %v963, %v1082
        %v1084 = vpop.f32.mrb[0].mxu0
        %1085 = vmatprep.mubr.bf16.mxu0 0
        %1086 = vmatmul.mubr.bf16.gmra.mrb[0].mxu0 %v595
        %v1087 = vpop.f32.mrb[0].mxu0
        %v1088 = vadd.f32 %v963, %v1087
        %v1089 = vpop.f32.mrb[0].mxu0
        %v1090 = vpop.f32.mrb[0].mxu0
        %v1091 = vadd.f32 %v963, %v1090
        %v1092 = vpop.f32.mrb[0].mxu0
        %1093 = vmatprep.mubr.bf16.mxu0 0
        %1094 = vmatmul.mubr.bf16.gmra.mrb[0].mxu0 %v598
        %v1095 = vpop.f32.mrb[0].mxu0
        %v1096 = vadd.f32 %v963, %v1095
        %v1097 = vpop.f32.mrb[0].mxu0
        %v1098 = vpop.f32.mrb[0].mxu0
        %v1099 = vadd.f32 %v963, %v1098
        %v1100 = vpop.f32.mrb[0].mxu0
        %1101 = vmatprep.mubr.bf16.mxu0 0
        %1102 = vmatmul.mubr.bf16.gmra.mrb[0].mxu0 %v601
        %v1103 = vpop.f32.mrb[0].mxu0
        %v1104 = vadd.f32 %v963, %v1103
        %v1105 = vpop.f32.mrb[0].mxu0
        %v1106 = vpop.f32.mrb[0].mxu0
        %v1107 = vadd.f32 %v963, %v1106
        %v1108 = vpop.f32.mrb[0].mxu0
        %1109 = vmatprep.mubr.bf16.mxu0 0
        %1110 = vmatmul.mubr.bf16.gmra.mrb[0].mxu0 %v604
        %v1111 = vpop.f32.mrb[0].mxu0
        %v1112 = vadd.f32 %v963, %v1111
        %v1113 = vpop.f32.mrb[0].mxu0
        %v1114 = vpop.f32.mrb[0].mxu0
        %v1115 = vadd.f32 %v963, %v1114
        %v1116 = vpop.f32.mrb[0].mxu0
        %1117 = vmatprep.mubr.bf16.mxu0 0
        %1118 = vmatmul.mubr.bf16.gmra.mrb[0].mxu0 %v607
        %v1119 = vpop.f32.mrb[0].mxu0
        %v1120 = vadd.f32 %v963, %v1119
        %v1121 = vpop.f32.mrb[0].mxu0
        %v1122 = vpop.f32.mrb[0].mxu0
        %v1123 = vadd.f32 %v963, %v1122
        %v1124 = vpop.f32.mrb[0].mxu0
        %1125 = vmatprep.mubr.bf16.mxu0 0
        %1126 = vmatmul.mubr.bf16.gmra.mrb[0].mxu0 %v610
        %v1127 = vpop.f32.mrb[0].mxu0
        %v1128 = vadd.f32 %v963, %v1127
        %v1129 = vpop.f32.mrb[0].mxu0
        %v1130 = vpop.f32.mrb[0].mxu0
        %v1131 = vadd.f32 %v963, %v1130
        %v1132 = vpop.f32.mrb[0].mxu0
        %1133 = vmatprep.mubr.bf16.mxu0 0
        %1134 = vmatmul.mubr.bf16.gmra.mrb[0].mxu0 %v613
        %v1135 = vpop.f32.mrb[0].mxu0
        %v1136 = vadd.f32 %v963, %v1135
        %v1137 = vpop.f32.mrb[0].mxu0
        %v1138 = vpop.f32.mrb[0].mxu0
        %v1139 = vadd.f32 %v963, %v1138
        %v1140 = vpop.f32.mrb[0].mxu0
        %1141 = vmatprep.mubr.bf16.mxu0 0
        %1142 = vmatmul.mubr.bf16.gmra.mrb[0].mxu0 %v616
        %v1143 = vpop.f32.mrb[0].mxu0
        %v1144 = vadd.f32 %v963, %v1143
        %v1145 = vpop.f32.mrb[0].mxu0
        %v1146 = vpop.f32.mrb[0].mxu0
        %v1147 = vadd.f32 %v963, %v1146
        %v1148 = vpop.f32.mrb[0].mxu0
        %1149 = vmatprep.mubr.bf16.mxu0 0
        %1150 = vmatmul.mubr.bf16.gmra.mrb[0].mxu0 %v619
        %v1151 = vpop.f32.mrb[0].mxu0
        %v1152 = vadd.f32 %v963, %v1151
        %v1153 = vpop.f32.mrb[0].mxu0
        %v1154 = vpop.f32.mrb[0].mxu0
        %v1155 = vadd.f32 %v963, %v1154
        %v1156 = vpop.f32.mrb[0].mxu0
        %1157 = vmatprep.mubr.bf16.mxu0 0
        %1158 = vmatmul.mubr.bf16.gmra.mrb[0].mxu0 %v622
        %v1159 = vpop.f32.mrb[0].mxu0
        %v1160 = vadd.f32 %v963, %v1159
        %v1161 = vpop.f32.mrb[0].mxu0
        %v1162 = vpop.f32.mrb[0].mxu0
        %v1163 = vadd.f32 %v963, %v1162
        %v1164 = vpop.f32.mrb[0].mxu0
        %1165 = vmatprep.mubr.bf16.mxu0 0
        %1166 = vmatmul.mubr.bf16.gmra.mrb[0].mxu0 %v625
        %v1167 = vpop.f32.mrb[0].mxu0
        %v1168 = vadd.f32 %v963, %v1167
        %v1169 = vpop.f32.mrb[0].mxu0
        %v1170 = vpop.f32.mrb[0].mxu0
        %v1171 = vadd.f32 %v963, %v1170
        %v1172 = vpop.f32.mrb[0].mxu0
        %1173 = vmatprep.mubr.bf16.mxu0 0
        %1174 = vmatmul.mubr.bf16.gmra.mrb[0].mxu0 %v628
        %v1175 = vpop.f32.mrb[0].mxu0
        %v1176 = vadd.f32 %v963, %v1175
        %v1177 = vpop.f32.mrb[0].mxu0
        %v1178 = vpop.f32.mrb[0].mxu0
        %v1179 = vadd.f32 %v963, %v1178
        %v1180 = vpop.f32.mrb[0].mxu0
        %1181 = vmatprep.mubr.bf16.mxu0 0
        %1182 = vmatmul.mubr.bf16.gmra.mrb[0].mxu0 %v631
        %v1183 = vpop.f32.mrb[0].mxu0
        %v1184 = vadd.f32 %v963, %v1183
        %v1185 = vpop.f32.mrb[0].mxu0
        %v1186 = vpop.f32.mrb[0].mxu0
        %v1187 = vadd.f32 %v963, %v1186
        %v1188 = vpop.f32.mrb[0].mxu0
        %1189 = vmatprep.mubr.bf16.mxu0 0
        %1190 = vmatmul.mubr.bf16.gmra.mrb[0].mxu0 %v634
        %v1191 = vpop.f32.mrb[0].mxu0
        %v1192 = vadd.f32 %v963, %v1191
        %v1193 = vpop.f32.mrb[0].mxu0
        %v1194 = vpop.f32.mrb[0].mxu0
        %v1195 = vadd.f32 %v963, %v1194
        %v1196 = vpop.f32.mrb[0].mxu0
        %1197 = vmatprep.mubr.bf16.mxu0 0
        %1198 = vmatmul.mubr.bf16.gmra.mrb[0].mxu0 %v637
        %v1199 = vpop.f32.mrb[0].mxu0
        %v1200 = vadd.f32 %v963, %v1199
        %v1201 = vpop.f32.mrb[0].mxu0
        %v1202 = vpop.f32.mrb[0].mxu0
        %v1203 = vadd.f32 %v963, %v1202
        %v1204 = vpop.f32.mrb[0].mxu0
        %1205 = vmatprep.mubr.bf16.mxu0 0
        %1206 = vmatmul.mubr.bf16.gmra.mrb[0].mxu0 %v640
        %v1207 = vpop.f32.mrb[0].mxu0
        %v1208 = vadd.f32 %v963, %v1207
        %v1209 = vpop.f32.mrb[0].mxu0
        %v1210 = vpop.f32.mrb[0].mxu0
        %v1211 = vadd.f32 %v963, %v1210
        %v1212 = vpop.f32.mrb[0].mxu0
        %1213 = vmatprep.mubr.bf16.mxu0 0
        %1214 = vmatmul.mubr.bf16.gmra.mrb[0].mxu0 %v643
        %v1215 = vpop.f32.mrb[0].mxu0
        %v1216 = vadd.f32 %v963, %v1215
        %v1217 = vpop.f32.mrb[0].mxu0
        %v1218 = vpop.f32.mrb[0].mxu0
        %v1219 = vadd.f32 %v963, %v1218
        %v1220 = vpop.f32.mrb[0].mxu0
        %1221 = vmatprep.mubr.bf16.mxu0 0
        %1222 = vmatmul.mubr.bf16.gmra.mrb[0].mxu0 %v646
        %v1223 = vpop.f32.mrb[0].mxu0
        %v1224 = vadd.f32 %v963, %v1223
        %v1225 = vpop.f32.mrb[0].mxu0
        %v1226 = vpop.f32.mrb[0].mxu0
        %v1227 = vadd.f32 %v963, %v1226
        %v1228 = vpop.f32.mrb[0].mxu0
        %1229 = vmatprep.mubr.bf16.mxu0 0
        %1230 = vmatmul.mubr.bf16.gmra.mrb[0].mxu0 %v649
        %v1231 = vpop.f32.mrb[0].mxu0
        %v1232 = vadd.f32 %v963, %v1231
        %v1233 = vpop.f32.mrb[0].mxu0
        %v1234 = vpop.f32.mrb[0].mxu0
        %v1235 = vadd.f32 %v963, %v1234
        %v1236 = vpop.f32.mrb[0].mxu0
        %1237 = vmatprep.mubr.bf16.mxu0 0
        %1238 = vmatmul.mubr.bf16.gmra.mrb[0].mxu0 %v652
        %v1239 = vpop.f32.mrb[0].mxu0
        %v1240 = vadd.f32 %v963, %v1239
        %v1241 = vpop.f32.mrb[0].mxu0
        %v1242 = vpop.f32.mrb[0].mxu0
        %v1243 = vadd.f32 %v963, %v1242
        %v1244 = vpop.f32.mrb[0].mxu0
        %1245 = vmatprep.mubr.bf16.mxu0 0
        %1246 = vmatmul.mubr.bf16.gmra.mrb[0].mxu0 %v655
        %v1247 = vpop.f32.mrb[0].mxu0
        %v1248 = vadd.f32 %v963, %v1247
        %v1249 = vpop.f32.mrb[0].mxu0
        %v1250 = vpop.f32.mrb[0].mxu0
        %v1251 = vadd.f32 %v963, %v1250
        %v1252 = vpop.f32.mrb[0].mxu0
        %1253 = vmatprep.mubr.bf16.mxu0 0
        %1254 = vmatmul.mubr.bf16.gmra.mrb[0].mxu0 %v658
        %v1255 = vpop.f32.mrb[0].mxu0
        %v1256 = vadd.f32 %v963, %v1255
        %v1257 = vpop.f32.mrb[0].mxu0
        %v1258 = vpop.f32.mrb[0].mxu0
        %v1259 = vadd.f32 %v963, %v1258
        %v1260 = vpop.f32.mrb[0].mxu0
        %1261 = vdwg.mxu0
        %v1262 = vmax.f32 %v702, 0.0
        %v1263 = vmax.f32 %v705, 0.0
        %v1264 = vmax.f32 %v710, 0.0
        %v1265 = vmax.f32 %v713, 0.0
        %v1266 = vmax.f32 %v718, 0.0
        %v1267 = vmax.f32 %v721, 0.0
        %v1268 = vmax.f32 %v726, 0.0
        %v1269 = vmax.f32 %v729, 0.0
        %v1270 = vmax.f32 %v734, 0.0
        %v1271 = vmax.f32 %v737, 0.0
        %v1272 = vmax.f32 %v742, 0.0
        %v1273 = vmax.f32 %v745, 0.0
        %v1274 = vmax.f32 %v750, 0.0
        %v1275 = vmax.f32 %v753, 0.0
        %v1276 = vmax.f32 %v758, 0.0
        %v1277 = vmax.f32 %v761, 0.0
        %v1278 = vmax.f32 %v766, 0.0
        %v1279 = vmax.f32 %v769, 0.0
        %v1280 = vmax.f32 %v774, 0.0
        %v1281 = vmax.f32 %v777, 0.0
        %v1282 = vmax.f32 %v782, 0.0
        %v1283 = vmax.f32 %v785, 0.0
        %v1284 = vmax.f32 %v790, 0.0
        %v1285 = vmax.f32 %v793, 0.0
        %v1286 = vmax.f32 %v798, 0.0
        %v1287 = vmax.f32 %v801, 0.0
        %v1288 = vmax.f32 %v806, 0.0
        %v1289 = vmax.f32 %v809, 0.0
        %v1290 = vmax.f32 %v814, 0.0
        %v1291 = vmax.f32 %v817, 0.0
        %v1292 = vmax.f32 %v822, 0.0
        %v1293 = vmax.f32 %v825, 0.0
        %v1294 = vmax.f32 %v830, 0.0
        %v1295 = vmax.f32 %v833, 0.0
        %v1296 = vmax.f32 %v838, 0.0
        %v1297 = vmax.f32 %v841, 0.0
        %v1298 = vmax.f32 %v846, 0.0
        %v1299 = vmax.f32 %v849, 0.0
        %v1300 = vmax.f32 %v854, 0.0
        %v1301 = vmax.f32 %v857, 0.0
        %v1302 = vmax.f32 %v862, 0.0
        %v1303 = vmax.f32 %v865, 0.0
        %v1304 = vmax.f32 %v870, 0.0
        %v1305 = vmax.f32 %v873, 0.0
        %v1306 = vmax.f32 %v878, 0.0
        %v1307 = vmax.f32 %v881, 0.0
        %v1308 = vmax.f32 %v886, 0.0
        %v1309 = vmax.f32 %v889, 0.0
        %v1310 = vmax.f32 %v894, 0.0
        %v1311 = vmax.f32 %v897, 0.0
        %v1312 = vmax.f32 %v902, 0.0
        %v1313 = vmax.f32 %v905, 0.0
        %v1314 = vmax.f32 %v910, 0.0
        %v1315 = vmax.f32 %v913, 0.0
        %v1316 = vmax.f32 %v918, 0.0
        %v1317 = vmax.f32 %v921, 0.0
        %v1318 = vmax.f32 %v926, 0.0
        %v1319 = vmax.f32 %v929, 0.0
        %v1320 = vmax.f32 %v934, 0.0
        %v1321 = vmax.f32 %v937, 0.0
        %v1322 = vmax.f32 %v942, 0.0
        %v1323 = vmax.f32 %v945, 0.0
        %v1324 = vmax.f32 %v950, 0.0
        %v1325 = vmax.f32 %v953, 0.0
        %v1326 = vpack.c.bf16 %v1263, %v1262
        %v1327 = vpack.c.bf16 %v1265, %v1264
        %v1328 = vpack.c.bf16 %v1267, %v1266
        %v1329 = vpack.c.bf16 %v1269, %v1268
        %v1330 = vpack.c.bf16 %v1271, %v1270
        %v1331 = vpack.c.bf16 %v1273, %v1272
        %v1332 = vpack.c.bf16 %v1275, %v1274
        %v1333 = vpack.c.bf16 %v1277, %v1276
        %v1334 = vpack.c.bf16 %v1279, %v1278
        %v1335 = vpack.c.bf16 %v1281, %v1280
        %v1336 = vpack.c.bf16 %v1283, %v1282
        %v1337 = vpack.c.bf16 %v1285, %v1284
        %v1338 = vpack.c.bf16 %v1287, %v1286
        %v1339 = vpack.c.bf16 %v1289, %v1288
        %v1340 = vpack.c.bf16 %v1291, %v1290
        %v1341 = vpack.c.bf16 %v1293, %v1292
        %v1342 = vpack.c.bf16 %v1295, %v1294
        %v1343 = vpack.c.bf16 %v1297, %v1296
        %v1344 = vpack.c.bf16 %v1299, %v1298
        %v1345 = vpack.c.bf16 %v1301, %v1300
        %v1346 = vpack.c.bf16 %v1303, %v1302
        %v1347 = vpack.c.bf16 %v1305, %v1304
        %v1348 = vpack.c.bf16 %v1307, %v1306
        %v1349 = vpack.c.bf16 %v1309, %v1308
        %v1350 = vpack.c.bf16 %v1311, %v1310
        %v1351 = vpack.c.bf16 %v1313, %v1312
        %v1352 = vpack.c.bf16 %v1315, %v1314
        %v1353 = vpack.c.bf16 %v1317, %v1316
        %v1354 = vpack.c.bf16 %v1319, %v1318
        %v1355 = vpack.c.bf16 %v1321, %v1320
        %v1356 = vpack.c.bf16 %v1323, %v1322
        %v1357 = vpack.c.bf16 %v1325, %v1324
        %v1390 = vunpack.c.l.b16 %v1326
        %v1391 = vunpack.c.h.b16 %v1326
        %v1392 = vunpack.c.l.b16 %v1327
        %v1393 = vunpack.c.h.b16 %v1327
        %v1394 = vunpack.c.l.b16 %v1328
        %v1395 = vunpack.c.h.b16 %v1328
        %v1396 = vunpack.c.l.b16 %v1329
        %v1397 = vunpack.c.h.b16 %v1329
        %v1398 = vunpack.c.l.b16 %v1330
        %v1399 = vunpack.c.h.b16 %v1330
        %v1400 = vunpack.c.l.b16 %v1331
        %v1401 = vunpack.c.h.b16 %v1331
        %v1402 = vunpack.c.l.b16 %v1332
        %v1403 = vunpack.c.h.b16 %v1332
        %v1404 = vunpack.c.l.b16 %v1333
        %v1405 = vunpack.c.h.b16 %v1333
        %v1406 = vunpack.c.l.b16 %v1334
        %v1407 = vunpack.c.h.b16 %v1334
        %v1408 = vunpack.c.l.b16 %v1335
        %v1409 = vunpack.c.h.b16 %v1335
        %v1410 = vunpack.c.l.b16 %v1336
        %v1411 = vunpack.c.h.b16 %v1336
        %v1412 = vunpack.c.l.b16 %v1337
        %v1413 = vunpack.c.h.b16 %v1337
        %v1414 = vunpack.c.l.b16 %v1338
        %v1415 = vunpack.c.h.b16 %v1338
        %v1416 = vunpack.c.l.b16 %v1339
        %v1417 = vunpack.c.h.b16 %v1339
        %v1418 = vunpack.c.l.b16 %v1340
        %v1419 = vunpack.c.h.b16 %v1340
        %v1420 = vunpack.c.l.b16 %v1341
        %v1421 = vunpack.c.h.b16 %v1341
        %v1422 = vunpack.c.l.b16 %v1342
        %v1423 = vunpack.c.h.b16 %v1342
        %v1424 = vunpack.c.l.b16 %v1343
        %v1425 = vunpack.c.h.b16 %v1343
        %v1426 = vunpack.c.l.b16 %v1344
        %v1427 = vunpack.c.h.b16 %v1344
        %v1428 = vunpack.c.l.b16 %v1345
        %v1429 = vunpack.c.h.b16 %v1345
        %v1430 = vunpack.c.l.b16 %v1346
        %v1431 = vunpack.c.h.b16 %v1346
        %v1432 = vunpack.c.l.b16 %v1347
        %v1433 = vunpack.c.h.b16 %v1347
        %v1434 = vunpack.c.l.b16 %v1348
        %v1435 = vunpack.c.h.b16 %v1348
        %v1436 = vunpack.c.l.b16 %v1349
        %v1437 = vunpack.c.h.b16 %v1349
        %v1438 = vunpack.c.l.b16 %v1350
        %v1439 = vunpack.c.h.b16 %v1350
        %v1440 = vunpack.c.l.b16 %v1351
        %v1441 = vunpack.c.h.b16 %v1351
        %v1442 = vunpack.c.l.b16 %v1352
        %v1443 = vunpack.c.h.b16 %v1352
        %v1444 = vunpack.c.l.b16 %v1353
        %v1445 = vunpack.c.h.b16 %v1353
        %v1446 = vunpack.c.l.b16 %v1354
        %v1447 = vunpack.c.h.b16 %v1354
        %v1448 = vunpack.c.l.b16 %v1355
        %v1449 = vunpack.c.h.b16 %v1355
        %v1450 = vunpack.c.l.b16 %v1356
        %v1451 = vunpack.c.h.b16 %v1356
        %v1452 = vunpack.c.l.b16 %v1357
        %v1453 = vunpack.c.h.b16 %v1357
        %v1454 = vpack.c.b16 %v1390, %v1390
        %v1455 = vpack.c.b16 %v1391, %v1391
        %v1456 = vpack.c.b16 %v1392, %v1392
        %v1457 = vpack.c.b16 %v1393, %v1393
        %v1458 = vpack.c.b16 %v1394, %v1394
        %v1459 = vpack.c.b16 %v1395, %v1395
        %v1460 = vpack.c.b16 %v1396, %v1396
        %v1461 = vpack.c.b16 %v1397, %v1397
        %v1462 = vpack.c.b16 %v1398, %v1398
        %v1463 = vpack.c.b16 %v1399, %v1399
        %v1464 = vpack.c.b16 %v1400, %v1400
        %v1465 = vpack.c.b16 %v1401, %v1401
        %v1466 = vpack.c.b16 %v1402, %v1402
        %v1467 = vpack.c.b16 %v1403, %v1403
        %v1468 = vpack.c.b16 %v1404, %v1404
        %v1469 = vpack.c.b16 %v1405, %v1405
        %v1470 = vpack.c.b16 %v1406, %v1406
        %v1471 = vpack.c.b16 %v1407, %v1407
        %v1472 = vpack.c.b16 %v1408, %v1408
        %v1473 = vpack.c.b16 %v1409, %v1409
        %v1474 = vpack.c.b16 %v1410, %v1410
        %v1475 = vpack.c.b16 %v1411, %v1411
        %v1476 = vpack.c.b16 %v1412, %v1412
        %v1477 = vpack.c.b16 %v1413, %v1413
        %v1478 = vpack.c.b16 %v1414, %v1414
        %v1479 = vpack.c.b16 %v1415, %v1415
        %v1480 = vpack.c.b16 %v1416, %v1416
        %v1481 = vpack.c.b16 %v1417, %v1417
        %v1482 = vpack.c.b16 %v1418, %v1418
        %v1483 = vpack.c.b16 %v1419, %v1419
        %v1484 = vpack.c.b16 %v1420, %v1420
        %v1485 = vpack.c.b16 %v1421, %v1421
        %v1486 = vpack.c.b16 %v1422, %v1422
        %v1487 = vpack.c.b16 %v1423, %v1423
        %v1488 = vpack.c.b16 %v1424, %v1424
        %v1489 = vpack.c.b16 %v1425, %v1425
        %v1490 = vpack.c.b16 %v1426, %v1426
        %v1491 = vpack.c.b16 %v1427, %v1427
        %v1492 = vpack.c.b16 %v1428, %v1428
        %v1493 = vpack.c.b16 %v1429, %v1429
        %v1494 = vpack.c.b16 %v1430, %v1430
        %v1495 = vpack.c.b16 %v1431, %v1431
        %v1496 = vpack.c.b16 %v1432, %v1432
        %v1497 = vpack.c.b16 %v1433, %v1433
        %v1498 = vpack.c.b16 %v1434, %v1434
        %v1499 = vpack.c.b16 %v1435, %v1435
        %v1500 = vpack.c.b16 %v1436, %v1436
        %v1501 = vpack.c.b16 %v1437, %v1437
        %v1502 = vpack.c.b16 %v1438, %v1438
        %v1503 = vpack.c.b16 %v1439, %v1439
        %v1504 = vpack.c.b16 %v1440, %v1440
        %v1505 = vpack.c.b16 %v1441, %v1441
        %v1506 = vpack.c.b16 %v1442, %v1442
        %v1507 = vpack.c.b16 %v1443, %v1443
        %v1508 = vpack.c.b16 %v1444, %v1444
        %v1509 = vpack.c.b16 %v1445, %v1445
        %v1510 = vpack.c.b16 %v1446, %v1446
        %v1511 = vpack.c.b16 %v1447, %v1447
        %v1512 = vpack.c.b16 %v1448, %v1448
        %v1513 = vpack.c.b16 %v1449, %v1449
        %v1514 = vpack.c.b16 %v1450, %v1450
        %v1515 = vpack.c.b16 %v1451, %v1451
        %v1516 = vpack.c.b16 %v1452, %v1452
        %v1517 = vpack.c.b16 %v1453, %v1453
        %vm1582 = vcmask 519168
        %1583 = vst.msk [vmem:[%s316] sm:$0xf] %vm1582, %v1454
        %1584 = vst.msk [vmem:[%s316 + $0x4] sm:$0xf] %vm1582, %v1455
        %1585 = vst.msk [vmem:[%s316 + $0x8] sm:$0xf] %vm1582, %v1456
        %1586 = vst.msk [vmem:[%s316 + $0xc] sm:$0xf] %vm1582, %v1457
        %1587 = vst.msk [vmem:[%s316 + $0x10] sm:$0xf] %vm1582, %v1458
        %1588 = vst.msk [vmem:[%s316 + $0x14] sm:$0xf] %vm1582, %v1459
        %1589 = vst.msk [vmem:[%s316 + $0x18] sm:$0xf] %vm1582, %v1460
        %1590 = vst.msk [vmem:[%s316 + $0x1c] sm:$0xf] %vm1582, %v1461
        %1591 = vst.msk [vmem:[%s316 + $0x20] sm:$0xf] %vm1582, %v1462
        %1592 = vst.msk [vmem:[%s316 + $0x24] sm:$0xf] %vm1582, %v1463
        %1593 = vst.msk [vmem:[%s316 + $0x28] sm:$0xf] %vm1582, %v1464
        %1594 = vst.msk [vmem:[%s316 + $0x2c] sm:$0xf] %vm1582, %v1465
        %1595 = vst.msk [vmem:[%s316 + $0x30] sm:$0xf] %vm1582, %v1466
        %1596 = vst.msk [vmem:[%s316 + $0x34] sm:$0xf] %vm1582, %v1467
        %1597 = vst.msk [vmem:[%s316 + $0x38] sm:$0xf] %vm1582, %v1468
        %1598 = vst.msk [vmem:[%s316 + $0x3c] sm:$0xf] %vm1582, %v1469
        %1599 = vst.msk [vmem:[%s316 + $0x40] sm:$0xf] %vm1582, %v1470
        %1600 = vst.msk [vmem:[%s316 + $0x44] sm:$0xf] %vm1582, %v1471
        %1601 = vst.msk [vmem:[%s316 + $0x48] sm:$0xf] %vm1582, %v1472
        %1602 = vst.msk [vmem:[%s316 + $0x4c] sm:$0xf] %vm1582, %v1473
        %1603 = vst.msk [vmem:[%s316 + $0x50] sm:$0xf] %vm1582, %v1474
        %1604 = vst.msk [vmem:[%s316 + $0x54] sm:$0xf] %vm1582, %v1475
        %1605 = vst.msk [vmem:[%s316 + $0x58] sm:$0xf] %vm1582, %v1476
        %1606 = vst.msk [vmem:[%s316 + $0x5c] sm:$0xf] %vm1582, %v1477
        %1607 = vst.msk [vmem:[%s316 + $0x60] sm:$0xf] %vm1582, %v1478
        %1608 = vst.msk [vmem:[%s316 + $0x64] sm:$0xf] %vm1582, %v1479
        %1609 = vst.msk [vmem:[%s316 + $0x68] sm:$0xf] %vm1582, %v1480
        %1610 = vst.msk [vmem:[%s316 + $0x6c] sm:$0xf] %vm1582, %v1481
        %1611 = vst.msk [vmem:[%s316 + $0x70] sm:$0xf] %vm1582, %v1482
        %1612 = vst.msk [vmem:[%s316 + $0x74] sm:$0xf] %vm1582, %v1483
        %1613 = vst.msk [vmem:[%s316 + $0x78] sm:$0xf] %vm1582, %v1484
        %1614 = vst.msk [vmem:[%s316 + $0x7c] sm:$0xf] %vm1582, %v1485
        %1615 = vst.msk [vmem:[%s316 + $0x80] sm:$0xf] %vm1582, %v1486
        %1616 = vst.msk [vmem:[%s316 + $0x84] sm:$0xf] %vm1582, %v1487
        %1617 = vst.msk [vmem:[%s316 + $0x88] sm:$0xf] %vm1582, %v1488
        %1618 = vst.msk [vmem:[%s316 + $0x8c] sm:$0xf] %vm1582, %v1489
        %1619 = vst.msk [vmem:[%s316 + $0x90] sm:$0xf] %vm1582, %v1490
        %1620 = vst.msk [vmem:[%s316 + $0x94] sm:$0xf] %vm1582, %v1491
        %1621 = vst.msk [vmem:[%s316 + $0x98] sm:$0xf] %vm1582, %v1492
        %1622 = vst.msk [vmem:[%s316 + $0x9c] sm:$0xf] %vm1582, %v1493
        %1623 = vst.msk [vmem:[%s316 + $0xa0] sm:$0xf] %vm1582, %v1494
        %1624 = vst.msk [vmem:[%s316 + $0xa4] sm:$0xf] %vm1582, %v1495
        %1625 = vst.msk [vmem:[%s316 + $0xa8] sm:$0xf] %vm1582, %v1496
        %1626 = vst.msk [vmem:[%s316 + $0xac] sm:$0xf] %vm1582, %v1497
        %1627 = vst.msk [vmem:[%s316 + $0xb0] sm:$0xf] %vm1582, %v1498
        %1628 = vst.msk [vmem:[%s316 + $0xb4] sm:$0xf] %vm1582, %v1499
        %1629 = vst.msk [vmem:[%s316 + $0xb8] sm:$0xf] %vm1582, %v1500
        %1630 = vst.msk [vmem:[%s316 + $0xbc] sm:$0xf] %vm1582, %v1501
        %1631 = vst.msk [vmem:[%s316 + $0xc0] sm:$0xf] %vm1582, %v1502
        %1632 = vst.msk [vmem:[%s316 + $0xc4] sm:$0xf] %vm1582, %v1503
        %1633 = vst.msk [vmem:[%s316 + $0xc8] sm:$0xf] %vm1582, %v1504
        %1634 = vst.msk [vmem:[%s316 + $0xcc] sm:$0xf] %vm1582, %v1505
        %1635 = vst.msk [vmem:[%s316 + $0xd0] sm:$0xf] %vm1582, %v1506
        %1636 = vst.msk [vmem:[%s316 + $0xd4] sm:$0xf] %vm1582, %v1507
        %1637 = vst.msk [vmem:[%s316 + $0xd8] sm:$0xf] %vm1582, %v1508
        %1638 = vst.msk [vmem:[%s316 + $0xdc] sm:$0xf] %vm1582, %v1509
        %1639 = vst.msk [vmem:[%s316 + $0xe0] sm:$0xf] %vm1582, %v1510
        %1640 = vst.msk [vmem:[%s316 + $0xe4] sm:$0xf] %vm1582, %v1511
        %1641 = vst.msk [vmem:[%s316 + $0xe8] sm:$0xf] %vm1582, %v1512
        %1642 = vst.msk [vmem:[%s316 + $0xec] sm:$0xf] %vm1582, %v1513
        %1643 = vst.msk [vmem:[%s316 + $0xf0] sm:$0xf] %vm1582, %v1514
        %1644 = vst.msk [vmem:[%s316 + $0xf4] sm:$0xf] %vm1582, %v1515
        %1645 = vst.msk [vmem:[%s316 + $0xf8] sm:$0xf] %vm1582, %v1516
        %1646 = vst.msk [vmem:[%s316 + $0xfc] sm:$0xf] %vm1582, %v1517
        %vm1647 = vcmask 523264
        %1648 = vst.msk [vmem:[%s322] sm:$0xff] %vm1647, %v1008
        %1649 = vst.msk [vmem:[%s322 + $0x8] sm:$0xff] %vm1647, %v1011
        %1650 = vst.msk [vmem:[%s322 + $0x10] sm:$0xff] %vm1647, %v1016
        %1651 = vst.msk [vmem:[%s322 + $0x18] sm:$0xff] %vm1647, %v1019
        %1652 = vst.msk [vmem:[%s322 + $0x20] sm:$0xff] %vm1647, %v1024
        %1653 = vst.msk [vmem:[%s322 + $0x28] sm:$0xff] %vm1647, %v1027
        %1654 = vst.msk [vmem:[%s322 + $0x30] sm:$0xff] %vm1647, %v1032
        %1655 = vst.msk [vmem:[%s322 + $0x38] sm:$0xff] %vm1647, %v1035
        %1656 = vst.msk [vmem:[%s322 + $0x40] sm:$0xff] %vm1647, %v1040
        %1657 = vst.msk [vmem:[%s322 + $0x48] sm:$0xff] %vm1647, %v1043
        %1658 = vst.msk [vmem:[%s322 + $0x50] sm:$0xff] %vm1647, %v1048
        %1659 = vst.msk [vmem:[%s322 + $0x58] sm:$0xff] %vm1647, %v1051
        %1660 = vst.msk [vmem:[%s322 + $0x60] sm:$0xff] %vm1647, %v1056
        %1661 = vst.msk [vmem:[%s322 + $0x68] sm:$0xff] %vm1647, %v1059
        %1662 = vst.msk [vmem:[%s322 + $0x70] sm:$0xff] %vm1647, %v1064
        %1663 = vst.msk [vmem:[%s322 + $0x78] sm:$0xff] %vm1647, %v1067
        %1664 = vst.msk [vmem:[%s322 + $0x80] sm:$0xff] %vm1647, %v1072
        %1665 = vst.msk [vmem:[%s322 + $0x88] sm:$0xff] %vm1647, %v1075
        %1666 = vst.msk [vmem:[%s322 + $0x90] sm:$0xff] %vm1647, %v1080
        %1667 = vst.msk [vmem:[%s322 + $0x98] sm:$0xff] %vm1647, %v1083
        %1668 = vst.msk [vmem:[%s322 + $0xa0] sm:$0xff] %vm1647, %v1088
        %1669 = vst.msk [vmem:[%s322 + $0xa8] sm:$0xff] %vm1647, %v1091
        %1670 = vst.msk [vmem:[%s322 + $0xb0] sm:$0xff] %vm1647, %v1096
        %1671 = vst.msk [vmem:[%s322 + $0xb8] sm:$0xff] %vm1647, %v1099
        %1672 = vst.msk [vmem:[%s322 + $0xc0] sm:$0xff] %vm1647, %v1104
        %1673 = vst.msk [vmem:[%s322 + $0xc8] sm:$0xff] %vm1647, %v1107
        %1674 = vst.msk [vmem:[%s322 + $0xd0] sm:$0xff] %vm1647, %v1112
        %1675 = vst.msk [vmem:[%s322 + $0xd8] sm:$0xff] %vm1647, %v1115
        %1676 = vst.msk [vmem:[%s322 + $0xe0] sm:$0xff] %vm1647, %v1120
        %1677 = vst.msk [vmem:[%s322 + $0xe8] sm:$0xff] %vm1647, %v1123
        %1678 = vst.msk [vmem:[%s322 + $0xf0] sm:$0xff] %vm1647, %v1128
        %1679 = vst.msk [vmem:[%s322 + $0xf8] sm:$0xff] %vm1647, %v1131
        %1680 = vst.msk [vmem:[%s322 + $0x100] sm:$0xff] %vm1647, %v1136
        %1681 = vst.msk [vmem:[%s322 + $0x108] sm:$0xff] %vm1647, %v1139
        %1682 = vst.msk [vmem:[%s322 + $0x110] sm:$0xff] %vm1647, %v1144
        %1683 = vst.msk [vmem:[%s322 + $0x118] sm:$0xff] %vm1647, %v1147
        %1684 = vst.msk [vmem:[%s322 + $0x120] sm:$0xff] %vm1647, %v1152
        %1685 = vst.msk [vmem:[%s322 + $0x128] sm:$0xff] %vm1647, %v1155
        %1686 = vst.msk [vmem:[%s322 + $0x130] sm:$0xff] %vm1647, %v1160
        %1687 = vst.msk [vmem:[%s322 + $0x138] sm:$0xff] %vm1647, %v1163
        %1688 = vst.msk [vmem:[%s322 + $0x140] sm:$0xff] %vm1647, %v1168
        %1689 = vst.msk [vmem:[%s322 + $0x148] sm:$0xff] %vm1647, %v1171
        %1690 = vst.msk [vmem:[%s322 + $0x150] sm:$0xff] %vm1647, %v1176
        %1691 = vst.msk [vmem:[%s322 + $0x158] sm:$0xff] %vm1647, %v1179
        %1692 = vst.msk [vmem:[%s322 + $0x160] sm:$0xff] %vm1647, %v1184
        %1693 = vst.msk [vmem:[%s322 + $0x168] sm:$0xff] %vm1647, %v1187
        %1694 = vst.msk [vmem:[%s322 + $0x170] sm:$0xff] %vm1647, %v1192
        %1695 = vst.msk [vmem:[%s322 + $0x178] sm:$0xff] %vm1647, %v1195
        %1696 = vst.msk [vmem:[%s322 + $0x180] sm:$0xff] %vm1647, %v1200
        %1697 = vst.msk [vmem:[%s322 + $0x188] sm:$0xff] %vm1647, %v1203
        %1698 = vst.msk [vmem:[%s322 + $0x190] sm:$0xff] %vm1647, %v1208
        %1699 = vst.msk [vmem:[%s322 + $0x198] sm:$0xff] %vm1647, %v1211
        %1700 = vst.msk [vmem:[%s322 + $0x1a0] sm:$0xff] %vm1647, %v1216
        %1701 = vst.msk [vmem:[%s322 + $0x1a8] sm:$0xff] %vm1647, %v1219
        %1702 = vst.msk [vmem:[%s322 + $0x1b0] sm:$0xff] %vm1647, %v1224
        %1703 = vst.msk [vmem:[%s322 + $0x1b8] sm:$0xff] %vm1647, %v1227
        %1704 = vst.msk [vmem:[%s322 + $0x1c0] sm:$0xff] %vm1647, %v1232
        %1705 = vst.msk [vmem:[%s322 + $0x1c8] sm:$0xff] %vm1647, %v1235
        %1706 = vst.msk [vmem:[%s322 + $0x1d0] sm:$0xff] %vm1647, %v1240
        %1707 = vst.msk [vmem:[%s322 + $0x1d8] sm:$0xff] %vm1647, %v1243
        %1708 = vst.msk [vmem:[%s322 + $0x1e0] sm:$0xff] %vm1647, %v1248
        %1709 = vst.msk [vmem:[%s322 + $0x1e8] sm:$0xff] %vm1647, %v1251
        %1710 = vst.msk [vmem:[%s322 + $0x1f0] sm:$0xff] %vm1647, %v1256
        %1711 = vst.msk [vmem:[%s322 + $0x1f8] sm:$0xff] %vm1647, %v1259
        %s1712 = smul.u32 64, %s21
        %p1713 = scmp.lt.s32.totalorder %s1712, 127
        %s1714 = scalar_select %p1713, %s1712, 127
        %s1715 = smul.addr %s1714, 4
        %s1716 = scalar_lea.vmem %s5, %s1715
        %s1717 = smul.u32 64, %s21
        %p1718 = scmp.lt.s32.totalorder %s1717, 127
        %s1719 = scalar_select %p1718, %s1717, 127
        %s1720 = smul.addr %s1719, 8
        %s1721 = scalar_lea.vmem %s6, %s1720
        // Predicated region
        $region57: #{baseline_forward.5} parent=39 // pred_check
          %p1722 = pneg %p149
        $region58: #{baseline_forward.5} parent=39 // pred_check_branch
          %1724 = sbr.rel (%p1722) target = $region60
        $region59: #{baseline_forward.5} parent=39 // pred_region
          %s1725 = smul.u32 64, %s21
        $region60: #{baseline_forward.5} parent=39 // pred_fallthru
          _
        // Predicated region
        $region61: #{baseline_forward.5} parent=39 // pred_check
          %p1726 = pneg %p175
        $region62: #{baseline_forward.5} parent=39 // pred_check_branch
          %1728 = sbr.rel (%p1726) target = $region64
        $region63: #{baseline_forward.5} parent=39 // pred_region
          %s1729 = smul.u32 64, %s21
        $region64: #{baseline_forward.5} parent=39 // pred_fallthru
          _
      $region40: #{baseline_forward.5} parent=5 // pred_fallthru
        _
      %p1730 = scmp.le.s32.totalorder 2, %s16
      // Predicated region
      $region65: #{baseline_forward.5} parent=5 // pred_check
        %p1731 = pneg %p1730
      $region66: #{baseline_forward.5} parent=5 // pred_check_branch
        %1733 = sbr.rel (%p1731) target = $region68
      $region67: #{baseline_forward.5} parent=5 // pred_region
        %s1734 = ssub.s32 %s16, 2
        // Predicated region
        $region69: #{baseline_forward.5} parent=67 // pred_check
          %p1735 = pneg %p155
        $region70: #{baseline_forward.5} parent=67 // pred_check_branch
          %1737 = sbr.rel (%p1735) target = $region72
        $region71: #{baseline_forward.5} parent=67 // pred_region
          %s1738 = smul.u32 64, %s22
          %p1739 = scmp.lt.s32.totalorder %s1738, 127
          %s1740 = scalar_select %p1739, %s1738, 127
          %s1741 = smul.addr %s1740, 4
          %s1742 = scalar_lea.vmem %s5, %s1741
        $region72: #{baseline_forward.5} parent=67 // pred_fallthru
          _
        // Predicated region
        $region73: #{baseline_forward.5} parent=67 // pred_check
          %p1743 = pneg %p181
        $region74: #{baseline_forward.5} parent=67 // pred_check_branch
          %1745 = sbr.rel (%p1743) target = $region76
        $region75: #{baseline_forward.5} parent=67 // pred_region
          %s1746 = smul.u32 64, %s22
          %p1747 = scmp.lt.s32.totalorder %s1746, 127
          %s1748 = scalar_select %p1747, %s1746, 127
          %s1749 = smul.addr %s1748, 8
          %s1750 = scalar_lea.vmem %s6, %s1749
        $region76: #{baseline_forward.5} parent=67 // pred_fallthru
          _
      $region68: #{baseline_forward.5} parent=5 // pred_fallthru
        _
    $region6: #{baseline_forward.5} parent=1 // loop_footer
      %s20 = sadd.s32 1, %s16
    $region7: #{baseline_forward.5} parent=1 // loop_footer_branch
      %15 = sbr.rel target = $region3
    $region8: #{baseline_forward.5} parent=1 // loop_exit
      _
    %1751 = vsyncpa [#allocation3], 1
    %s1752 = scalar_lea.sflag [#allocation3], 1
    %1753 = vsyncpa %s1752, 1
    %1754 = vsyncpa [#allocation5], 1
    %1755 = vsyncpa [#allocation8], 1

// kernel: baseline_forward.6
$region0: #{baseline_forward.6}
  #allocation0 [shape = 'u32[]', space=smem, size = 0x4, offset = 0x4, fixed_abs, tag = 'smem constant byte address 0x4 - core index']
  #allocation1 [shape = 'u32[144,128]{1,0:T(1,128)}', space=vmem, size = 0x12000, scoped, tag = 'internal scratch']
  %s0 = inlined_call_operand.vmem [shape: bf16[1024,576], index: 0, kind: input, shape index: {}]
  %s1 = inlined_call_operand.vmem [shape: bf16[576,64], index: 1, kind: input, shape index: {}]
  %s2 = inlined_call_operand.vmem [shape: f32[1,64], index: 2, kind: input, shape index: {}]
  %s3 = inlined_call_operand.vmem [shape: f32[1024,64], index: 3, kind: input, shape index: {}]
  %s4 = inlined_call_operand.vmem [shape: bf16[1024,64], index: 4, kind: output, shape index: {}]
  %s5 = sld [smem:[#allocation0]]
  $region49: #{baseline_forward.6} parent=0
    _
  %s7 = ssub.s32 1, %s5
  %s8 = scalar_select 0, %s7, %s5
  loop: start=0, step=1, limit=4
  $region2: #{baseline_forward.6} parent=0 // loop_pre_header
    _
  $region3: #{baseline_forward.6} parent=0 // loop_header
    %s10 = sphi 0, %s14
    %p11 = scmp.ge.s32.totalorder %s10, 4
    %s20 = sphi 0, %s22
    %s23 = sphi 0, %s20
    %s24 = sphi 0, %s23
    %s40 = sphi 0, %s24
    %s44 = sphi 0, %s44
    %s46 = sphi 0, %s44
    %s47 = sphi 0, %s46
    %s61 = sphi 0, %s47
    %s65 = sphi 0, %s65
    %s67 = sphi 0, %s65
    %s68 = sphi 0, %s67
    %s82 = sphi 0, %s68
    %s88 = sphi 0, %s90
    %s91 = sphi 0, %s88
    %s92 = sphi 0, %s91
    %s108 = sphi 0, %s92
    %s114 = sphi 0, %s116
    %s117 = sphi 0, %s114
    %s118 = sphi 0, %s117
    %s134 = sphi 0, %s118
  $region4: #{baseline_forward.6} parent=0 // loop_header_branch
    %13 = sbr.rel (%p11) target = $region8
  $region5: #{baseline_forward.6} parent=0 // loop_body
    %s15 = ssub.s32 %s10, 1
    %s16 = ssub.s32 %s10, 2
    %s17 = sadd.s32 %s10, 1
    %s18 = ssub.s32 %s10, %s17
    %p19 = scmp.eq.s32.totalorder %s18, 0
    %s21 = sadd.s32 %s20, 1
    %s22 = scalar_select %p19, %s20, %s21
    %p25 = pneg %p19
    %p26 = scmp.eq.s32.totalorder %s10, 1
    %p27 = por %p25, %p26
    %p28 = scmp.ne.s32.totalorder %s20, %s23
    %p29 = scmp.eq.s32.totalorder %s10, 0
    %p30 = por %p28, %p29
    %p31 = scmp.ne.s32.totalorder %s20, %s23
    %p32 = scmp.eq.s32.totalorder %s15, 1
    %p33 = por %p31, %p32
    %p34 = scmp.ne.s32.totalorder %s23, %s24
    %p35 = scmp.eq.s32.totalorder %s15, 0
    %p36 = por %p34, %p35
    %p37 = scmp.ne.s32.totalorder %s23, %s24
    %p38 = scmp.eq.s32.totalorder %s16, 1
    %p39 = por %p37, %p38
    %p41 = scmp.ne.s32.totalorder %s24, %s40
    %p42 = scmp.eq.s32.totalorder %s16, 0
    %p43 = por %p41, %p42
    %s45 = sadd.s32 %s44, 1
    %p48 = scmp.eq.s32.totalorder %s10, 1
    %p49 = scmp.ne.s32.totalorder %s44, %s46
    %p50 = scmp.eq.s32.totalorder %s10, 0
    %p51 = por %p49, %p50
    %p52 = scmp.ne.s32.totalorder %s44, %s46
    %p53 = scmp.eq.s32.totalorder %s15, 1
    %p54 = por %p52, %p53
    %p55 = scmp.ne.s32.totalorder %s46, %s47
    %p56 = scmp.eq.s32.totalorder %s15, 0
    %p57 = por %p55, %p56
    %p58 = scmp.ne.s32.totalorder %s46, %s47
    %p59 = scmp.eq.s32.totalorder %s16, 1
    %p60 = por %p58, %p59
    %p62 = scmp.ne.s32.totalorder %s47, %s61
    %p63 = scmp.eq.s32.totalorder %s16, 0
    %p64 = por %p62, %p63
    %s66 = sadd.s32 %s65, 1
    %p69 = scmp.eq.s32.totalorder %s10, 1
    %p70 = scmp.ne.s32.totalorder %s65, %s67
    %p71 = scmp.eq.s32.totalorder %s10, 0
    %p72 = por %p70, %p71
    %p73 = scmp.ne.s32.totalorder %s65, %s67
    %p74 = scmp.eq.s32.totalorder %s15, 1
    %p75 = por %p73, %p74
    %p76 = scmp.ne.s32.totalorder %s67, %s68
    %p77 = scmp.eq.s32.totalorder %s15, 0
    %p78 = por %p76, %p77
    %p79 = scmp.ne.s32.totalorder %s67, %s68
    %p80 = scmp.eq.s32.totalorder %s16, 1
    %p81 = por %p79, %p80
    %p83 = scmp.ne.s32.totalorder %s68, %s82
    %p84 = scmp.eq.s32.totalorder %s16, 0
    %p85 = por %p83, %p84
    %s86 = ssub.s32 %s10, %s17
    %p87 = scmp.eq.s32.totalorder %s86, 0
    %s89 = sadd.s32 %s88, 1
    %s90 = scalar_select %p87, %s88, %s89
    %p93 = pneg %p87
    %p94 = scmp.eq.s32.totalorder %s10, 1
    %p95 = por %p93, %p94
    %p96 = scmp.ne.s32.totalorder %s88, %s91
    %p97 = scmp.eq.s32.totalorder %s10, 0
    %p98 = por %p96, %p97
    %p99 = scmp.ne.s32.totalorder %s88, %s91
    %p100 = scmp.eq.s32.totalorder %s15, 1
    %p101 = por %p99, %p100
    %p102 = scmp.ne.s32.totalorder %s91, %s92
    %p103 = scmp.eq.s32.totalorder %s15, 0
    %p104 = por %p102, %p103
    %p105 = scmp.ne.s32.totalorder %s91, %s92
    %p106 = scmp.eq.s32.totalorder %s16, 1
    %p107 = por %p105, %p106
    %p109 = scmp.ne.s32.totalorder %s92, %s108
    %p110 = scmp.eq.s32.totalorder %s16, 0
    %p111 = por %p109, %p110
    %s112 = ssub.s32 %s10, %s17
    %p113 = scmp.eq.s32.totalorder %s112, 0
    %s115 = sadd.s32 %s114, 1
    %s116 = scalar_select %p113, %s114, %s115
    %p119 = pneg %p113
    %p120 = scmp.eq.s32.totalorder %s10, 1
    %p121 = por %p119, %p120
    %p122 = scmp.ne.s32.totalorder %s114, %s117
    %p123 = scmp.eq.s32.totalorder %s10, 0
    %p124 = por %p122, %p123
    %p125 = scmp.ne.s32.totalorder %s114, %s117
    %p126 = scmp.eq.s32.totalorder %s15, 1
    %p127 = por %p125, %p126
    %p128 = scmp.ne.s32.totalorder %s117, %s118
    %p129 = scmp.eq.s32.totalorder %s15, 0
    %p130 = por %p128, %p129
    %p131 = scmp.ne.s32.totalorder %s117, %s118
    %p132 = scmp.eq.s32.totalorder %s16, 1
    %p133 = por %p131, %p132
    %p135 = scmp.ne.s32.totalorder %s118, %s134
    %p136 = scmp.eq.s32.totalorder %s16, 0
    %p137 = por %p135, %p136
    %p138 = scmp.le.s32.totalorder 1, %s10
    %p139 = scmp.lt.s32.totalorder %s10, 3
    %p140 = pnand %p138, %p139
    %p141 = pneg %p140
    // Predicated region
    $region9: #{baseline_forward.6} parent=5 // pred_check
      _
    $region10: #{baseline_forward.6} parent=5 // pred_check_branch
      %143 = sbr.rel (%p140) target = $region12
    $region11: #{baseline_forward.6} parent=5 // pred_region
      %s144 = ssub.s32 %s10, 1
      // Predicated region
      $region13: #{baseline_forward.6} parent=11 // pred_check
        %p145 = pneg %p57
      $region14: #{baseline_forward.6} parent=11 // pred_check_branch
        %147 = sbr.rel (%p145) target = $region16
      $region15: #{baseline_forward.6} parent=11 // pred_region
        _
      $region16: #{baseline_forward.6} parent=11 // pred_fallthru
        _
      // Predicated region
      $region17: #{baseline_forward.6} parent=11 // pred_check
        %p148 = pneg %p78
      $region18: #{baseline_forward.6} parent=11 // pred_check_branch
        %150 = sbr.rel (%p148) target = $region20
      $region19: #{baseline_forward.6} parent=11 // pred_region
        _
      $region20: #{baseline_forward.6} parent=11 // pred_fallthru
        _
    $region12: #{baseline_forward.6} parent=5 // pred_fallthru
      _
    %p151 = scmp.lt.s32.totalorder %s10, 2
    // Predicated region
    $region21: #{baseline_forward.6} parent=5 // pred_check
      %p152 = pneg %p151
    $region22: #{baseline_forward.6} parent=5 // pred_check_branch
      %154 = sbr.rel (%p152) target = $region24
    $region23: #{baseline_forward.6} parent=5 // pred_region
      // Predicated region
      $region25: #{baseline_forward.6} parent=23 // pred_check
        %p155 = pneg %p30
      $region26: #{baseline_forward.6} parent=23 // pred_check_branch
        %157 = sbr.rel (%p155) target = $region28
      $region27: #{baseline_forward.6} parent=23 // pred_region
        %s158 = smul.u32 64, %s10
        %p159 = scmp.lt.s32.totalorder %s158, 127
        %s160 = scalar_select %p159, %s158, 127
        %s161 = smul.addr %s160, 5
        %s162 = smul.addr %s161, 4
        %s163 = scalar_lea.vmem %s0, %s162
        %s164 = smul.u32 64, %s10
      $region28: #{baseline_forward.6} parent=23 // pred_fallthru
        _
      // Predicated region
      $region29: #{baseline_forward.6} parent=23 // pred_check
        %p165 = pneg %p98
      $region30: #{baseline_forward.6} parent=23 // pred_check_branch
        %167 = sbr.rel (%p165) target = $region32
      $region31: #{baseline_forward.6} parent=23 // pred_region
        %s168 = smul.u32 64, %s10
        %p169 = scmp.lt.s32.totalorder %s168, 127
        %s170 = scalar_select %p169, %s168, 127
        %s171 = smul.addr %s170, 8
        %s172 = scalar_lea.vmem %s3, %s171
        %s173 = smul.u32 64, %s10
      $region32: #{baseline_forward.6} parent=23 // pred_fallthru
        _
    $region24: #{baseline_forward.6} parent=5 // pred_fallthru
      _
    %p174 = scmp.le.s32.totalorder 1, %s10
    %p175 = scmp.lt.s32.totalorder %s10, 3
    %p176 = pnand %p174, %p175
    %p177 = pneg %p176
    // Predicated region
    $region33: #{baseline_forward.6} parent=5 // pred_check
      _
    $region34: #{baseline_forward.6} parent=5 // pred_check_branch
      %179 = sbr.rel (%p176) target = $region36
    $region35: #{baseline_forward.6} parent=5 // pred_region
      %s180 = ssub.s32 %s10, 1
      %s181 = smul.u32 64, %s15
      %p182 = scmp.lt.s32.totalorder %s181, 127
      %s183 = scalar_select %p182, %s181, 127
      %s184 = smul.addr %s183, 5
      %s185 = smul.addr %s184, 4
      %s186 = scalar_lea.vmem %s0, %s185
      %p187 = pneg %p36
      %p188 = pneg %p33
      %p189 = pneg %p57
      %p190 = pneg %p54
      %p191 = pneg %p78
      %p192 = pneg %p75
      %s193 = smul.u32 64, %s15
      %p194 = scmp.lt.s32.totalorder %s193, 127
      %s195 = scalar_select %p194, %s193, 127
      %s196 = smul.addr %s195, 8
      %s197 = scalar_lea.vmem %s3, %s196
      %p198 = pneg %p104
      %p199 = pneg %p101
      %p200 = pneg %p130
      %p201 = pneg %p127
      %s202 = smul.u32 64, %s15
      %p203 = scmp.lt.s32.totalorder %s202, 127
      %s204 = scalar_select %p203, %s202, 127
      %s205 = smul.addr %s204, 4
      %s206 = scalar_lea.vmem %s4, %s205
      %s207 = smul.u32 64, %s15
      %p208 = scmp.lt.s32.totalorder %s207, 127
      %s209 = scalar_select %p208, %s207, 127
      %s210 = smul.addr %s209, 5
      %s211 = smul.addr %s210, 4
      %s212 = scalar_lea.vmem %s0, %s211
      %s213 = smul.u32 64, %s15
      %s214 = smul.u32 64, %s15
      %p215 = scmp.lt.s32.totalorder %s214, 127
      %s216 = scalar_select %p215, %s214, 127
      %s217 = smul.addr %s216, 8
      %s218 = scalar_lea.vmem %s3, %s217
      %s219 = smul.u32 64, %s15
      %s220 = smul.u32 64, %s15
      %p221 = scmp.lt.s32.totalorder %s220, 127
      %s222 = scalar_select %p221, %s220, 127
      %s223 = smul.addr %s222, 4
      %s224 = scalar_lea.vmem %s4, %s223
      %s225 = smul.u32 64, %s15
      %v227 = vld [vmem:[%s212] sm:$0xff]
      %v228 = vld [vmem:[%s212 + $0x8] sm:$0xff]
      %v229 = vld [vmem:[%s212 + $0x10] sm:$0xf]
      %v230 = vld [vmem:[%s212 + $0x14] sm:$0xff]
      %v231 = vld [vmem:[%s212 + $0x1c] sm:$0xff]
      %v232 = vld [vmem:[%s212 + $0x24] sm:$0xf]
      %v233 = vld [vmem:[%s212 + $0x28] sm:$0xff]
      %v234 = vld [vmem:[%s212 + $0x30] sm:$0xff]
      %v235 = vld [vmem:[%s212 + $0x38] sm:$0xf]
      %v236 = vld [vmem:[%s212 + $0x3c] sm:$0xff]
      %v237 = vld [vmem:[%s212 + $0x44] sm:$0xff]
      %v238 = vld [vmem:[%s212 + $0x4c] sm:$0xf]
      %v239 = vld [vmem:[%s212 + $0x50] sm:$0xff]
      %v240 = vld [vmem:[%s212 + $0x58] sm:$0xff]
      %v241 = vld [vmem:[%s212 + $0x60] sm:$0xf]
      %v242 = vld [vmem:[%s212 + $0x64] sm:$0xff]
      %v243 = vld [vmem:[%s212 + $0x6c] sm:$0xff]
      %v244 = vld [vmem:[%s212 + $0x74] sm:$0xf]
      %v245 = vld [vmem:[%s212 + $0x78] sm:$0xff]
      %v246 = vld [vmem:[%s212 + $0x80] sm:$0xff]
      %v247 = vld [vmem:[%s212 + $0x88] sm:$0xf]
      %v248 = vld [vmem:[%s212 + $0x8c] sm:$0xff]
      %v249 = vld [vmem:[%s212 + $0x94] sm:$0xff]
      %v250 = vld [vmem:[%s212 + $0x9c] sm:$0xf]
      %v251 = vld [vmem:[%s212 + $0xa0] sm:$0xff]
      %v252 = vld [vmem:[%s212 + $0xa8] sm:$0xff]
      %v253 = vld [vmem:[%s212 + $0xb0] sm:$0xf]
      %v254 = vld [vmem:[%s212 + $0xb4] sm:$0xff]
      %v255 = vld [vmem:[%s212 + $0xbc] sm:$0xff]
      %v256 = vld [vmem:[%s212 + $0xc4] sm:$0xf]
      %v257 = vld [vmem:[%s212 + $0xc8] sm:$0xff]
      %v258 = vld [vmem:[%s212 + $0xd0] sm:$0xff]
      %v259 = vld [vmem:[%s212 + $0xd8] sm:$0xf]
      %v260 = vld [vmem:[%s212 + $0xdc] sm:$0xff]
      %v261 = vld [vmem:[%s212 + $0xe4] sm:$0xff]
      %v262 = vld [vmem:[%s212 + $0xec] sm:$0xf]
      %v263 = vld [vmem:[%s212 + $0xf0] sm:$0xff]
      %v264 = vld [vmem:[%s212 + $0xf8] sm:$0xff]
      %v265 = vld [vmem:[%s212 + $0x100] sm:$0xf]
      %v266 = vld [vmem:[%s212 + $0x104] sm:$0xff]
      %v267 = vld [vmem:[%s212 + $0x10c] sm:$0xff]
      %v268 = vld [vmem:[%s212 + $0x114] sm:$0xf]
      %v269 = vld [vmem:[%s212 + $0x118] sm:$0xff]
      %v270 = vld [vmem:[%s212 + $0x120] sm:$0xff]
      %v271 = vld [vmem:[%s212 + $0x128] sm:$0xf]
      %v272 = vld [vmem:[%s212 + $0x12c] sm:$0xff]
      %v273 = vld [vmem:[%s212 + $0x134] sm:$0xff]
      %v274 = vld [vmem:[%s212 + $0x13c] sm:$0xf]
      %v275 = vld [vmem:[%s212 + $0x140] sm:$0xff]
      %v276 = vld [vmem:[%s212 + $0x148] sm:$0xff]
      %v277 = vld [vmem:[%s212 + $0x150] sm:$0xf]
      %v278 = vld [vmem:[%s212 + $0x154] sm:$0xff]
      %v279 = vld [vmem:[%s212 + $0x15c] sm:$0xff]
      %v280 = vld [vmem:[%s212 + $0x164] sm:$0xf]
      %v281 = vld [vmem:[%s212 + $0x168] sm:$0xff]
      %v282 = vld [vmem:[%s212 + $0x170] sm:$0xff]
      %v283 = vld [vmem:[%s212 + $0x178] sm:$0xf]
      %v284 = vld [vmem:[%s212 + $0x17c] sm:$0xff]
      %v285 = vld [vmem:[%s212 + $0x184] sm:$0xff]
      %v286 = vld [vmem:[%s212 + $0x18c] sm:$0xf]
      %v287 = vld [vmem:[%s212 + $0x190] sm:$0xff]
      %v288 = vld [vmem:[%s212 + $0x198] sm:$0xff]
      %v289 = vld [vmem:[%s212 + $0x1a0] sm:$0xf]
      %v290 = vld [vmem:[%s212 + $0x1a4] sm:$0xff]
      %v291 = vld [vmem:[%s212 + $0x1ac] sm:$0xff]
      %v292 = vld [vmem:[%s212 + $0x1b4] sm:$0xf]
      %v293 = vld [vmem:[%s212 + $0x1b8] sm:$0xff]
      %v294 = vld [vmem:[%s212 + $0x1c0] sm:$0xff]
      %v295 = vld [vmem:[%s212 + $0x1c8] sm:$0xf]
      %v296 = vld [vmem:[%s212 + $0x1cc] sm:$0xff]
      %v297 = vld [vmem:[%s212 + $0x1d4] sm:$0xff]
      %v298 = vld [vmem:[%s212 + $0x1dc] sm:$0xf]
      %v299 = vld [vmem:[%s212 + $0x1e0] sm:$0xff]
      %v300 = vld [vmem:[%s212 + $0x1e8] sm:$0xff]
      %v301 = vld [vmem:[%s212 + $0x1f0] sm:$0xf]
      %v302 = vld [vmem:[%s212 + $0x1f4] sm:$0xff]
      %v303 = vld [vmem:[%s212 + $0x1fc] sm:$0xff]
      %v304 = vld [vmem:[%s212 + $0x204] sm:$0xf]
      %v305 = vld [vmem:[%s212 + $0x208] sm:$0xff]
      %v306 = vld [vmem:[%s212 + $0x210] sm:$0xff]
      %v307 = vld [vmem:[%s212 + $0x218] sm:$0xf]
      %v308 = vld [vmem:[%s212 + $0x21c] sm:$0xff]
      %v309 = vld [vmem:[%s212 + $0x224] sm:$0xff]
      %v310 = vld [vmem:[%s212 + $0x22c] sm:$0xf]
      %v311 = vld [vmem:[%s212 + $0x230] sm:$0xff]
      %v312 = vld [vmem:[%s212 + $0x238] sm:$0xff]
      %v313 = vld [vmem:[%s212 + $0x240] sm:$0xf]
      %v314 = vld [vmem:[%s212 + $0x244] sm:$0xff]
      %v315 = vld [vmem:[%s212 + $0x24c] sm:$0xff]
      %v316 = vld [vmem:[%s212 + $0x254] sm:$0xf]
      %v317 = vld [vmem:[%s212 + $0x258] sm:$0xff]
      %v318 = vld [vmem:[%s212 + $0x260] sm:$0xff]
      %v319 = vld [vmem:[%s212 + $0x268] sm:$0xf]
      %v320 = vld [vmem:[%s212 + $0x26c] sm:$0xff]
      %v321 = vld [vmem:[%s212 + $0x274] sm:$0xff]
      %v322 = vld [vmem:[%s212 + $0x27c] sm:$0xf]
      %v323 = vld [vmem:[%s212 + $0x280] sm:$0xff]
      %v324 = vld [vmem:[%s212 + $0x288] sm:$0xff]
      %v325 = vld [vmem:[%s212 + $0x290] sm:$0xf]
      %v326 = vld [vmem:[%s212 + $0x294] sm:$0xff]
      %v327 = vld [vmem:[%s212 + $0x29c] sm:$0xff]
      %v328 = vld [vmem:[%s212 + $0x2a4] sm:$0xf]
      %v329 = vld [vmem:[%s212 + $0x2a8] sm:$0xff]
      %v330 = vld [vmem:[%s212 + $0x2b0] sm:$0xff]
      %v331 = vld [vmem:[%s212 + $0x2b8] sm:$0xf]
      %v332 = vld [vmem:[%s212 + $0x2bc] sm:$0xff]
      %v333 = vld [vmem:[%s212 + $0x2c4] sm:$0xff]
      %v334 = vld [vmem:[%s212 + $0x2cc] sm:$0xf]
      %v335 = vld [vmem:[%s212 + $0x2d0] sm:$0xff]
      %v336 = vld [vmem:[%s212 + $0x2d8] sm:$0xff]
      %v337 = vld [vmem:[%s212 + $0x2e0] sm:$0xf]
      %v338 = vld [vmem:[%s212 + $0x2e4] sm:$0xff]
      %v339 = vld [vmem:[%s212 + $0x2ec] sm:$0xff]
      %v340 = vld [vmem:[%s212 + $0x2f4] sm:$0xf]
      %v341 = vld [vmem:[%s212 + $0x2f8] sm:$0xff]
      %v342 = vld [vmem:[%s212 + $0x300] sm:$0xff]
      %v343 = vld [vmem:[%s212 + $0x308] sm:$0xf]
      %v344 = vld [vmem:[%s212 + $0x30c] sm:$0xff]
      %v345 = vld [vmem:[%s212 + $0x314] sm:$0xff]
      %v346 = vld [vmem:[%s212 + $0x31c] sm:$0xf]
      %v347 = vld [vmem:[%s212 + $0x320] sm:$0xff]
      %v348 = vld [vmem:[%s212 + $0x328] sm:$0xff]
      %v349 = vld [vmem:[%s212 + $0x330] sm:$0xf]
      %v350 = vld [vmem:[%s212 + $0x334] sm:$0xff]
      %v351 = vld [vmem:[%s212 + $0x33c] sm:$0xff]
      %v352 = vld [vmem:[%s212 + $0x344] sm:$0xf]
      %v353 = vld [vmem:[%s212 + $0x348] sm:$0xff]
      %v354 = vld [vmem:[%s212 + $0x350] sm:$0xff]
      %v355 = vld [vmem:[%s212 + $0x358] sm:$0xf]
      %v356 = vld [vmem:[%s212 + $0x35c] sm:$0xff]
      %v357 = vld [vmem:[%s212 + $0x364] sm:$0xff]
      %v358 = vld [vmem:[%s212 + $0x36c] sm:$0xf]
      %v359 = vld [vmem:[%s212 + $0x370] sm:$0xff]
      %v360 = vld [vmem:[%s212 + $0x378] sm:$0xff]
      %v361 = vld [vmem:[%s212 + $0x380] sm:$0xf]
      %v362 = vld [vmem:[%s212 + $0x384] sm:$0xff]
      %v363 = vld [vmem:[%s212 + $0x38c] sm:$0xff]
      %v364 = vld [vmem:[%s212 + $0x394] sm:$0xf]
      %v365 = vld [vmem:[%s212 + $0x398] sm:$0xff]
      %v366 = vld [vmem:[%s212 + $0x3a0] sm:$0xff]
      %v367 = vld [vmem:[%s212 + $0x3a8] sm:$0xf]
      %v368 = vld [vmem:[%s212 + $0x3ac] sm:$0xff]
      %v369 = vld [vmem:[%s212 + $0x3b4] sm:$0xff]
      %v370 = vld [vmem:[%s212 + $0x3bc] sm:$0xf]
      %v371 = vld [vmem:[%s212 + $0x3c0] sm:$0xff]
      %v372 = vld [vmem:[%s212 + $0x3c8] sm:$0xff]
      %v373 = vld [vmem:[%s212 + $0x3d0] sm:$0xf]
      %v374 = vld [vmem:[%s212 + $0x3d4] sm:$0xff]
      %v375 = vld [vmem:[%s212 + $0x3dc] sm:$0xff]
      %v376 = vld [vmem:[%s212 + $0x3e4] sm:$0xf]
      %v377 = vld [vmem:[%s212 + $0x3e8] sm:$0xff]
      %v378 = vld [vmem:[%s212 + $0x3f0] sm:$0xff]
      %v379 = vld [vmem:[%s212 + $0x3f8] sm:$0xf]
      %v380 = vld [vmem:[%s212 + $0x3fc] sm:$0xff]
      %v381 = vld [vmem:[%s212 + $0x404] sm:$0xff]
      %v382 = vld [vmem:[%s212 + $0x40c] sm:$0xf]
      %v383 = vld [vmem:[%s212 + $0x410] sm:$0xff]
      %v384 = vld [vmem:[%s212 + $0x418] sm:$0xff]
      %v385 = vld [vmem:[%s212 + $0x420] sm:$0xf]
      %v386 = vld [vmem:[%s212 + $0x424] sm:$0xff]
      %v387 = vld [vmem:[%s212 + $0x42c] sm:$0xff]
      %v388 = vld [vmem:[%s212 + $0x434] sm:$0xf]
      %v389 = vld [vmem:[%s212 + $0x438] sm:$0xff]
      %v390 = vld [vmem:[%s212 + $0x440] sm:$0xff]
      %v391 = vld [vmem:[%s212 + $0x448] sm:$0xf]
      %v392 = vld [vmem:[%s212 + $0x44c] sm:$0xff]
      %v393 = vld [vmem:[%s212 + $0x454] sm:$0xff]
      %v394 = vld [vmem:[%s212 + $0x45c] sm:$0xf]
      %v395 = vld [vmem:[%s212 + $0x460] sm:$0xff]
      %v396 = vld [vmem:[%s212 + $0x468] sm:$0xff]
      %v397 = vld [vmem:[%s212 + $0x470] sm:$0xf]
      %v398 = vld [vmem:[%s212 + $0x474] sm:$0xff]
      %v399 = vld [vmem:[%s212 + $0x47c] sm:$0xff]
      %v400 = vld [vmem:[%s212 + $0x484] sm:$0xf]
      %v401 = vld [vmem:[%s212 + $0x488] sm:$0xff]
      %v402 = vld [vmem:[%s212 + $0x490] sm:$0xff]
      %v403 = vld [vmem:[%s212 + $0x498] sm:$0xf]
      %v404 = vld [vmem:[%s212 + $0x49c] sm:$0xff]
      %v405 = vld [vmem:[%s212 + $0x4a4] sm:$0xff]
      %v406 = vld [vmem:[%s212 + $0x4ac] sm:$0xf]
      %v407 = vld [vmem:[%s212 + $0x4b0] sm:$0xff]
      %v408 = vld [vmem:[%s212 + $0x4b8] sm:$0xff]
      %v409 = vld [vmem:[%s212 + $0x4c0] sm:$0xf]
      %v410 = vld [vmem:[%s212 + $0x4c4] sm:$0xff]
      %v411 = vld [vmem:[%s212 + $0x4cc] sm:$0xff]
      %v412 = vld [vmem:[%s212 + $0x4d4] sm:$0xf]
      %v413 = vld [vmem:[%s212 + $0x4d8] sm:$0xff]
      %v414 = vld [vmem:[%s212 + $0x4e0] sm:$0xff]
      %v415 = vld [vmem:[%s212 + $0x4e8] sm:$0xf]
      %v416 = vld [vmem:[%s212 + $0x4ec] sm:$0xff]
      %v417 = vld [vmem:[%s212 + $0x4f4] sm:$0xff]
      %v418 = vld [vmem:[%s212 + $0x4fc] sm:$0xf]
      %v419 = vld [vmem:[%s1] sm:$0xf]
      %v420 = vld [vmem:[%s1 + $0x4] sm:$0xf]
      %v421 = vld [vmem:[%s1 + $0x8] sm:$0xf]
      %v422 = vld [vmem:[%s1 + $0xc] sm:$0xf]
      %v423 = vld [vmem:[%s1 + $0x10] sm:$0xf]
      %v424 = vld [vmem:[%s1 + $0x14] sm:$0xf]
      %v425 = vld [vmem:[%s1 + $0x18] sm:$0xf]
      %v426 = vld [vmem:[%s1 + $0x1c] sm:$0xf]
      %v427 = vld [vmem:[%s1 + $0x20] sm:$0xf]
      %v428 = vld [vmem:[%s1 + $0x24] sm:$0xf]
      %v429 = vld [vmem:[%s1 + $0x28] sm:$0xf]
      %v430 = vld [vmem:[%s1 + $0x2c] sm:$0xf]
      %v431 = vld [vmem:[%s1 + $0x30] sm:$0xf]
      %v432 = vld [vmem:[%s1 + $0x34] sm:$0xf]
      %v433 = vld [vmem:[%s1 + $0x38] sm:$0xf]
      %v434 = vld [vmem:[%s1 + $0x3c] sm:$0xf]
      %v435 = vld [vmem:[%s1 + $0x40] sm:$0xf]
      %v436 = vld [vmem:[%s1 + $0x44] sm:$0xf]
      %v437 = vld [vmem:[%s1 + $0x48] sm:$0xf]
      %v438 = vld [vmem:[%s1 + $0x4c] sm:$0xf]
      %v439 = vld [vmem:[%s1 + $0x50] sm:$0xf]
      %v440 = vld [vmem:[%s1 + $0x54] sm:$0xf]
      %v441 = vld [vmem:[%s1 + $0x58] sm:$0xf]
      %v442 = vld [vmem:[%s1 + $0x5c] sm:$0xf]
      %v443 = vld [vmem:[%s1 + $0x60] sm:$0xf]
      %v444 = vld [vmem:[%s1 + $0x64] sm:$0xf]
      %v445 = vld [vmem:[%s1 + $0x68] sm:$0xf]
      %v446 = vld [vmem:[%s1 + $0x6c] sm:$0xf]
      %v447 = vld [vmem:[%s1 + $0x70] sm:$0xf]
      %v448 = vld [vmem:[%s1 + $0x74] sm:$0xf]
      %v449 = vld [vmem:[%s1 + $0x78] sm:$0xf]
      %v450 = vld [vmem:[%s1 + $0x7c] sm:$0xf]
      %v451 = vld [vmem:[%s1 + $0x80] sm:$0xf]
      %v452 = vld [vmem:[%s1 + $0x84] sm:$0xf]
      %v453 = vld [vmem:[%s1 + $0x88] sm:$0xf]
      %v454 = vld [vmem:[%s1 + $0x8c] sm:$0xf]
      %v455 = vld [vmem:[%s1 + $0x90] sm:$0xf]
      %v456 = vld [vmem:[%s1 + $0x94] sm:$0xf]
      %v457 = vld [vmem:[%s1 + $0x98] sm:$0xf]
      %v458 = vld [vmem:[%s1 + $0x9c] sm:$0xf]
      %v459 = vld [vmem:[%s1 + $0xa0] sm:$0xf]
      %v460 = vld [vmem:[%s1 + $0xa4] sm:$0xf]
      %v461 = vld [vmem:[%s1 + $0xa8] sm:$0xf]
      %v462 = vld [vmem:[%s1 + $0xac] sm:$0xf]
      %v463 = vld [vmem:[%s1 + $0xb0] sm:$0xf]
      %v464 = vld [vmem:[%s1 + $0xb4] sm:$0xf]
      %v465 = vld [vmem:[%s1 + $0xb8] sm:$0xf]
      %v466 = vld [vmem:[%s1 + $0xbc] sm:$0xf]
      %v467 = vld [vmem:[%s1 + $0xc0] sm:$0xf]
      %v468 = vld [vmem:[%s1 + $0xc4] sm:$0xf]
      %v469 = vld [vmem:[%s1 + $0xc8] sm:$0xf]
      %v470 = vld [vmem:[%s1 + $0xcc] sm:$0xf]
      %v471 = vld [vmem:[%s1 + $0xd0] sm:$0xf]
      %v472 = vld [vmem:[%s1 + $0xd4] sm:$0xf]
      %v473 = vld [vmem:[%s1 + $0xd8] sm:$0xf]
      %v474 = vld [vmem:[%s1 + $0xdc] sm:$0xf]
      %v475 = vld [vmem:[%s1 + $0xe0] sm:$0xf]
      %v476 = vld [vmem:[%s1 + $0xe4] sm:$0xf]
      %v477 = vld [vmem:[%s1 + $0xe8] sm:$0xf]
      %v478 = vld [vmem:[%s1 + $0xec] sm:$0xf]
      %v479 = vld [vmem:[%s1 + $0xf0] sm:$0xf]
      %v480 = vld [vmem:[%s1 + $0xf4] sm:$0xf]
      %v481 = vld [vmem:[%s1 + $0xf8] sm:$0xf]
      %v482 = vld [vmem:[%s1 + $0xfc] sm:$0xf]
      %v483 = vld [vmem:[%s1 + $0x100] sm:$0xf]
      %v484 = vld [vmem:[%s1 + $0x104] sm:$0xf]
      %v485 = vld [vmem:[%s1 + $0x108] sm:$0xf]
      %v486 = vld [vmem:[%s1 + $0x10c] sm:$0xf]
      %v487 = vld [vmem:[%s1 + $0x110] sm:$0xf]
      %v488 = vld [vmem:[%s1 + $0x114] sm:$0xf]
      %v489 = vld [vmem:[%s1 + $0x118] sm:$0xf]
      %v490 = vld [vmem:[%s1 + $0x11c] sm:$0xf]
      %v491 = vld [vmem:[%s2] sm:$0x1]
      %v493 = vlaneseq
      %v494 = vshrl.u32 %v493, 7
      %v495 = vsub.s32 0, %v494
      %v496 = vrot.slane %v491, %v495
      %v690 = vunpack.c.l.b16 %v227
      %v691 = vunpack.c.h.b16 %v227
      %v692 = vunpack.c.l.b16 %v228
      %v693 = vunpack.c.h.b16 %v228
      %v694 = vunpack.c.l.b16 %v229
      %v695 = vunpack.c.l.b16 %v230
      %v696 = vunpack.c.h.b16 %v230
      %v697 = vunpack.c.l.b16 %v231
      %v698 = vunpack.c.h.b16 %v231
      %v699 = vunpack.c.l.b16 %v232
      %v700 = vunpack.c.l.b16 %v233
      %v701 = vunpack.c.h.b16 %v233
      %v702 = vunpack.c.l.b16 %v234
      %v703 = vunpack.c.h.b16 %v234
      %v704 = vunpack.c.l.b16 %v235
      %v705 = vunpack.c.l.b16 %v236
      %v706 = vunpack.c.h.b16 %v236
      %v707 = vunpack.c.l.b16 %v237
      %v708 = vunpack.c.h.b16 %v237
      %v709 = vunpack.c.l.b16 %v238
      %v710 = vunpack.c.l.b16 %v239
      %v711 = vunpack.c.h.b16 %v239
      %v712 = vunpack.c.l.b16 %v240
      %v713 = vunpack.c.h.b16 %v240
      %v714 = vunpack.c.l.b16 %v241
      %v715 = vunpack.c.l.b16 %v242
      %v716 = vunpack.c.h.b16 %v242
      %v717 = vunpack.c.l.b16 %v243
      %v718 = vunpack.c.h.b16 %v243
      %v719 = vunpack.c.l.b16 %v244
      %v720 = vunpack.c.l.b16 %v245
      %v721 = vunpack.c.h.b16 %v245
      %v722 = vunpack.c.l.b16 %v246
      %v723 = vunpack.c.h.b16 %v246
      %v724 = vunpack.c.l.b16 %v247
      %v725 = vunpack.c.l.b16 %v248
      %v726 = vunpack.c.h.b16 %v248
      %v727 = vunpack.c.l.b16 %v249
      %v728 = vunpack.c.h.b16 %v249
      %v729 = vunpack.c.l.b16 %v250
      %v730 = vunpack.c.l.b16 %v251
      %v731 = vunpack.c.h.b16 %v251
      %v732 = vunpack.c.l.b16 %v252
      %v733 = vunpack.c.h.b16 %v252
      %v734 = vunpack.c.l.b16 %v253
      %v735 = vunpack.c.l.b16 %v254
      %v736 = vunpack.c.h.b16 %v254
      %v737 = vunpack.c.l.b16 %v255
      %v738 = vunpack.c.h.b16 %v255
      %v739 = vunpack.c.l.b16 %v256
      %v740 = vunpack.c.l.b16 %v257
      %v741 = vunpack.c.h.b16 %v257
      %v742 = vunpack.c.l.b16 %v258
      %v743 = vunpack.c.h.b16 %v258
      %v744 = vunpack.c.l.b16 %v259
      %v745 = vunpack.c.l.b16 %v260
      %v746 = vunpack.c.h.b16 %v260
      %v747 = vunpack.c.l.b16 %v261
      %v748 = vunpack.c.h.b16 %v261
      %v749 = vunpack.c.l.b16 %v262
      %v750 = vunpack.c.l.b16 %v263
      %v751 = vunpack.c.h.b16 %v263
      %v752 = vunpack.c.l.b16 %v264
      %v753 = vunpack.c.h.b16 %v264
      %v754 = vunpack.c.l.b16 %v265
      %v755 = vunpack.c.l.b16 %v266
      %v756 = vunpack.c.h.b16 %v266
      %v757 = vunpack.c.l.b16 %v267
      %v758 = vunpack.c.h.b16 %v267
      %v759 = vunpack.c.l.b16 %v268
      %v760 = vunpack.c.l.b16 %v269
      %v761 = vunpack.c.h.b16 %v269
      %v762 = vunpack.c.l.b16 %v270
      %v763 = vunpack.c.h.b16 %v270
      %v764 = vunpack.c.l.b16 %v271
      %v765 = vunpack.c.l.b16 %v272
      %v766 = vunpack.c.h.b16 %v272
      %v767 = vunpack.c.l.b16 %v273
      %v768 = vunpack.c.h.b16 %v273
      %v769 = vunpack.c.l.b16 %v274
      %v770 = vunpack.c.l.b16 %v275
      %v771 = vunpack.c.h.b16 %v275
      %v772 = vunpack.c.l.b16 %v276
      %v773 = vunpack.c.h.b16 %v276
      %v774 = vunpack.c.l.b16 %v277
      %v775 = vunpack.c.l.b16 %v278
      %v776 = vunpack.c.h.b16 %v278
      %v777 = vunpack.c.l.b16 %v279
      %v778 = vunpack.c.h.b16 %v279
      %v779 = vunpack.c.l.b16 %v280
      %v780 = vunpack.c.l.b16 %v281
      %v781 = vunpack.c.h.b16 %v281
      %v782 = vunpack.c.l.b16 %v282
      %v783 = vunpack.c.h.b16 %v282
      %v784 = vunpack.c.l.b16 %v283
      %v785 = vunpack.c.l.b16 %v284
      %v786 = vunpack.c.h.b16 %v284
      %v787 = vunpack.c.l.b16 %v285
      %v788 = vunpack.c.h.b16 %v285
      %v789 = vunpack.c.l.b16 %v286
      %v790 = vunpack.c.l.b16 %v287
      %v791 = vunpack.c.h.b16 %v287
      %v792 = vunpack.c.l.b16 %v288
      %v793 = vunpack.c.h.b16 %v288
      %v794 = vunpack.c.l.b16 %v289
      %v795 = vunpack.c.l.b16 %v290
      %v796 = vunpack.c.h.b16 %v290
      %v797 = vunpack.c.l.b16 %v291
      %v798 = vunpack.c.h.b16 %v291
      %v799 = vunpack.c.l.b16 %v292
      %v800 = vunpack.c.l.b16 %v293
      %v801 = vunpack.c.h.b16 %v293
      %v802 = vunpack.c.l.b16 %v294
      %v803 = vunpack.c.h.b16 %v294
      %v804 = vunpack.c.l.b16 %v295
      %v805 = vunpack.c.l.b16 %v296
      %v806 = vunpack.c.h.b16 %v296
      %v807 = vunpack.c.l.b16 %v297
      %v808 = vunpack.c.h.b16 %v297
      %v809 = vunpack.c.l.b16 %v298
      %v810 = vunpack.c.l.b16 %v299
      %v811 = vunpack.c.h.b16 %v299
      %v812 = vunpack.c.l.b16 %v300
      %v813 = vunpack.c.h.b16 %v300
      %v814 = vunpack.c.l.b16 %v301
      %v815 = vunpack.c.l.b16 %v302
      %v816 = vunpack.c.h.b16 %v302
      %v817 = vunpack.c.l.b16 %v303
      %v818 = vunpack.c.h.b16 %v303
      %v819 = vunpack.c.l.b16 %v304
      %v820 = vunpack.c.l.b16 %v305
      %v821 = vunpack.c.h.b16 %v305
      %v822 = vunpack.c.l.b16 %v306
      %v823 = vunpack.c.h.b16 %v306
      %v824 = vunpack.c.l.b16 %v307
      %v825 = vunpack.c.l.b16 %v308
      %v826 = vunpack.c.h.b16 %v308
      %v827 = vunpack.c.l.b16 %v309
      %v828 = vunpack.c.h.b16 %v309
      %v829 = vunpack.c.l.b16 %v310
      %v830 = vunpack.c.l.b16 %v311
      %v831 = vunpack.c.h.b16 %v311
      %v832 = vunpack.c.l.b16 %v312
      %v833 = vunpack.c.h.b16 %v312
      %v834 = vunpack.c.l.b16 %v313
      %v835 = vunpack.c.l.b16 %v314
      %v836 = vunpack.c.h.b16 %v314
      %v837 = vunpack.c.l.b16 %v315
      %v838 = vunpack.c.h.b16 %v315
      %v839 = vunpack.c.l.b16 %v316
      %v840 = vunpack.c.l.b16 %v317
      %v841 = vunpack.c.h.b16 %v317
      %v842 = vunpack.c.l.b16 %v318
      %v843 = vunpack.c.h.b16 %v318
      %v844 = vunpack.c.l.b16 %v319
      %v845 = vunpack.c.l.b16 %v320
      %v846 = vunpack.c.h.b16 %v320
      %v847 = vunpack.c.l.b16 %v321
      %v848 = vunpack.c.h.b16 %v321
      %v849 = vunpack.c.l.b16 %v322
      %v850 = vunpack.c.l.b16 %v323
      %v851 = vunpack.c.h.b16 %v323
      %v852 = vunpack.c.l.b16 %v324
      %v853 = vunpack.c.h.b16 %v324
      %v854 = vunpack.c.l.b16 %v325
      %v855 = vunpack.c.l.b16 %v326
      %v856 = vunpack.c.h.b16 %v326
      %v857 = vunpack.c.l.b16 %v327
      %v858 = vunpack.c.h.b16 %v327
      %v859 = vunpack.c.l.b16 %v328
      %v860 = vunpack.c.l.b16 %v329
      %v861 = vunpack.c.h.b16 %v329
      %v862 = vunpack.c.l.b16 %v330
      %v863 = vunpack.c.h.b16 %v330
      %v864 = vunpack.c.l.b16 %v331
      %v865 = vunpack.c.l.b16 %v332
      %v866 = vunpack.c.h.b16 %v332
      %v867 = vunpack.c.l.b16 %v333
      %v868 = vunpack.c.h.b16 %v333
      %v869 = vunpack.c.l.b16 %v334
      %v870 = vunpack.c.l.b16 %v335
      %v871 = vunpack.c.h.b16 %v335
      %v872 = vunpack.c.l.b16 %v336
      %v873 = vunpack.c.h.b16 %v336
      %v874 = vunpack.c.l.b16 %v337
      %v875 = vunpack.c.l.b16 %v338
      %v876 = vunpack.c.h.b16 %v338
      %v877 = vunpack.c.l.b16 %v339
      %v878 = vunpack.c.h.b16 %v339
      %v879 = vunpack.c.l.b16 %v340
      %v880 = vunpack.c.l.b16 %v341
      %v881 = vunpack.c.h.b16 %v341
      %v882 = vunpack.c.l.b16 %v342
      %v883 = vunpack.c.h.b16 %v342
      %v884 = vunpack.c.l.b16 %v343
      %v885 = vunpack.c.l.b16 %v344
      %v886 = vunpack.c.h.b16 %v344
      %v887 = vunpack.c.l.b16 %v345
      %v888 = vunpack.c.h.b16 %v345
      %v889 = vunpack.c.l.b16 %v346
      %v890 = vunpack.c.l.b16 %v347
      %v891 = vunpack.c.h.b16 %v347
      %v892 = vunpack.c.l.b16 %v348
      %v893 = vunpack.c.h.b16 %v348
      %v894 = vunpack.c.l.b16 %v349
      %v895 = vunpack.c.l.b16 %v350
      %v896 = vunpack.c.h.b16 %v350
      %v897 = vunpack.c.l.b16 %v351
      %v898 = vunpack.c.h.b16 %v351
      %v899 = vunpack.c.l.b16 %v352
      %v900 = vunpack.c.l.b16 %v353
      %v901 = vunpack.c.h.b16 %v353
      %v902 = vunpack.c.l.b16 %v354
      %v903 = vunpack.c.h.b16 %v354
      %v904 = vunpack.c.l.b16 %v355
      %v905 = vunpack.c.l.b16 %v356
      %v906 = vunpack.c.h.b16 %v356
      %v907 = vunpack.c.l.b16 %v357
      %v908 = vunpack.c.h.b16 %v357
      %v909 = vunpack.c.l.b16 %v358
      %v910 = vunpack.c.l.b16 %v359
      %v911 = vunpack.c.h.b16 %v359
      %v912 = vunpack.c.l.b16 %v360
      %v913 = vunpack.c.h.b16 %v360
      %v914 = vunpack.c.l.b16 %v361
      %v915 = vunpack.c.l.b16 %v362
      %v916 = vunpack.c.h.b16 %v362
      %v917 = vunpack.c.l.b16 %v363
      %v918 = vunpack.c.h.b16 %v363
      %v919 = vunpack.c.l.b16 %v364
      %v920 = vunpack.c.l.b16 %v365
      %v921 = vunpack.c.h.b16 %v365
      %v922 = vunpack.c.l.b16 %v366
      %v923 = vunpack.c.h.b16 %v366
      %v924 = vunpack.c.l.b16 %v367
      %v925 = vunpack.c.l.b16 %v368
      %v926 = vunpack.c.h.b16 %v368
      %v927 = vunpack.c.l.b16 %v369
      %v928 = vunpack.c.h.b16 %v369
      %v929 = vunpack.c.l.b16 %v370
      %v930 = vunpack.c.l.b16 %v371
      %v931 = vunpack.c.h.b16 %v371
      %v932 = vunpack.c.l.b16 %v372
      %v933 = vunpack.c.h.b16 %v372
      %v934 = vunpack.c.l.b16 %v373
      %v935 = vunpack.c.l.b16 %v374
      %v936 = vunpack.c.h.b16 %v374
      %v937 = vunpack.c.l.b16 %v375
      %v938 = vunpack.c.h.b16 %v375
      %v939 = vunpack.c.l.b16 %v376
      %v940 = vunpack.c.l.b16 %v377
      %v941 = vunpack.c.h.b16 %v377
      %v942 = vunpack.c.l.b16 %v378
      %v943 = vunpack.c.h.b16 %v378
      %v944 = vunpack.c.l.b16 %v379
      %v945 = vunpack.c.l.b16 %v380
      %v946 = vunpack.c.h.b16 %v380
      %v947 = vunpack.c.l.b16 %v381
      %v948 = vunpack.c.h.b16 %v381
      %v949 = vunpack.c.l.b16 %v382
      %v950 = vunpack.c.l.b16 %v383
      %v951 = vunpack.c.h.b16 %v383
      %v952 = vunpack.c.l.b16 %v384
      %v953 = vunpack.c.h.b16 %v384
      %v954 = vunpack.c.l.b16 %v385
      %v955 = vunpack.c.l.b16 %v386
      %v956 = vunpack.c.h.b16 %v386
      %v957 = vunpack.c.l.b16 %v387
      %v958 = vunpack.c.h.b16 %v387
      %v959 = vunpack.c.l.b16 %v388
      %v960 = vunpack.c.l.b16 %v389
      %v961 = vunpack.c.h.b16 %v389
      %v962 = vunpack.c.l.b16 %v390
      %v963 = vunpack.c.h.b16 %v390
      %v964 = vunpack.c.l.b16 %v391
      %v965 = vunpack.c.l.b16 %v392
      %v966 = vunpack.c.h.b16 %v392
      %v967 = vunpack.c.l.b16 %v393
      %v968 = vunpack.c.h.b16 %v393
      %v969 = vunpack.c.l.b16 %v394
      %v970 = vunpack.c.l.b16 %v395
      %v971 = vunpack.c.h.b16 %v395
      %v972 = vunpack.c.l.b16 %v396
      %v973 = vunpack.c.h.b16 %v396
      %v974 = vunpack.c.l.b16 %v397
      %v975 = vunpack.c.l.b16 %v398
      %v976 = vunpack.c.h.b16 %v398
      %v977 = vunpack.c.l.b16 %v399
      %v978 = vunpack.c.h.b16 %v399
      %v979 = vunpack.c.l.b16 %v400
      %v980 = vunpack.c.l.b16 %v401
      %v981 = vunpack.c.h.b16 %v401
      %v982 = vunpack.c.l.b16 %v402
      %v983 = vunpack.c.h.b16 %v402
      %v984 = vunpack.c.l.b16 %v403
      %v985 = vunpack.c.l.b16 %v404
      %v986 = vunpack.c.h.b16 %v404
      %v987 = vunpack.c.l.b16 %v405
      %v988 = vunpack.c.h.b16 %v405
      %v989 = vunpack.c.l.b16 %v406
      %v990 = vunpack.c.l.b16 %v407
      %v991 = vunpack.c.h.b16 %v407
      %v992 = vunpack.c.l.b16 %v408
      %v993 = vunpack.c.h.b16 %v408
      %v994 = vunpack.c.l.b16 %v409
      %v995 = vunpack.c.l.b16 %v410
      %v996 = vunpack.c.h.b16 %v410
      %v997 = vunpack.c.l.b16 %v411
      %v998 = vunpack.c.h.b16 %v411
      %v999 = vunpack.c.l.b16 %v412
      %v1000 = vunpack.c.l.b16 %v413
      %v1001 = vunpack.c.h.b16 %v413
      %v1002 = vunpack.c.l.b16 %v414
      %v1003 = vunpack.c.h.b16 %v414
      %v1004 = vunpack.c.l.b16 %v415
      %v1005 = vunpack.c.l.b16 %v416
      %v1006 = vunpack.c.h.b16 %v416
      %v1007 = vunpack.c.l.b16 %v417
      %v1008 = vunpack.c.h.b16 %v417
      %v1009 = vunpack.c.l.b16 %v418
      %v1010 = vpack.c.b16 %v695, %v690
      %v1011 = vpack.c.b16 %v696, %v691
      %v1012 = vpack.c.b16 %v697, %v692
      %v1013 = vpack.c.b16 %v698, %v693
      %v1014 = vpack.c.b16 %v699, %v694
      %v1015 = vpack.c.b16 %v705, %v700
      %v1016 = vpack.c.b16 %v706, %v701
      %v1017 = vpack.c.b16 %v707, %v702
      %v1018 = vpack.c.b16 %v708, %v703
      %v1019 = vpack.c.b16 %v709, %v704
      %v1020 = vpack.c.b16 %v715, %v710
      %v1021 = vpack.c.b16 %v716, %v711
      %v1022 = vpack.c.b16 %v717, %v712
      %v1023 = vpack.c.b16 %v718, %v713
      %v1024 = vpack.c.b16 %v719, %v714
      %v1025 = vpack.c.b16 %v725, %v720
      %v1026 = vpack.c.b16 %v726, %v721
      %v1027 = vpack.c.b16 %v727, %v722
      %v1028 = vpack.c.b16 %v728, %v723
      %v1029 = vpack.c.b16 %v729, %v724
      %v1030 = vpack.c.b16 %v735, %v730
      %v1031 = vpack.c.b16 %v736, %v731
      %v1032 = vpack.c.b16 %v737, %v732
      %v1033 = vpack.c.b16 %v738, %v733
      %v1034 = vpack.c.b16 %v739, %v734
      %v1035 = vpack.c.b16 %v745, %v740
      %v1036 = vpack.c.b16 %v746, %v741
      %v1037 = vpack.c.b16 %v747, %v742
      %v1038 = vpack.c.b16 %v748, %v743
      %v1039 = vpack.c.b16 %v749, %v744
      %v1040 = vpack.c.b16 %v755, %v750
      %v1041 = vpack.c.b16 %v756, %v751
      %v1042 = vpack.c.b16 %v757, %v752
      %v1043 = vpack.c.b16 %v758, %v753
      %v1044 = vpack.c.b16 %v759, %v754
      %v1045 = vpack.c.b16 %v765, %v760
      %v1046 = vpack.c.b16 %v766, %v761
      %v1047 = vpack.c.b16 %v767, %v762
      %v1048 = vpack.c.b16 %v768, %v763
      %v1049 = vpack.c.b16 %v769, %v764
      %v1050 = vpack.c.b16 %v775, %v770
      %v1051 = vpack.c.b16 %v776, %v771
      %v1052 = vpack.c.b16 %v777, %v772
      %v1053 = vpack.c.b16 %v778, %v773
      %v1054 = vpack.c.b16 %v779, %v774
      %v1055 = vpack.c.b16 %v785, %v780
      %v1056 = vpack.c.b16 %v786, %v781
      %v1057 = vpack.c.b16 %v787, %v782
      %v1058 = vpack.c.b16 %v788, %v783
      %v1059 = vpack.c.b16 %v789, %v784
      %v1060 = vpack.c.b16 %v795, %v790
      %v1061 = vpack.c.b16 %v796, %v791
      %v1062 = vpack.c.b16 %v797, %v792
      %v1063 = vpack.c.b16 %v798, %v793
      %v1064 = vpack.c.b16 %v799, %v794
      %v1065 = vpack.c.b16 %v805, %v800
      %v1066 = vpack.c.b16 %v806, %v801
      %v1067 = vpack.c.b16 %v807, %v802
      %v1068 = vpack.c.b16 %v808, %v803
      %v1069 = vpack.c.b16 %v809, %v804
      %v1070 = vpack.c.b16 %v815, %v810
      %v1071 = vpack.c.b16 %v816, %v811
      %v1072 = vpack.c.b16 %v817, %v812
      %v1073 = vpack.c.b16 %v818, %v813
      %v1074 = vpack.c.b16 %v819, %v814
      %v1075 = vpack.c.b16 %v825, %v820
      %v1076 = vpack.c.b16 %v826, %v821
      %v1077 = vpack.c.b16 %v827, %v822
      %v1078 = vpack.c.b16 %v828, %v823
      %v1079 = vpack.c.b16 %v829, %v824
      %v1080 = vpack.c.b16 %v835, %v830
      %v1081 = vpack.c.b16 %v836, %v831
      %v1082 = vpack.c.b16 %v837, %v832
      %v1083 = vpack.c.b16 %v838, %v833
      %v1084 = vpack.c.b16 %v839, %v834
      %v1085 = vpack.c.b16 %v845, %v840
      %v1086 = vpack.c.b16 %v846, %v841
      %v1087 = vpack.c.b16 %v847, %v842
      %v1088 = vpack.c.b16 %v848, %v843
      %v1089 = vpack.c.b16 %v849, %v844
      %v1090 = vpack.c.b16 %v855, %v850
      %v1091 = vpack.c.b16 %v856, %v851
      %v1092 = vpack.c.b16 %v857, %v852
      %v1093 = vpack.c.b16 %v858, %v853
      %v1094 = vpack.c.b16 %v859, %v854
      %v1095 = vpack.c.b16 %v865, %v860
      %v1096 = vpack.c.b16 %v866, %v861
      %v1097 = vpack.c.b16 %v867, %v862
      %v1098 = vpack.c.b16 %v868, %v863
      %v1099 = vpack.c.b16 %v869, %v864
      %v1100 = vpack.c.b16 %v875, %v870
      %v1101 = vpack.c.b16 %v876, %v871
      %v1102 = vpack.c.b16 %v877, %v872
      %v1103 = vpack.c.b16 %v878, %v873
      %v1104 = vpack.c.b16 %v879, %v874
      %v1105 = vpack.c.b16 %v885, %v880
      %v1106 = vpack.c.b16 %v886, %v881
      %v1107 = vpack.c.b16 %v887, %v882
      %v1108 = vpack.c.b16 %v888, %v883
      %v1109 = vpack.c.b16 %v889, %v884
      %v1110 = vpack.c.b16 %v895, %v890
      %v1111 = vpack.c.b16 %v896, %v891
      %v1112 = vpack.c.b16 %v897, %v892
      %v1113 = vpack.c.b16 %v898, %v893
      %v1114 = vpack.c.b16 %v899, %v894
      %v1115 = vpack.c.b16 %v905, %v900
      %v1116 = vpack.c.b16 %v906, %v901
      %v1117 = vpack.c.b16 %v907, %v902
      %v1118 = vpack.c.b16 %v908, %v903
      %v1119 = vpack.c.b16 %v909, %v904
      %v1120 = vpack.c.b16 %v915, %v910
      %v1121 = vpack.c.b16 %v916, %v911
      %v1122 = vpack.c.b16 %v917, %v912
      %v1123 = vpack.c.b16 %v918, %v913
      %v1124 = vpack.c.b16 %v919, %v914
      %v1125 = vpack.c.b16 %v925, %v920
      %v1126 = vpack.c.b16 %v926, %v921
      %v1127 = vpack.c.b16 %v927, %v922
      %v1128 = vpack.c.b16 %v928, %v923
      %v1129 = vpack.c.b16 %v929, %v924
      %v1130 = vpack.c.b16 %v935, %v930
      %v1131 = vpack.c.b16 %v936, %v931
      %v1132 = vpack.c.b16 %v937, %v932
      %v1133 = vpack.c.b16 %v938, %v933
      %v1134 = vpack.c.b16 %v939, %v934
      %v1135 = vpack.c.b16 %v945, %v940
      %v1136 = vpack.c.b16 %v946, %v941
      %v1137 = vpack.c.b16 %v947, %v942
      %v1138 = vpack.c.b16 %v948, %v943
      %v1139 = vpack.c.b16 %v949, %v944
      %v1140 = vpack.c.b16 %v955, %v950
      %v1141 = vpack.c.b16 %v956, %v951
      %v1142 = vpack.c.b16 %v957, %v952
      %v1143 = vpack.c.b16 %v958, %v953
      %v1144 = vpack.c.b16 %v959, %v954
      %v1145 = vpack.c.b16 %v965, %v960
      %v1146 = vpack.c.b16 %v966, %v961
      %v1147 = vpack.c.b16 %v967, %v962
      %v1148 = vpack.c.b16 %v968, %v963
      %v1149 = vpack.c.b16 %v969, %v964
      %v1150 = vpack.c.b16 %v975, %v970
      %v1151 = vpack.c.b16 %v976, %v971
      %v1152 = vpack.c.b16 %v977, %v972
      %v1153 = vpack.c.b16 %v978, %v973
      %v1154 = vpack.c.b16 %v979, %v974
      %v1155 = vpack.c.b16 %v985, %v980
      %v1156 = vpack.c.b16 %v986, %v981
      %v1157 = vpack.c.b16 %v987, %v982
      %v1158 = vpack.c.b16 %v988, %v983
      %v1159 = vpack.c.b16 %v989, %v984
      %v1160 = vpack.c.b16 %v995, %v990
      %v1161 = vpack.c.b16 %v996, %v991
      %v1162 = vpack.c.b16 %v997, %v992
      %v1163 = vpack.c.b16 %v998, %v993
      %v1164 = vpack.c.b16 %v999, %v994
      %v1165 = vpack.c.b16 %v1005, %v1000
      %v1166 = vpack.c.b16 %v1006, %v1001
      %v1167 = vpack.c.b16 %v1007, %v1002
      %v1168 = vpack.c.b16 %v1008, %v1003
      %v1169 = vpack.c.b16 %v1009, %v1004
      %v1370 = vunpack.c.l.b16 %v419
      %v1371 = vunpack.c.l.b16 %v420
      %v1372 = vunpack.c.l.b16 %v421
      %v1373 = vunpack.c.l.b16 %v422
      %v1374 = vunpack.c.l.b16 %v423
      %v1375 = vunpack.c.l.b16 %v424
      %v1376 = vunpack.c.l.b16 %v425
      %v1377 = vunpack.c.l.b16 %v426
      %v1378 = vunpack.c.l.b16 %v427
      %v1379 = vunpack.c.l.b16 %v428
      %v1380 = vunpack.c.l.b16 %v429
      %v1381 = vunpack.c.l.b16 %v430
      %v1382 = vunpack.c.l.b16 %v431
      %v1383 = vunpack.c.l.b16 %v432
      %v1384 = vunpack.c.l.b16 %v433
      %v1385 = vunpack.c.l.b16 %v434
      %v1386 = vunpack.c.l.b16 %v435
      %v1387 = vunpack.c.l.b16 %v436
      %v1388 = vunpack.c.l.b16 %v437
      %v1389 = vunpack.c.l.b16 %v438
      %v1390 = vunpack.c.l.b16 %v439
      %v1391 = vunpack.c.l.b16 %v440
      %v1392 = vunpack.c.l.b16 %v441
      %v1393 = vunpack.c.l.b16 %v442
      %v1394 = vunpack.c.l.b16 %v443
      %v1395 = vunpack.c.l.b16 %v444
      %v1396 = vunpack.c.l.b16 %v445
      %v1397 = vunpack.c.l.b16 %v446
      %v1398 = vunpack.c.l.b16 %v447
      %v1399 = vunpack.c.l.b16 %v448
      %v1400 = vunpack.c.l.b16 %v449
      %v1401 = vunpack.c.l.b16 %v450
      %v1402 = vunpack.c.l.b16 %v451
      %v1403 = vunpack.c.l.b16 %v452
      %v1404 = vunpack.c.l.b16 %v453
      %v1405 = vunpack.c.l.b16 %v454
      %v1406 = vunpack.c.l.b16 %v455
      %v1407 = vunpack.c.l.b16 %v456
      %v1408 = vunpack.c.l.b16 %v457
      %v1409 = vunpack.c.l.b16 %v458
      %v1410 = vunpack.c.l.b16 %v459
      %v1411 = vunpack.c.l.b16 %v460
      %v1412 = vunpack.c.l.b16 %v461
      %v1413 = vunpack.c.l.b16 %v462
      %v1414 = vunpack.c.l.b16 %v463
      %v1415 = vunpack.c.l.b16 %v464
      %v1416 = vunpack.c.l.b16 %v465
      %v1417 = vunpack.c.l.b16 %v466
      %v1418 = vunpack.c.l.b16 %v467
      %v1419 = vunpack.c.l.b16 %v468
      %v1420 = vunpack.c.l.b16 %v469
      %v1421 = vunpack.c.l.b16 %v470
      %v1422 = vunpack.c.l.b16 %v471
      %v1423 = vunpack.c.l.b16 %v472
      %v1424 = vunpack.c.l.b16 %v473
      %v1425 = vunpack.c.l.b16 %v474
      %v1426 = vunpack.c.l.b16 %v475
      %v1427 = vunpack.c.l.b16 %v476
      %v1428 = vunpack.c.l.b16 %v477
      %v1429 = vunpack.c.l.b16 %v478
      %v1430 = vunpack.c.l.b16 %v479
      %v1431 = vunpack.c.l.b16 %v480
      %v1432 = vunpack.c.l.b16 %v481
      %v1433 = vunpack.c.l.b16 %v482
      %v1434 = vunpack.c.l.b16 %v483
      %v1435 = vunpack.c.l.b16 %v484
      %v1436 = vunpack.c.l.b16 %v485
      %v1437 = vunpack.c.l.b16 %v486
      %v1438 = vunpack.c.l.b16 %v487
      %v1439 = vunpack.c.l.b16 %v488
      %v1440 = vunpack.c.l.b16 %v489
      %v1441 = vunpack.c.l.b16 %v490
      %v1442 = vpack.c.b16 %v1371, %v1370
      %v1443 = vpack.c.b16 %v1373, %v1372
      %v1444 = vpack.c.b16 %v1375, %v1374
      %v1445 = vpack.c.b16 %v1377, %v1376
      %v1446 = vpack.c.b16 %v1379, %v1378
      %v1447 = vpack.c.b16 %v1381, %v1380
      %v1448 = vpack.c.b16 %v1383, %v1382
      %v1449 = vpack.c.b16 %v1385, %v1384
      %v1450 = vpack.c.b16 %v1387, %v1386
      %v1451 = vpack.c.b16 %v1389, %v1388
      %v1452 = vpack.c.b16 %v1391, %v1390
      %v1453 = vpack.c.b16 %v1393, %v1392
      %v1454 = vpack.c.b16 %v1395, %v1394
      %v1455 = vpack.c.b16 %v1397, %v1396
      %v1456 = vpack.c.b16 %v1399, %v1398
      %v1457 = vpack.c.b16 %v1401, %v1400
      %v1458 = vpack.c.b16 %v1403, %v1402
      %v1459 = vpack.c.b16 %v1405, %v1404
      %v1460 = vpack.c.b16 %v1407, %v1406
      %v1461 = vpack.c.b16 %v1409, %v1408
      %v1462 = vpack.c.b16 %v1411, %v1410
      %v1463 = vpack.c.b16 %v1413, %v1412
      %v1464 = vpack.c.b16 %v1415, %v1414
      %v1465 = vpack.c.b16 %v1417, %v1416
      %v1466 = vpack.c.b16 %v1419, %v1418
      %v1467 = vpack.c.b16 %v1421, %v1420
      %v1468 = vpack.c.b16 %v1423, %v1422
      %v1469 = vpack.c.b16 %v1425, %v1424
      %v1470 = vpack.c.b16 %v1427, %v1426
      %v1471 = vpack.c.b16 %v1429, %v1428
      %v1472 = vpack.c.b16 %v1431, %v1430
      %v1473 = vpack.c.b16 %v1433, %v1432
      %v1474 = vpack.c.b16 %v1435, %v1434
      %v1475 = vpack.c.b16 %v1437, %v1436
      %v1476 = vpack.c.b16 %v1439, %v1438
      %v1477 = vpack.c.b16 %v1441, %v1440
      %vm1514 = vcmask 523264
      %v1516 = vsel %vm1514, %v1014, 0
      %v1519 = vsel %vm1514, %v1019, 0
      %v1522 = vsel %vm1514, %v1024, 0
      %v1525 = vsel %vm1514, %v1029, 0
      %v1528 = vsel %vm1514, %v1034, 0
      %v1531 = vsel %vm1514, %v1039, 0
      %v1534 = vsel %vm1514, %v1044, 0
      %v1537 = vsel %vm1514, %v1049, 0
      %v1540 = vsel %vm1514, %v1054, 0
      %v1543 = vsel %vm1514, %v1059, 0
      %v1546 = vsel %vm1514, %v1064, 0
      %v1549 = vsel %vm1514, %v1069, 0
      %v1552 = vsel %vm1514, %v1074, 0
      %v1555 = vsel %vm1514, %v1079, 0
      %v1558 = vsel %vm1514, %v1084, 0
      %v1561 = vsel %vm1514, %v1089, 0
      %v1564 = vsel %vm1514, %v1094, 0
      %v1567 = vsel %vm1514, %v1099, 0
      %v1570 = vsel %vm1514, %v1104, 0
      %v1573 = vsel %vm1514, %v1109, 0
      %v1576 = vsel %vm1514, %v1114, 0
      %v1579 = vsel %vm1514, %v1119, 0
      %v1582 = vsel %vm1514, %v1124, 0
      %v1585 = vsel %vm1514, %v1129, 0
      %v1588 = vsel %vm1514, %v1134, 0
      %v1591 = vsel %vm1514, %v1139, 0
      %v1594 = vsel %vm1514, %v1144, 0
      %v1597 = vsel %vm1514, %v1149, 0
      %v1600 = vsel %vm1514, %v1154, 0
      %v1603 = vsel %vm1514, %v1159, 0
      %v1606 = vsel %vm1514, %v1164, 0
      %v1609 = vsel %vm1514, %v1169, 0
      %1611 = vmatprep.subr.bf16.mxu0 0
      %1612 = vmatpush1.bf16.msra.mxu0 %v1442
      %1613 = vmatprep.subr.bf16.mxu0 0
      %1614 = vmatpush1.bf16.msra.mxu0 %v1443
      %1615 = vmatprep.subr.bf16.mxu0 0
      %1616 = vmatpush1.bf16.msra.mxu0 %v1444
      %1617 = vmatprep.subr.bf16.mxu0 0
      %1618 = vmatpush1.bf16.msra.mxu0 %v1445
      %1619 = vmatprep.subr.bf16.mxu0 0
      %1620 = vmatpush1.bf16.msra.mxu0 %v1446
      %1621 = vmatprep.subr.bf16.mxu0 0
      %1622 = vmatpush1.bf16.msra.mxu0 %v1447
      %1623 = vmatprep.subr.bf16.mxu0 0
      %1624 = vmatpush1.bf16.msra.mxu0 %v1448
      %1625 = vmatprep.subr.bf16.mxu0 0
      %1626 = vmatpush1.bf16.msra.mxu0 %v1449
      %1627 = vmatprep.subr.bf16.mxu0 0
      %1628 = vmatpush1.bf16.msra.mxu0 %v1450
      %1629 = vmatprep.subr.bf16.mxu0 0
      %1630 = vmatpush1.bf16.msra.mxu0 %v1451
      %1631 = vmatprep.subr.bf16.mxu0 0
      %1632 = vmatpush1.bf16.msra.mxu0 %v1452
      %1633 = vmatprep.subr.bf16.mxu0 0
      %1634 = vmatpush1.bf16.msra.mxu0 %v1453
      %1635 = vmatprep.subr.bf16.mxu0 0
      %1636 = vmatpush1.bf16.msra.mxu0 %v1454
      %1637 = vmatprep.subr.bf16.mxu0 0
      %1638 = vmatpush1.bf16.msra.mxu0 %v1455
      %1639 = vmatprep.subr.bf16.mxu0 0
      %1640 = vmatpush1.bf16.msra.mxu0 %v1456
      %1641 = vmatprep.subr.bf16.mxu0 0
      %1642 = vmatpush1.bf16.msra.mxu0 %v1457
      %1643 = vmatprep.mubr.bf16.mxu0 %v1011
      %1644 = vmatmul.mubr.bf16.gmra.mrb[0].mxu0 %v1010
      %v1645 = vpop.f32.mrb[0].mxu0
      %v1646 = vadd.f32 %v496, %v1645
      %v1647 = vpop.f32.mrb[0].mxu0
      %v1648 = vpop.f32.mrb[0].mxu0
      %v1649 = vadd.f32 %v496, %v1648
      %v1650 = vpop.f32.mrb[0].mxu0
      %1651 = vmatprep.mubr.bf16.mxu0 %v1016
      %1652 = vmatmul.mubr.bf16.gmra.mrb[0].mxu0 %v1015
      %v1653 = vpop.f32.mrb[0].mxu0
      %v1654 = vadd.f32 %v496, %v1653
      %v1655 = vpop.f32.mrb[0].mxu0
      %v1656 = vpop.f32.mrb[0].mxu0
      %v1657 = vadd.f32 %v496, %v1656
      %v1658 = vpop.f32.mrb[0].mxu0
      %1659 = vmatprep.mubr.bf16.mxu0 %v1021
      %1660 = vmatmul.mubr.bf16.gmra.mrb[0].mxu0 %v1020
      %v1661 = vpop.f32.mrb[0].mxu0
      %v1662 = vadd.f32 %v496, %v1661
      %v1663 = vpop.f32.mrb[0].mxu0
      %v1664 = vpop.f32.mrb[0].mxu0
      %v1665 = vadd.f32 %v496, %v1664
      %v1666 = vpop.f32.mrb[0].mxu0
      %1667 = vmatprep.mubr.bf16.mxu0 %v1026
      %1668 = vmatmul.mubr.bf16.gmra.mrb[0].mxu0 %v1025
      %v1669 = vpop.f32.mrb[0].mxu0
      %v1670 = vadd.f32 %v496, %v1669
      %v1671 = vpop.f32.mrb[0].mxu0
      %v1672 = vpop.f32.mrb[0].mxu0
      %v1673 = vadd.f32 %v496, %v1672
      %v1674 = vpop.f32.mrb[0].mxu0
      %1675 = vmatprep.mubr.bf16.mxu0 %v1031
      %1676 = vmatmul.mubr.bf16.gmra.mrb[0].mxu0 %v1030
      %v1677 = vpop.f32.mrb[0].mxu0
      %v1678 = vadd.f32 %v496, %v1677
      %v1679 = vpop.f32.mrb[0].mxu0
      %v1680 = vpop.f32.mrb[0].mxu0
      %v1681 = vadd.f32 %v496, %v1680
      %v1682 = vpop.f32.mrb[0].mxu0
      %1683 = vmatprep.mubr.bf16.mxu0 %v1036
      %1684 = vmatmul.mubr.bf16.gmra.mrb[0].mxu0 %v1035
      %v1685 = vpop.f32.mrb[0].mxu0
      %v1686 = vadd.f32 %v496, %v1685
      %v1687 = vpop.f32.mrb[0].mxu0
      %v1688 = vpop.f32.mrb[0].mxu0
      %v1689 = vadd.f32 %v496, %v1688
      %v1690 = vpop.f32.mrb[0].mxu0
      %1691 = vmatprep.mubr.bf16.mxu0 %v1041
      %1692 = vmatmul.mubr.bf16.gmra.mrb[0].mxu0 %v1040
      %v1693 = vpop.f32.mrb[0].mxu0
      %v1694 = vadd.f32 %v496, %v1693
      %v1695 = vpop.f32.mrb[0].mxu0
      %v1696 = vpop.f32.mrb[0].mxu0
      %v1697 = vadd.f32 %v496, %v1696
      %v1698 = vpop.f32.mrb[0].mxu0
      %1699 = vmatprep.mubr.bf16.mxu0 %v1046
      %1700 = vmatmul.mubr.bf16.gmra.mrb[0].mxu0 %v1045
      %v1701 = vpop.f32.mrb[0].mxu0
      %v1702 = vadd.f32 %v496, %v1701
      %v1703 = vpop.f32.mrb[0].mxu0
      %v1704 = vpop.f32.mrb[0].mxu0
      %v1705 = vadd.f32 %v496, %v1704
      %v1706 = vpop.f32.mrb[0].mxu0
      %1707 = vmatprep.mubr.bf16.mxu0 %v1051
      %1708 = vmatmul.mubr.bf16.gmra.mrb[0].mxu0 %v1050
      %v1709 = vpop.f32.mrb[0].mxu0
      %v1710 = vadd.f32 %v496, %v1709
      %v1711 = vpop.f32.mrb[0].mxu0
      %v1712 = vpop.f32.mrb[0].mxu0
      %v1713 = vadd.f32 %v496, %v1712
      %v1714 = vpop.f32.mrb[0].mxu0
      %1715 = vmatprep.mubr.bf16.mxu0 %v1056
      %1716 = vmatmul.mubr.bf16.gmra.mrb[0].mxu0 %v1055
      %v1717 = vpop.f32.mrb[0].mxu0
      %v1718 = vadd.f32 %v496, %v1717
      %v1719 = vpop.f32.mrb[0].mxu0
      %v1720 = vpop.f32.mrb[0].mxu0
      %v1721 = vadd.f32 %v496, %v1720
      %v1722 = vpop.f32.mrb[0].mxu0
      %1723 = vmatprep.mubr.bf16.mxu0 %v1061
      %1724 = vmatmul.mubr.bf16.gmra.mrb[0].mxu0 %v1060
      %v1725 = vpop.f32.mrb[0].mxu0
      %v1726 = vadd.f32 %v496, %v1725
      %v1727 = vpop.f32.mrb[0].mxu0
      %v1728 = vpop.f32.mrb[0].mxu0
      %v1729 = vadd.f32 %v496, %v1728
      %v1730 = vpop.f32.mrb[0].mxu0
      %1731 = vmatprep.mubr.bf16.mxu0 %v1066
      %1732 = vmatmul.mubr.bf16.gmra.mrb[0].mxu0 %v1065
      %v1733 = vpop.f32.mrb[0].mxu0
      %v1734 = vadd.f32 %v496, %v1733
      %v1735 = vpop.f32.mrb[0].mxu0
      %v1736 = vpop.f32.mrb[0].mxu0
      %v1737 = vadd.f32 %v496, %v1736
      %v1738 = vpop.f32.mrb[0].mxu0
      %1739 = vmatprep.mubr.bf16.mxu0 %v1071
      %1740 = vmatmul.mubr.bf16.gmra.mrb[0].mxu0 %v1070
      %v1741 = vpop.f32.mrb[0].mxu0
      %v1742 = vadd.f32 %v496, %v1741
      %v1743 = vpop.f32.mrb[0].mxu0
      %v1744 = vpop.f32.mrb[0].mxu0
      %v1745 = vadd.f32 %v496, %v1744
      %v1746 = vpop.f32.mrb[0].mxu0
      %1747 = vmatprep.mubr.bf16.mxu0 %v1076
      %1748 = vmatmul.mubr.bf16.gmra.mrb[0].mxu0 %v1075
      %v1749 = vpop.f32.mrb[0].mxu0
      %v1750 = vadd.f32 %v496, %v1749
      %v1751 = vpop.f32.mrb[0].mxu0
      %v1752 = vpop.f32.mrb[0].mxu0
      %v1753 = vadd.f32 %v496, %v1752
      %v1754 = vpop.f32.mrb[0].mxu0
      %1755 = vmatprep.mubr.bf16.mxu0 %v1081
      %1756 = vmatmul.mubr.bf16.gmra.mrb[0].mxu0 %v1080
      %v1757 = vpop.f32.mrb[0].mxu0
      %v1758 = vadd.f32 %v496, %v1757
      %v1759 = vpop.f32.mrb[0].mxu0
      %v1760 = vpop.f32.mrb[0].mxu0
      %v1761 = vadd.f32 %v496, %v1760
      %v1762 = vpop.f32.mrb[0].mxu0
      %1763 = vmatprep.mubr.bf16.mxu0 %v1086
      %1764 = vmatmul.mubr.bf16.gmra.mrb[0].mxu0 %v1085
      %v1765 = vpop.f32.mrb[0].mxu0
      %v1766 = vadd.f32 %v496, %v1765
      %v1767 = vpop.f32.mrb[0].mxu0
      %v1768 = vpop.f32.mrb[0].mxu0
      %v1769 = vadd.f32 %v496, %v1768
      %v1770 = vpop.f32.mrb[0].mxu0
      %1771 = vmatprep.mubr.bf16.mxu0 %v1091
      %1772 = vmatmul.mubr.bf16.gmra.mrb[0].mxu0 %v1090
      %v1773 = vpop.f32.mrb[0].mxu0
      %v1774 = vadd.f32 %v496, %v1773
      %v1775 = vpop.f32.mrb[0].mxu0
      %v1776 = vpop.f32.mrb[0].mxu0
      %v1777 = vadd.f32 %v496, %v1776
      %v1778 = vpop.f32.mrb[0].mxu0
      %1779 = vmatprep.mubr.bf16.mxu0 %v1096
      %1780 = vmatmul.mubr.bf16.gmra.mrb[0].mxu0 %v1095
      %v1781 = vpop.f32.mrb[0].mxu0
      %v1782 = vadd.f32 %v496, %v1781
      %v1783 = vpop.f32.mrb[0].mxu0
      %v1784 = vpop.f32.mrb[0].mxu0
      %v1785 = vadd.f32 %v496, %v1784
      %v1786 = vpop.f32.mrb[0].mxu0
      %1787 = vmatprep.mubr.bf16.mxu0 %v1101
      %1788 = vmatmul.mubr.bf16.gmra.mrb[0].mxu0 %v1100
      %v1789 = vpop.f32.mrb[0].mxu0
      %v1790 = vadd.f32 %v496, %v1789
      %v1791 = vpop.f32.mrb[0].mxu0
      %v1792 = vpop.f32.mrb[0].mxu0
      %v1793 = vadd.f32 %v496, %v1792
      %v1794 = vpop.f32.mrb[0].mxu0
      %1795 = vmatprep.mubr.bf16.mxu0 %v1106
      %1796 = vmatmul.mubr.bf16.gmra.mrb[0].mxu0 %v1105
      %v1797 = vpop.f32.mrb[0].mxu0
      %v1798 = vadd.f32 %v496, %v1797
      %v1799 = vpop.f32.mrb[0].mxu0
      %v1800 = vpop.f32.mrb[0].mxu0
      %v1801 = vadd.f32 %v496, %v1800
      %v1802 = vpop.f32.mrb[0].mxu0
      %1803 = vmatprep.mubr.bf16.mxu0 %v1111
      %1804 = vmatmul.mubr.bf16.gmra.mrb[0].mxu0 %v1110
      %v1805 = vpop.f32.mrb[0].mxu0
      %v1806 = vadd.f32 %v496, %v1805
      %v1807 = vpop.f32.mrb[0].mxu0
      %v1808 = vpop.f32.mrb[0].mxu0
      %v1809 = vadd.f32 %v496, %v1808
      %v1810 = vpop.f32.mrb[0].mxu0
      %1811 = vmatprep.mubr.bf16.mxu0 %v1116
      %1812 = vmatmul.mubr.bf16.gmra.mrb[0].mxu0 %v1115
      %v1813 = vpop.f32.mrb[0].mxu0
      %v1814 = vadd.f32 %v496, %v1813
      %v1815 = vpop.f32.mrb[0].mxu0
      %v1816 = vpop.f32.mrb[0].mxu0
      %v1817 = vadd.f32 %v496, %v1816
      %v1818 = vpop.f32.mrb[0].mxu0
      %1819 = vmatprep.mubr.bf16.mxu0 %v1121
      %1820 = vmatmul.mubr.bf16.gmra.mrb[0].mxu0 %v1120
      %v1821 = vpop.f32.mrb[0].mxu0
      %v1822 = vadd.f32 %v496, %v1821
      %v1823 = vpop.f32.mrb[0].mxu0
      %v1824 = vpop.f32.mrb[0].mxu0
      %v1825 = vadd.f32 %v496, %v1824
      %v1826 = vpop.f32.mrb[0].mxu0
      %1827 = vmatprep.mubr.bf16.mxu0 %v1126
      %1828 = vmatmul.mubr.bf16.gmra.mrb[0].mxu0 %v1125
      %v1829 = vpop.f32.mrb[0].mxu0
      %v1830 = vadd.f32 %v496, %v1829
      %v1831 = vpop.f32.mrb[0].mxu0
      %v1832 = vpop.f32.mrb[0].mxu0
      %v1833 = vadd.f32 %v496, %v1832
      %v1834 = vpop.f32.mrb[0].mxu0
      %1835 = vmatprep.mubr.bf16.mxu0 %v1131
      %1836 = vmatmul.mubr.bf16.gmra.mrb[0].mxu0 %v1130
      %v1837 = vpop.f32.mrb[0].mxu0
      %v1838 = vadd.f32 %v496, %v1837
      %v1839 = vpop.f32.mrb[0].mxu0
      %v1840 = vpop.f32.mrb[0].mxu0
      %v1841 = vadd.f32 %v496, %v1840
      %v1842 = vpop.f32.mrb[0].mxu0
      %1843 = vmatprep.mubr.bf16.mxu0 %v1136
      %1844 = vmatmul.mubr.bf16.gmra.mrb[0].mxu0 %v1135
      %v1845 = vpop.f32.mrb[0].mxu0
      %v1846 = vadd.f32 %v496, %v1845
      %v1847 = vpop.f32.mrb[0].mxu0
      %v1848 = vpop.f32.mrb[0].mxu0
      %v1849 = vadd.f32 %v496, %v1848
      %v1850 = vpop.f32.mrb[0].mxu0
      %1851 = vmatprep.mubr.bf16.mxu0 %v1141
      %1852 = vmatmul.mubr.bf16.gmra.mrb[0].mxu0 %v1140
      %v1853 = vpop.f32.mrb[0].mxu0
      %v1854 = vadd.f32 %v496, %v1853
      %v1855 = vpop.f32.mrb[0].mxu0
      %v1856 = vpop.f32.mrb[0].mxu0
      %v1857 = vadd.f32 %v496, %v1856
      %v1858 = vpop.f32.mrb[0].mxu0
      %1859 = vmatprep.mubr.bf16.mxu0 %v1146
      %1860 = vmatmul.mubr.bf16.gmra.mrb[0].mxu0 %v1145
      %v1861 = vpop.f32.mrb[0].mxu0
      %v1862 = vadd.f32 %v496, %v1861
      %v1863 = vpop.f32.mrb[0].mxu0
      %v1864 = vpop.f32.mrb[0].mxu0
      %v1865 = vadd.f32 %v496, %v1864
      %v1866 = vpop.f32.mrb[0].mxu0
      %1867 = vmatprep.mubr.bf16.mxu0 %v1151
      %1868 = vmatmul.mubr.bf16.gmra.mrb[0].mxu0 %v1150
      %v1869 = vpop.f32.mrb[0].mxu0
      %v1870 = vadd.f32 %v496, %v1869
      %v1871 = vpop.f32.mrb[0].mxu0
      %v1872 = vpop.f32.mrb[0].mxu0
      %v1873 = vadd.f32 %v496, %v1872
      %v1874 = vpop.f32.mrb[0].mxu0
      %1875 = vmatprep.mubr.bf16.mxu0 %v1156
      %1876 = vmatmul.mubr.bf16.gmra.mrb[0].mxu0 %v1155
      %v1877 = vpop.f32.mrb[0].mxu0
      %v1878 = vadd.f32 %v496, %v1877
      %v1879 = vpop.f32.mrb[0].mxu0
      %v1880 = vpop.f32.mrb[0].mxu0
      %v1881 = vadd.f32 %v496, %v1880
      %v1882 = vpop.f32.mrb[0].mxu0
      %1883 = vmatprep.mubr.bf16.mxu0 %v1161
      %1884 = vmatmul.mubr.bf16.gmra.mrb[0].mxu0 %v1160
      %v1885 = vpop.f32.mrb[0].mxu0
      %v1886 = vadd.f32 %v496, %v1885
      %v1887 = vpop.f32.mrb[0].mxu0
      %v1888 = vpop.f32.mrb[0].mxu0
      %v1889 = vadd.f32 %v496, %v1888
      %v1890 = vpop.f32.mrb[0].mxu0
      %1891 = vmatprep.mubr.bf16.mxu0 %v1166
      %1892 = vmatmul.mubr.bf16.gmra.mrb[0].mxu0 %v1165
      %v1893 = vpop.f32.mrb[0].mxu0
      %v1894 = vadd.f32 %v496, %v1893
      %v1895 = vpop.f32.mrb[0].mxu0
      %v1896 = vpop.f32.mrb[0].mxu0
      %v1897 = vadd.f32 %v496, %v1896
      %v1898 = vpop.f32.mrb[0].mxu0
      %1899 = vdwg.mxu0
      %1900 = vmatprep.subr.bf16.mxu0 0
      %1901 = vmatpush1.bf16.msra.mxu0 %v1458
      %1902 = vmatprep.subr.bf16.mxu0 0
      %1903 = vmatpush1.bf16.msra.mxu0 %v1459
      %1904 = vmatprep.subr.bf16.mxu0 0
      %1905 = vmatpush1.bf16.msra.mxu0 %v1460
      %1906 = vmatprep.subr.bf16.mxu0 0
      %1907 = vmatpush1.bf16.msra.mxu0 %v1461
      %1908 = vmatprep.subr.bf16.mxu0 0
      %1909 = vmatpush1.bf16.msra.mxu0 %v1462
      %1910 = vmatprep.subr.bf16.mxu0 0
      %1911 = vmatpush1.bf16.msra.mxu0 %v1463
      %1912 = vmatprep.subr.bf16.mxu0 0
      %1913 = vmatpush1.bf16.msra.mxu0 %v1464
      %1914 = vmatprep.subr.bf16.mxu0 0
      %1915 = vmatpush1.bf16.msra.mxu0 %v1465
      %1916 = vmatprep.subr.bf16.mxu0 0
      %1917 = vmatpush1.bf16.msra.mxu0 %v1466
      %1918 = vmatprep.subr.bf16.mxu0 0
      %1919 = vmatpush1.bf16.msra.mxu0 %v1467
      %1920 = vmatprep.subr.bf16.mxu0 0
      %1921 = vmatpush1.bf16.msra.mxu0 %v1468
      %1922 = vmatprep.subr.bf16.mxu0 0
      %1923 = vmatpush1.bf16.msra.mxu0 %v1469
      %1924 = vmatprep.subr.bf16.mxu0 0
      %1925 = vmatpush1.bf16.msra.mxu0 %v1470
      %1926 = vmatprep.subr.bf16.mxu0 0
      %1927 = vmatpush1.bf16.msra.mxu0 %v1471
      %1928 = vmatprep.subr.bf16.mxu0 0
      %1929 = vmatpush1.bf16.msra.mxu0 %v1472
      %1930 = vmatprep.subr.bf16.mxu0 0
      %1931 = vmatpush1.bf16.msra.mxu0 %v1473
      %1932 = vmatprep.mubr.bf16.mxu0 %v1013
      %1933 = vmatmul.mubr.bf16.gmra.mrb[0].mxu0 %v1012
      %v1934 = vpop.f32.mrb[0].mxu0
      %v1935 = vadd.f32 %v1646, %v1934
      %v1936 = vpop.f32.mrb[0].mxu0
      %v1937 = vpop.f32.mrb[0].mxu0
      %v1938 = vadd.f32 %v1649, %v1937
      %v1939 = vpop.f32.mrb[0].mxu0
      %1940 = vmatprep.mubr.bf16.mxu0 %v1018
      %1941 = vmatmul.mubr.bf16.gmra.mrb[0].mxu0 %v1017
      %v1942 = vpop.f32.mrb[0].mxu0
      %v1943 = vadd.f32 %v1654, %v1942
      %v1944 = vpop.f32.mrb[0].mxu0
      %v1945 = vpop.f32.mrb[0].mxu0
      %v1946 = vadd.f32 %v1657, %v1945
      %v1947 = vpop.f32.mrb[0].mxu0
      %1948 = vmatprep.mubr.bf16.mxu0 %v1023
      %1949 = vmatmul.mubr.bf16.gmra.mrb[0].mxu0 %v1022
      %v1950 = vpop.f32.mrb[0].mxu0
      %v1951 = vadd.f32 %v1662, %v1950
      %v1952 = vpop.f32.mrb[0].mxu0
      %v1953 = vpop.f32.mrb[0].mxu0
      %v1954 = vadd.f32 %v1665, %v1953
      %v1955 = vpop.f32.mrb[0].mxu0
      %1956 = vmatprep.mubr.bf16.mxu0 %v1028
      %1957 = vmatmul.mubr.bf16.gmra.mrb[0].mxu0 %v1027
      %v1958 = vpop.f32.mrb[0].mxu0
      %v1959 = vadd.f32 %v1670, %v1958
      %v1960 = vpop.f32.mrb[0].mxu0
      %v1961 = vpop.f32.mrb[0].mxu0
      %v1962 = vadd.f32 %v1673, %v1961
      %v1963 = vpop.f32.mrb[0].mxu0
      %1964 = vmatprep.mubr.bf16.mxu0 %v1033
      %1965 = vmatmul.mubr.bf16.gmra.mrb[0].mxu0 %v1032
      %v1966 = vpop.f32.mrb[0].mxu0
      %v1967 = vadd.f32 %v1678, %v1966
      %v1968 = vpop.f32.mrb[0].mxu0
      %v1969 = vpop.f32.mrb[0].mxu0
      %v1970 = vadd.f32 %v1681, %v1969
      %v1971 = vpop.f32.mrb[0].mxu0
      %1972 = vmatprep.mubr.bf16.mxu0 %v1038
      %1973 = vmatmul.mubr.bf16.gmra.mrb[0].mxu0 %v1037
      %v1974 = vpop.f32.mrb[0].mxu0
      %v1975 = vadd.f32 %v1686, %v1974
      %v1976 = vpop.f32.mrb[0].mxu0
      %v1977 = vpop.f32.mrb[0].mxu0
      %v1978 = vadd.f32 %v1689, %v1977
      %v1979 = vpop.f32.mrb[0].mxu0
      %1980 = vmatprep.mubr.bf16.mxu0 %v1043
      %1981 = vmatmul.mubr.bf16.gmra.mrb[0].mxu0 %v1042
      %v1982 = vpop.f32.mrb[0].mxu0
      %v1983 = vadd.f32 %v1694, %v1982
      %v1984 = vpop.f32.mrb[0].mxu0
      %v1985 = vpop.f32.mrb[0].mxu0
      %v1986 = vadd.f32 %v1697, %v1985
      %v1987 = vpop.f32.mrb[0].mxu0
      %1988 = vmatprep.mubr.bf16.mxu0 %v1048
      %1989 = vmatmul.mubr.bf16.gmra.mrb[0].mxu0 %v1047
      %v1990 = vpop.f32.mrb[0].mxu0
      %v1991 = vadd.f32 %v1702, %v1990
      %v1992 = vpop.f32.mrb[0].mxu0
      %v1993 = vpop.f32.mrb[0].mxu0
      %v1994 = vadd.f32 %v1705, %v1993
      %v1995 = vpop.f32.mrb[0].mxu0
      %1996 = vmatprep.mubr.bf16.mxu0 %v1053
      %1997 = vmatmul.mubr.bf16.gmra.mrb[0].mxu0 %v1052
      %v1998 = vpop.f32.mrb[0].mxu0
      %v1999 = vadd.f32 %v1710, %v1998
      %v2000 = vpop.f32.mrb[0].mxu0
      %v2001 = vpop.f32.mrb[0].mxu0
      %v2002 = vadd.f32 %v1713, %v2001
      %v2003 = vpop.f32.mrb[0].mxu0
      %2004 = vmatprep.mubr.bf16.mxu0 %v1058
      %2005 = vmatmul.mubr.bf16.gmra.mrb[0].mxu0 %v1057
      %v2006 = vpop.f32.mrb[0].mxu0
      %v2007 = vadd.f32 %v1718, %v2006
      %v2008 = vpop.f32.mrb[0].mxu0
      %v2009 = vpop.f32.mrb[0].mxu0
      %v2010 = vadd.f32 %v1721, %v2009
      %v2011 = vpop.f32.mrb[0].mxu0
      %2012 = vmatprep.mubr.bf16.mxu0 %v1063
      %2013 = vmatmul.mubr.bf16.gmra.mrb[0].mxu0 %v1062
      %v2014 = vpop.f32.mrb[0].mxu0
      %v2015 = vadd.f32 %v1726, %v2014
      %v2016 = vpop.f32.mrb[0].mxu0
      %v2017 = vpop.f32.mrb[0].mxu0
      %v2018 = vadd.f32 %v1729, %v2017
      %v2019 = vpop.f32.mrb[0].mxu0
      %2020 = vmatprep.mubr.bf16.mxu0 %v1068
      %2021 = vmatmul.mubr.bf16.gmra.mrb[0].mxu0 %v1067
      %v2022 = vpop.f32.mrb[0].mxu0
      %v2023 = vadd.f32 %v1734, %v2022
      %v2024 = vpop.f32.mrb[0].mxu0
      %v2025 = vpop.f32.mrb[0].mxu0
      %v2026 = vadd.f32 %v1737, %v2025
      %v2027 = vpop.f32.mrb[0].mxu0
      %2028 = vmatprep.mubr.bf16.mxu0 %v1073
      %2029 = vmatmul.mubr.bf16.gmra.mrb[0].mxu0 %v1072
      %v2030 = vpop.f32.mrb[0].mxu0
      %v2031 = vadd.f32 %v1742, %v2030
      %v2032 = vpop.f32.mrb[0].mxu0
      %v2033 = vpop.f32.mrb[0].mxu0
      %v2034 = vadd.f32 %v1745, %v2033
      %v2035 = vpop.f32.mrb[0].mxu0
      %2036 = vmatprep.mubr.bf16.mxu0 %v1078
      %2037 = vmatmul.mubr.bf16.gmra.mrb[0].mxu0 %v1077
      %v2038 = vpop.f32.mrb[0].mxu0
      %v2039 = vadd.f32 %v1750, %v2038
      %v2040 = vpop.f32.mrb[0].mxu0
      %v2041 = vpop.f32.mrb[0].mxu0
      %v2042 = vadd.f32 %v1753, %v2041
      %v2043 = vpop.f32.mrb[0].mxu0
      %2044 = vmatprep.mubr.bf16.mxu0 %v1083
      %2045 = vmatmul.mubr.bf16.gmra.mrb[0].mxu0 %v1082
      %v2046 = vpop.f32.mrb[0].mxu0
      %v2047 = vadd.f32 %v1758, %v2046
      %v2048 = vpop.f32.mrb[0].mxu0
      %v2049 = vpop.f32.mrb[0].mxu0
      %v2050 = vadd.f32 %v1761, %v2049
      %v2051 = vpop.f32.mrb[0].mxu0
      %2052 = vmatprep.mubr.bf16.mxu0 %v1088
      %2053 = vmatmul.mubr.bf16.gmra.mrb[0].mxu0 %v1087
      %v2054 = vpop.f32.mrb[0].mxu0
      %v2055 = vadd.f32 %v1766, %v2054
      %v2056 = vpop.f32.mrb[0].mxu0
      %v2057 = vpop.f32.mrb[0].mxu0
      %v2058 = vadd.f32 %v1769, %v2057
      %v2059 = vpop.f32.mrb[0].mxu0
      %2060 = vmatprep.mubr.bf16.mxu0 %v1093
      %2061 = vmatmul.mubr.bf16.gmra.mrb[0].mxu0 %v1092
      %v2062 = vpop.f32.mrb[0].mxu0
      %v2063 = vadd.f32 %v1774, %v2062
      %v2064 = vpop.f32.mrb[0].mxu0
      %v2065 = vpop.f32.mrb[0].mxu0
      %v2066 = vadd.f32 %v1777, %v2065
      %v2067 = vpop.f32.mrb[0].mxu0
      %2068 = vmatprep.mubr.bf16.mxu0 %v1098
      %2069 = vmatmul.mubr.bf16.gmra.mrb[0].mxu0 %v1097
      %v2070 = vpop.f32.mrb[0].mxu0
      %v2071 = vadd.f32 %v1782, %v2070
      %v2072 = vpop.f32.mrb[0].mxu0
      %v2073 = vpop.f32.mrb[0].mxu0
      %v2074 = vadd.f32 %v1785, %v2073
      %v2075 = vpop.f32.mrb[0].mxu0
      %2076 = vmatprep.mubr.bf16.mxu0 %v1103
      %2077 = vmatmul.mubr.bf16.gmra.mrb[0].mxu0 %v1102
      %v2078 = vpop.f32.mrb[0].mxu0
      %v2079 = vadd.f32 %v1790, %v2078
      %v2080 = vpop.f32.mrb[0].mxu0
      %v2081 = vpop.f32.mrb[0].mxu0
      %v2082 = vadd.f32 %v1793, %v2081
      %v2083 = vpop.f32.mrb[0].mxu0
      %2084 = vmatprep.mubr.bf16.mxu0 %v1108
      %2085 = vmatmul.mubr.bf16.gmra.mrb[0].mxu0 %v1107
      %v2086 = vpop.f32.mrb[0].mxu0
      %v2087 = vadd.f32 %v1798, %v2086
      %v2088 = vpop.f32.mrb[0].mxu0
      %v2089 = vpop.f32.mrb[0].mxu0
      %v2090 = vadd.f32 %v1801, %v2089
      %v2091 = vpop.f32.mrb[0].mxu0
      %2092 = vmatprep.mubr.bf16.mxu0 %v1113
      %2093 = vmatmul.mubr.bf16.gmra.mrb[0].mxu0 %v1112
      %v2094 = vpop.f32.mrb[0].mxu0
      %v2095 = vadd.f32 %v1806, %v2094
      %v2096 = vpop.f32.mrb[0].mxu0
      %v2097 = vpop.f32.mrb[0].mxu0
      %v2098 = vadd.f32 %v1809, %v2097
      %v2099 = vpop.f32.mrb[0].mxu0
      %2100 = vmatprep.mubr.bf16.mxu0 %v1118
      %2101 = vmatmul.mubr.bf16.gmra.mrb[0].mxu0 %v1117
      %v2102 = vpop.f32.mrb[0].mxu0
      %v2103 = vadd.f32 %v1814, %v2102
      %v2104 = vpop.f32.mrb[0].mxu0
      %v2105 = vpop.f32.mrb[0].mxu0
      %v2106 = vadd.f32 %v1817, %v2105
      %v2107 = vpop.f32.mrb[0].mxu0
      %2108 = vmatprep.mubr.bf16.mxu0 %v1123
      %2109 = vmatmul.mubr.bf16.gmra.mrb[0].mxu0 %v1122
      %v2110 = vpop.f32.mrb[0].mxu0
      %v2111 = vadd.f32 %v1822, %v2110
      %v2112 = vpop.f32.mrb[0].mxu0
      %v2113 = vpop.f32.mrb[0].mxu0
      %v2114 = vadd.f32 %v1825, %v2113
      %v2115 = vpop.f32.mrb[0].mxu0
      %2116 = vmatprep.mubr.bf16.mxu0 %v1128
      %2117 = vmatmul.mubr.bf16.gmra.mrb[0].mxu0 %v1127
      %v2118 = vpop.f32.mrb[0].mxu0
      %v2119 = vadd.f32 %v1830, %v2118
      %v2120 = vpop.f32.mrb[0].mxu0
      %v2121 = vpop.f32.mrb[0].mxu0
      %v2122 = vadd.f32 %v1833, %v2121
      %v2123 = vpop.f32.mrb[0].mxu0
      %2124 = vmatprep.mubr.bf16.mxu0 %v1133
      %2125 = vmatmul.mubr.bf16.gmra.mrb[0].mxu0 %v1132
      %v2126 = vpop.f32.mrb[0].mxu0
      %v2127 = vadd.f32 %v1838, %v2126
      %v2128 = vpop.f32.mrb[0].mxu0
      %v2129 = vpop.f32.mrb[0].mxu0
      %v2130 = vadd.f32 %v1841, %v2129
      %v2131 = vpop.f32.mrb[0].mxu0
      %2132 = vmatprep.mubr.bf16.mxu0 %v1138
      %2133 = vmatmul.mubr.bf16.gmra.mrb[0].mxu0 %v1137
      %v2134 = vpop.f32.mrb[0].mxu0
      %v2135 = vadd.f32 %v1846, %v2134
      %v2136 = vpop.f32.mrb[0].mxu0
      %v2137 = vpop.f32.mrb[0].mxu0
      %v2138 = vadd.f32 %v1849, %v2137
      %v2139 = vpop.f32.mrb[0].mxu0
      %2140 = vmatprep.mubr.bf16.mxu0 %v1143
      %2141 = vmatmul.mubr.bf16.gmra.mrb[0].mxu0 %v1142
      %v2142 = vpop.f32.mrb[0].mxu0
      %v2143 = vadd.f32 %v1854, %v2142
      %v2144 = vpop.f32.mrb[0].mxu0
      %v2145 = vpop.f32.mrb[0].mxu0
      %v2146 = vadd.f32 %v1857, %v2145
      %v2147 = vpop.f32.mrb[0].mxu0
      %2148 = vmatprep.mubr.bf16.mxu0 %v1148
      %2149 = vmatmul.mubr.bf16.gmra.mrb[0].mxu0 %v1147
      %v2150 = vpop.f32.mrb[0].mxu0
      %v2151 = vadd.f32 %v1862, %v2150
      %v2152 = vpop.f32.mrb[0].mxu0
      %v2153 = vpop.f32.mrb[0].mxu0
      %v2154 = vadd.f32 %v1865, %v2153
      %v2155 = vpop.f32.mrb[0].mxu0
      %2156 = vmatprep.mubr.bf16.mxu0 %v1153
      %2157 = vmatmul.mubr.bf16.gmra.mrb[0].mxu0 %v1152
      %v2158 = vpop.f32.mrb[0].mxu0
      %v2159 = vadd.f32 %v1870, %v2158
      %v2160 = vpop.f32.mrb[0].mxu0
      %v2161 = vpop.f32.mrb[0].mxu0
      %v2162 = vadd.f32 %v1873, %v2161
      %v2163 = vpop.f32.mrb[0].mxu0
      %2164 = vmatprep.mubr.bf16.mxu0 %v1158
      %2165 = vmatmul.mubr.bf16.gmra.mrb[0].mxu0 %v1157
      %v2166 = vpop.f32.mrb[0].mxu0
      %v2167 = vadd.f32 %v1878, %v2166
      %v2168 = vpop.f32.mrb[0].mxu0
      %v2169 = vpop.f32.mrb[0].mxu0
      %v2170 = vadd.f32 %v1881, %v2169
      %v2171 = vpop.f32.mrb[0].mxu0
      %2172 = vmatprep.mubr.bf16.mxu0 %v1163
      %2173 = vmatmul.mubr.bf16.gmra.mrb[0].mxu0 %v1162
      %v2174 = vpop.f32.mrb[0].mxu0
      %v2175 = vadd.f32 %v1886, %v2174
      %v2176 = vpop.f32.mrb[0].mxu0
      %v2177 = vpop.f32.mrb[0].mxu0
      %v2178 = vadd.f32 %v1889, %v2177
      %v2179 = vpop.f32.mrb[0].mxu0
      %2180 = vmatprep.mubr.bf16.mxu0 %v1168
      %2181 = vmatmul.mubr.bf16.gmra.mrb[0].mxu0 %v1167
      %v2182 = vpop.f32.mrb[0].mxu0
      %v2183 = vadd.f32 %v1894, %v2182
      %v2184 = vpop.f32.mrb[0].mxu0
      %v2185 = vpop.f32.mrb[0].mxu0
      %v2186 = vadd.f32 %v1897, %v2185
      %v2187 = vpop.f32.mrb[0].mxu0
      %2188 = vdwg.mxu0
      %2189 = vmatprep.subr.bf16.mxu0 0
      %2190 = vmatpush1.bf16.msra.mxu0 %v1474
      %2191 = vmatprep.subr.bf16.mxu0 0
      %2192 = vmatpush1.bf16.msra.mxu0 %v1475
      %2193 = vmatprep.subr.bf16.mxu0 0
      %2194 = vmatpush1.bf16.msra.mxu0 %v1476
      %2195 = vmatprep.subr.bf16.mxu0 0
      %2196 = vmatpush1.bf16.msra.mxu0 %v1477
      %2197 = vmatprep.subr.bf16.mxu0 0
      %2198 = vmatpush1.bf16.msra.mxu0 0
      %2199 = vmatprep.subr.bf16.mxu0 0
      %2200 = vmatpush1.bf16.msra.mxu0 0
      %2201 = vmatprep.subr.bf16.mxu0 0
      %2202 = vmatpush1.bf16.msra.mxu0 0
      %2203 = vmatprep.subr.bf16.mxu0 0
      %2204 = vmatpush1.bf16.msra.mxu0 0
      %2205 = vmatprep.subr.bf16.mxu0 0
      %2206 = vmatpush1.bf16.msra.mxu0 0
      %2207 = vmatprep.subr.bf16.mxu0 0
      %2208 = vmatpush1.bf16.msra.mxu0 0
      %2209 = vmatprep.subr.bf16.mxu0 0
      %2210 = vmatpush1.bf16.msra.mxu0 0
      %2211 = vmatprep.subr.bf16.mxu0 0
      %2212 = vmatpush1.bf16.msra.mxu0 0
      %2213 = vmatprep.subr.bf16.mxu0 0
      %2214 = vmatpush1.bf16.msra.mxu0 0
      %2215 = vmatprep.subr.bf16.mxu0 0
      %2216 = vmatpush1.bf16.msra.mxu0 0
      %2217 = vmatprep.subr.bf16.mxu0 0
      %2218 = vmatpush1.bf16.msra.mxu0 0
      %2219 = vmatprep.subr.bf16.mxu0 0
      %2220 = vmatpush1.bf16.msra.mxu0 0
      %2221 = vmatprep.mubr.bf16.mxu0 0
      %2222 = vmatmul.mubr.bf16.gmra.mrb[0].mxu0 %v1516
      %v2223 = vpop.f32.mrb[0].mxu0
      %v2224 = vadd.f32 %v1935, %v2223
      %v2225 = vpop.f32.mrb[0].mxu0
      %v2226 = vpop.f32.mrb[0].mxu0
      %v2227 = vadd.f32 %v1938, %v2226
      %v2228 = vpop.f32.mrb[0].mxu0
      %2229 = vmatprep.mubr.bf16.mxu0 0
      %2230 = vmatmul.mubr.bf16.gmra.mrb[0].mxu0 %v1519
      %v2231 = vpop.f32.mrb[0].mxu0
      %v2232 = vadd.f32 %v1943, %v2231
      %v2233 = vpop.f32.mrb[0].mxu0
      %v2234 = vpop.f32.mrb[0].mxu0
      %v2235 = vadd.f32 %v1946, %v2234
      %v2236 = vpop.f32.mrb[0].mxu0
      %2237 = vmatprep.mubr.bf16.mxu0 0
      %2238 = vmatmul.mubr.bf16.gmra.mrb[0].mxu0 %v1522
      %v2239 = vpop.f32.mrb[0].mxu0
      %v2240 = vadd.f32 %v1951, %v2239
      %v2241 = vpop.f32.mrb[0].mxu0
      %v2242 = vpop.f32.mrb[0].mxu0
      %v2243 = vadd.f32 %v1954, %v2242
      %v2244 = vpop.f32.mrb[0].mxu0
      %2245 = vmatprep.mubr.bf16.mxu0 0
      %2246 = vmatmul.mubr.bf16.gmra.mrb[0].mxu0 %v1525
      %v2247 = vpop.f32.mrb[0].mxu0
      %v2248 = vadd.f32 %v1959, %v2247
      %v2249 = vpop.f32.mrb[0].mxu0
      %v2250 = vpop.f32.mrb[0].mxu0
      %v2251 = vadd.f32 %v1962, %v2250
      %v2252 = vpop.f32.mrb[0].mxu0
      %2253 = vmatprep.mubr.bf16.mxu0 0
      %2254 = vmatmul.mubr.bf16.gmra.mrb[0].mxu0 %v1528
      %v2255 = vpop.f32.mrb[0].mxu0
      %v2256 = vadd.f32 %v1967, %v2255
      %v2257 = vpop.f32.mrb[0].mxu0
      %v2258 = vpop.f32.mrb[0].mxu0
      %v2259 = vadd.f32 %v1970, %v2258
      %v2260 = vpop.f32.mrb[0].mxu0
      %2261 = vmatprep.mubr.bf16.mxu0 0
      %2262 = vmatmul.mubr.bf16.gmra.mrb[0].mxu0 %v1531
      %v2263 = vpop.f32.mrb[0].mxu0
      %v2264 = vadd.f32 %v1975, %v2263
      %v2265 = vpop.f32.mrb[0].mxu0
      %v2266 = vpop.f32.mrb[0].mxu0
      %v2267 = vadd.f32 %v1978, %v2266
      %v2268 = vpop.f32.mrb[0].mxu0
      %2269 = vmatprep.mubr.bf16.mxu0 0
      %2270 = vmatmul.mubr.bf16.gmra.mrb[0].mxu0 %v1534
      %v2271 = vpop.f32.mrb[0].mxu0
      %v2272 = vadd.f32 %v1983, %v2271
      %v2273 = vpop.f32.mrb[0].mxu0
      %v2274 = vpop.f32.mrb[0].mxu0
      %v2275 = vadd.f32 %v1986, %v2274
      %v2276 = vpop.f32.mrb[0].mxu0
      %2277 = vmatprep.mubr.bf16.mxu0 0
      %2278 = vmatmul.mubr.bf16.gmra.mrb[0].mxu0 %v1537
      %v2279 = vpop.f32.mrb[0].mxu0
      %v2280 = vadd.f32 %v1991, %v2279
      %v2281 = vpop.f32.mrb[0].mxu0
      %v2282 = vpop.f32.mrb[0].mxu0
      %v2283 = vadd.f32 %v1994, %v2282
      %v2284 = vpop.f32.mrb[0].mxu0
      %2285 = vmatprep.mubr.bf16.mxu0 0
      %2286 = vmatmul.mubr.bf16.gmra.mrb[0].mxu0 %v1540
      %v2287 = vpop.f32.mrb[0].mxu0
      %v2288 = vadd.f32 %v1999, %v2287
      %v2289 = vpop.f32.mrb[0].mxu0
      %v2290 = vpop.f32.mrb[0].mxu0
      %v2291 = vadd.f32 %v2002, %v2290
      %v2292 = vpop.f32.mrb[0].mxu0
      %2293 = vmatprep.mubr.bf16.mxu0 0
      %2294 = vmatmul.mubr.bf16.gmra.mrb[0].mxu0 %v1543
      %v2295 = vpop.f32.mrb[0].mxu0
      %v2296 = vadd.f32 %v2007, %v2295
      %v2297 = vpop.f32.mrb[0].mxu0
      %v2298 = vpop.f32.mrb[0].mxu0
      %v2299 = vadd.f32 %v2010, %v2298
      %v2300 = vpop.f32.mrb[0].mxu0
      %2301 = vmatprep.mubr.bf16.mxu0 0
      %2302 = vmatmul.mubr.bf16.gmra.mrb[0].mxu0 %v1546
      %v2303 = vpop.f32.mrb[0].mxu0
      %v2304 = vadd.f32 %v2015, %v2303
      %v2305 = vpop.f32.mrb[0].mxu0
      %v2306 = vpop.f32.mrb[0].mxu0
      %v2307 = vadd.f32 %v2018, %v2306
      %v2308 = vpop.f32.mrb[0].mxu0
      %2309 = vmatprep.mubr.bf16.mxu0 0
      %2310 = vmatmul.mubr.bf16.gmra.mrb[0].mxu0 %v1549
      %v2311 = vpop.f32.mrb[0].mxu0
      %v2312 = vadd.f32 %v2023, %v2311
      %v2313 = vpop.f32.mrb[0].mxu0
      %v2314 = vpop.f32.mrb[0].mxu0
      %v2315 = vadd.f32 %v2026, %v2314
      %v2316 = vpop.f32.mrb[0].mxu0
      %2317 = vmatprep.mubr.bf16.mxu0 0
      %2318 = vmatmul.mubr.bf16.gmra.mrb[0].mxu0 %v1552
      %v2319 = vpop.f32.mrb[0].mxu0
      %v2320 = vadd.f32 %v2031, %v2319
      %v2321 = vpop.f32.mrb[0].mxu0
      %v2322 = vpop.f32.mrb[0].mxu0
      %v2323 = vadd.f32 %v2034, %v2322
      %v2324 = vpop.f32.mrb[0].mxu0
      %2325 = vmatprep.mubr.bf16.mxu0 0
      %2326 = vmatmul.mubr.bf16.gmra.mrb[0].mxu0 %v1555
      %v2327 = vpop.f32.mrb[0].mxu0
      %v2328 = vadd.f32 %v2039, %v2327
      %v2329 = vpop.f32.mrb[0].mxu0
      %v2330 = vpop.f32.mrb[0].mxu0
      %v2331 = vadd.f32 %v2042, %v2330
      %v2332 = vpop.f32.mrb[0].mxu0
      %2333 = vmatprep.mubr.bf16.mxu0 0
      %2334 = vmatmul.mubr.bf16.gmra.mrb[0].mxu0 %v1558
      %v2335 = vpop.f32.mrb[0].mxu0
      %v2336 = vadd.f32 %v2047, %v2335
      %v2337 = vpop.f32.mrb[0].mxu0
      %v2338 = vpop.f32.mrb[0].mxu0
      %v2339 = vadd.f32 %v2050, %v2338
      %v2340 = vpop.f32.mrb[0].mxu0
      %2341 = vmatprep.mubr.bf16.mxu0 0
      %2342 = vmatmul.mubr.bf16.gmra.mrb[0].mxu0 %v1561
      %v2343 = vpop.f32.mrb[0].mxu0
      %v2344 = vadd.f32 %v2055, %v2343
      %v2345 = vpop.f32.mrb[0].mxu0
      %v2346 = vpop.f32.mrb[0].mxu0
      %v2347 = vadd.f32 %v2058, %v2346
      %v2348 = vpop.f32.mrb[0].mxu0
      %2349 = vmatprep.mubr.bf16.mxu0 0
      %2350 = vmatmul.mubr.bf16.gmra.mrb[0].mxu0 %v1564
      %v2351 = vpop.f32.mrb[0].mxu0
      %v2352 = vadd.f32 %v2063, %v2351
      %v2353 = vpop.f32.mrb[0].mxu0
      %v2354 = vpop.f32.mrb[0].mxu0
      %v2355 = vadd.f32 %v2066, %v2354
      %v2356 = vpop.f32.mrb[0].mxu0
      %2357 = vmatprep.mubr.bf16.mxu0 0
      %2358 = vmatmul.mubr.bf16.gmra.mrb[0].mxu0 %v1567
      %v2359 = vpop.f32.mrb[0].mxu0
      %v2360 = vadd.f32 %v2071, %v2359
      %v2361 = vpop.f32.mrb[0].mxu0
      %v2362 = vpop.f32.mrb[0].mxu0
      %v2363 = vadd.f32 %v2074, %v2362
      %v2364 = vpop.f32.mrb[0].mxu0
      %2365 = vmatprep.mubr.bf16.mxu0 0
      %2366 = vmatmul.mubr.bf16.gmra.mrb[0].mxu0 %v1570
      %v2367 = vpop.f32.mrb[0].mxu0
      %v2368 = vadd.f32 %v2079, %v2367
      %v2369 = vpop.f32.mrb[0].mxu0
      %v2370 = vpop.f32.mrb[0].mxu0
      %v2371 = vadd.f32 %v2082, %v2370
      %v2372 = vpop.f32.mrb[0].mxu0
      %2373 = vmatprep.mubr.bf16.mxu0 0
      %2374 = vmatmul.mubr.bf16.gmra.mrb[0].mxu0 %v1573
      %v2375 = vpop.f32.mrb[0].mxu0
      %v2376 = vadd.f32 %v2087, %v2375
      %v2377 = vpop.f32.mrb[0].mxu0
      %v2378 = vpop.f32.mrb[0].mxu0
      %v2379 = vadd.f32 %v2090, %v2378
      %v2380 = vpop.f32.mrb[0].mxu0
      %2381 = vmatprep.mubr.bf16.mxu0 0
      %2382 = vmatmul.mubr.bf16.gmra.mrb[0].mxu0 %v1576
      %v2383 = vpop.f32.mrb[0].mxu0
      %v2384 = vadd.f32 %v2095, %v2383
      %v2385 = vpop.f32.mrb[0].mxu0
      %v2386 = vpop.f32.mrb[0].mxu0
      %v2387 = vadd.f32 %v2098, %v2386
      %v2388 = vpop.f32.mrb[0].mxu0
      %2389 = vmatprep.mubr.bf16.mxu0 0
      %2390 = vmatmul.mubr.bf16.gmra.mrb[0].mxu0 %v1579
      %v2391 = vpop.f32.mrb[0].mxu0
      %v2392 = vadd.f32 %v2103, %v2391
      %v2393 = vpop.f32.mrb[0].mxu0
      %v2394 = vpop.f32.mrb[0].mxu0
      %v2395 = vadd.f32 %v2106, %v2394
      %v2396 = vpop.f32.mrb[0].mxu0
      %2397 = vmatprep.mubr.bf16.mxu0 0
      %2398 = vmatmul.mubr.bf16.gmra.mrb[0].mxu0 %v1582
      %v2399 = vpop.f32.mrb[0].mxu0
      %v2400 = vadd.f32 %v2111, %v2399
      %v2401 = vpop.f32.mrb[0].mxu0
      %v2402 = vpop.f32.mrb[0].mxu0
      %v2403 = vadd.f32 %v2114, %v2402
      %v2404 = vpop.f32.mrb[0].mxu0
      %2405 = vmatprep.mubr.bf16.mxu0 0
      %2406 = vmatmul.mubr.bf16.gmra.mrb[0].mxu0 %v1585
      %v2407 = vpop.f32.mrb[0].mxu0
      %v2408 = vadd.f32 %v2119, %v2407
      %v2409 = vpop.f32.mrb[0].mxu0
      %v2410 = vpop.f32.mrb[0].mxu0
      %v2411 = vadd.f32 %v2122, %v2410
      %v2412 = vpop.f32.mrb[0].mxu0
      %2413 = vmatprep.mubr.bf16.mxu0 0
      %2414 = vmatmul.mubr.bf16.gmra.mrb[0].mxu0 %v1588
      %v2415 = vpop.f32.mrb[0].mxu0
      %v2416 = vadd.f32 %v2127, %v2415
      %v2417 = vpop.f32.mrb[0].mxu0
      %v2418 = vpop.f32.mrb[0].mxu0
      %v2419 = vadd.f32 %v2130, %v2418
      %v2420 = vpop.f32.mrb[0].mxu0
      %2421 = vmatprep.mubr.bf16.mxu0 0
      %2422 = vmatmul.mubr.bf16.gmra.mrb[0].mxu0 %v1591
      %v2423 = vpop.f32.mrb[0].mxu0
      %v2424 = vadd.f32 %v2135, %v2423
      %v2425 = vpop.f32.mrb[0].mxu0
      %v2426 = vpop.f32.mrb[0].mxu0
      %v2427 = vadd.f32 %v2138, %v2426
      %v2428 = vpop.f32.mrb[0].mxu0
      %2429 = vmatprep.mubr.bf16.mxu0 0
      %2430 = vmatmul.mubr.bf16.gmra.mrb[0].mxu0 %v1594
      %v2431 = vpop.f32.mrb[0].mxu0
      %v2432 = vadd.f32 %v2143, %v2431
      %v2433 = vpop.f32.mrb[0].mxu0
      %v2434 = vpop.f32.mrb[0].mxu0
      %v2435 = vadd.f32 %v2146, %v2434
      %v2436 = vpop.f32.mrb[0].mxu0
      %2437 = vmatprep.mubr.bf16.mxu0 0
      %2438 = vmatmul.mubr.bf16.gmra.mrb[0].mxu0 %v1597
      %v2439 = vpop.f32.mrb[0].mxu0
      %v2440 = vadd.f32 %v2151, %v2439
      %v2441 = vpop.f32.mrb[0].mxu0
      %v2442 = vpop.f32.mrb[0].mxu0
      %v2443 = vadd.f32 %v2154, %v2442
      %v2444 = vpop.f32.mrb[0].mxu0
      %2445 = vmatprep.mubr.bf16.mxu0 0
      %2446 = vmatmul.mubr.bf16.gmra.mrb[0].mxu0 %v1600
      %v2447 = vpop.f32.mrb[0].mxu0
      %v2448 = vadd.f32 %v2159, %v2447
      %v2449 = vpop.f32.mrb[0].mxu0
      %v2450 = vpop.f32.mrb[0].mxu0
      %v2451 = vadd.f32 %v2162, %v2450
      %v2452 = vpop.f32.mrb[0].mxu0
      %2453 = vmatprep.mubr.bf16.mxu0 0
      %2454 = vmatmul.mubr.bf16.gmra.mrb[0].mxu0 %v1603
      %v2455 = vpop.f32.mrb[0].mxu0
      %v2456 = vadd.f32 %v2167, %v2455
      %v2457 = vpop.f32.mrb[0].mxu0
      %v2458 = vpop.f32.mrb[0].mxu0
      %v2459 = vadd.f32 %v2170, %v2458
      %v2460 = vpop.f32.mrb[0].mxu0
      %2461 = vmatprep.mubr.bf16.mxu0 0
      %2462 = vmatmul.mubr.bf16.gmra.mrb[0].mxu0 %v1606
      %v2463 = vpop.f32.mrb[0].mxu0
      %v2464 = vadd.f32 %v2175, %v2463
      %v2465 = vpop.f32.mrb[0].mxu0
      %v2466 = vpop.f32.mrb[0].mxu0
      %v2467 = vadd.f32 %v2178, %v2466
      %v2468 = vpop.f32.mrb[0].mxu0
      %2469 = vmatprep.mubr.bf16.mxu0 0
      %2470 = vmatmul.mubr.bf16.gmra.mrb[0].mxu0 %v1609
      %v2471 = vpop.f32.mrb[0].mxu0
      %v2472 = vadd.f32 %v2183, %v2471
      %v2473 = vpop.f32.mrb[0].mxu0
      %v2474 = vpop.f32.mrb[0].mxu0
      %v2475 = vadd.f32 %v2186, %v2474
      %v2476 = vpop.f32.mrb[0].mxu0
      %2477 = vdwg.mxu0
      %v2478 = vld [vmem:[%s218] sm:$0xff]
      %v2479 = vld [vmem:[%s218 + $0x8] sm:$0xff]
      %v2480 = vld [vmem:[%s218 + $0x10] sm:$0xff]
      %v2481 = vld [vmem:[%s218 + $0x18] sm:$0xff]
      %v2482 = vld [vmem:[%s218 + $0x20] sm:$0xff]
      %v2483 = vld [vmem:[%s218 + $0x28] sm:$0xff]
      %v2484 = vld [vmem:[%s218 + $0x30] sm:$0xff]
      %v2485 = vld [vmem:[%s218 + $0x38] sm:$0xff]
      %v2486 = vld [vmem:[%s218 + $0x40] sm:$0xff]
      %v2487 = vld [vmem:[%s218 + $0x48] sm:$0xff]
      %v2488 = vld [vmem:[%s218 + $0x50] sm:$0xff]
      %v2489 = vld [vmem:[%s218 + $0x58] sm:$0xff]
      %v2490 = vld [vmem:[%s218 + $0x60] sm:$0xff]
      %v2491 = vld [vmem:[%s218 + $0x68] sm:$0xff]
      %v2492 = vld [vmem:[%s218 + $0x70] sm:$0xff]
      %v2493 = vld [vmem:[%s218 + $0x78] sm:$0xff]
      %v2494 = vld [vmem:[%s218 + $0x80] sm:$0xff]
      %v2495 = vld [vmem:[%s218 + $0x88] sm:$0xff]
      %v2496 = vld [vmem:[%s218 + $0x90] sm:$0xff]
      %v2497 = vld [vmem:[%s218 + $0x98] sm:$0xff]
      %v2498 = vld [vmem:[%s218 + $0xa0] sm:$0xff]
      %v2499 = vld [vmem:[%s218 + $0xa8] sm:$0xff]
      %v2500 = vld [vmem:[%s218 + $0xb0] sm:$0xff]
      %v2501 = vld [vmem:[%s218 + $0xb8] sm:$0xff]
      %v2502 = vld [vmem:[%s218 + $0xc0] sm:$0xff]
      %v2503 = vld [vmem:[%s218 + $0xc8] sm:$0xff]
      %v2504 = vld [vmem:[%s218 + $0xd0] sm:$0xff]
      %v2505 = vld [vmem:[%s218 + $0xd8] sm:$0xff]
      %v2506 = vld [vmem:[%s218 + $0xe0] sm:$0xff]
      %v2507 = vld [vmem:[%s218 + $0xe8] sm:$0xff]
      %v2508 = vld [vmem:[%s218 + $0xf0] sm:$0xff]
      %v2509 = vld [vmem:[%s218 + $0xf8] sm:$0xff]
      %v2510 = vld [vmem:[%s218 + $0x100] sm:$0xff]
      %v2511 = vld [vmem:[%s218 + $0x108] sm:$0xff]
      %v2512 = vld [vmem:[%s218 + $0x110] sm:$0xff]
      %v2513 = vld [vmem:[%s218 + $0x118] sm:$0xff]
      %v2514 = vld [vmem:[%s218 + $0x120] sm:$0xff]
      %v2515 = vld [vmem:[%s218 + $0x128] sm:$0xff]
      %v2516 = vld [vmem:[%s218 + $0x130] sm:$0xff]
      %v2517 = vld [vmem:[%s218 + $0x138] sm:$0xff]
      %v2518 = vld [vmem:[%s218 + $0x140] sm:$0xff]
      %v2519 = vld [vmem:[%s218 + $0x148] sm:$0xff]
      %v2520 = vld [vmem:[%s218 + $0x150] sm:$0xff]
      %v2521 = vld [vmem:[%s218 + $0x158] sm:$0xff]
      %v2522 = vld [vmem:[%s218 + $0x160] sm:$0xff]
      %v2523 = vld [vmem:[%s218 + $0x168] sm:$0xff]
      %v2524 = vld [vmem:[%s218 + $0x170] sm:$0xff]
      %v2525 = vld [vmem:[%s218 + $0x178] sm:$0xff]
      %v2526 = vld [vmem:[%s218 + $0x180] sm:$0xff]
      %v2527 = vld [vmem:[%s218 + $0x188] sm:$0xff]
      %v2528 = vld [vmem:[%s218 + $0x190] sm:$0xff]
      %v2529 = vld [vmem:[%s218 + $0x198] sm:$0xff]
      %v2530 = vld [vmem:[%s218 + $0x1a0] sm:$0xff]
      %v2531 = vld [vmem:[%s218 + $0x1a8] sm:$0xff]
      %v2532 = vld [vmem:[%s218 + $0x1b0] sm:$0xff]
      %v2533 = vld [vmem:[%s218 + $0x1b8] sm:$0xff]
      %v2534 = vld [vmem:[%s218 + $0x1c0] sm:$0xff]
      %v2535 = vld [vmem:[%s218 + $0x1c8] sm:$0xff]
      %v2536 = vld [vmem:[%s218 + $0x1d0] sm:$0xff]
      %v2537 = vld [vmem:[%s218 + $0x1d8] sm:$0xff]
      %v2538 = vld [vmem:[%s218 + $0x1e0] sm:$0xff]
      %v2539 = vld [vmem:[%s218 + $0x1e8] sm:$0xff]
      %v2540 = vld [vmem:[%s218 + $0x1f0] sm:$0xff]
      %v2541 = vld [vmem:[%s218 + $0x1f8] sm:$0xff]
      %v2542 = vadd.f32 %v2224, %v2478
      %v2543 = vadd.f32 %v2227, %v2479
      %v2544 = vadd.f32 %v2232, %v2480
      %v2545 = vadd.f32 %v2235, %v2481
      %v2546 = vadd.f32 %v2240, %v2482
      %v2547 = vadd.f32 %v2243, %v2483
      %v2548 = vadd.f32 %v2248, %v2484
      %v2549 = vadd.f32 %v2251, %v2485
      %v2550 = vadd.f32 %v2256, %v2486
      %v2551 = vadd.f32 %v2259, %v2487
      %v2552 = vadd.f32 %v2264, %v2488
      %v2553 = vadd.f32 %v2267, %v2489
      %v2554 = vadd.f32 %v2272, %v2490
      %v2555 = vadd.f32 %v2275, %v2491
      %v2556 = vadd.f32 %v2280, %v2492
      %v2557 = vadd.f32 %v2283, %v2493
      %v2558 = vadd.f32 %v2288, %v2494
      %v2559 = vadd.f32 %v2291, %v2495
      %v2560 = vadd.f32 %v2296, %v2496
      %v2561 = vadd.f32 %v2299, %v2497
      %v2562 = vadd.f32 %v2304, %v2498
      %v2563 = vadd.f32 %v2307, %v2499
      %v2564 = vadd.f32 %v2312, %v2500
      %v2565 = vadd.f32 %v2315, %v2501
      %v2566 = vadd.f32 %v2320, %v2502
      %v2567 = vadd.f32 %v2323, %v2503
      %v2568 = vadd.f32 %v2328, %v2504
      %v2569 = vadd.f32 %v2331, %v2505
      %v2570 = vadd.f32 %v2336, %v2506
      %v2571 = vadd.f32 %v2339, %v2507
      %v2572 = vadd.f32 %v2344, %v2508
      %v2573 = vadd.f32 %v2347, %v2509
      %v2574 = vadd.f32 %v2352, %v2510
      %v2575 = vadd.f32 %v2355, %v2511
      %v2576 = vadd.f32 %v2360, %v2512
      %v2577 = vadd.f32 %v2363, %v2513
      %v2578 = vadd.f32 %v2368, %v2514
      %v2579 = vadd.f32 %v2371, %v2515
      %v2580 = vadd.f32 %v2376, %v2516
      %v2581 = vadd.f32 %v2379, %v2517
      %v2582 = vadd.f32 %v2384, %v2518
      %v2583 = vadd.f32 %v2387, %v2519
      %v2584 = vadd.f32 %v2392, %v2520
      %v2585 = vadd.f32 %v2395, %v2521
      %v2586 = vadd.f32 %v2400, %v2522
      %v2587 = vadd.f32 %v2403, %v2523
      %v2588 = vadd.f32 %v2408, %v2524
      %v2589 = vadd.f32 %v2411, %v2525
      %v2590 = vadd.f32 %v2416, %v2526
      %v2591 = vadd.f32 %v2419, %v2527
      %v2592 = vadd.f32 %v2424, %v2528
      %v2593 = vadd.f32 %v2427, %v2529
      %v2594 = vadd.f32 %v2432, %v2530
      %v2595 = vadd.f32 %v2435, %v2531
      %v2596 = vadd.f32 %v2440, %v2532
      %v2597 = vadd.f32 %v2443, %v2533
      %v2598 = vadd.f32 %v2448, %v2534
      %v2599 = vadd.f32 %v2451, %v2535
      %v2600 = vadd.f32 %v2456, %v2536
      %v2601 = vadd.f32 %v2459, %v2537
      %v2602 = vadd.f32 %v2464, %v2538
      %v2603 = vadd.f32 %v2467, %v2539
      %v2604 = vadd.f32 %v2472, %v2540
      %v2605 = vadd.f32 %v2475, %v2541
      %v2606 = vmax.f32 %v2542, 0.0
      %v2607 = vmax.f32 %v2543, 0.0
      %v2608 = vmax.f32 %v2544, 0.0
      %v2609 = vmax.f32 %v2545, 0.0
      %v2610 = vmax.f32 %v2546, 0.0
      %v2611 = vmax.f32 %v2547, 0.0
      %v2612 = vmax.f32 %v2548, 0.0
      %v2613 = vmax.f32 %v2549, 0.0
      %v2614 = vmax.f32 %v2550, 0.0
      %v2615 = vmax.f32 %v2551, 0.0
      %v2616 = vmax.f32 %v2552, 0.0
      %v2617 = vmax.f32 %v2553, 0.0
      %v2618 = vmax.f32 %v2554, 0.0
      %v2619 = vmax.f32 %v2555, 0.0
      %v2620 = vmax.f32 %v2556, 0.0
      %v2621 = vmax.f32 %v2557, 0.0
      %v2622 = vmax.f32 %v2558, 0.0
      %v2623 = vmax.f32 %v2559, 0.0
      %v2624 = vmax.f32 %v2560, 0.0
      %v2625 = vmax.f32 %v2561, 0.0
      %v2626 = vmax.f32 %v2562, 0.0
      %v2627 = vmax.f32 %v2563, 0.0
      %v2628 = vmax.f32 %v2564, 0.0
      %v2629 = vmax.f32 %v2565, 0.0
      %v2630 = vmax.f32 %v2566, 0.0
      %v2631 = vmax.f32 %v2567, 0.0
      %v2632 = vmax.f32 %v2568, 0.0
      %v2633 = vmax.f32 %v2569, 0.0
      %v2634 = vmax.f32 %v2570, 0.0
      %v2635 = vmax.f32 %v2571, 0.0
      %v2636 = vmax.f32 %v2572, 0.0
      %v2637 = vmax.f32 %v2573, 0.0
      %v2638 = vmax.f32 %v2574, 0.0
      %v2639 = vmax.f32 %v2575, 0.0
      %v2640 = vmax.f32 %v2576, 0.0
      %v2641 = vmax.f32 %v2577, 0.0
      %v2642 = vmax.f32 %v2578, 0.0
      %v2643 = vmax.f32 %v2579, 0.0
      %v2644 = vmax.f32 %v2580, 0.0
      %v2645 = vmax.f32 %v2581, 0.0
      %v2646 = vmax.f32 %v2582, 0.0
      %v2647 = vmax.f32 %v2583, 0.0
      %v2648 = vmax.f32 %v2584, 0.0
      %v2649 = vmax.f32 %v2585, 0.0
      %v2650 = vmax.f32 %v2586, 0.0
      %v2651 = vmax.f32 %v2587, 0.0
      %v2652 = vmax.f32 %v2588, 0.0
      %v2653 = vmax.f32 %v2589, 0.0
      %v2654 = vmax.f32 %v2590, 0.0
      %v2655 = vmax.f32 %v2591, 0.0
      %v2656 = vmax.f32 %v2592, 0.0
      %v2657 = vmax.f32 %v2593, 0.0
      %v2658 = vmax.f32 %v2594, 0.0
      %v2659 = vmax.f32 %v2595, 0.0
      %v2660 = vmax.f32 %v2596, 0.0
      %v2661 = vmax.f32 %v2597, 0.0
      %v2662 = vmax.f32 %v2598, 0.0
      %v2663 = vmax.f32 %v2599, 0.0
      %v2664 = vmax.f32 %v2600, 0.0
      %v2665 = vmax.f32 %v2601, 0.0
      %v2666 = vmax.f32 %v2602, 0.0
      %v2667 = vmax.f32 %v2603, 0.0
      %v2668 = vmax.f32 %v2604, 0.0
      %v2669 = vmax.f32 %v2605, 0.0
      %v2670 = vpack.c.bf16 %v2607, %v2606
      %v2671 = vpack.c.bf16 %v2609, %v2608
      %v2672 = vpack.c.bf16 %v2611, %v2610
      %v2673 = vpack.c.bf16 %v2613, %v2612
      %v2674 = vpack.c.bf16 %v2615, %v2614
      %v2675 = vpack.c.bf16 %v2617, %v2616
      %v2676 = vpack.c.bf16 %v2619, %v2618
      %v2677 = vpack.c.bf16 %v2621, %v2620
      %v2678 = vpack.c.bf16 %v2623, %v2622
      %v2679 = vpack.c.bf16 %v2625, %v2624
      %v2680 = vpack.c.bf16 %v2627, %v2626
      %v2681 = vpack.c.bf16 %v2629, %v2628
      %v2682 = vpack.c.bf16 %v2631, %v2630
      %v2683 = vpack.c.bf16 %v2633, %v2632
      %v2684 = vpack.c.bf16 %v2635, %v2634
      %v2685 = vpack.c.bf16 %v2637, %v2636
      %v2686 = vpack.c.bf16 %v2639, %v2638
      %v2687 = vpack.c.bf16 %v2641, %v2640
      %v2688 = vpack.c.bf16 %v2643, %v2642
      %v2689 = vpack.c.bf16 %v2645, %v2644
      %v2690 = vpack.c.bf16 %v2647, %v2646
      %v2691 = vpack.c.bf16 %v2649, %v2648
      %v2692 = vpack.c.bf16 %v2651, %v2650
      %v2693 = vpack.c.bf16 %v2653, %v2652
      %v2694 = vpack.c.bf16 %v2655, %v2654
      %v2695 = vpack.c.bf16 %v2657, %v2656
      %v2696 = vpack.c.bf16 %v2659, %v2658
      %v2697 = vpack.c.bf16 %v2661, %v2660
      %v2698 = vpack.c.bf16 %v2663, %v2662
      %v2699 = vpack.c.bf16 %v2665, %v2664
      %v2700 = vpack.c.bf16 %v2667, %v2666
      %v2701 = vpack.c.bf16 %v2669, %v2668
      %v2734 = vunpack.c.l.b16 %v2670
      %v2735 = vunpack.c.h.b16 %v2670
      %v2736 = vunpack.c.l.b16 %v2671
      %v2737 = vunpack.c.h.b16 %v2671
      %v2738 = vunpack.c.l.b16 %v2672
      %v2739 = vunpack.c.h.b16 %v2672
      %v2740 = vunpack.c.l.b16 %v2673
      %v2741 = vunpack.c.h.b16 %v2673
      %v2742 = vunpack.c.l.b16 %v2674
      %v2743 = vunpack.c.h.b16 %v2674
      %v2744 = vunpack.c.l.b16 %v2675
      %v2745 = vunpack.c.h.b16 %v2675
      %v2746 = vunpack.c.l.b16 %v2676
      %v2747 = vunpack.c.h.b16 %v2676
      %v2748 = vunpack.c.l.b16 %v2677
      %v2749 = vunpack.c.h.b16 %v2677
      %v2750 = vunpack.c.l.b16 %v2678
      %v2751 = vunpack.c.h.b16 %v2678
      %v2752 = vunpack.c.l.b16 %v2679
      %v2753 = vunpack.c.h.b16 %v2679
      %v2754 = vunpack.c.l.b16 %v2680
      %v2755 = vunpack.c.h.b16 %v2680
      %v2756 = vunpack.c.l.b16 %v2681
      %v2757 = vunpack.c.h.b16 %v2681
      %v2758 = vunpack.c.l.b16 %v2682
      %v2759 = vunpack.c.h.b16 %v2682
      %v2760 = vunpack.c.l.b16 %v2683
      %v2761 = vunpack.c.h.b16 %v2683
      %v2762 = vunpack.c.l.b16 %v2684
      %v2763 = vunpack.c.h.b16 %v2684
      %v2764 = vunpack.c.l.b16 %v2685
      %v2765 = vunpack.c.h.b16 %v2685
      %v2766 = vunpack.c.l.b16 %v2686
      %v2767 = vunpack.c.h.b16 %v2686
      %v2768 = vunpack.c.l.b16 %v2687
      %v2769 = vunpack.c.h.b16 %v2687
      %v2770 = vunpack.c.l.b16 %v2688
      %v2771 = vunpack.c.h.b16 %v2688
      %v2772 = vunpack.c.l.b16 %v2689
      %v2773 = vunpack.c.h.b16 %v2689
      %v2774 = vunpack.c.l.b16 %v2690
      %v2775 = vunpack.c.h.b16 %v2690
      %v2776 = vunpack.c.l.b16 %v2691
      %v2777 = vunpack.c.h.b16 %v2691
      %v2778 = vunpack.c.l.b16 %v2692
      %v2779 = vunpack.c.h.b16 %v2692
      %v2780 = vunpack.c.l.b16 %v2693
      %v2781 = vunpack.c.h.b16 %v2693
      %v2782 = vunpack.c.l.b16 %v2694
      %v2783 = vunpack.c.h.b16 %v2694
      %v2784 = vunpack.c.l.b16 %v2695
      %v2785 = vunpack.c.h.b16 %v2695
      %v2786 = vunpack.c.l.b16 %v2696
      %v2787 = vunpack.c.h.b16 %v2696
      %v2788 = vunpack.c.l.b16 %v2697
      %v2789 = vunpack.c.h.b16 %v2697
      %v2790 = vunpack.c.l.b16 %v2698
      %v2791 = vunpack.c.h.b16 %v2698
      %v2792 = vunpack.c.l.b16 %v2699
      %v2793 = vunpack.c.h.b16 %v2699
      %v2794 = vunpack.c.l.b16 %v2700
      %v2795 = vunpack.c.h.b16 %v2700
      %v2796 = vunpack.c.l.b16 %v2701
      %v2797 = vunpack.c.h.b16 %v2701
      %v2798 = vpack.c.b16 %v2734, %v2734
      %v2799 = vpack.c.b16 %v2735, %v2735
      %v2800 = vpack.c.b16 %v2736, %v2736
      %v2801 = vpack.c.b16 %v2737, %v2737
      %v2802 = vpack.c.b16 %v2738, %v2738
      %v2803 = vpack.c.b16 %v2739, %v2739
      %v2804 = vpack.c.b16 %v2740, %v2740
      %v2805 = vpack.c.b16 %v2741, %v2741
      %v2806 = vpack.c.b16 %v2742, %v2742
      %v2807 = vpack.c.b16 %v2743, %v2743
      %v2808 = vpack.c.b16 %v2744, %v2744
      %v2809 = vpack.c.b16 %v2745, %v2745
      %v2810 = vpack.c.b16 %v2746, %v2746
      %v2811 = vpack.c.b16 %v2747, %v2747
      %v2812 = vpack.c.b16 %v2748, %v2748
      %v2813 = vpack.c.b16 %v2749, %v2749
      %v2814 = vpack.c.b16 %v2750, %v2750
      %v2815 = vpack.c.b16 %v2751, %v2751
      %v2816 = vpack.c.b16 %v2752, %v2752
      %v2817 = vpack.c.b16 %v2753, %v2753
      %v2818 = vpack.c.b16 %v2754, %v2754
      %v2819 = vpack.c.b16 %v2755, %v2755
      %v2820 = vpack.c.b16 %v2756, %v2756
      %v2821 = vpack.c.b16 %v2757, %v2757
      %v2822 = vpack.c.b16 %v2758, %v2758
      %v2823 = vpack.c.b16 %v2759, %v2759
      %v2824 = vpack.c.b16 %v2760, %v2760
      %v2825 = vpack.c.b16 %v2761, %v2761
      %v2826 = vpack.c.b16 %v2762, %v2762
      %v2827 = vpack.c.b16 %v2763, %v2763
      %v2828 = vpack.c.b16 %v2764, %v2764
      %v2829 = vpack.c.b16 %v2765, %v2765
      %v2830 = vpack.c.b16 %v2766, %v2766
      %v2831 = vpack.c.b16 %v2767, %v2767
      %v2832 = vpack.c.b16 %v2768, %v2768
      %v2833 = vpack.c.b16 %v2769, %v2769
      %v2834 = vpack.c.b16 %v2770, %v2770
      %v2835 = vpack.c.b16 %v2771, %v2771
      %v2836 = vpack.c.b16 %v2772, %v2772
      %v2837 = vpack.c.b16 %v2773, %v2773
      %v2838 = vpack.c.b16 %v2774, %v2774
      %v2839 = vpack.c.b16 %v2775, %v2775
      %v2840 = vpack.c.b16 %v2776, %v2776
      %v2841 = vpack.c.b16 %v2777, %v2777
      %v2842 = vpack.c.b16 %v2778, %v2778
      %v2843 = vpack.c.b16 %v2779, %v2779
      %v2844 = vpack.c.b16 %v2780, %v2780
      %v2845 = vpack.c.b16 %v2781, %v2781
      %v2846 = vpack.c.b16 %v2782, %v2782
      %v2847 = vpack.c.b16 %v2783, %v2783
      %v2848 = vpack.c.b16 %v2784, %v2784
      %v2849 = vpack.c.b16 %v2785, %v2785
      %v2850 = vpack.c.b16 %v2786, %v2786
      %v2851 = vpack.c.b16 %v2787, %v2787
      %v2852 = vpack.c.b16 %v2788, %v2788
      %v2853 = vpack.c.b16 %v2789, %v2789
      %v2854 = vpack.c.b16 %v2790, %v2790
      %v2855 = vpack.c.b16 %v2791, %v2791
      %v2856 = vpack.c.b16 %v2792, %v2792
      %v2857 = vpack.c.b16 %v2793, %v2793
      %v2858 = vpack.c.b16 %v2794, %v2794
      %v2859 = vpack.c.b16 %v2795, %v2795
      %v2860 = vpack.c.b16 %v2796, %v2796
      %v2861 = vpack.c.b16 %v2797, %v2797
      %vm2926 = vcmask 519168
      %2927 = vst.msk [vmem:[%s224] sm:$0xf] %vm2926, %v2798
      %2928 = vst.msk [vmem:[%s224 + $0x4] sm:$0xf] %vm2926, %v2799
      %2929 = vst.msk [vmem:[%s224 + $0x8] sm:$0xf] %vm2926, %v2800
      %2930 = vst.msk [vmem:[%s224 + $0xc] sm:$0xf] %vm2926, %v2801
      %2931 = vst.msk [vmem:[%s224 + $0x10] sm:$0xf] %vm2926, %v2802
      %2932 = vst.msk [vmem:[%s224 + $0x14] sm:$0xf] %vm2926, %v2803
      %2933 = vst.msk [vmem:[%s224 + $0x18] sm:$0xf] %vm2926, %v2804
      %2934 = vst.msk [vmem:[%s224 + $0x1c] sm:$0xf] %vm2926, %v2805
      %2935 = vst.msk [vmem:[%s224 + $0x20] sm:$0xf] %vm2926, %v2806
      %2936 = vst.msk [vmem:[%s224 + $0x24] sm:$0xf] %vm2926, %v2807
      %2937 = vst.msk [vmem:[%s224 + $0x28] sm:$0xf] %vm2926, %v2808
      %2938 = vst.msk [vmem:[%s224 + $0x2c] sm:$0xf] %vm2926, %v2809
      %2939 = vst.msk [vmem:[%s224 + $0x30] sm:$0xf] %vm2926, %v2810
      %2940 = vst.msk [vmem:[%s224 + $0x34] sm:$0xf] %vm2926, %v2811
      %2941 = vst.msk [vmem:[%s224 + $0x38] sm:$0xf] %vm2926, %v2812
      %2942 = vst.msk [vmem:[%s224 + $0x3c] sm:$0xf] %vm2926, %v2813
      %2943 = vst.msk [vmem:[%s224 + $0x40] sm:$0xf] %vm2926, %v2814
      %2944 = vst.msk [vmem:[%s224 + $0x44] sm:$0xf] %vm2926, %v2815
      %2945 = vst.msk [vmem:[%s224 + $0x48] sm:$0xf] %vm2926, %v2816
      %2946 = vst.msk [vmem:[%s224 + $0x4c] sm:$0xf] %vm2926, %v2817
      %2947 = vst.msk [vmem:[%s224 + $0x50] sm:$0xf] %vm2926, %v2818
      %2948 = vst.msk [vmem:[%s224 + $0x54] sm:$0xf] %vm2926, %v2819
      %2949 = vst.msk [vmem:[%s224 + $0x58] sm:$0xf] %vm2926, %v2820
      %2950 = vst.msk [vmem:[%s224 + $0x5c] sm:$0xf] %vm2926, %v2821
      %2951 = vst.msk [vmem:[%s224 + $0x60] sm:$0xf] %vm2926, %v2822
      %2952 = vst.msk [vmem:[%s224 + $0x64] sm:$0xf] %vm2926, %v2823
      %2953 = vst.msk [vmem:[%s224 + $0x68] sm:$0xf] %vm2926, %v2824
      %2954 = vst.msk [vmem:[%s224 + $0x6c] sm:$0xf] %vm2926, %v2825
      %2955 = vst.msk [vmem:[%s224 + $0x70] sm:$0xf] %vm2926, %v2826
      %2956 = vst.msk [vmem:[%s224 + $0x74] sm:$0xf] %vm2926, %v2827
      %2957 = vst.msk [vmem:[%s224 + $0x78] sm:$0xf] %vm2926, %v2828
      %2958 = vst.msk [vmem:[%s224 + $0x7c] sm:$0xf] %vm2926, %v2829
      %2959 = vst.msk [vmem:[%s224 + $0x80] sm:$0xf] %vm2926, %v2830
      %2960 = vst.msk [vmem:[%s224 + $0x84] sm:$0xf] %vm2926, %v2831
      %2961 = vst.msk [vmem:[%s224 + $0x88] sm:$0xf] %vm2926, %v2832
      %2962 = vst.msk [vmem:[%s224 + $0x8c] sm:$0xf] %vm2926, %v2833
      %2963 = vst.msk [vmem:[%s224 + $0x90] sm:$0xf] %vm2926, %v2834
      %2964 = vst.msk [vmem:[%s224 + $0x94] sm:$0xf] %vm2926, %v2835
      %2965 = vst.msk [vmem:[%s224 + $0x98] sm:$0xf] %vm2926, %v2836
      %2966 = vst.msk [vmem:[%s224 + $0x9c] sm:$0xf] %vm2926, %v2837
      %2967 = vst.msk [vmem:[%s224 + $0xa0] sm:$0xf] %vm2926, %v2838
      %2968 = vst.msk [vmem:[%s224 + $0xa4] sm:$0xf] %vm2926, %v2839
      %2969 = vst.msk [vmem:[%s224 + $0xa8] sm:$0xf] %vm2926, %v2840
      %2970 = vst.msk [vmem:[%s224 + $0xac] sm:$0xf] %vm2926, %v2841
      %2971 = vst.msk [vmem:[%s224 + $0xb0] sm:$0xf] %vm2926, %v2842
      %2972 = vst.msk [vmem:[%s224 + $0xb4] sm:$0xf] %vm2926, %v2843
      %2973 = vst.msk [vmem:[%s224 + $0xb8] sm:$0xf] %vm2926, %v2844
      %2974 = vst.msk [vmem:[%s224 + $0xbc] sm:$0xf] %vm2926, %v2845
      %2975 = vst.msk [vmem:[%s224 + $0xc0] sm:$0xf] %vm2926, %v2846
      %2976 = vst.msk [vmem:[%s224 + $0xc4] sm:$0xf] %vm2926, %v2847
      %2977 = vst.msk [vmem:[%s224 + $0xc8] sm:$0xf] %vm2926, %v2848
      %2978 = vst.msk [vmem:[%s224 + $0xcc] sm:$0xf] %vm2926, %v2849
      %2979 = vst.msk [vmem:[%s224 + $0xd0] sm:$0xf] %vm2926, %v2850
      %2980 = vst.msk [vmem:[%s224 + $0xd4] sm:$0xf] %vm2926, %v2851
      %2981 = vst.msk [vmem:[%s224 + $0xd8] sm:$0xf] %vm2926, %v2852
      %2982 = vst.msk [vmem:[%s224 + $0xdc] sm:$0xf] %vm2926, %v2853
      %2983 = vst.msk [vmem:[%s224 + $0xe0] sm:$0xf] %vm2926, %v2854
      %2984 = vst.msk [vmem:[%s224 + $0xe4] sm:$0xf] %vm2926, %v2855
      %2985 = vst.msk [vmem:[%s224 + $0xe8] sm:$0xf] %vm2926, %v2856
      %2986 = vst.msk [vmem:[%s224 + $0xec] sm:$0xf] %vm2926, %v2857
      %2987 = vst.msk [vmem:[%s224 + $0xf0] sm:$0xf] %vm2926, %v2858
      %2988 = vst.msk [vmem:[%s224 + $0xf4] sm:$0xf] %vm2926, %v2859
      %2989 = vst.msk [vmem:[%s224 + $0xf8] sm:$0xf] %vm2926, %v2860
      %2990 = vst.msk [vmem:[%s224 + $0xfc] sm:$0xf] %vm2926, %v2861
      %s2991 = smul.u32 64, %s15
      %p2992 = scmp.lt.s32.totalorder %s2991, 127
      %s2993 = scalar_select %p2992, %s2991, 127
      %s2994 = smul.addr %s2993, 4
      %s2995 = scalar_lea.vmem %s4, %s2994
      // Predicated region
      $region37: #{baseline_forward.6} parent=35 // pred_check
        %p2996 = pneg %p127
      $region38: #{baseline_forward.6} parent=35 // pred_check_branch
        %2998 = sbr.rel (%p2996) target = $region40
      $region39: #{baseline_forward.6} parent=35 // pred_region
        %s2999 = smul.u32 64, %s15
      $region40: #{baseline_forward.6} parent=35 // pred_fallthru
        _
    $region36: #{baseline_forward.6} parent=5 // pred_fallthru
      _
    %p3000 = scmp.le.s32.totalorder 2, %s10
    // Predicated region
    $region41: #{baseline_forward.6} parent=5 // pred_check
      %p3001 = pneg %p3000
    $region42: #{baseline_forward.6} parent=5 // pred_check_branch
      %3003 = sbr.rel (%p3001) target = $region44
    $region43: #{baseline_forward.6} parent=5 // pred_region
      %s3004 = ssub.s32 %s10, 2
      // Predicated region
      $region45: #{baseline_forward.6} parent=43 // pred_check
        %p3005 = pneg %p133
      $region46: #{baseline_forward.6} parent=43 // pred_check_branch
        %3007 = sbr.rel (%p3005) target = $region48
      $region47: #{baseline_forward.6} parent=43 // pred_region
        %s3008 = smul.u32 64, %s16
        %p3009 = scmp.lt.s32.totalorder %s3008, 127
        %s3010 = scalar_select %p3009, %s3008, 127
        %s3011 = smul.addr %s3010, 4
        %s3012 = scalar_lea.vmem %s4, %s3011
      $region48: #{baseline_forward.6} parent=43 // pred_fallthru
        _
    $region44: #{baseline_forward.6} parent=5 // pred_fallthru
      _
  $region6: #{baseline_forward.6} parent=0 // loop_footer
    %s14 = sadd.s32 1, %s10
  $region7: #{baseline_forward.6} parent=0 // loop_footer_branch
    %9 = sbr.rel target = $region3
  $region8: #{baseline_forward.6} parent=0 // loop_exit
    _

// kernel: baseline_forward.7
$region0: #{baseline_forward.7}
  #allocation0 [shape = 'u32[]', space=smem, size = 0x4, offset = 0x4, fixed_abs, tag = 'smem constant byte address 0x4 - core index']
  #allocation1 [shape = 'u32[144,128]{1,0:T(1,128)}', space=vmem, size = 0x12000, scoped, tag = 'internal scratch']
  %s0 = inlined_call_operand.vmem [shape: bf16[256,576], index: 0, kind: input, shape index: {}]
  %s1 = inlined_call_operand.vmem [shape: bf16[576,128], index: 1, kind: input, shape index: {}]
  %s2 = inlined_call_operand.vmem [shape: f32[1,128], index: 2, kind: input, shape index: {}]
  %s3 = inlined_call_operand.vmem [shape: bf16[576,128], index: 3, kind: input, shape index: {}]
  %s4 = inlined_call_operand.vmem [shape: f32[1,128], index: 4, kind: input, shape index: {}]
  %s5 = inlined_call_operand.vmem [shape: bf16[256,128], index: 5, kind: output, shape index: {0}]
  %s6 = inlined_call_operand.vmem [shape: f32[256,128], index: 6, kind: output, shape index: {1}]
  %7 = xla_tuple %s5, %s6
  %s8 = sld [smem:[#allocation0]]
  $region61: #{baseline_forward.7} parent=0
    _
  %s10 = ssub.s32 1, %s8
  %s11 = scalar_select 0, %s10, %s8
  loop: start=0, step=1, limit=4
  $region2: #{baseline_forward.7} parent=0 // loop_pre_header
    _
  $region3: #{baseline_forward.7} parent=0 // loop_header
    %s13 = sphi 0, %s17
    %p14 = scmp.ge.s32.totalorder %s13, 4
    %s23 = sphi 0, %s25
    %s26 = sphi 0, %s23
    %s27 = sphi 0, %s26
    %s43 = sphi 0, %s27
    %s47 = sphi 0, %s47
    %s49 = sphi 0, %s47
    %s50 = sphi 0, %s49
    %s64 = sphi 0, %s50
    %s68 = sphi 0, %s68
    %s70 = sphi 0, %s68
    %s71 = sphi 0, %s70
    %s85 = sphi 0, %s71
    %s89 = sphi 0, %s89
    %s91 = sphi 0, %s89
    %s92 = sphi 0, %s91
    %s106 = sphi 0, %s92
    %s110 = sphi 0, %s110
    %s112 = sphi 0, %s110
    %s113 = sphi 0, %s112
    %s127 = sphi 0, %s113
    %s133 = sphi 0, %s135
    %s136 = sphi 0, %s133
    %s137 = sphi 0, %s136
    %s153 = sphi 0, %s137
    %s159 = sphi 0, %s161
    %s162 = sphi 0, %s159
    %s163 = sphi 0, %s162
    %s179 = sphi 0, %s163
  $region4: #{baseline_forward.7} parent=0 // loop_header_branch
    %16 = sbr.rel (%p14) target = $region8
  $region5: #{baseline_forward.7} parent=0 // loop_body
    %s18 = ssub.s32 %s13, 1
    %s19 = ssub.s32 %s13, 2
    %s20 = sadd.s32 %s13, 1
    %s21 = ssub.s32 %s13, %s20
    %p22 = scmp.eq.s32.totalorder %s21, 0
    %s24 = sadd.s32 %s23, 1
    %s25 = scalar_select %p22, %s23, %s24
    %p28 = pneg %p22
    %p29 = scmp.eq.s32.totalorder %s13, 1
    %p30 = por %p28, %p29
    %p31 = scmp.ne.s32.totalorder %s23, %s26
    %p32 = scmp.eq.s32.totalorder %s13, 0
    %p33 = por %p31, %p32
    %p34 = scmp.ne.s32.totalorder %s23, %s26
    %p35 = scmp.eq.s32.totalorder %s18, 1
    %p36 = por %p34, %p35
    %p37 = scmp.ne.s32.totalorder %s26, %s27
    %p38 = scmp.eq.s32.totalorder %s18, 0
    %p39 = por %p37, %p38
    %p40 = scmp.ne.s32.totalorder %s26, %s27
    %p41 = scmp.eq.s32.totalorder %s19, 1
    %p42 = por %p40, %p41
    %p44 = scmp.ne.s32.totalorder %s27, %s43
    %p45 = scmp.eq.s32.totalorder %s19, 0
    %p46 = por %p44, %p45
    %s48 = sadd.s32 %s47, 1
    %p51 = scmp.eq.s32.totalorder %s13, 1
    %p52 = scmp.ne.s32.totalorder %s47, %s49
    %p53 = scmp.eq.s32.totalorder %s13, 0
    %p54 = por %p52, %p53
    %p55 = scmp.ne.s32.totalorder %s47, %s49
    %p56 = scmp.eq.s32.totalorder %s18, 1
    %p57 = por %p55, %p56
    %p58 = scmp.ne.s32.totalorder %s49, %s50
    %p59 = scmp.eq.s32.totalorder %s18, 0
    %p60 = por %p58, %p59
    %p61 = scmp.ne.s32.totalorder %s49, %s50
    %p62 = scmp.eq.s32.totalorder %s19, 1
    %p63 = por %p61, %p62
    %p65 = scmp.ne.s32.totalorder %s50, %s64
    %p66 = scmp.eq.s32.totalorder %s19, 0
    %p67 = por %p65, %p66
    %s69 = sadd.s32 %s68, 1
    %p72 = scmp.eq.s32.totalorder %s13, 1
    %p73 = scmp.ne.s32.totalorder %s68, %s70
    %p74 = scmp.eq.s32.totalorder %s13, 0
    %p75 = por %p73, %p74
    %p76 = scmp.ne.s32.totalorder %s68, %s70
    %p77 = scmp.eq.s32.totalorder %s18, 1
    %p78 = por %p76, %p77
    %p79 = scmp.ne.s32.totalorder %s70, %s71
    %p80 = scmp.eq.s32.totalorder %s18, 0
    %p81 = por %p79, %p80
    %p82 = scmp.ne.s32.totalorder %s70, %s71
    %p83 = scmp.eq.s32.totalorder %s19, 1
    %p84 = por %p82, %p83
    %p86 = scmp.ne.s32.totalorder %s71, %s85
    %p87 = scmp.eq.s32.totalorder %s19, 0
    %p88 = por %p86, %p87
    %s90 = sadd.s32 %s89, 1
    %p93 = scmp.eq.s32.totalorder %s13, 1
    %p94 = scmp.ne.s32.totalorder %s89, %s91
    %p95 = scmp.eq.s32.totalorder %s13, 0
    %p96 = por %p94, %p95
    %p97 = scmp.ne.s32.totalorder %s89, %s91
    %p98 = scmp.eq.s32.totalorder %s18, 1
    %p99 = por %p97, %p98
    %p100 = scmp.ne.s32.totalorder %s91, %s92
    %p101 = scmp.eq.s32.totalorder %s18, 0
    %p102 = por %p100, %p101
    %p103 = scmp.ne.s32.totalorder %s91, %s92
    %p104 = scmp.eq.s32.totalorder %s19, 1
    %p105 = por %p103, %p104
    %p107 = scmp.ne.s32.totalorder %s92, %s106
    %p108 = scmp.eq.s32.totalorder %s19, 0
    %p109 = por %p107, %p108
    %s111 = sadd.s32 %s110, 1
    %p114 = scmp.eq.s32.totalorder %s13, 1
    %p115 = scmp.ne.s32.totalorder %s110, %s112
    %p116 = scmp.eq.s32.totalorder %s13, 0
    %p117 = por %p115, %p116
    %p118 = scmp.ne.s32.totalorder %s110, %s112
    %p119 = scmp.eq.s32.totalorder %s18, 1
    %p120 = por %p118, %p119
    %p121 = scmp.ne.s32.totalorder %s112, %s113
    %p122 = scmp.eq.s32.totalorder %s18, 0
    %p123 = por %p121, %p122
    %p124 = scmp.ne.s32.totalorder %s112, %s113
    %p125 = scmp.eq.s32.totalorder %s19, 1
    %p126 = por %p124, %p125
    %p128 = scmp.ne.s32.totalorder %s113, %s127
    %p129 = scmp.eq.s32.totalorder %s19, 0
    %p130 = por %p128, %p129
    %s131 = ssub.s32 %s13, %s20
    %p132 = scmp.eq.s32.totalorder %s131, 0
    %s134 = sadd.s32 %s133, 1
    %s135 = scalar_select %p132, %s133, %s134
    %p138 = pneg %p132
    %p139 = scmp.eq.s32.totalorder %s13, 1
    %p140 = por %p138, %p139
    %p141 = scmp.ne.s32.totalorder %s133, %s136
    %p142 = scmp.eq.s32.totalorder %s13, 0
    %p143 = por %p141, %p142
    %p144 = scmp.ne.s32.totalorder %s133, %s136
    %p145 = scmp.eq.s32.totalorder %s18, 1
    %p146 = por %p144, %p145
    %p147 = scmp.ne.s32.totalorder %s136, %s137
    %p148 = scmp.eq.s32.totalorder %s18, 0
    %p149 = por %p147, %p148
    %p150 = scmp.ne.s32.totalorder %s136, %s137
    %p151 = scmp.eq.s32.totalorder %s19, 1
    %p152 = por %p150, %p151
    %p154 = scmp.ne.s32.totalorder %s137, %s153
    %p155 = scmp.eq.s32.totalorder %s19, 0
    %p156 = por %p154, %p155
    %s157 = ssub.s32 %s13, %s20
    %p158 = scmp.eq.s32.totalorder %s157, 0
    %s160 = sadd.s32 %s159, 1
    %s161 = scalar_select %p158, %s159, %s160
    %p164 = pneg %p158
    %p165 = scmp.eq.s32.totalorder %s13, 1
    %p166 = por %p164, %p165
    %p167 = scmp.ne.s32.totalorder %s159, %s162
    %p168 = scmp.eq.s32.totalorder %s13, 0
    %p169 = por %p167, %p168
    %p170 = scmp.ne.s32.totalorder %s159, %s162
    %p171 = scmp.eq.s32.totalorder %s18, 1
    %p172 = por %p170, %p171
    %p173 = scmp.ne.s32.totalorder %s162, %s163
    %p174 = scmp.eq.s32.totalorder %s18, 0
    %p175 = por %p173, %p174
    %p176 = scmp.ne.s32.totalorder %s162, %s163
    %p177 = scmp.eq.s32.totalorder %s19, 1
    %p178 = por %p176, %p177
    %p180 = scmp.ne.s32.totalorder %s163, %s179
    %p181 = scmp.eq.s32.totalorder %s19, 0
    %p182 = por %p180, %p181
    %p183 = scmp.le.s32.totalorder 1, %s13
    %p184 = scmp.lt.s32.totalorder %s13, 3
    %p185 = pnand %p183, %p184
    %p186 = pneg %p185
    // Predicated region
    $region9: #{baseline_forward.7} parent=5 // pred_check
      _
    $region10: #{baseline_forward.7} parent=5 // pred_check_branch
      %188 = sbr.rel (%p185) target = $region12
    $region11: #{baseline_forward.7} parent=5 // pred_region
      %s189 = ssub.s32 %s13, 1
      // Predicated region
      $region13: #{baseline_forward.7} parent=11 // pred_check
        %p190 = pneg %p60
      $region14: #{baseline_forward.7} parent=11 // pred_check_branch
        %192 = sbr.rel (%p190) target = $region16
      $region15: #{baseline_forward.7} parent=11 // pred_region
        _
      $region16: #{baseline_forward.7} parent=11 // pred_fallthru
        _
      // Predicated region
      $region17: #{baseline_forward.7} parent=11 // pred_check
        %p193 = pneg %p81
      $region18: #{baseline_forward.7} parent=11 // pred_check_branch
        %195 = sbr.rel (%p193) target = $region20
      $region19: #{baseline_forward.7} parent=11 // pred_region
        _
      $region20: #{baseline_forward.7} parent=11 // pred_fallthru
        _
      // Predicated region
      $region21: #{baseline_forward.7} parent=11 // pred_check
        %p196 = pneg %p102
      $region22: #{baseline_forward.7} parent=11 // pred_check_branch
        %198 = sbr.rel (%p196) target = $region24
      $region23: #{baseline_forward.7} parent=11 // pred_region
        _
      $region24: #{baseline_forward.7} parent=11 // pred_fallthru
        _
      // Predicated region
      $region25: #{baseline_forward.7} parent=11 // pred_check
        %p199 = pneg %p123
      $region26: #{baseline_forward.7} parent=11 // pred_check_branch
        %201 = sbr.rel (%p199) target = $region28
      $region27: #{baseline_forward.7} parent=11 // pred_region
        _
      $region28: #{baseline_forward.7} parent=11 // pred_fallthru
        _
    $region12: #{baseline_forward.7} parent=5 // pred_fallthru
      _
    %p202 = scmp.lt.s32.totalorder %s13, 2
    // Predicated region
    $region29: #{baseline_forward.7} parent=5 // pred_check
      %p203 = pneg %p202
    $region30: #{baseline_forward.7} parent=5 // pred_check_branch
      %205 = sbr.rel (%p203) target = $region32
    $region31: #{baseline_forward.7} parent=5 // pred_region
      // Predicated region
      $region33: #{baseline_forward.7} parent=31 // pred_check
        %p206 = pneg %p33
      $region34: #{baseline_forward.7} parent=31 // pred_check_branch
        %208 = sbr.rel (%p206) target = $region36
      $region35: #{baseline_forward.7} parent=31 // pred_region
        %s209 = smul.u32 16, %s13
        %p210 = scmp.lt.s32.totalorder %s209, 31
        %s211 = scalar_select %p210, %s209, 31
        %s212 = smul.addr %s211, 5
        %s213 = smul.addr %s212, 4
        %s214 = scalar_lea.vmem %s0, %s213
        %s215 = smul.u32 16, %s13
      $region36: #{baseline_forward.7} parent=31 // pred_fallthru
        _
    $region32: #{baseline_forward.7} parent=5 // pred_fallthru
      _
    %p216 = scmp.le.s32.totalorder 1, %s13
    %p217 = scmp.lt.s32.totalorder %s13, 3
    %p218 = pnand %p216, %p217
    %p219 = pneg %p218
    // Predicated region
    $region37: #{baseline_forward.7} parent=5 // pred_check
      _
    $region38: #{baseline_forward.7} parent=5 // pred_check_branch
      %221 = sbr.rel (%p218) target = $region40
    $region39: #{baseline_forward.7} parent=5 // pred_region
      %s222 = ssub.s32 %s13, 1
      %s223 = smul.u32 16, %s18
      %p224 = scmp.lt.s32.totalorder %s223, 31
      %s225 = scalar_select %p224, %s223, 31
      %s226 = smul.addr %s225, 5
      %s227 = smul.addr %s226, 4
      %s228 = scalar_lea.vmem %s0, %s227
      %p229 = pneg %p39
      %p230 = pneg %p36
      %p231 = pneg %p60
      %p232 = pneg %p57
      %p233 = pneg %p81
      %p234 = pneg %p78
      %p235 = pneg %p102
      %p236 = pneg %p99
      %p237 = pneg %p123
      %p238 = pneg %p120
      %p239 = pneg %p149
      %p240 = pneg %p146
      %s241 = smul.u32 16, %s18
      %p242 = scmp.lt.s32.totalorder %s241, 31
      %s243 = scalar_select %p242, %s241, 31
      %s244 = smul.addr %s243, 4
      %s245 = scalar_lea.vmem %s5, %s244
      %p246 = pneg %p175
      %p247 = pneg %p172
      %s248 = smul.u32 16, %s18
      %p249 = scmp.lt.s32.totalorder %s248, 31
      %s250 = scalar_select %p249, %s248, 31
      %s251 = smul.addr %s250, 8
      %s252 = scalar_lea.vmem %s6, %s251
      %s253 = smul.u32 16, %s18
      %p254 = scmp.lt.s32.totalorder %s253, 31
      %s255 = scalar_select %p254, %s253, 31
      %s256 = smul.addr %s255, 5
      %s257 = smul.addr %s256, 4
      %s258 = scalar_lea.vmem %s0, %s257
      %s259 = smul.u32 16, %s18
      %s260 = smul.u32 16, %s18
      %p261 = scmp.lt.s32.totalorder %s260, 31
      %s262 = scalar_select %p261, %s260, 31
      %s263 = smul.addr %s262, 4
      %s264 = scalar_lea.vmem %s5, %s263
      %s265 = smul.u32 16, %s18
      %s266 = smul.u32 16, %s18
      %p267 = scmp.lt.s32.totalorder %s266, 31
      %s268 = scalar_select %p267, %s266, 31
      %s269 = smul.addr %s268, 8
      %s270 = scalar_lea.vmem %s6, %s269
      %s271 = smul.u32 16, %s18
      %v273 = vld [vmem:[%s258] sm:$0xff]
      %v274 = vld [vmem:[%s258 + $0x8] sm:$0xff]
      %v275 = vld [vmem:[%s258 + $0x10] sm:$0xf]
      %v276 = vld [vmem:[%s258 + $0x14] sm:$0xff]
      %v277 = vld [vmem:[%s258 + $0x1c] sm:$0xff]
      %v278 = vld [vmem:[%s258 + $0x24] sm:$0xf]
      %v279 = vld [vmem:[%s258 + $0x28] sm:$0xff]
      %v280 = vld [vmem:[%s258 + $0x30] sm:$0xff]
      %v281 = vld [vmem:[%s258 + $0x38] sm:$0xf]
      %v282 = vld [vmem:[%s258 + $0x3c] sm:$0xff]
      %v283 = vld [vmem:[%s258 + $0x44] sm:$0xff]
      %v284 = vld [vmem:[%s258 + $0x4c] sm:$0xf]
      %v285 = vld [vmem:[%s258 + $0x50] sm:$0xff]
      %v286 = vld [vmem:[%s258 + $0x58] sm:$0xff]
      %v287 = vld [vmem:[%s258 + $0x60] sm:$0xf]
      %v288 = vld [vmem:[%s258 + $0x64] sm:$0xff]
      %v289 = vld [vmem:[%s258 + $0x6c] sm:$0xff]
      %v290 = vld [vmem:[%s258 + $0x74] sm:$0xf]
      %v291 = vld [vmem:[%s258 + $0x78] sm:$0xff]
      %v292 = vld [vmem:[%s258 + $0x80] sm:$0xff]
      %v293 = vld [vmem:[%s258 + $0x88] sm:$0xf]
      %v294 = vld [vmem:[%s258 + $0x8c] sm:$0xff]
      %v295 = vld [vmem:[%s258 + $0x94] sm:$0xff]
      %v296 = vld [vmem:[%s258 + $0x9c] sm:$0xf]
      %v297 = vld [vmem:[%s258 + $0xa0] sm:$0xff]
      %v298 = vld [vmem:[%s258 + $0xa8] sm:$0xff]
      %v299 = vld [vmem:[%s258 + $0xb0] sm:$0xf]
      %v300 = vld [vmem:[%s258 + $0xb4] sm:$0xff]
      %v301 = vld [vmem:[%s258 + $0xbc] sm:$0xff]
      %v302 = vld [vmem:[%s258 + $0xc4] sm:$0xf]
      %v303 = vld [vmem:[%s258 + $0xc8] sm:$0xff]
      %v304 = vld [vmem:[%s258 + $0xd0] sm:$0xff]
      %v305 = vld [vmem:[%s258 + $0xd8] sm:$0xf]
      %v306 = vld [vmem:[%s258 + $0xdc] sm:$0xff]
      %v307 = vld [vmem:[%s258 + $0xe4] sm:$0xff]
      %v308 = vld [vmem:[%s258 + $0xec] sm:$0xf]
      %v309 = vld [vmem:[%s258 + $0xf0] sm:$0xff]
      %v310 = vld [vmem:[%s258 + $0xf8] sm:$0xff]
      %v311 = vld [vmem:[%s258 + $0x100] sm:$0xf]
      %v312 = vld [vmem:[%s258 + $0x104] sm:$0xff]
      %v313 = vld [vmem:[%s258 + $0x10c] sm:$0xff]
      %v314 = vld [vmem:[%s258 + $0x114] sm:$0xf]
      %v315 = vld [vmem:[%s258 + $0x118] sm:$0xff]
      %v316 = vld [vmem:[%s258 + $0x120] sm:$0xff]
      %v317 = vld [vmem:[%s258 + $0x128] sm:$0xf]
      %v318 = vld [vmem:[%s258 + $0x12c] sm:$0xff]
      %v319 = vld [vmem:[%s258 + $0x134] sm:$0xff]
      %v320 = vld [vmem:[%s258 + $0x13c] sm:$0xf]
      %v321 = vld [vmem:[%s1] sm:$0xf]
      %v322 = vld [vmem:[%s1 + $0x4] sm:$0xf]
      %v323 = vld [vmem:[%s1 + $0x8] sm:$0xf]
      %v324 = vld [vmem:[%s1 + $0xc] sm:$0xf]
      %v325 = vld [vmem:[%s1 + $0x10] sm:$0xf]
      %v326 = vld [vmem:[%s1 + $0x14] sm:$0xf]
      %v327 = vld [vmem:[%s1 + $0x18] sm:$0xf]
      %v328 = vld [vmem:[%s1 + $0x1c] sm:$0xf]
      %v329 = vld [vmem:[%s1 + $0x20] sm:$0xf]
      %v330 = vld [vmem:[%s1 + $0x24] sm:$0xf]
      %v331 = vld [vmem:[%s1 + $0x28] sm:$0xf]
      %v332 = vld [vmem:[%s1 + $0x2c] sm:$0xf]
      %v333 = vld [vmem:[%s1 + $0x30] sm:$0xf]
      %v334 = vld [vmem:[%s1 + $0x34] sm:$0xf]
      %v335 = vld [vmem:[%s1 + $0x38] sm:$0xf]
      %v336 = vld [vmem:[%s1 + $0x3c] sm:$0xf]
      %v337 = vld [vmem:[%s1 + $0x40] sm:$0xf]
      %v338 = vld [vmem:[%s1 + $0x44] sm:$0xf]
      %v339 = vld [vmem:[%s1 + $0x48] sm:$0xf]
      %v340 = vld [vmem:[%s1 + $0x4c] sm:$0xf]
      %v341 = vld [vmem:[%s1 + $0x50] sm:$0xf]
      %v342 = vld [vmem:[%s1 + $0x54] sm:$0xf]
      %v343 = vld [vmem:[%s1 + $0x58] sm:$0xf]
      %v344 = vld [vmem:[%s1 + $0x5c] sm:$0xf]
      %v345 = vld [vmem:[%s1 + $0x60] sm:$0xf]
      %v346 = vld [vmem:[%s1 + $0x64] sm:$0xf]
      %v347 = vld [vmem:[%s1 + $0x68] sm:$0xf]
      %v348 = vld [vmem:[%s1 + $0x6c] sm:$0xf]
      %v349 = vld [vmem:[%s1 + $0x70] sm:$0xf]
      %v350 = vld [vmem:[%s1 + $0x74] sm:$0xf]
      %v351 = vld [vmem:[%s1 + $0x78] sm:$0xf]
      %v352 = vld [vmem:[%s1 + $0x7c] sm:$0xf]
      %v353 = vld [vmem:[%s1 + $0x80] sm:$0xf]
      %v354 = vld [vmem:[%s1 + $0x84] sm:$0xf]
      %v355 = vld [vmem:[%s1 + $0x88] sm:$0xf]
      %v356 = vld [vmem:[%s1 + $0x8c] sm:$0xf]
      %v357 = vld [vmem:[%s1 + $0x90] sm:$0xf]
      %v358 = vld [vmem:[%s1 + $0x94] sm:$0xf]
      %v359 = vld [vmem:[%s1 + $0x98] sm:$0xf]
      %v360 = vld [vmem:[%s1 + $0x9c] sm:$0xf]
      %v361 = vld [vmem:[%s1 + $0xa0] sm:$0xf]
      %v362 = vld [vmem:[%s1 + $0xa4] sm:$0xf]
      %v363 = vld [vmem:[%s1 + $0xa8] sm:$0xf]
      %v364 = vld [vmem:[%s1 + $0xac] sm:$0xf]
      %v365 = vld [vmem:[%s1 + $0xb0] sm:$0xf]
      %v366 = vld [vmem:[%s1 + $0xb4] sm:$0xf]
      %v367 = vld [vmem:[%s1 + $0xb8] sm:$0xf]
      %v368 = vld [vmem:[%s1 + $0xbc] sm:$0xf]
      %v369 = vld [vmem:[%s1 + $0xc0] sm:$0xf]
      %v370 = vld [vmem:[%s1 + $0xc4] sm:$0xf]
      %v371 = vld [vmem:[%s1 + $0xc8] sm:$0xf]
      %v372 = vld [vmem:[%s1 + $0xcc] sm:$0xf]
      %v373 = vld [vmem:[%s1 + $0xd0] sm:$0xf]
      %v374 = vld [vmem:[%s1 + $0xd4] sm:$0xf]
      %v375 = vld [vmem:[%s1 + $0xd8] sm:$0xf]
      %v376 = vld [vmem:[%s1 + $0xdc] sm:$0xf]
      %v377 = vld [vmem:[%s1 + $0xe0] sm:$0xf]
      %v378 = vld [vmem:[%s1 + $0xe4] sm:$0xf]
      %v379 = vld [vmem:[%s1 + $0xe8] sm:$0xf]
      %v380 = vld [vmem:[%s1 + $0xec] sm:$0xf]
      %v381 = vld [vmem:[%s1 + $0xf0] sm:$0xf]
      %v382 = vld [vmem:[%s1 + $0xf4] sm:$0xf]
      %v383 = vld [vmem:[%s1 + $0xf8] sm:$0xf]
      %v384 = vld [vmem:[%s1 + $0xfc] sm:$0xf]
      %v385 = vld [vmem:[%s1 + $0x100] sm:$0xf]
      %v386 = vld [vmem:[%s1 + $0x104] sm:$0xf]
      %v387 = vld [vmem:[%s1 + $0x108] sm:$0xf]
      %v388 = vld [vmem:[%s1 + $0x10c] sm:$0xf]
      %v389 = vld [vmem:[%s1 + $0x110] sm:$0xf]
      %v390 = vld [vmem:[%s1 + $0x114] sm:$0xf]
      %v391 = vld [vmem:[%s1 + $0x118] sm:$0xf]
      %v392 = vld [vmem:[%s1 + $0x11c] sm:$0xf]
      %v393 = vld [vmem:[%s2] sm:$0x1]
      %v395 = vlaneseq
      %v396 = vshrl.u32 %v395, 7
      %v397 = vsub.s32 0, %v396
      %v398 = vrot.slane %v393, %v397
      %v448 = vunpack.c.l.b16 %v273
      %v449 = vunpack.c.h.b16 %v273
      %v450 = vunpack.c.l.b16 %v274
      %v451 = vunpack.c.h.b16 %v274
      %v452 = vunpack.c.l.b16 %v275
      %v453 = vunpack.c.l.b16 %v276
      %v454 = vunpack.c.h.b16 %v276
      %v455 = vunpack.c.l.b16 %v277
      %v456 = vunpack.c.h.b16 %v277
      %v457 = vunpack.c.l.b16 %v278
      %v458 = vunpack.c.l.b16 %v279
      %v459 = vunpack.c.h.b16 %v279
      %v460 = vunpack.c.l.b16 %v280
      %v461 = vunpack.c.h.b16 %v280
      %v462 = vunpack.c.l.b16 %v281
      %v463 = vunpack.c.l.b16 %v282
      %v464 = vunpack.c.h.b16 %v282
      %v465 = vunpack.c.l.b16 %v283
      %v466 = vunpack.c.h.b16 %v283
      %v467 = vunpack.c.l.b16 %v284
      %v468 = vunpack.c.l.b16 %v285
      %v469 = vunpack.c.h.b16 %v285
      %v470 = vunpack.c.l.b16 %v286
      %v471 = vunpack.c.h.b16 %v286
      %v472 = vunpack.c.l.b16 %v287
      %v473 = vunpack.c.l.b16 %v288
      %v474 = vunpack.c.h.b16 %v288
      %v475 = vunpack.c.l.b16 %v289
      %v476 = vunpack.c.h.b16 %v289
      %v477 = vunpack.c.l.b16 %v290
      %v478 = vunpack.c.l.b16 %v291
      %v479 = vunpack.c.h.b16 %v291
      %v480 = vunpack.c.l.b16 %v292
      %v481 = vunpack.c.h.b16 %v292
      %v482 = vunpack.c.l.b16 %v293
      %v483 = vunpack.c.l.b16 %v294
      %v484 = vunpack.c.h.b16 %v294
      %v485 = vunpack.c.l.b16 %v295
      %v486 = vunpack.c.h.b16 %v295
      %v487 = vunpack.c.l.b16 %v296
      %v488 = vunpack.c.l.b16 %v297
      %v489 = vunpack.c.h.b16 %v297
      %v490 = vunpack.c.l.b16 %v298
      %v491 = vunpack.c.h.b16 %v298
      %v492 = vunpack.c.l.b16 %v299
      %v493 = vunpack.c.l.b16 %v300
      %v494 = vunpack.c.h.b16 %v300
      %v495 = vunpack.c.l.b16 %v301
      %v496 = vunpack.c.h.b16 %v301
      %v497 = vunpack.c.l.b16 %v302
      %v498 = vunpack.c.l.b16 %v303
      %v499 = vunpack.c.h.b16 %v303
      %v500 = vunpack.c.l.b16 %v304
      %v501 = vunpack.c.h.b16 %v304
      %v502 = vunpack.c.l.b16 %v305
      %v503 = vunpack.c.l.b16 %v306
      %v504 = vunpack.c.h.b16 %v306
      %v505 = vunpack.c.l.b16 %v307
      %v506 = vunpack.c.h.b16 %v307
      %v507 = vunpack.c.l.b16 %v308
      %v508 = vunpack.c.l.b16 %v309
      %v509 = vunpack.c.h.b16 %v309
      %v510 = vunpack.c.l.b16 %v310
      %v511 = vunpack.c.h.b16 %v310
      %v512 = vunpack.c.l.b16 %v311
      %v513 = vunpack.c.l.b16 %v312
      %v514 = vunpack.c.h.b16 %v312
      %v515 = vunpack.c.l.b16 %v313
      %v516 = vunpack.c.h.b16 %v313
      %v517 = vunpack.c.l.b16 %v314
      %v518 = vunpack.c.l.b16 %v315
      %v519 = vunpack.c.h.b16 %v315
      %v520 = vunpack.c.l.b16 %v316
      %v521 = vunpack.c.h.b16 %v316
      %v522 = vunpack.c.l.b16 %v317
      %v523 = vunpack.c.l.b16 %v318
      %v524 = vunpack.c.h.b16 %v318
      %v525 = vunpack.c.l.b16 %v319
      %v526 = vunpack.c.h.b16 %v319
      %v527 = vunpack.c.l.b16 %v320
      %v528 = vpack.c.b16 %v453, %v448
      %v529 = vpack.c.b16 %v454, %v449
      %v530 = vpack.c.b16 %v455, %v450
      %v531 = vpack.c.b16 %v456, %v451
      %v532 = vpack.c.b16 %v457, %v452
      %v533 = vpack.c.b16 %v463, %v458
      %v534 = vpack.c.b16 %v464, %v459
      %v535 = vpack.c.b16 %v465, %v460
      %v536 = vpack.c.b16 %v466, %v461
      %v537 = vpack.c.b16 %v467, %v462
      %v538 = vpack.c.b16 %v473, %v468
      %v539 = vpack.c.b16 %v474, %v469
      %v540 = vpack.c.b16 %v475, %v470
      %v541 = vpack.c.b16 %v476, %v471
      %v542 = vpack.c.b16 %v477, %v472
      %v543 = vpack.c.b16 %v483, %v478
      %v544 = vpack.c.b16 %v484, %v479
      %v545 = vpack.c.b16 %v485, %v480
      %v546 = vpack.c.b16 %v486, %v481
      %v547 = vpack.c.b16 %v487, %v482
      %v548 = vpack.c.b16 %v493, %v488
      %v549 = vpack.c.b16 %v494, %v489
      %v550 = vpack.c.b16 %v495, %v490
      %v551 = vpack.c.b16 %v496, %v491
      %v552 = vpack.c.b16 %v497, %v492
      %v553 = vpack.c.b16 %v503, %v498
      %v554 = vpack.c.b16 %v504, %v499
      %v555 = vpack.c.b16 %v505, %v500
      %v556 = vpack.c.b16 %v506, %v501
      %v557 = vpack.c.b16 %v507, %v502
      %v558 = vpack.c.b16 %v513, %v508
      %v559 = vpack.c.b16 %v514, %v509
      %v560 = vpack.c.b16 %v515, %v510
      %v561 = vpack.c.b16 %v516, %v511
      %v562 = vpack.c.b16 %v517, %v512
      %v563 = vpack.c.b16 %v523, %v518
      %v564 = vpack.c.b16 %v524, %v519
      %v565 = vpack.c.b16 %v525, %v520
      %v566 = vpack.c.b16 %v526, %v521
      %v567 = vpack.c.b16 %v527, %v522
      %v672 = vunpack.c.l.b16 %v321
      %v673 = vunpack.c.l.b16 %v322
      %v674 = vunpack.c.l.b16 %v323
      %v675 = vunpack.c.l.b16 %v324
      %v676 = vunpack.c.l.b16 %v325
      %v677 = vunpack.c.l.b16 %v326
      %v678 = vunpack.c.l.b16 %v327
      %v679 = vunpack.c.l.b16 %v328
      %v680 = vunpack.c.l.b16 %v329
      %v681 = vunpack.c.l.b16 %v330
      %v682 = vunpack.c.l.b16 %v331
      %v683 = vunpack.c.l.b16 %v332
      %v684 = vunpack.c.l.b16 %v333
      %v685 = vunpack.c.l.b16 %v334
      %v686 = vunpack.c.l.b16 %v335
      %v687 = vunpack.c.l.b16 %v336
      %v688 = vunpack.c.l.b16 %v337
      %v689 = vunpack.c.l.b16 %v338
      %v690 = vunpack.c.l.b16 %v339
      %v691 = vunpack.c.l.b16 %v340
      %v692 = vunpack.c.l.b16 %v341
      %v693 = vunpack.c.l.b16 %v342
      %v694 = vunpack.c.l.b16 %v343
      %v695 = vunpack.c.l.b16 %v344
      %v696 = vunpack.c.l.b16 %v345
      %v697 = vunpack.c.l.b16 %v346
      %v698 = vunpack.c.l.b16 %v347
      %v699 = vunpack.c.l.b16 %v348
      %v700 = vunpack.c.l.b16 %v349
      %v701 = vunpack.c.l.b16 %v350
      %v702 = vunpack.c.l.b16 %v351
      %v703 = vunpack.c.l.b16 %v352
      %v704 = vunpack.c.l.b16 %v353
      %v705 = vunpack.c.l.b16 %v354
      %v706 = vunpack.c.l.b16 %v355
      %v707 = vunpack.c.l.b16 %v356
      %v708 = vunpack.c.l.b16 %v357
      %v709 = vunpack.c.l.b16 %v358
      %v710 = vunpack.c.l.b16 %v359
      %v711 = vunpack.c.l.b16 %v360
      %v712 = vunpack.c.l.b16 %v361
      %v713 = vunpack.c.l.b16 %v362
      %v714 = vunpack.c.l.b16 %v363
      %v715 = vunpack.c.l.b16 %v364
      %v716 = vunpack.c.l.b16 %v365
      %v717 = vunpack.c.l.b16 %v366
      %v718 = vunpack.c.l.b16 %v367
      %v719 = vunpack.c.l.b16 %v368
      %v720 = vunpack.c.l.b16 %v369
      %v721 = vunpack.c.l.b16 %v370
      %v722 = vunpack.c.l.b16 %v371
      %v723 = vunpack.c.l.b16 %v372
      %v724 = vunpack.c.l.b16 %v373
      %v725 = vunpack.c.l.b16 %v374
      %v726 = vunpack.c.l.b16 %v375
      %v727 = vunpack.c.l.b16 %v376
      %v728 = vunpack.c.l.b16 %v377
      %v729 = vunpack.c.l.b16 %v378
      %v730 = vunpack.c.l.b16 %v379
      %v731 = vunpack.c.l.b16 %v380
      %v732 = vunpack.c.l.b16 %v381
      %v733 = vunpack.c.l.b16 %v382
      %v734 = vunpack.c.l.b16 %v383
      %v735 = vunpack.c.l.b16 %v384
      %v736 = vunpack.c.l.b16 %v385
      %v737 = vunpack.c.l.b16 %v386
      %v738 = vunpack.c.l.b16 %v387
      %v739 = vunpack.c.l.b16 %v388
      %v740 = vunpack.c.l.b16 %v389
      %v741 = vunpack.c.l.b16 %v390
      %v742 = vunpack.c.l.b16 %v391
      %v743 = vunpack.c.l.b16 %v392
      %v744 = vpack.c.b16 %v673, %v672
      %v745 = vpack.c.b16 %v675, %v674
      %v746 = vpack.c.b16 %v677, %v676
      %v747 = vpack.c.b16 %v679, %v678
      %v748 = vpack.c.b16 %v681, %v680
      %v749 = vpack.c.b16 %v683, %v682
      %v750 = vpack.c.b16 %v685, %v684
      %v751 = vpack.c.b16 %v687, %v686
      %v752 = vpack.c.b16 %v689, %v688
      %v753 = vpack.c.b16 %v691, %v690
      %v754 = vpack.c.b16 %v693, %v692
      %v755 = vpack.c.b16 %v695, %v694
      %v756 = vpack.c.b16 %v697, %v696
      %v757 = vpack.c.b16 %v699, %v698
      %v758 = vpack.c.b16 %v701, %v700
      %v759 = vpack.c.b16 %v703, %v702
      %v760 = vpack.c.b16 %v705, %v704
      %v761 = vpack.c.b16 %v707, %v706
      %v762 = vpack.c.b16 %v709, %v708
      %v763 = vpack.c.b16 %v711, %v710
      %v764 = vpack.c.b16 %v713, %v712
      %v765 = vpack.c.b16 %v715, %v714
      %v766 = vpack.c.b16 %v717, %v716
      %v767 = vpack.c.b16 %v719, %v718
      %v768 = vpack.c.b16 %v721, %v720
      %v769 = vpack.c.b16 %v723, %v722
      %v770 = vpack.c.b16 %v725, %v724
      %v771 = vpack.c.b16 %v727, %v726
      %v772 = vpack.c.b16 %v729, %v728
      %v773 = vpack.c.b16 %v731, %v730
      %v774 = vpack.c.b16 %v733, %v732
      %v775 = vpack.c.b16 %v735, %v734
      %v776 = vpack.c.b16 %v737, %v736
      %v777 = vpack.c.b16 %v739, %v738
      %v778 = vpack.c.b16 %v741, %v740
      %v779 = vpack.c.b16 %v743, %v742
      %vm816 = vcmask 523264
      %v818 = vsel %vm816, %v532, 0
      %v821 = vsel %vm816, %v537, 0
      %v824 = vsel %vm816, %v542, 0
      %v827 = vsel %vm816, %v547, 0
      %v830 = vsel %vm816, %v552, 0
      %v833 = vsel %vm816, %v557, 0
      %v836 = vsel %vm816, %v562, 0
      %v839 = vsel %vm816, %v567, 0
      %841 = vmatprep.subr.bf16.mxu0 0
      %842 = vmatpush1.bf16.msra.mxu0 %v744
      %843 = vmatprep.subr.bf16.mxu0 0
      %844 = vmatpush1.bf16.msra.mxu0 %v745
      %845 = vmatprep.subr.bf16.mxu0 0
      %846 = vmatpush1.bf16.msra.mxu0 %v746
      %847 = vmatprep.subr.bf16.mxu0 0
      %848 = vmatpush1.bf16.msra.mxu0 %v747
      %849 = vmatprep.subr.bf16.mxu0 0
      %850 = vmatpush1.bf16.msra.mxu0 %v748
      %851 = vmatprep.subr.bf16.mxu0 0
      %852 = vmatpush1.bf16.msra.mxu0 %v749
      %853 = vmatprep.subr.bf16.mxu0 0
      %854 = vmatpush1.bf16.msra.mxu0 %v750
      %855 = vmatprep.subr.bf16.mxu0 0
      %856 = vmatpush1.bf16.msra.mxu0 %v751
      %857 = vmatprep.subr.bf16.mxu0 0
      %858 = vmatpush1.bf16.msra.mxu0 %v752
      %859 = vmatprep.subr.bf16.mxu0 0
      %860 = vmatpush1.bf16.msra.mxu0 %v753
      %861 = vmatprep.subr.bf16.mxu0 0
      %862 = vmatpush1.bf16.msra.mxu0 %v754
      %863 = vmatprep.subr.bf16.mxu0 0
      %864 = vmatpush1.bf16.msra.mxu0 %v755
      %865 = vmatprep.subr.bf16.mxu0 0
      %866 = vmatpush1.bf16.msra.mxu0 %v756
      %867 = vmatprep.subr.bf16.mxu0 0
      %868 = vmatpush1.bf16.msra.mxu0 %v757
      %869 = vmatprep.subr.bf16.mxu0 0
      %870 = vmatpush1.bf16.msra.mxu0 %v758
      %871 = vmatprep.subr.bf16.mxu0 0
      %872 = vmatpush1.bf16.msra.mxu0 %v759
      %873 = vmatprep.mubr.bf16.mxu0 %v529
      %874 = vmatmul.mubr.bf16.gmra.mrb[0].mxu0 %v528
      %v875 = vpop.f32.mrb[0].mxu0
      %v876 = vadd.f32 %v398, %v875
      %v877 = vpop.f32.mrb[0].mxu0
      %v878 = vpop.f32.mrb[0].mxu0
      %v879 = vadd.f32 %v398, %v878
      %v880 = vpop.f32.mrb[0].mxu0
      %881 = vmatprep.mubr.bf16.mxu0 %v534
      %882 = vmatmul.mubr.bf16.gmra.mrb[0].mxu0 %v533
      %v883 = vpop.f32.mrb[0].mxu0
      %v884 = vadd.f32 %v398, %v883
      %v885 = vpop.f32.mrb[0].mxu0
      %v886 = vpop.f32.mrb[0].mxu0
      %v887 = vadd.f32 %v398, %v886
      %v888 = vpop.f32.mrb[0].mxu0
      %889 = vmatprep.mubr.bf16.mxu0 %v539
      %890 = vmatmul.mubr.bf16.gmra.mrb[0].mxu0 %v538
      %v891 = vpop.f32.mrb[0].mxu0
      %v892 = vadd.f32 %v398, %v891
      %v893 = vpop.f32.mrb[0].mxu0
      %v894 = vpop.f32.mrb[0].mxu0
      %v895 = vadd.f32 %v398, %v894
      %v896 = vpop.f32.mrb[0].mxu0
      %897 = vmatprep.mubr.bf16.mxu0 %v544
      %898 = vmatmul.mubr.bf16.gmra.mrb[0].mxu0 %v543
      %v899 = vpop.f32.mrb[0].mxu0
      %v900 = vadd.f32 %v398, %v899
      %v901 = vpop.f32.mrb[0].mxu0
      %v902 = vpop.f32.mrb[0].mxu0
      %v903 = vadd.f32 %v398, %v902
      %v904 = vpop.f32.mrb[0].mxu0
      %905 = vmatprep.mubr.bf16.mxu0 %v549
      %906 = vmatmul.mubr.bf16.gmra.mrb[0].mxu0 %v548
      %v907 = vpop.f32.mrb[0].mxu0
      %v908 = vadd.f32 %v398, %v907
      %v909 = vpop.f32.mrb[0].mxu0
      %v910 = vpop.f32.mrb[0].mxu0
      %v911 = vadd.f32 %v398, %v910
      %v912 = vpop.f32.mrb[0].mxu0
      %913 = vmatprep.mubr.bf16.mxu0 %v554
      %914 = vmatmul.mubr.bf16.gmra.mrb[0].mxu0 %v553
      %v915 = vpop.f32.mrb[0].mxu0
      %v916 = vadd.f32 %v398, %v915
      %v917 = vpop.f32.mrb[0].mxu0
      %v918 = vpop.f32.mrb[0].mxu0
      %v919 = vadd.f32 %v398, %v918
      %v920 = vpop.f32.mrb[0].mxu0
      %921 = vmatprep.mubr.bf16.mxu0 %v559
      %922 = vmatmul.mubr.bf16.gmra.mrb[0].mxu0 %v558
      %v923 = vpop.f32.mrb[0].mxu0
      %v924 = vadd.f32 %v398, %v923
      %v925 = vpop.f32.mrb[0].mxu0
      %v926 = vpop.f32.mrb[0].mxu0
      %v927 = vadd.f32 %v398, %v926
      %v928 = vpop.f32.mrb[0].mxu0
      %929 = vmatprep.mubr.bf16.mxu0 %v564
      %930 = vmatmul.mubr.bf16.gmra.mrb[0].mxu0 %v563
      %v931 = vpop.f32.mrb[0].mxu0
      %v932 = vadd.f32 %v398, %v931
      %v933 = vpop.f32.mrb[0].mxu0
      %v934 = vpop.f32.mrb[0].mxu0
      %v935 = vadd.f32 %v398, %v934
      %v936 = vpop.f32.mrb[0].mxu0
      %937 = vdwg.mxu0
      %938 = vmatprep.subr.bf16.mxu0 0
      %939 = vmatpush1.bf16.msra.mxu0 %v760
      %940 = vmatprep.subr.bf16.mxu0 0
      %941 = vmatpush1.bf16.msra.mxu0 %v761
      %942 = vmatprep.subr.bf16.mxu0 0
      %943 = vmatpush1.bf16.msra.mxu0 %v762
      %944 = vmatprep.subr.bf16.mxu0 0
      %945 = vmatpush1.bf16.msra.mxu0 %v763
      %946 = vmatprep.subr.bf16.mxu0 0
      %947 = vmatpush1.bf16.msra.mxu0 %v764
      %948 = vmatprep.subr.bf16.mxu0 0
      %949 = vmatpush1.bf16.msra.mxu0 %v765
      %950 = vmatprep.subr.bf16.mxu0 0
      %951 = vmatpush1.bf16.msra.mxu0 %v766
      %952 = vmatprep.subr.bf16.mxu0 0
      %953 = vmatpush1.bf16.msra.mxu0 %v767
      %954 = vmatprep.subr.bf16.mxu0 0
      %955 = vmatpush1.bf16.msra.mxu0 %v768
      %956 = vmatprep.subr.bf16.mxu0 0
      %957 = vmatpush1.bf16.msra.mxu0 %v769
      %958 = vmatprep.subr.bf16.mxu0 0
      %959 = vmatpush1.bf16.msra.mxu0 %v770
      %960 = vmatprep.subr.bf16.mxu0 0
      %961 = vmatpush1.bf16.msra.mxu0 %v771
      %962 = vmatprep.subr.bf16.mxu0 0
      %963 = vmatpush1.bf16.msra.mxu0 %v772
      %964 = vmatprep.subr.bf16.mxu0 0
      %965 = vmatpush1.bf16.msra.mxu0 %v773
      %966 = vmatprep.subr.bf16.mxu0 0
      %967 = vmatpush1.bf16.msra.mxu0 %v774
      %968 = vmatprep.subr.bf16.mxu0 0
      %969 = vmatpush1.bf16.msra.mxu0 %v775
      %970 = vmatprep.mubr.bf16.mxu0 %v531
      %971 = vmatmul.mubr.bf16.gmra.mrb[0].mxu0 %v530
      %v972 = vpop.f32.mrb[0].mxu0
      %v973 = vadd.f32 %v876, %v972
      %v974 = vpop.f32.mrb[0].mxu0
      %v975 = vpop.f32.mrb[0].mxu0
      %v976 = vadd.f32 %v879, %v975
      %v977 = vpop.f32.mrb[0].mxu0
      %978 = vmatprep.mubr.bf16.mxu0 %v536
      %979 = vmatmul.mubr.bf16.gmra.mrb[0].mxu0 %v535
      %v980 = vpop.f32.mrb[0].mxu0
      %v981 = vadd.f32 %v884, %v980
      %v982 = vpop.f32.mrb[0].mxu0
      %v983 = vpop.f32.mrb[0].mxu0
      %v984 = vadd.f32 %v887, %v983
      %v985 = vpop.f32.mrb[0].mxu0
      %986 = vmatprep.mubr.bf16.mxu0 %v541
      %987 = vmatmul.mubr.bf16.gmra.mrb[0].mxu0 %v540
      %v988 = vpop.f32.mrb[0].mxu0
      %v989 = vadd.f32 %v892, %v988
      %v990 = vpop.f32.mrb[0].mxu0
      %v991 = vpop.f32.mrb[0].mxu0
      %v992 = vadd.f32 %v895, %v991
      %v993 = vpop.f32.mrb[0].mxu0
      %994 = vmatprep.mubr.bf16.mxu0 %v546
      %995 = vmatmul.mubr.bf16.gmra.mrb[0].mxu0 %v545
      %v996 = vpop.f32.mrb[0].mxu0
      %v997 = vadd.f32 %v900, %v996
      %v998 = vpop.f32.mrb[0].mxu0
      %v999 = vpop.f32.mrb[0].mxu0
      %v1000 = vadd.f32 %v903, %v999
      %v1001 = vpop.f32.mrb[0].mxu0
      %1002 = vmatprep.mubr.bf16.mxu0 %v551
      %1003 = vmatmul.mubr.bf16.gmra.mrb[0].mxu0 %v550
      %v1004 = vpop.f32.mrb[0].mxu0
      %v1005 = vadd.f32 %v908, %v1004
      %v1006 = vpop.f32.mrb[0].mxu0
      %v1007 = vpop.f32.mrb[0].mxu0
      %v1008 = vadd.f32 %v911, %v1007
      %v1009 = vpop.f32.mrb[0].mxu0
      %1010 = vmatprep.mubr.bf16.mxu0 %v556
      %1011 = vmatmul.mubr.bf16.gmra.mrb[0].mxu0 %v555
      %v1012 = vpop.f32.mrb[0].mxu0
      %v1013 = vadd.f32 %v916, %v1012
      %v1014 = vpop.f32.mrb[0].mxu0
      %v1015 = vpop.f32.mrb[0].mxu0
      %v1016 = vadd.f32 %v919, %v1015
      %v1017 = vpop.f32.mrb[0].mxu0
      %1018 = vmatprep.mubr.bf16.mxu0 %v561
      %1019 = vmatmul.mubr.bf16.gmra.mrb[0].mxu0 %v560
      %v1020 = vpop.f32.mrb[0].mxu0
      %v1021 = vadd.f32 %v924, %v1020
      %v1022 = vpop.f32.mrb[0].mxu0
      %v1023 = vpop.f32.mrb[0].mxu0
      %v1024 = vadd.f32 %v927, %v1023
      %v1025 = vpop.f32.mrb[0].mxu0
      %1026 = vmatprep.mubr.bf16.mxu0 %v566
      %1027 = vmatmul.mubr.bf16.gmra.mrb[0].mxu0 %v565
      %v1028 = vpop.f32.mrb[0].mxu0
      %v1029 = vadd.f32 %v932, %v1028
      %v1030 = vpop.f32.mrb[0].mxu0
      %v1031 = vpop.f32.mrb[0].mxu0
      %v1032 = vadd.f32 %v935, %v1031
      %v1033 = vpop.f32.mrb[0].mxu0
      %1034 = vdwg.mxu0
      %1035 = vmatprep.subr.bf16.mxu0 0
      %1036 = vmatpush1.bf16.msra.mxu0 %v776
      %1037 = vmatprep.subr.bf16.mxu0 0
      %1038 = vmatpush1.bf16.msra.mxu0 %v777
      %1039 = vmatprep.subr.bf16.mxu0 0
      %1040 = vmatpush1.bf16.msra.mxu0 %v778
      %1041 = vmatprep.subr.bf16.mxu0 0
      %1042 = vmatpush1.bf16.msra.mxu0 %v779
      %1043 = vmatprep.subr.bf16.mxu0 0
      %1044 = vmatpush1.bf16.msra.mxu0 0
      %1045 = vmatprep.subr.bf16.mxu0 0
      %1046 = vmatpush1.bf16.msra.mxu0 0
      %1047 = vmatprep.subr.bf16.mxu0 0
      %1048 = vmatpush1.bf16.msra.mxu0 0
      %1049 = vmatprep.subr.bf16.mxu0 0
      %1050 = vmatpush1.bf16.msra.mxu0 0
      %1051 = vmatprep.subr.bf16.mxu0 0
      %1052 = vmatpush1.bf16.msra.mxu0 0
      %1053 = vmatprep.subr.bf16.mxu0 0
      %1054 = vmatpush1.bf16.msra.mxu0 0
      %1055 = vmatprep.subr.bf16.mxu0 0
      %1056 = vmatpush1.bf16.msra.mxu0 0
      %1057 = vmatprep.subr.bf16.mxu0 0
      %1058 = vmatpush1.bf16.msra.mxu0 0
      %1059 = vmatprep.subr.bf16.mxu0 0
      %1060 = vmatpush1.bf16.msra.mxu0 0
      %1061 = vmatprep.subr.bf16.mxu0 0
      %1062 = vmatpush1.bf16.msra.mxu0 0
      %1063 = vmatprep.subr.bf16.mxu0 0
      %1064 = vmatpush1.bf16.msra.mxu0 0
      %1065 = vmatprep.subr.bf16.mxu0 0
      %1066 = vmatpush1.bf16.msra.mxu0 0
      %1067 = vmatprep.mubr.bf16.mxu0 0
      %1068 = vmatmul.mubr.bf16.gmra.mrb[0].mxu0 %v818
      %v1069 = vpop.f32.mrb[0].mxu0
      %v1070 = vadd.f32 %v973, %v1069
      %v1071 = vpop.f32.mrb[0].mxu0
      %v1072 = vpop.f32.mrb[0].mxu0
      %v1073 = vadd.f32 %v976, %v1072
      %v1074 = vpop.f32.mrb[0].mxu0
      %1075 = vmatprep.mubr.bf16.mxu0 0
      %1076 = vmatmul.mubr.bf16.gmra.mrb[0].mxu0 %v821
      %v1077 = vpop.f32.mrb[0].mxu0
      %v1078 = vadd.f32 %v981, %v1077
      %v1079 = vpop.f32.mrb[0].mxu0
      %v1080 = vpop.f32.mrb[0].mxu0
      %v1081 = vadd.f32 %v984, %v1080
      %v1082 = vpop.f32.mrb[0].mxu0
      %1083 = vmatprep.mubr.bf16.mxu0 0
      %1084 = vmatmul.mubr.bf16.gmra.mrb[0].mxu0 %v824
      %v1085 = vpop.f32.mrb[0].mxu0
      %v1086 = vadd.f32 %v989, %v1085
      %v1087 = vpop.f32.mrb[0].mxu0
      %v1088 = vpop.f32.mrb[0].mxu0
      %v1089 = vadd.f32 %v992, %v1088
      %v1090 = vpop.f32.mrb[0].mxu0
      %1091 = vmatprep.mubr.bf16.mxu0 0
      %1092 = vmatmul.mubr.bf16.gmra.mrb[0].mxu0 %v827
      %v1093 = vpop.f32.mrb[0].mxu0
      %v1094 = vadd.f32 %v997, %v1093
      %v1095 = vpop.f32.mrb[0].mxu0
      %v1096 = vpop.f32.mrb[0].mxu0
      %v1097 = vadd.f32 %v1000, %v1096
      %v1098 = vpop.f32.mrb[0].mxu0
      %1099 = vmatprep.mubr.bf16.mxu0 0
      %1100 = vmatmul.mubr.bf16.gmra.mrb[0].mxu0 %v830
      %v1101 = vpop.f32.mrb[0].mxu0
      %v1102 = vadd.f32 %v1005, %v1101
      %v1103 = vpop.f32.mrb[0].mxu0
      %v1104 = vpop.f32.mrb[0].mxu0
      %v1105 = vadd.f32 %v1008, %v1104
      %v1106 = vpop.f32.mrb[0].mxu0
      %1107 = vmatprep.mubr.bf16.mxu0 0
      %1108 = vmatmul.mubr.bf16.gmra.mrb[0].mxu0 %v833
      %v1109 = vpop.f32.mrb[0].mxu0
      %v1110 = vadd.f32 %v1013, %v1109
      %v1111 = vpop.f32.mrb[0].mxu0
      %v1112 = vpop.f32.mrb[0].mxu0
      %v1113 = vadd.f32 %v1016, %v1112
      %v1114 = vpop.f32.mrb[0].mxu0
      %1115 = vmatprep.mubr.bf16.mxu0 0
      %1116 = vmatmul.mubr.bf16.gmra.mrb[0].mxu0 %v836
      %v1117 = vpop.f32.mrb[0].mxu0
      %v1118 = vadd.f32 %v1021, %v1117
      %v1119 = vpop.f32.mrb[0].mxu0
      %v1120 = vpop.f32.mrb[0].mxu0
      %v1121 = vadd.f32 %v1024, %v1120
      %v1122 = vpop.f32.mrb[0].mxu0
      %1123 = vmatprep.mubr.bf16.mxu0 0
      %1124 = vmatmul.mubr.bf16.gmra.mrb[0].mxu0 %v839
      %v1125 = vpop.f32.mrb[0].mxu0
      %v1126 = vadd.f32 %v1029, %v1125
      %v1127 = vpop.f32.mrb[0].mxu0
      %v1128 = vpop.f32.mrb[0].mxu0
      %v1129 = vadd.f32 %v1032, %v1128
      %v1130 = vpop.f32.mrb[0].mxu0
      %1131 = vdwg.mxu0
      %v1132 = vld [vmem:[%s3] sm:$0xf]
      %v1133 = vld [vmem:[%s3 + $0x4] sm:$0xf]
      %v1134 = vld [vmem:[%s3 + $0x8] sm:$0xf]
      %v1135 = vld [vmem:[%s3 + $0xc] sm:$0xf]
      %v1136 = vld [vmem:[%s3 + $0x10] sm:$0xf]
      %v1137 = vld [vmem:[%s3 + $0x14] sm:$0xf]
      %v1138 = vld [vmem:[%s3 + $0x18] sm:$0xf]
      %v1139 = vld [vmem:[%s3 + $0x1c] sm:$0xf]
      %v1140 = vld [vmem:[%s3 + $0x20] sm:$0xf]
      %v1141 = vld [vmem:[%s3 + $0x24] sm:$0xf]
      %v1142 = vld [vmem:[%s3 + $0x28] sm:$0xf]
      %v1143 = vld [vmem:[%s3 + $0x2c] sm:$0xf]
      %v1144 = vld [vmem:[%s3 + $0x30] sm:$0xf]
      %v1145 = vld [vmem:[%s3 + $0x34] sm:$0xf]
      %v1146 = vld [vmem:[%s3 + $0x38] sm:$0xf]
      %v1147 = vld [vmem:[%s3 + $0x3c] sm:$0xf]
      %v1148 = vld [vmem:[%s3 + $0x40] sm:$0xf]
      %v1149 = vld [vmem:[%s3 + $0x44] sm:$0xf]
      %v1150 = vld [vmem:[%s3 + $0x48] sm:$0xf]
      %v1151 = vld [vmem:[%s3 + $0x4c] sm:$0xf]
      %v1152 = vld [vmem:[%s3 + $0x50] sm:$0xf]
      %v1153 = vld [vmem:[%s3 + $0x54] sm:$0xf]
      %v1154 = vld [vmem:[%s3 + $0x58] sm:$0xf]
      %v1155 = vld [vmem:[%s3 + $0x5c] sm:$0xf]
      %v1156 = vld [vmem:[%s3 + $0x60] sm:$0xf]
      %v1157 = vld [vmem:[%s3 + $0x64] sm:$0xf]
      %v1158 = vld [vmem:[%s3 + $0x68] sm:$0xf]
      %v1159 = vld [vmem:[%s3 + $0x6c] sm:$0xf]
      %v1160 = vld [vmem:[%s3 + $0x70] sm:$0xf]
      %v1161 = vld [vmem:[%s3 + $0x74] sm:$0xf]
      %v1162 = vld [vmem:[%s3 + $0x78] sm:$0xf]
      %v1163 = vld [vmem:[%s3 + $0x7c] sm:$0xf]
      %v1164 = vld [vmem:[%s3 + $0x80] sm:$0xf]
      %v1165 = vld [vmem:[%s3 + $0x84] sm:$0xf]
      %v1166 = vld [vmem:[%s3 + $0x88] sm:$0xf]
      %v1167 = vld [vmem:[%s3 + $0x8c] sm:$0xf]
      %v1168 = vld [vmem:[%s3 + $0x90] sm:$0xf]
      %v1169 = vld [vmem:[%s3 + $0x94] sm:$0xf]
      %v1170 = vld [vmem:[%s3 + $0x98] sm:$0xf]
      %v1171 = vld [vmem:[%s3 + $0x9c] sm:$0xf]
      %v1172 = vld [vmem:[%s3 + $0xa0] sm:$0xf]
      %v1173 = vld [vmem:[%s3 + $0xa4] sm:$0xf]
      %v1174 = vld [vmem:[%s3 + $0xa8] sm:$0xf]
      %v1175 = vld [vmem:[%s3 + $0xac] sm:$0xf]
      %v1176 = vld [vmem:[%s3 + $0xb0] sm:$0xf]
      %v1177 = vld [vmem:[%s3 + $0xb4] sm:$0xf]
      %v1178 = vld [vmem:[%s3 + $0xb8] sm:$0xf]
      %v1179 = vld [vmem:[%s3 + $0xbc] sm:$0xf]
      %v1180 = vld [vmem:[%s3 + $0xc0] sm:$0xf]
      %v1181 = vld [vmem:[%s3 + $0xc4] sm:$0xf]
      %v1182 = vld [vmem:[%s3 + $0xc8] sm:$0xf]
      %v1183 = vld [vmem:[%s3 + $0xcc] sm:$0xf]
      %v1184 = vld [vmem:[%s3 + $0xd0] sm:$0xf]
      %v1185 = vld [vmem:[%s3 + $0xd4] sm:$0xf]
      %v1186 = vld [vmem:[%s3 + $0xd8] sm:$0xf]
      %v1187 = vld [vmem:[%s3 + $0xdc] sm:$0xf]
      %v1188 = vld [vmem:[%s3 + $0xe0] sm:$0xf]
      %v1189 = vld [vmem:[%s3 + $0xe4] sm:$0xf]
      %v1190 = vld [vmem:[%s3 + $0xe8] sm:$0xf]
      %v1191 = vld [vmem:[%s3 + $0xec] sm:$0xf]
      %v1192 = vld [vmem:[%s3 + $0xf0] sm:$0xf]
      %v1193 = vld [vmem:[%s3 + $0xf4] sm:$0xf]
      %v1194 = vld [vmem:[%s3 + $0xf8] sm:$0xf]
      %v1195 = vld [vmem:[%s3 + $0xfc] sm:$0xf]
      %v1196 = vld [vmem:[%s3 + $0x100] sm:$0xf]
      %v1197 = vld [vmem:[%s3 + $0x104] sm:$0xf]
      %v1198 = vld [vmem:[%s3 + $0x108] sm:$0xf]
      %v1199 = vld [vmem:[%s3 + $0x10c] sm:$0xf]
      %v1200 = vld [vmem:[%s3 + $0x110] sm:$0xf]
      %v1201 = vld [vmem:[%s3 + $0x114] sm:$0xf]
      %v1202 = vld [vmem:[%s3 + $0x118] sm:$0xf]
      %v1203 = vld [vmem:[%s3 + $0x11c] sm:$0xf]
      %v1204 = vld [vmem:[%s4] sm:$0x1]
      %v1206 = vlaneseq
      %v1207 = vshrl.u32 %v1206, 7
      %v1208 = vsub.s32 0, %v1207
      %v1209 = vrot.slane %v1204, %v1208
      %v1283 = vunpack.c.l.b16 %v1132
      %v1284 = vunpack.c.l.b16 %v1133
      %v1285 = vunpack.c.l.b16 %v1134
      %v1286 = vunpack.c.l.b16 %v1135
      %v1287 = vunpack.c.l.b16 %v1136
      %v1288 = vunpack.c.l.b16 %v1137
      %v1289 = vunpack.c.l.b16 %v1138
      %v1290 = vunpack.c.l.b16 %v1139
      %v1291 = vunpack.c.l.b16 %v1140
      %v1292 = vunpack.c.l.b16 %v1141
      %v1293 = vunpack.c.l.b16 %v1142
      %v1294 = vunpack.c.l.b16 %v1143
      %v1295 = vunpack.c.l.b16 %v1144
      %v1296 = vunpack.c.l.b16 %v1145
      %v1297 = vunpack.c.l.b16 %v1146
      %v1298 = vunpack.c.l.b16 %v1147
      %v1299 = vunpack.c.l.b16 %v1148
      %v1300 = vunpack.c.l.b16 %v1149
      %v1301 = vunpack.c.l.b16 %v1150
      %v1302 = vunpack.c.l.b16 %v1151
      %v1303 = vunpack.c.l.b16 %v1152
      %v1304 = vunpack.c.l.b16 %v1153
      %v1305 = vunpack.c.l.b16 %v1154
      %v1306 = vunpack.c.l.b16 %v1155
      %v1307 = vunpack.c.l.b16 %v1156
      %v1308 = vunpack.c.l.b16 %v1157
      %v1309 = vunpack.c.l.b16 %v1158
      %v1310 = vunpack.c.l.b16 %v1159
      %v1311 = vunpack.c.l.b16 %v1160
      %v1312 = vunpack.c.l.b16 %v1161
      %v1313 = vunpack.c.l.b16 %v1162
      %v1314 = vunpack.c.l.b16 %v1163
      %v1315 = vunpack.c.l.b16 %v1164
      %v1316 = vunpack.c.l.b16 %v1165
      %v1317 = vunpack.c.l.b16 %v1166
      %v1318 = vunpack.c.l.b16 %v1167
      %v1319 = vunpack.c.l.b16 %v1168
      %v1320 = vunpack.c.l.b16 %v1169
      %v1321 = vunpack.c.l.b16 %v1170
      %v1322 = vunpack.c.l.b16 %v1171
      %v1323 = vunpack.c.l.b16 %v1172
      %v1324 = vunpack.c.l.b16 %v1173
      %v1325 = vunpack.c.l.b16 %v1174
      %v1326 = vunpack.c.l.b16 %v1175
      %v1327 = vunpack.c.l.b16 %v1176
      %v1328 = vunpack.c.l.b16 %v1177
      %v1329 = vunpack.c.l.b16 %v1178
      %v1330 = vunpack.c.l.b16 %v1179
      %v1331 = vunpack.c.l.b16 %v1180
      %v1332 = vunpack.c.l.b16 %v1181
      %v1333 = vunpack.c.l.b16 %v1182
      %v1334 = vunpack.c.l.b16 %v1183
      %v1335 = vunpack.c.l.b16 %v1184
      %v1336 = vunpack.c.l.b16 %v1185
      %v1337 = vunpack.c.l.b16 %v1186
      %v1338 = vunpack.c.l.b16 %v1187
      %v1339 = vunpack.c.l.b16 %v1188
      %v1340 = vunpack.c.l.b16 %v1189
      %v1341 = vunpack.c.l.b16 %v1190
      %v1342 = vunpack.c.l.b16 %v1191
      %v1343 = vunpack.c.l.b16 %v1192
      %v1344 = vunpack.c.l.b16 %v1193
      %v1345 = vunpack.c.l.b16 %v1194
      %v1346 = vunpack.c.l.b16 %v1195
      %v1347 = vunpack.c.l.b16 %v1196
      %v1348 = vunpack.c.l.b16 %v1197
      %v1349 = vunpack.c.l.b16 %v1198
      %v1350 = vunpack.c.l.b16 %v1199
      %v1351 = vunpack.c.l.b16 %v1200
      %v1352 = vunpack.c.l.b16 %v1201
      %v1353 = vunpack.c.l.b16 %v1202
      %v1354 = vunpack.c.l.b16 %v1203
      %v1355 = vpack.c.b16 %v1284, %v1283
      %v1356 = vpack.c.b16 %v1286, %v1285
      %v1357 = vpack.c.b16 %v1288, %v1287
      %v1358 = vpack.c.b16 %v1290, %v1289
      %v1359 = vpack.c.b16 %v1292, %v1291
      %v1360 = vpack.c.b16 %v1294, %v1293
      %v1361 = vpack.c.b16 %v1296, %v1295
      %v1362 = vpack.c.b16 %v1298, %v1297
      %v1363 = vpack.c.b16 %v1300, %v1299
      %v1364 = vpack.c.b16 %v1302, %v1301
      %v1365 = vpack.c.b16 %v1304, %v1303
      %v1366 = vpack.c.b16 %v1306, %v1305
      %v1367 = vpack.c.b16 %v1308, %v1307
      %v1368 = vpack.c.b16 %v1310, %v1309
      %v1369 = vpack.c.b16 %v1312, %v1311
      %v1370 = vpack.c.b16 %v1314, %v1313
      %v1371 = vpack.c.b16 %v1316, %v1315
      %v1372 = vpack.c.b16 %v1318, %v1317
      %v1373 = vpack.c.b16 %v1320, %v1319
      %v1374 = vpack.c.b16 %v1322, %v1321
      %v1375 = vpack.c.b16 %v1324, %v1323
      %v1376 = vpack.c.b16 %v1326, %v1325
      %v1377 = vpack.c.b16 %v1328, %v1327
      %v1378 = vpack.c.b16 %v1330, %v1329
      %v1379 = vpack.c.b16 %v1332, %v1331
      %v1380 = vpack.c.b16 %v1334, %v1333
      %v1381 = vpack.c.b16 %v1336, %v1335
      %v1382 = vpack.c.b16 %v1338, %v1337
      %v1383 = vpack.c.b16 %v1340, %v1339
      %v1384 = vpack.c.b16 %v1342, %v1341
      %v1385 = vpack.c.b16 %v1344, %v1343
      %v1386 = vpack.c.b16 %v1346, %v1345
      %v1387 = vpack.c.b16 %v1348, %v1347
      %v1388 = vpack.c.b16 %v1350, %v1349
      %v1389 = vpack.c.b16 %v1352, %v1351
      %v1390 = vpack.c.b16 %v1354, %v1353
      %1427 = vmatprep.subr.bf16.mxu0 0
      %1428 = vmatpush1.bf16.msra.mxu0 %v1355
      %1429 = vmatprep.subr.bf16.mxu0 0
      %1430 = vmatpush1.bf16.msra.mxu0 %v1356
      %1431 = vmatprep.subr.bf16.mxu0 0
      %1432 = vmatpush1.bf16.msra.mxu0 %v1357
      %1433 = vmatprep.subr.bf16.mxu0 0
      %1434 = vmatpush1.bf16.msra.mxu0 %v1358
      %1435 = vmatprep.subr.bf16.mxu0 0
      %1436 = vmatpush1.bf16.msra.mxu0 %v1359
      %1437 = vmatprep.subr.bf16.mxu0 0
      %1438 = vmatpush1.bf16.msra.mxu0 %v1360
      %1439 = vmatprep.subr.bf16.mxu0 0
      %1440 = vmatpush1.bf16.msra.mxu0 %v1361
      %1441 = vmatprep.subr.bf16.mxu0 0
      %1442 = vmatpush1.bf16.msra.mxu0 %v1362
      %1443 = vmatprep.subr.bf16.mxu0 0
      %1444 = vmatpush1.bf16.msra.mxu0 %v1363
      %1445 = vmatprep.subr.bf16.mxu0 0
      %1446 = vmatpush1.bf16.msra.mxu0 %v1364
      %1447 = vmatprep.subr.bf16.mxu0 0
      %1448 = vmatpush1.bf16.msra.mxu0 %v1365
      %1449 = vmatprep.subr.bf16.mxu0 0
      %1450 = vmatpush1.bf16.msra.mxu0 %v1366
      %1451 = vmatprep.subr.bf16.mxu0 0
      %1452 = vmatpush1.bf16.msra.mxu0 %v1367
      %1453 = vmatprep.subr.bf16.mxu0 0
      %1454 = vmatpush1.bf16.msra.mxu0 %v1368
      %1455 = vmatprep.subr.bf16.mxu0 0
      %1456 = vmatpush1.bf16.msra.mxu0 %v1369
      %1457 = vmatprep.subr.bf16.mxu0 0
      %1458 = vmatpush1.bf16.msra.mxu0 %v1370
      %1459 = vmatprep.mubr.bf16.mxu0 %v529
      %1460 = vmatmul.mubr.bf16.gmra.mrb[0].mxu0 %v528
      %v1461 = vpop.f32.mrb[0].mxu0
      %v1462 = vadd.f32 %v1209, %v1461
      %v1463 = vpop.f32.mrb[0].mxu0
      %v1464 = vpop.f32.mrb[0].mxu0
      %v1465 = vadd.f32 %v1209, %v1464
      %v1466 = vpop.f32.mrb[0].mxu0
      %1467 = vmatprep.mubr.bf16.mxu0 %v534
      %1468 = vmatmul.mubr.bf16.gmra.mrb[0].mxu0 %v533
      %v1469 = vpop.f32.mrb[0].mxu0
      %v1470 = vadd.f32 %v1209, %v1469
      %v1471 = vpop.f32.mrb[0].mxu0
      %v1472 = vpop.f32.mrb[0].mxu0
      %v1473 = vadd.f32 %v1209, %v1472
      %v1474 = vpop.f32.mrb[0].mxu0
      %1475 = vmatprep.mubr.bf16.mxu0 %v539
      %1476 = vmatmul.mubr.bf16.gmra.mrb[0].mxu0 %v538
      %v1477 = vpop.f32.mrb[0].mxu0
      %v1478 = vadd.f32 %v1209, %v1477
      %v1479 = vpop.f32.mrb[0].mxu0
      %v1480 = vpop.f32.mrb[0].mxu0
      %v1481 = vadd.f32 %v1209, %v1480
      %v1482 = vpop.f32.mrb[0].mxu0
      %1483 = vmatprep.mubr.bf16.mxu0 %v544
      %1484 = vmatmul.mubr.bf16.gmra.mrb[0].mxu0 %v543
      %v1485 = vpop.f32.mrb[0].mxu0
      %v1486 = vadd.f32 %v1209, %v1485
      %v1487 = vpop.f32.mrb[0].mxu0
      %v1488 = vpop.f32.mrb[0].mxu0
      %v1489 = vadd.f32 %v1209, %v1488
      %v1490 = vpop.f32.mrb[0].mxu0
      %1491 = vmatprep.mubr.bf16.mxu0 %v549
      %1492 = vmatmul.mubr.bf16.gmra.mrb[0].mxu0 %v548
      %v1493 = vpop.f32.mrb[0].mxu0
      %v1494 = vadd.f32 %v1209, %v1493
      %v1495 = vpop.f32.mrb[0].mxu0
      %v1496 = vpop.f32.mrb[0].mxu0
      %v1497 = vadd.f32 %v1209, %v1496
      %v1498 = vpop.f32.mrb[0].mxu0
      %1499 = vmatprep.mubr.bf16.mxu0 %v554
      %1500 = vmatmul.mubr.bf16.gmra.mrb[0].mxu0 %v553
      %v1501 = vpop.f32.mrb[0].mxu0
      %v1502 = vadd.f32 %v1209, %v1501
      %v1503 = vpop.f32.mrb[0].mxu0
      %v1504 = vpop.f32.mrb[0].mxu0
      %v1505 = vadd.f32 %v1209, %v1504
      %v1506 = vpop.f32.mrb[0].mxu0
      %1507 = vmatprep.mubr.bf16.mxu0 %v559
      %1508 = vmatmul.mubr.bf16.gmra.mrb[0].mxu0 %v558
      %v1509 = vpop.f32.mrb[0].mxu0
      %v1510 = vadd.f32 %v1209, %v1509
      %v1511 = vpop.f32.mrb[0].mxu0
      %v1512 = vpop.f32.mrb[0].mxu0
      %v1513 = vadd.f32 %v1209, %v1512
      %v1514 = vpop.f32.mrb[0].mxu0
      %1515 = vmatprep.mubr.bf16.mxu0 %v564
      %1516 = vmatmul.mubr.bf16.gmra.mrb[0].mxu0 %v563
      %v1517 = vpop.f32.mrb[0].mxu0
      %v1518 = vadd.f32 %v1209, %v1517
      %v1519 = vpop.f32.mrb[0].mxu0
      %v1520 = vpop.f32.mrb[0].mxu0
      %v1521 = vadd.f32 %v1209, %v1520
      %v1522 = vpop.f32.mrb[0].mxu0
      %1523 = vdwg.mxu0
      %1524 = vmatprep.subr.bf16.mxu0 0
      %1525 = vmatpush1.bf16.msra.mxu0 %v1371
      %1526 = vmatprep.subr.bf16.mxu0 0
      %1527 = vmatpush1.bf16.msra.mxu0 %v1372
      %1528 = vmatprep.subr.bf16.mxu0 0
      %1529 = vmatpush1.bf16.msra.mxu0 %v1373
      %1530 = vmatprep.subr.bf16.mxu0 0
      %1531 = vmatpush1.bf16.msra.mxu0 %v1374
      %1532 = vmatprep.subr.bf16.mxu0 0
      %1533 = vmatpush1.bf16.msra.mxu0 %v1375
      %1534 = vmatprep.subr.bf16.mxu0 0
      %1535 = vmatpush1.bf16.msra.mxu0 %v1376
      %1536 = vmatprep.subr.bf16.mxu0 0
      %1537 = vmatpush1.bf16.msra.mxu0 %v1377
      %1538 = vmatprep.subr.bf16.mxu0 0
      %1539 = vmatpush1.bf16.msra.mxu0 %v1378
      %1540 = vmatprep.subr.bf16.mxu0 0
      %1541 = vmatpush1.bf16.msra.mxu0 %v1379
      %1542 = vmatprep.subr.bf16.mxu0 0
      %1543 = vmatpush1.bf16.msra.mxu0 %v1380
      %1544 = vmatprep.subr.bf16.mxu0 0
      %1545 = vmatpush1.bf16.msra.mxu0 %v1381
      %1546 = vmatprep.subr.bf16.mxu0 0
      %1547 = vmatpush1.bf16.msra.mxu0 %v1382
      %1548 = vmatprep.subr.bf16.mxu0 0
      %1549 = vmatpush1.bf16.msra.mxu0 %v1383
      %1550 = vmatprep.subr.bf16.mxu0 0
      %1551 = vmatpush1.bf16.msra.mxu0 %v1384
      %1552 = vmatprep.subr.bf16.mxu0 0
      %1553 = vmatpush1.bf16.msra.mxu0 %v1385
      %1554 = vmatprep.subr.bf16.mxu0 0
      %1555 = vmatpush1.bf16.msra.mxu0 %v1386
      %1556 = vmatprep.mubr.bf16.mxu0 %v531
      %1557 = vmatmul.mubr.bf16.gmra.mrb[0].mxu0 %v530
      %v1558 = vpop.f32.mrb[0].mxu0
      %v1559 = vadd.f32 %v1462, %v1558
      %v1560 = vpop.f32.mrb[0].mxu0
      %v1561 = vpop.f32.mrb[0].mxu0
      %v1562 = vadd.f32 %v1465, %v1561
      %v1563 = vpop.f32.mrb[0].mxu0
      %1564 = vmatprep.mubr.bf16.mxu0 %v536
      %1565 = vmatmul.mubr.bf16.gmra.mrb[0].mxu0 %v535
      %v1566 = vpop.f32.mrb[0].mxu0
      %v1567 = vadd.f32 %v1470, %v1566
      %v1568 = vpop.f32.mrb[0].mxu0
      %v1569 = vpop.f32.mrb[0].mxu0
      %v1570 = vadd.f32 %v1473, %v1569
      %v1571 = vpop.f32.mrb[0].mxu0
      %1572 = vmatprep.mubr.bf16.mxu0 %v541
      %1573 = vmatmul.mubr.bf16.gmra.mrb[0].mxu0 %v540
      %v1574 = vpop.f32.mrb[0].mxu0
      %v1575 = vadd.f32 %v1478, %v1574
      %v1576 = vpop.f32.mrb[0].mxu0
      %v1577 = vpop.f32.mrb[0].mxu0
      %v1578 = vadd.f32 %v1481, %v1577
      %v1579 = vpop.f32.mrb[0].mxu0
      %1580 = vmatprep.mubr.bf16.mxu0 %v546
      %1581 = vmatmul.mubr.bf16.gmra.mrb[0].mxu0 %v545
      %v1582 = vpop.f32.mrb[0].mxu0
      %v1583 = vadd.f32 %v1486, %v1582
      %v1584 = vpop.f32.mrb[0].mxu0
      %v1585 = vpop.f32.mrb[0].mxu0
      %v1586 = vadd.f32 %v1489, %v1585
      %v1587 = vpop.f32.mrb[0].mxu0
      %1588 = vmatprep.mubr.bf16.mxu0 %v551
      %1589 = vmatmul.mubr.bf16.gmra.mrb[0].mxu0 %v550
      %v1590 = vpop.f32.mrb[0].mxu0
      %v1591 = vadd.f32 %v1494, %v1590
      %v1592 = vpop.f32.mrb[0].mxu0
      %v1593 = vpop.f32.mrb[0].mxu0
      %v1594 = vadd.f32 %v1497, %v1593
      %v1595 = vpop.f32.mrb[0].mxu0
      %1596 = vmatprep.mubr.bf16.mxu0 %v556
      %1597 = vmatmul.mubr.bf16.gmra.mrb[0].mxu0 %v555
      %v1598 = vpop.f32.mrb[0].mxu0
      %v1599 = vadd.f32 %v1502, %v1598
      %v1600 = vpop.f32.mrb[0].mxu0
      %v1601 = vpop.f32.mrb[0].mxu0
      %v1602 = vadd.f32 %v1505, %v1601
      %v1603 = vpop.f32.mrb[0].mxu0
      %1604 = vmatprep.mubr.bf16.mxu0 %v561
      %1605 = vmatmul.mubr.bf16.gmra.mrb[0].mxu0 %v560
      %v1606 = vpop.f32.mrb[0].mxu0
      %v1607 = vadd.f32 %v1510, %v1606
      %v1608 = vpop.f32.mrb[0].mxu0
      %v1609 = vpop.f32.mrb[0].mxu0
      %v1610 = vadd.f32 %v1513, %v1609
      %v1611 = vpop.f32.mrb[0].mxu0
      %1612 = vmatprep.mubr.bf16.mxu0 %v566
      %1613 = vmatmul.mubr.bf16.gmra.mrb[0].mxu0 %v565
      %v1614 = vpop.f32.mrb[0].mxu0
      %v1615 = vadd.f32 %v1518, %v1614
      %v1616 = vpop.f32.mrb[0].mxu0
      %v1617 = vpop.f32.mrb[0].mxu0
      %v1618 = vadd.f32 %v1521, %v1617
      %v1619 = vpop.f32.mrb[0].mxu0
      %1620 = vdwg.mxu0
      %1621 = vmatprep.subr.bf16.mxu0 0
      %1622 = vmatpush1.bf16.msra.mxu0 %v1387
      %1623 = vmatprep.subr.bf16.mxu0 0
      %1624 = vmatpush1.bf16.msra.mxu0 %v1388
      %1625 = vmatprep.subr.bf16.mxu0 0
      %1626 = vmatpush1.bf16.msra.mxu0 %v1389
      %1627 = vmatprep.subr.bf16.mxu0 0
      %1628 = vmatpush1.bf16.msra.mxu0 %v1390
      %1629 = vmatprep.subr.bf16.mxu0 0
      %1630 = vmatpush1.bf16.msra.mxu0 0
      %1631 = vmatprep.subr.bf16.mxu0 0
      %1632 = vmatpush1.bf16.msra.mxu0 0
      %1633 = vmatprep.subr.bf16.mxu0 0
      %1634 = vmatpush1.bf16.msra.mxu0 0
      %1635 = vmatprep.subr.bf16.mxu0 0
      %1636 = vmatpush1.bf16.msra.mxu0 0
      %1637 = vmatprep.subr.bf16.mxu0 0
      %1638 = vmatpush1.bf16.msra.mxu0 0
      %1639 = vmatprep.subr.bf16.mxu0 0
      %1640 = vmatpush1.bf16.msra.mxu0 0
      %1641 = vmatprep.subr.bf16.mxu0 0
      %1642 = vmatpush1.bf16.msra.mxu0 0
      %1643 = vmatprep.subr.bf16.mxu0 0
      %1644 = vmatpush1.bf16.msra.mxu0 0
      %1645 = vmatprep.subr.bf16.mxu0 0
      %1646 = vmatpush1.bf16.msra.mxu0 0
      %1647 = vmatprep.subr.bf16.mxu0 0
      %1648 = vmatpush1.bf16.msra.mxu0 0
      %1649 = vmatprep.subr.bf16.mxu0 0
      %1650 = vmatpush1.bf16.msra.mxu0 0
      %1651 = vmatprep.subr.bf16.mxu0 0
      %1652 = vmatpush1.bf16.msra.mxu0 0
      %1653 = vmatprep.mubr.bf16.mxu0 0
      %1654 = vmatmul.mubr.bf16.gmra.mrb[0].mxu0 %v818
      %v1655 = vpop.f32.mrb[0].mxu0
      %v1656 = vadd.f32 %v1559, %v1655
      %v1657 = vpop.f32.mrb[0].mxu0
      %v1658 = vpop.f32.mrb[0].mxu0
      %v1659 = vadd.f32 %v1562, %v1658
      %v1660 = vpop.f32.mrb[0].mxu0
      %1661 = vmatprep.mubr.bf16.mxu0 0
      %1662 = vmatmul.mubr.bf16.gmra.mrb[0].mxu0 %v821
      %v1663 = vpop.f32.mrb[0].mxu0
      %v1664 = vadd.f32 %v1567, %v1663
      %v1665 = vpop.f32.mrb[0].mxu0
      %v1666 = vpop.f32.mrb[0].mxu0
      %v1667 = vadd.f32 %v1570, %v1666
      %v1668 = vpop.f32.mrb[0].mxu0
      %1669 = vmatprep.mubr.bf16.mxu0 0
      %1670 = vmatmul.mubr.bf16.gmra.mrb[0].mxu0 %v824
      %v1671 = vpop.f32.mrb[0].mxu0
      %v1672 = vadd.f32 %v1575, %v1671
      %v1673 = vpop.f32.mrb[0].mxu0
      %v1674 = vpop.f32.mrb[0].mxu0
      %v1675 = vadd.f32 %v1578, %v1674
      %v1676 = vpop.f32.mrb[0].mxu0
      %1677 = vmatprep.mubr.bf16.mxu0 0
      %1678 = vmatmul.mubr.bf16.gmra.mrb[0].mxu0 %v827
      %v1679 = vpop.f32.mrb[0].mxu0
      %v1680 = vadd.f32 %v1583, %v1679
      %v1681 = vpop.f32.mrb[0].mxu0
      %v1682 = vpop.f32.mrb[0].mxu0
      %v1683 = vadd.f32 %v1586, %v1682
      %v1684 = vpop.f32.mrb[0].mxu0
      %1685 = vmatprep.mubr.bf16.mxu0 0
      %1686 = vmatmul.mubr.bf16.gmra.mrb[0].mxu0 %v830
      %v1687 = vpop.f32.mrb[0].mxu0
      %v1688 = vadd.f32 %v1591, %v1687
      %v1689 = vpop.f32.mrb[0].mxu0
      %v1690 = vpop.f32.mrb[0].mxu0
      %v1691 = vadd.f32 %v1594, %v1690
      %v1692 = vpop.f32.mrb[0].mxu0
      %1693 = vmatprep.mubr.bf16.mxu0 0
      %1694 = vmatmul.mubr.bf16.gmra.mrb[0].mxu0 %v833
      %v1695 = vpop.f32.mrb[0].mxu0
      %v1696 = vadd.f32 %v1599, %v1695
      %v1697 = vpop.f32.mrb[0].mxu0
      %v1698 = vpop.f32.mrb[0].mxu0
      %v1699 = vadd.f32 %v1602, %v1698
      %v1700 = vpop.f32.mrb[0].mxu0
      %1701 = vmatprep.mubr.bf16.mxu0 0
      %1702 = vmatmul.mubr.bf16.gmra.mrb[0].mxu0 %v836
      %v1703 = vpop.f32.mrb[0].mxu0
      %v1704 = vadd.f32 %v1607, %v1703
      %v1705 = vpop.f32.mrb[0].mxu0
      %v1706 = vpop.f32.mrb[0].mxu0
      %v1707 = vadd.f32 %v1610, %v1706
      %v1708 = vpop.f32.mrb[0].mxu0
      %1709 = vmatprep.mubr.bf16.mxu0 0
      %1710 = vmatmul.mubr.bf16.gmra.mrb[0].mxu0 %v839
      %v1711 = vpop.f32.mrb[0].mxu0
      %v1712 = vadd.f32 %v1615, %v1711
      %v1713 = vpop.f32.mrb[0].mxu0
      %v1714 = vpop.f32.mrb[0].mxu0
      %v1715 = vadd.f32 %v1618, %v1714
      %v1716 = vpop.f32.mrb[0].mxu0
      %1717 = vdwg.mxu0
      %v1718 = vmax.f32 %v1070, 0.0
      %v1719 = vmax.f32 %v1073, 0.0
      %v1720 = vmax.f32 %v1078, 0.0
      %v1721 = vmax.f32 %v1081, 0.0
      %v1722 = vmax.f32 %v1086, 0.0
      %v1723 = vmax.f32 %v1089, 0.0
      %v1724 = vmax.f32 %v1094, 0.0
      %v1725 = vmax.f32 %v1097, 0.0
      %v1726 = vmax.f32 %v1102, 0.0
      %v1727 = vmax.f32 %v1105, 0.0
      %v1728 = vmax.f32 %v1110, 0.0
      %v1729 = vmax.f32 %v1113, 0.0
      %v1730 = vmax.f32 %v1118, 0.0
      %v1731 = vmax.f32 %v1121, 0.0
      %v1732 = vmax.f32 %v1126, 0.0
      %v1733 = vmax.f32 %v1129, 0.0
      %v1734 = vpack.c.bf16 %v1719, %v1718
      %v1735 = vpack.c.bf16 %v1721, %v1720
      %v1736 = vpack.c.bf16 %v1723, %v1722
      %v1737 = vpack.c.bf16 %v1725, %v1724
      %v1738 = vpack.c.bf16 %v1727, %v1726
      %v1739 = vpack.c.bf16 %v1729, %v1728
      %v1740 = vpack.c.bf16 %v1731, %v1730
      %v1741 = vpack.c.bf16 %v1733, %v1732
      %v1750 = vunpack.c.l.b16 %v1734
      %v1751 = vunpack.c.h.b16 %v1734
      %v1752 = vunpack.c.l.b16 %v1735
      %v1753 = vunpack.c.h.b16 %v1735
      %v1754 = vunpack.c.l.b16 %v1736
      %v1755 = vunpack.c.h.b16 %v1736
      %v1756 = vunpack.c.l.b16 %v1737
      %v1757 = vunpack.c.h.b16 %v1737
      %v1758 = vunpack.c.l.b16 %v1738
      %v1759 = vunpack.c.h.b16 %v1738
      %v1760 = vunpack.c.l.b16 %v1739
      %v1761 = vunpack.c.h.b16 %v1739
      %v1762 = vunpack.c.l.b16 %v1740
      %v1763 = vunpack.c.h.b16 %v1740
      %v1764 = vunpack.c.l.b16 %v1741
      %v1765 = vunpack.c.h.b16 %v1741
      %v1766 = vpack.c.b16 %v1750, %v1750
      %v1767 = vpack.c.b16 %v1751, %v1751
      %v1768 = vpack.c.b16 %v1752, %v1752
      %v1769 = vpack.c.b16 %v1753, %v1753
      %v1770 = vpack.c.b16 %v1754, %v1754
      %v1771 = vpack.c.b16 %v1755, %v1755
      %v1772 = vpack.c.b16 %v1756, %v1756
      %v1773 = vpack.c.b16 %v1757, %v1757
      %v1774 = vpack.c.b16 %v1758, %v1758
      %v1775 = vpack.c.b16 %v1759, %v1759
      %v1776 = vpack.c.b16 %v1760, %v1760
      %v1777 = vpack.c.b16 %v1761, %v1761
      %v1778 = vpack.c.b16 %v1762, %v1762
      %v1779 = vpack.c.b16 %v1763, %v1763
      %v1780 = vpack.c.b16 %v1764, %v1764
      %v1781 = vpack.c.b16 %v1765, %v1765
      %1798 = vst [vmem:[%s264] sm:$0xf] %v1766
      %1799 = vst [vmem:[%s264 + $0x4] sm:$0xf] %v1767
      %1800 = vst [vmem:[%s264 + $0x8] sm:$0xf] %v1768
      %1801 = vst [vmem:[%s264 + $0xc] sm:$0xf] %v1769
      %1802 = vst [vmem:[%s264 + $0x10] sm:$0xf] %v1770
      %1803 = vst [vmem:[%s264 + $0x14] sm:$0xf] %v1771
      %1804 = vst [vmem:[%s264 + $0x18] sm:$0xf] %v1772
      %1805 = vst [vmem:[%s264 + $0x1c] sm:$0xf] %v1773
      %1806 = vst [vmem:[%s264 + $0x20] sm:$0xf] %v1774
      %1807 = vst [vmem:[%s264 + $0x24] sm:$0xf] %v1775
      %1808 = vst [vmem:[%s264 + $0x28] sm:$0xf] %v1776
      %1809 = vst [vmem:[%s264 + $0x2c] sm:$0xf] %v1777
      %1810 = vst [vmem:[%s264 + $0x30] sm:$0xf] %v1778
      %1811 = vst [vmem:[%s264 + $0x34] sm:$0xf] %v1779
      %1812 = vst [vmem:[%s264 + $0x38] sm:$0xf] %v1780
      %1813 = vst [vmem:[%s264 + $0x3c] sm:$0xf] %v1781
      %1814 = vst [vmem:[%s270] sm:$0xff] %v1656
      %1815 = vst [vmem:[%s270 + $0x8] sm:$0xff] %v1659
      %1816 = vst [vmem:[%s270 + $0x10] sm:$0xff] %v1664
      %1817 = vst [vmem:[%s270 + $0x18] sm:$0xff] %v1667
      %1818 = vst [vmem:[%s270 + $0x20] sm:$0xff] %v1672
      %1819 = vst [vmem:[%s270 + $0x28] sm:$0xff] %v1675
      %1820 = vst [vmem:[%s270 + $0x30] sm:$0xff] %v1680
      %1821 = vst [vmem:[%s270 + $0x38] sm:$0xff] %v1683
      %1822 = vst [vmem:[%s270 + $0x40] sm:$0xff] %v1688
      %1823 = vst [vmem:[%s270 + $0x48] sm:$0xff] %v1691
      %1824 = vst [vmem:[%s270 + $0x50] sm:$0xff] %v1696
      %1825 = vst [vmem:[%s270 + $0x58] sm:$0xff] %v1699
      %1826 = vst [vmem:[%s270 + $0x60] sm:$0xff] %v1704
      %1827 = vst [vmem:[%s270 + $0x68] sm:$0xff] %v1707
      %1828 = vst [vmem:[%s270 + $0x70] sm:$0xff] %v1712
      %1829 = vst [vmem:[%s270 + $0x78] sm:$0xff] %v1715
      %s1830 = smul.u32 16, %s18
      %p1831 = scmp.lt.s32.totalorder %s1830, 31
      %s1832 = scalar_select %p1831, %s1830, 31
      %s1833 = smul.addr %s1832, 4
      %s1834 = scalar_lea.vmem %s5, %s1833
      %s1835 = smul.u32 16, %s18
      %p1836 = scmp.lt.s32.totalorder %s1835, 31
      %s1837 = scalar_select %p1836, %s1835, 31
      %s1838 = smul.addr %s1837, 8
      %s1839 = scalar_lea.vmem %s6, %s1838
      // Predicated region
      $region41: #{baseline_forward.7} parent=39 // pred_check
        %p1840 = pneg %p146
      $region42: #{baseline_forward.7} parent=39 // pred_check_branch
        %1842 = sbr.rel (%p1840) target = $region44
      $region43: #{baseline_forward.7} parent=39 // pred_region
        %s1843 = smul.u32 16, %s18
      $region44: #{baseline_forward.7} parent=39 // pred_fallthru
        _
      // Predicated region
      $region45: #{baseline_forward.7} parent=39 // pred_check
        %p1844 = pneg %p172
      $region46: #{baseline_forward.7} parent=39 // pred_check_branch
        %1846 = sbr.rel (%p1844) target = $region48
      $region47: #{baseline_forward.7} parent=39 // pred_region
        %s1847 = smul.u32 16, %s18
      $region48: #{baseline_forward.7} parent=39 // pred_fallthru
        _
    $region40: #{baseline_forward.7} parent=5 // pred_fallthru
      _
    %p1848 = scmp.le.s32.totalorder 2, %s13
    // Predicated region
    $region49: #{baseline_forward.7} parent=5 // pred_check
      %p1849 = pneg %p1848
    $region50: #{baseline_forward.7} parent=5 // pred_check_branch
      %1851 = sbr.rel (%p1849) target = $region52
    $region51: #{baseline_forward.7} parent=5 // pred_region
      %s1852 = ssub.s32 %s13, 2
      // Predicated region
      $region53: #{baseline_forward.7} parent=51 // pred_check
        %p1853 = pneg %p152
      $region54: #{baseline_forward.7} parent=51 // pred_check_branch
        %1855 = sbr.rel (%p1853) target = $region56
      $region55: #{baseline_forward.7} parent=51 // pred_region
        %s1856 = smul.u32 16, %s19
        %p1857 = scmp.lt.s32.totalorder %s1856, 31
        %s1858 = scalar_select %p1857, %s1856, 31
        %s1859 = smul.addr %s1858, 4
        %s1860 = scalar_lea.vmem %s5, %s1859
      $region56: #{baseline_forward.7} parent=51 // pred_fallthru
        _
      // Predicated region
      $region57: #{baseline_forward.7} parent=51 // pred_check
        %p1861 = pneg %p178
      $region58: #{baseline_forward.7} parent=51 // pred_check_branch
        %1863 = sbr.rel (%p1861) target = $region60
      $region59: #{baseline_forward.7} parent=51 // pred_region
        %s1864 = smul.u32 16, %s19
        %p1865 = scmp.lt.s32.totalorder %s1864, 31
        %s1866 = scalar_select %p1865, %s1864, 31
        %s1867 = smul.addr %s1866, 8
        %s1868 = scalar_lea.vmem %s6, %s1867
      $region60: #{baseline_forward.7} parent=51 // pred_fallthru
        _
    $region52: #{baseline_forward.7} parent=5 // pred_fallthru
      _
  $region6: #{baseline_forward.7} parent=0 // loop_footer
    %s17 = sadd.s32 1, %s13
  $region7: #{baseline_forward.7} parent=0 // loop_footer_branch
    %12 = sbr.rel target = $region3
  $region8: #{baseline_forward.7} parent=0 // loop_exit
    _

// kernel: baseline_forward.8
$region0: #{baseline_forward.8}
  #allocation0 [shape = 'u32[]', space=smem, size = 0x4, offset = 0x4, fixed_abs, tag = 'smem constant byte address 0x4 - core index']
  #allocation1 [shape = 'u32[144,128]{1,0:T(1,128)}', space=vmem, size = 0x12000, scoped, tag = 'internal scratch']
  %s0 = inlined_call_operand.vmem [shape: bf16[256,1152], index: 0, kind: input, shape index: {}]
  %s1 = inlined_call_operand.vmem [shape: bf16[1152,128], index: 1, kind: input, shape index: {}]
  %s2 = inlined_call_operand.vmem [shape: f32[1,128], index: 2, kind: input, shape index: {}]
  %s3 = inlined_call_operand.vmem [shape: f32[256,128], index: 3, kind: input, shape index: {}]
  %s4 = inlined_call_operand.vmem [shape: f32[16,256], index: 4, kind: input, shape index: {}]
  %s5 = inlined_call_operand.vmem [shape: f32[16,128], index: 5, kind: output, shape index: {}]
  %s6 = sld [smem:[#allocation0]]
  $region53: #{baseline_forward.8} parent=0
    _
  %s8 = ssub.s32 1, %s6
  %s9 = scalar_select 0, %s8, %s6
  loop: start=0, step=1, limit=4
  $region2: #{baseline_forward.8} parent=0 // loop_pre_header
    _
  $region3: #{baseline_forward.8} parent=0 // loop_header
    %s11 = sphi 0, %s15
    %p12 = scmp.ge.s32.totalorder %s11, 4
    %s21 = sphi 0, %s23
    %s24 = sphi 0, %s21
    %s25 = sphi 0, %s24
    %s41 = sphi 0, %s25
    %s45 = sphi 0, %s45
    %s47 = sphi 0, %s45
    %s48 = sphi 0, %s47
    %s62 = sphi 0, %s48
    %s66 = sphi 0, %s66
    %s68 = sphi 0, %s66
    %s69 = sphi 0, %s68
    %s83 = sphi 0, %s69
    %s89 = sphi 0, %s91
    %s92 = sphi 0, %s89
    %s93 = sphi 0, %s92
    %s109 = sphi 0, %s93
    %s117 = sphi 0, %s119
    %s120 = sphi 0, %s117
    %s121 = sphi 0, %s120
    %s137 = sphi 0, %s121
    %s143 = sphi 0, %s145
    %s146 = sphi 0, %s143
    %s147 = sphi 0, %s146
    %s163 = sphi 0, %s147
  $region4: #{baseline_forward.8} parent=0 // loop_header_branch
    %14 = sbr.rel (%p12) target = $region8
  $region5: #{baseline_forward.8} parent=0 // loop_body
    %s16 = ssub.s32 %s11, 1
    %s17 = ssub.s32 %s11, 2
    %s18 = sadd.s32 %s11, 1
    %s19 = ssub.s32 %s11, %s18
    %p20 = scmp.eq.s32.totalorder %s19, 0
    %s22 = sadd.s32 %s21, 1
    %s23 = scalar_select %p20, %s21, %s22
    %p26 = pneg %p20
    %p27 = scmp.eq.s32.totalorder %s11, 1
    %p28 = por %p26, %p27
    %p29 = scmp.ne.s32.totalorder %s21, %s24
    %p30 = scmp.eq.s32.totalorder %s11, 0
    %p31 = por %p29, %p30
    %p32 = scmp.ne.s32.totalorder %s21, %s24
    %p33 = scmp.eq.s32.totalorder %s16, 1
    %p34 = por %p32, %p33
    %p35 = scmp.ne.s32.totalorder %s24, %s25
    %p36 = scmp.eq.s32.totalorder %s16, 0
    %p37 = por %p35, %p36
    %p38 = scmp.ne.s32.totalorder %s24, %s25
    %p39 = scmp.eq.s32.totalorder %s17, 1
    %p40 = por %p38, %p39
    %p42 = scmp.ne.s32.totalorder %s25, %s41
    %p43 = scmp.eq.s32.totalorder %s17, 0
    %p44 = por %p42, %p43
    %s46 = sadd.s32 %s45, 1
    %p49 = scmp.eq.s32.totalorder %s11, 1
    %p50 = scmp.ne.s32.totalorder %s45, %s47
    %p51 = scmp.eq.s32.totalorder %s11, 0
    %p52 = por %p50, %p51
    %p53 = scmp.ne.s32.totalorder %s45, %s47
    %p54 = scmp.eq.s32.totalorder %s16, 1
    %p55 = por %p53, %p54
    %p56 = scmp.ne.s32.totalorder %s47, %s48
    %p57 = scmp.eq.s32.totalorder %s16, 0
    %p58 = por %p56, %p57
    %p59 = scmp.ne.s32.totalorder %s47, %s48
    %p60 = scmp.eq.s32.totalorder %s17, 1
    %p61 = por %p59, %p60
    %p63 = scmp.ne.s32.totalorder %s48, %s62
    %p64 = scmp.eq.s32.totalorder %s17, 0
    %p65 = por %p63, %p64
    %s67 = sadd.s32 %s66, 1
    %p70 = scmp.eq.s32.totalorder %s11, 1
    %p71 = scmp.ne.s32.totalorder %s66, %s68
    %p72 = scmp.eq.s32.totalorder %s11, 0
    %p73 = por %p71, %p72
    %p74 = scmp.ne.s32.totalorder %s66, %s68
    %p75 = scmp.eq.s32.totalorder %s16, 1
    %p76 = por %p74, %p75
    %p77 = scmp.ne.s32.totalorder %s68, %s69
    %p78 = scmp.eq.s32.totalorder %s16, 0
    %p79 = por %p77, %p78
    %p80 = scmp.ne.s32.totalorder %s68, %s69
    %p81 = scmp.eq.s32.totalorder %s17, 1
    %p82 = por %p80, %p81
    %p84 = scmp.ne.s32.totalorder %s69, %s83
    %p85 = scmp.eq.s32.totalorder %s17, 0
    %p86 = por %p84, %p85
    %s87 = ssub.s32 %s11, %s18
    %p88 = scmp.eq.s32.totalorder %s87, 0
    %s90 = sadd.s32 %s89, 1
    %s91 = scalar_select %p88, %s89, %s90
    %p94 = pneg %p88
    %p95 = scmp.eq.s32.totalorder %s11, 1
    %p96 = por %p94, %p95
    %p97 = scmp.ne.s32.totalorder %s89, %s92
    %p98 = scmp.eq.s32.totalorder %s11, 0
    %p99 = por %p97, %p98
    %p100 = scmp.ne.s32.totalorder %s89, %s92
    %p101 = scmp.eq.s32.totalorder %s16, 1
    %p102 = por %p100, %p101
    %p103 = scmp.ne.s32.totalorder %s92, %s93
    %p104 = scmp.eq.s32.totalorder %s16, 0
    %p105 = por %p103, %p104
    %p106 = scmp.ne.s32.totalorder %s92, %s93
    %p107 = scmp.eq.s32.totalorder %s17, 1
    %p108 = por %p106, %p107
    %p110 = scmp.ne.s32.totalorder %s93, %s109
    %p111 = scmp.eq.s32.totalorder %s17, 0
    %p112 = por %p110, %p111
    %s113 = ssub.s32 %s11, %s18
    %s114 = ssub.s32 %s11, %s18
    %s115 = sor.u32 %s113, %s114
    %p116 = scmp.eq.s32.totalorder %s115, 0
    %s118 = sadd.s32 %s117, 1
    %s119 = scalar_select %p116, %s117, %s118
    %p122 = pneg %p116
    %p123 = scmp.eq.s32.totalorder %s11, 1
    %p124 = por %p122, %p123
    %p125 = scmp.ne.s32.totalorder %s117, %s120
    %p126 = scmp.eq.s32.totalorder %s11, 0
    %p127 = por %p125, %p126
    %p128 = scmp.ne.s32.totalorder %s117, %s120
    %p129 = scmp.eq.s32.totalorder %s16, 1
    %p130 = por %p128, %p129
    %p131 = scmp.ne.s32.totalorder %s120, %s121
    %p132 = scmp.eq.s32.totalorder %s16, 0
    %p133 = por %p131, %p132
    %p134 = scmp.ne.s32.totalorder %s120, %s121
    %p135 = scmp.eq.s32.totalorder %s17, 1
    %p136 = por %p134, %p135
    %p138 = scmp.ne.s32.totalorder %s121, %s137
    %p139 = scmp.eq.s32.totalorder %s17, 0
    %p140 = por %p138, %p139
    %s141 = ssub.s32 %s11, %s18
    %p142 = scmp.eq.s32.totalorder %s141, 0
    %s144 = sadd.s32 %s143, 1
    %s145 = scalar_select %p142, %s143, %s144
    %p148 = pneg %p142
    %p149 = scmp.eq.s32.totalorder %s11, 1
    %p150 = por %p148, %p149
    %p151 = scmp.ne.s32.totalorder %s143, %s146
    %p152 = scmp.eq.s32.totalorder %s11, 0
    %p153 = por %p151, %p152
    %p154 = scmp.ne.s32.totalorder %s143, %s146
    %p155 = scmp.eq.s32.totalorder %s16, 1
    %p156 = por %p154, %p155
    %p157 = scmp.ne.s32.totalorder %s146, %s147
    %p158 = scmp.eq.s32.totalorder %s16, 0
    %p159 = por %p157, %p158
    %p160 = scmp.ne.s32.totalorder %s146, %s147
    %p161 = scmp.eq.s32.totalorder %s17, 1
    %p162 = por %p160, %p161
    %p164 = scmp.ne.s32.totalorder %s147, %s163
    %p165 = scmp.eq.s32.totalorder %s17, 0
    %p166 = por %p164, %p165
    %p167 = scmp.le.s32.totalorder 1, %s11
    %p168 = scmp.lt.s32.totalorder %s11, 3
    %p169 = pnand %p167, %p168
    %p170 = pneg %p169
    // Predicated region
    $region9: #{baseline_forward.8} parent=5 // pred_check
      _
    $region10: #{baseline_forward.8} parent=5 // pred_check_branch
      %172 = sbr.rel (%p169) target = $region12
    $region11: #{baseline_forward.8} parent=5 // pred_region
      %s173 = ssub.s32 %s11, 1
      // Predicated region
      $region13: #{baseline_forward.8} parent=11 // pred_check
        %p174 = pneg %p58
      $region14: #{baseline_forward.8} parent=11 // pred_check_branch
        %176 = sbr.rel (%p174) target = $region16
      $region15: #{baseline_forward.8} parent=11 // pred_region
        _
      $region16: #{baseline_forward.8} parent=11 // pred_fallthru
        _
      // Predicated region
      $region17: #{baseline_forward.8} parent=11 // pred_check
        %p177 = pneg %p79
      $region18: #{baseline_forward.8} parent=11 // pred_check_branch
        %179 = sbr.rel (%p177) target = $region20
      $region19: #{baseline_forward.8} parent=11 // pred_region
        _
      $region20: #{baseline_forward.8} parent=11 // pred_fallthru
        _
    $region12: #{baseline_forward.8} parent=5 // pred_fallthru
      _
    %p180 = scmp.lt.s32.totalorder %s11, 2
    // Predicated region
    $region21: #{baseline_forward.8} parent=5 // pred_check
      %p181 = pneg %p180
    $region22: #{baseline_forward.8} parent=5 // pred_check_branch
      %183 = sbr.rel (%p181) target = $region24
    $region23: #{baseline_forward.8} parent=5 // pred_region
      // Predicated region
      $region25: #{baseline_forward.8} parent=23 // pred_check
        %p184 = pneg %p31
      $region26: #{baseline_forward.8} parent=23 // pred_check_branch
        %186 = sbr.rel (%p184) target = $region28
      $region27: #{baseline_forward.8} parent=23 // pred_region
        %s187 = smul.u32 16, %s11
        %p188 = scmp.lt.s32.totalorder %s187, 31
        %s189 = scalar_select %p188, %s187, 31
        %s190 = smul.addr %s189, 9
        %s191 = smul.addr %s190, 4
        %s192 = scalar_lea.vmem %s0, %s191
        %s193 = smul.u32 16, %s11
      $region28: #{baseline_forward.8} parent=23 // pred_fallthru
        _
      // Predicated region
      $region29: #{baseline_forward.8} parent=23 // pred_check
        %p194 = pneg %p99
      $region30: #{baseline_forward.8} parent=23 // pred_check_branch
        %196 = sbr.rel (%p194) target = $region32
      $region31: #{baseline_forward.8} parent=23 // pred_region
        %s197 = smul.u32 16, %s11
        %p198 = scmp.lt.s32.totalorder %s197, 31
        %s199 = scalar_select %p198, %s197, 31
        %s200 = smul.addr %s199, 8
        %s201 = scalar_lea.vmem %s3, %s200
        %s202 = smul.u32 16, %s11
      $region32: #{baseline_forward.8} parent=23 // pred_fallthru
        _
      // Predicated region
      $region33: #{baseline_forward.8} parent=23 // pred_check
        %p203 = pneg %p127
      $region34: #{baseline_forward.8} parent=23 // pred_check_branch
        %205 = sbr.rel (%p203) target = $region36
      $region35: #{baseline_forward.8} parent=23 // pred_region
        %p206 = scmp.lt.s32.totalorder %s11, 1
        %s207 = scalar_select %p206, %s11, 1
        %p208 = scmp.lt.s32.totalorder %s11, 1
        %s209 = scalar_select %p208, %s11, 1
        %s210 = smul.addr %s207, 2
        %s211 = sadd.s32 %s209, %s210
        %s212 = smul.addr %s211, 8
        %s213 = scalar_lea.vmem %s4, %s212
      $region36: #{baseline_forward.8} parent=23 // pred_fallthru
        _
    $region24: #{baseline_forward.8} parent=5 // pred_fallthru
      _
    %p214 = scmp.le.s32.totalorder 1, %s11
    %p215 = scmp.lt.s32.totalorder %s11, 3
    %p216 = pnand %p214, %p215
    %p217 = pneg %p216
    // Predicated region
    $region37: #{baseline_forward.8} parent=5 // pred_check
      _
    $region38: #{baseline_forward.8} parent=5 // pred_check_branch
      %219 = sbr.rel (%p216) target = $region40
    $region39: #{baseline_forward.8} parent=5 // pred_region
      %s220 = ssub.s32 %s11, 1
      %s221 = smul.u32 16, %s16
      %p222 = scmp.lt.s32.totalorder %s221, 31
      %s223 = scalar_select %p222, %s221, 31
      %s224 = smul.addr %s223, 9
      %s225 = smul.addr %s224, 4
      %s226 = scalar_lea.vmem %s0, %s225
      %p227 = pneg %p37
      %p228 = pneg %p34
      %p229 = pneg %p58
      %p230 = pneg %p55
      %p231 = pneg %p79
      %p232 = pneg %p76
      %s233 = smul.u32 16, %s16
      %p234 = scmp.lt.s32.totalorder %s233, 31
      %s235 = scalar_select %p234, %s233, 31
      %s236 = smul.addr %s235, 8
      %s237 = scalar_lea.vmem %s3, %s236
      %p238 = pneg %p105
      %p239 = pneg %p102
      %p240 = scmp.lt.s32.totalorder %s16, 1
      %s241 = scalar_select %p240, %s16, 1
      %p242 = scmp.lt.s32.totalorder %s16, 1
      %s243 = scalar_select %p242, %s16, 1
      %s244 = smul.addr %s241, 2
      %s245 = sadd.s32 %s243, %s244
      %s246 = smul.addr %s245, 8
      %s247 = scalar_lea.vmem %s4, %s246
      %p248 = pneg %p133
      %p249 = pneg %p130
      %p250 = pneg %p159
      %p251 = pneg %p156
      %p252 = scmp.lt.s32.totalorder %s16, 1
      %s253 = scalar_select %p252, %s16, 1
      %s254 = smul.addr %s253, 8
      %s255 = scalar_lea.vmem %s5, %s254
      %s256 = smul.u32 16, %s16
      %p257 = scmp.lt.s32.totalorder %s256, 31
      %s258 = scalar_select %p257, %s256, 31
      %s259 = smul.addr %s258, 9
      %s260 = smul.addr %s259, 4
      %s261 = scalar_lea.vmem %s0, %s260
      %s262 = smul.u32 16, %s16
      %s263 = smul.u32 16, %s16
      %p264 = scmp.lt.s32.totalorder %s263, 31
      %s265 = scalar_select %p264, %s263, 31
      %s266 = smul.addr %s265, 8
      %s267 = scalar_lea.vmem %s3, %s266
      %s268 = smul.u32 16, %s16
      %p269 = scmp.lt.s32.totalorder %s16, 1
      %s270 = scalar_select %p269, %s16, 1
      %p271 = scmp.lt.s32.totalorder %s16, 1
      %s272 = scalar_select %p271, %s16, 1
      %s273 = smul.addr %s270, 2
      %s274 = sadd.s32 %s272, %s273
      %s275 = smul.addr %s274, 8
      %s276 = scalar_lea.vmem %s4, %s275
      %p277 = scmp.lt.s32.totalorder %s16, 1
      %s278 = scalar_select %p277, %s16, 1
      %s279 = smul.addr %s278, 8
      %s280 = scalar_lea.vmem %s5, %s279
      %v282 = vld [vmem:[%s261] sm:$0xff]
      %v283 = vld [vmem:[%s261 + $0x8] sm:$0xff]
      %v284 = vld [vmem:[%s261 + $0x10] sm:$0xff]
      %v285 = vld [vmem:[%s261 + $0x18] sm:$0xff]
      %v286 = vld [vmem:[%s261 + $0x20] sm:$0xf]
      %v287 = vld [vmem:[%s261 + $0x24] sm:$0xff]
      %v288 = vld [vmem:[%s261 + $0x2c] sm:$0xff]
      %v289 = vld [vmem:[%s261 + $0x34] sm:$0xff]
      %v290 = vld [vmem:[%s261 + $0x3c] sm:$0xff]
      %v291 = vld [vmem:[%s261 + $0x44] sm:$0xf]
      %v292 = vld [vmem:[%s261 + $0x48] sm:$0xff]
      %v293 = vld [vmem:[%s261 + $0x50] sm:$0xff]
      %v294 = vld [vmem:[%s261 + $0x58] sm:$0xff]
      %v295 = vld [vmem:[%s261 + $0x60] sm:$0xff]
      %v296 = vld [vmem:[%s261 + $0x68] sm:$0xf]
      %v297 = vld [vmem:[%s261 + $0x6c] sm:$0xff]
      %v298 = vld [vmem:[%s261 + $0x74] sm:$0xff]
      %v299 = vld [vmem:[%s261 + $0x7c] sm:$0xff]
      %v300 = vld [vmem:[%s261 + $0x84] sm:$0xff]
      %v301 = vld [vmem:[%s261 + $0x8c] sm:$0xf]
      %v302 = vld [vmem:[%s261 + $0x90] sm:$0xff]
      %v303 = vld [vmem:[%s261 + $0x98] sm:$0xff]
      %v304 = vld [vmem:[%s261 + $0xa0] sm:$0xff]
      %v305 = vld [vmem:[%s261 + $0xa8] sm:$0xff]
      %v306 = vld [vmem:[%s261 + $0xb0] sm:$0xf]
      %v307 = vld [vmem:[%s261 + $0xb4] sm:$0xff]
      %v308 = vld [vmem:[%s261 + $0xbc] sm:$0xff]
      %v309 = vld [vmem:[%s261 + $0xc4] sm:$0xff]
      %v310 = vld [vmem:[%s261 + $0xcc] sm:$0xff]
      %v311 = vld [vmem:[%s261 + $0xd4] sm:$0xf]
      %v312 = vld [vmem:[%s261 + $0xd8] sm:$0xff]
      %v313 = vld [vmem:[%s261 + $0xe0] sm:$0xff]
      %v314 = vld [vmem:[%s261 + $0xe8] sm:$0xff]
      %v315 = vld [vmem:[%s261 + $0xf0] sm:$0xff]
      %v316 = vld [vmem:[%s261 + $0xf8] sm:$0xf]
      %v317 = vld [vmem:[%s261 + $0xfc] sm:$0xff]
      %v318 = vld [vmem:[%s261 + $0x104] sm:$0xff]
      %v319 = vld [vmem:[%s261 + $0x10c] sm:$0xff]
      %v320 = vld [vmem:[%s261 + $0x114] sm:$0xff]
      %v321 = vld [vmem:[%s261 + $0x11c] sm:$0xf]
      %v322 = vld [vmem:[%s261 + $0x120] sm:$0xff]
      %v323 = vld [vmem:[%s261 + $0x128] sm:$0xff]
      %v324 = vld [vmem:[%s261 + $0x130] sm:$0xff]
      %v325 = vld [vmem:[%s261 + $0x138] sm:$0xff]
      %v326 = vld [vmem:[%s261 + $0x140] sm:$0xf]
      %v327 = vld [vmem:[%s261 + $0x144] sm:$0xff]
      %v328 = vld [vmem:[%s261 + $0x14c] sm:$0xff]
      %v329 = vld [vmem:[%s261 + $0x154] sm:$0xff]
      %v330 = vld [vmem:[%s261 + $0x15c] sm:$0xff]
      %v331 = vld [vmem:[%s261 + $0x164] sm:$0xf]
      %v332 = vld [vmem:[%s261 + $0x168] sm:$0xff]
      %v333 = vld [vmem:[%s261 + $0x170] sm:$0xff]
      %v334 = vld [vmem:[%s261 + $0x178] sm:$0xff]
      %v335 = vld [vmem:[%s261 + $0x180] sm:$0xff]
      %v336 = vld [vmem:[%s261 + $0x188] sm:$0xf]
      %v337 = vld [vmem:[%s261 + $0x18c] sm:$0xff]
      %v338 = vld [vmem:[%s261 + $0x194] sm:$0xff]
      %v339 = vld [vmem:[%s261 + $0x19c] sm:$0xff]
      %v340 = vld [vmem:[%s261 + $0x1a4] sm:$0xff]
      %v341 = vld [vmem:[%s261 + $0x1ac] sm:$0xf]
      %v342 = vld [vmem:[%s261 + $0x1b0] sm:$0xff]
      %v343 = vld [vmem:[%s261 + $0x1b8] sm:$0xff]
      %v344 = vld [vmem:[%s261 + $0x1c0] sm:$0xff]
      %v345 = vld [vmem:[%s261 + $0x1c8] sm:$0xff]
      %v346 = vld [vmem:[%s261 + $0x1d0] sm:$0xf]
      %v347 = vld [vmem:[%s261 + $0x1d4] sm:$0xff]
      %v348 = vld [vmem:[%s261 + $0x1dc] sm:$0xff]
      %v349 = vld [vmem:[%s261 + $0x1e4] sm:$0xff]
      %v350 = vld [vmem:[%s261 + $0x1ec] sm:$0xff]
      %v351 = vld [vmem:[%s261 + $0x1f4] sm:$0xf]
      %v352 = vld [vmem:[%s261 + $0x1f8] sm:$0xff]
      %v353 = vld [vmem:[%s261 + $0x200] sm:$0xff]
      %v354 = vld [vmem:[%s261 + $0x208] sm:$0xff]
      %v355 = vld [vmem:[%s261 + $0x210] sm:$0xff]
      %v356 = vld [vmem:[%s261 + $0x218] sm:$0xf]
      %v357 = vld [vmem:[%s261 + $0x21c] sm:$0xff]
      %v358 = vld [vmem:[%s261 + $0x224] sm:$0xff]
      %v359 = vld [vmem:[%s261 + $0x22c] sm:$0xff]
      %v360 = vld [vmem:[%s261 + $0x234] sm:$0xff]
      %v361 = vld [vmem:[%s261 + $0x23c] sm:$0xf]
      %v362 = vld [vmem:[%s1] sm:$0xf]
      %v363 = vld [vmem:[%s1 + $0x4] sm:$0xf]
      %v364 = vld [vmem:[%s1 + $0x8] sm:$0xf]
      %v365 = vld [vmem:[%s1 + $0xc] sm:$0xf]
      %v366 = vld [vmem:[%s1 + $0x10] sm:$0xf]
      %v367 = vld [vmem:[%s1 + $0x14] sm:$0xf]
      %v368 = vld [vmem:[%s1 + $0x18] sm:$0xf]
      %v369 = vld [vmem:[%s1 + $0x1c] sm:$0xf]
      %v370 = vld [vmem:[%s1 + $0x20] sm:$0xf]
      %v371 = vld [vmem:[%s1 + $0x24] sm:$0xf]
      %v372 = vld [vmem:[%s1 + $0x28] sm:$0xf]
      %v373 = vld [vmem:[%s1 + $0x2c] sm:$0xf]
      %v374 = vld [vmem:[%s1 + $0x30] sm:$0xf]
      %v375 = vld [vmem:[%s1 + $0x34] sm:$0xf]
      %v376 = vld [vmem:[%s1 + $0x38] sm:$0xf]
      %v377 = vld [vmem:[%s1 + $0x3c] sm:$0xf]
      %v378 = vld [vmem:[%s1 + $0x40] sm:$0xf]
      %v379 = vld [vmem:[%s1 + $0x44] sm:$0xf]
      %v380 = vld [vmem:[%s1 + $0x48] sm:$0xf]
      %v381 = vld [vmem:[%s1 + $0x4c] sm:$0xf]
      %v382 = vld [vmem:[%s1 + $0x50] sm:$0xf]
      %v383 = vld [vmem:[%s1 + $0x54] sm:$0xf]
      %v384 = vld [vmem:[%s1 + $0x58] sm:$0xf]
      %v385 = vld [vmem:[%s1 + $0x5c] sm:$0xf]
      %v386 = vld [vmem:[%s1 + $0x60] sm:$0xf]
      %v387 = vld [vmem:[%s1 + $0x64] sm:$0xf]
      %v388 = vld [vmem:[%s1 + $0x68] sm:$0xf]
      %v389 = vld [vmem:[%s1 + $0x6c] sm:$0xf]
      %v390 = vld [vmem:[%s1 + $0x70] sm:$0xf]
      %v391 = vld [vmem:[%s1 + $0x74] sm:$0xf]
      %v392 = vld [vmem:[%s1 + $0x78] sm:$0xf]
      %v393 = vld [vmem:[%s1 + $0x7c] sm:$0xf]
      %v394 = vld [vmem:[%s1 + $0x80] sm:$0xf]
      %v395 = vld [vmem:[%s1 + $0x84] sm:$0xf]
      %v396 = vld [vmem:[%s1 + $0x88] sm:$0xf]
      %v397 = vld [vmem:[%s1 + $0x8c] sm:$0xf]
      %v398 = vld [vmem:[%s1 + $0x90] sm:$0xf]
      %v399 = vld [vmem:[%s1 + $0x94] sm:$0xf]
      %v400 = vld [vmem:[%s1 + $0x98] sm:$0xf]
      %v401 = vld [vmem:[%s1 + $0x9c] sm:$0xf]
      %v402 = vld [vmem:[%s1 + $0xa0] sm:$0xf]
      %v403 = vld [vmem:[%s1 + $0xa4] sm:$0xf]
      %v404 = vld [vmem:[%s1 + $0xa8] sm:$0xf]
      %v405 = vld [vmem:[%s1 + $0xac] sm:$0xf]
      %v406 = vld [vmem:[%s1 + $0xb0] sm:$0xf]
      %v407 = vld [vmem:[%s1 + $0xb4] sm:$0xf]
      %v408 = vld [vmem:[%s1 + $0xb8] sm:$0xf]
      %v409 = vld [vmem:[%s1 + $0xbc] sm:$0xf]
      %v410 = vld [vmem:[%s1 + $0xc0] sm:$0xf]
      %v411 = vld [vmem:[%s1 + $0xc4] sm:$0xf]
      %v412 = vld [vmem:[%s1 + $0xc8] sm:$0xf]
      %v413 = vld [vmem:[%s1 + $0xcc] sm:$0xf]
      %v414 = vld [vmem:[%s1 + $0xd0] sm:$0xf]
      %v415 = vld [vmem:[%s1 + $0xd4] sm:$0xf]
      %v416 = vld [vmem:[%s1 + $0xd8] sm:$0xf]
      %v417 = vld [vmem:[%s1 + $0xdc] sm:$0xf]
      %v418 = vld [vmem:[%s1 + $0xe0] sm:$0xf]
      %v419 = vld [vmem:[%s1 + $0xe4] sm:$0xf]
      %v420 = vld [vmem:[%s1 + $0xe8] sm:$0xf]
      %v421 = vld [vmem:[%s1 + $0xec] sm:$0xf]
      %v422 = vld [vmem:[%s1 + $0xf0] sm:$0xf]
      %v423 = vld [vmem:[%s1 + $0xf4] sm:$0xf]
      %v424 = vld [vmem:[%s1 + $0xf8] sm:$0xf]
      %v425 = vld [vmem:[%s1 + $0xfc] sm:$0xf]
      %v426 = vld [vmem:[%s1 + $0x100] sm:$0xf]
      %v427 = vld [vmem:[%s1 + $0x104] sm:$0xf]
      %v428 = vld [vmem:[%s1 + $0x108] sm:$0xf]
      %v429 = vld [vmem:[%s1 + $0x10c] sm:$0xf]
      %v430 = vld [vmem:[%s1 + $0x110] sm:$0xf]
      %v431 = vld [vmem:[%s1 + $0x114] sm:$0xf]
      %v432 = vld [vmem:[%s1 + $0x118] sm:$0xf]
      %v433 = vld [vmem:[%s1 + $0x11c] sm:$0xf]
      %v434 = vld [vmem:[%s1 + $0x120] sm:$0xf]
      %v435 = vld [vmem:[%s1 + $0x124] sm:$0xf]
      %v436 = vld [vmem:[%s1 + $0x128] sm:$0xf]
      %v437 = vld [vmem:[%s1 + $0x12c] sm:$0xf]
      %v438 = vld [vmem:[%s1 + $0x130] sm:$0xf]
      %v439 = vld [vmem:[%s1 + $0x134] sm:$0xf]
      %v440 = vld [vmem:[%s1 + $0x138] sm:$0xf]
      %v441 = vld [vmem:[%s1 + $0x13c] sm:$0xf]
      %v442 = vld [vmem:[%s1 + $0x140] sm:$0xf]
      %v443 = vld [vmem:[%s1 + $0x144] sm:$0xf]
      %v444 = vld [vmem:[%s1 + $0x148] sm:$0xf]
      %v445 = vld [vmem:[%s1 + $0x14c] sm:$0xf]
      %v446 = vld [vmem:[%s1 + $0x150] sm:$0xf]
      %v447 = vld [vmem:[%s1 + $0x154] sm:$0xf]
      %v448 = vld [vmem:[%s1 + $0x158] sm:$0xf]
      %v449 = vld [vmem:[%s1 + $0x15c] sm:$0xf]
      %v450 = vld [vmem:[%s1 + $0x160] sm:$0xf]
      %v451 = vld [vmem:[%s1 + $0x164] sm:$0xf]
      %v452 = vld [vmem:[%s1 + $0x168] sm:$0xf]
      %v453 = vld [vmem:[%s1 + $0x16c] sm:$0xf]
      %v454 = vld [vmem:[%s1 + $0x170] sm:$0xf]
      %v455 = vld [vmem:[%s1 + $0x174] sm:$0xf]
      %v456 = vld [vmem:[%s1 + $0x178] sm:$0xf]
      %v457 = vld [vmem:[%s1 + $0x17c] sm:$0xf]
      %v458 = vld [vmem:[%s1 + $0x180] sm:$0xf]
      %v459 = vld [vmem:[%s1 + $0x184] sm:$0xf]
      %v460 = vld [vmem:[%s1 + $0x188] sm:$0xf]
      %v461 = vld [vmem:[%s1 + $0x18c] sm:$0xf]
      %v462 = vld [vmem:[%s1 + $0x190] sm:$0xf]
      %v463 = vld [vmem:[%s1 + $0x194] sm:$0xf]
      %v464 = vld [vmem:[%s1 + $0x198] sm:$0xf]
      %v465 = vld [vmem:[%s1 + $0x19c] sm:$0xf]
      %v466 = vld [vmem:[%s1 + $0x1a0] sm:$0xf]
      %v467 = vld [vmem:[%s1 + $0x1a4] sm:$0xf]
      %v468 = vld [vmem:[%s1 + $0x1a8] sm:$0xf]
      %v469 = vld [vmem:[%s1 + $0x1ac] sm:$0xf]
      %v470 = vld [vmem:[%s1 + $0x1b0] sm:$0xf]
      %v471 = vld [vmem:[%s1 + $0x1b4] sm:$0xf]
      %v472 = vld [vmem:[%s1 + $0x1b8] sm:$0xf]
      %v473 = vld [vmem:[%s1 + $0x1bc] sm:$0xf]
      %v474 = vld [vmem:[%s1 + $0x1c0] sm:$0xf]
      %v475 = vld [vmem:[%s1 + $0x1c4] sm:$0xf]
      %v476 = vld [vmem:[%s1 + $0x1c8] sm:$0xf]
      %v477 = vld [vmem:[%s1 + $0x1cc] sm:$0xf]
      %v478 = vld [vmem:[%s1 + $0x1d0] sm:$0xf]
      %v479 = vld [vmem:[%s1 + $0x1d4] sm:$0xf]
      %v480 = vld [vmem:[%s1 + $0x1d8] sm:$0xf]
      %v481 = vld [vmem:[%s1 + $0x1dc] sm:$0xf]
      %v482 = vld [vmem:[%s1 + $0x1e0] sm:$0xf]
      %v483 = vld [vmem:[%s1 + $0x1e4] sm:$0xf]
      %v484 = vld [vmem:[%s1 + $0x1e8] sm:$0xf]
      %v485 = vld [vmem:[%s1 + $0x1ec] sm:$0xf]
      %v486 = vld [vmem:[%s1 + $0x1f0] sm:$0xf]
      %v487 = vld [vmem:[%s1 + $0x1f4] sm:$0xf]
      %v488 = vld [vmem:[%s1 + $0x1f8] sm:$0xf]
      %v489 = vld [vmem:[%s1 + $0x1fc] sm:$0xf]
      %v490 = vld [vmem:[%s1 + $0x200] sm:$0xf]
      %v491 = vld [vmem:[%s1 + $0x204] sm:$0xf]
      %v492 = vld [vmem:[%s1 + $0x208] sm:$0xf]
      %v493 = vld [vmem:[%s1 + $0x20c] sm:$0xf]
      %v494 = vld [vmem:[%s1 + $0x210] sm:$0xf]
      %v495 = vld [vmem:[%s1 + $0x214] sm:$0xf]
      %v496 = vld [vmem:[%s1 + $0x218] sm:$0xf]
      %v497 = vld [vmem:[%s1 + $0x21c] sm:$0xf]
      %v498 = vld [vmem:[%s1 + $0x220] sm:$0xf]
      %v499 = vld [vmem:[%s1 + $0x224] sm:$0xf]
      %v500 = vld [vmem:[%s1 + $0x228] sm:$0xf]
      %v501 = vld [vmem:[%s1 + $0x22c] sm:$0xf]
      %v502 = vld [vmem:[%s1 + $0x230] sm:$0xf]
      %v503 = vld [vmem:[%s1 + $0x234] sm:$0xf]
      %v504 = vld [vmem:[%s1 + $0x238] sm:$0xf]
      %v505 = vld [vmem:[%s1 + $0x23c] sm:$0xf]
      %v506 = vld [vmem:[%s2] sm:$0x1]
      %v508 = vlaneseq
      %v509 = vshrl.u32 %v508, 7
      %v510 = vsub.s32 0, %v509
      %v511 = vrot.slane %v506, %v510
      %v593 = vunpack.c.l.b16 %v282
      %v594 = vunpack.c.h.b16 %v282
      %v595 = vunpack.c.l.b16 %v283
      %v596 = vunpack.c.h.b16 %v283
      %v597 = vunpack.c.l.b16 %v284
      %v598 = vunpack.c.h.b16 %v284
      %v599 = vunpack.c.l.b16 %v285
      %v600 = vunpack.c.h.b16 %v285
      %v601 = vunpack.c.l.b16 %v286
      %v602 = vunpack.c.l.b16 %v287
      %v603 = vunpack.c.h.b16 %v287
      %v604 = vunpack.c.l.b16 %v288
      %v605 = vunpack.c.h.b16 %v288
      %v606 = vunpack.c.l.b16 %v289
      %v607 = vunpack.c.h.b16 %v289
      %v608 = vunpack.c.l.b16 %v290
      %v609 = vunpack.c.h.b16 %v290
      %v610 = vunpack.c.l.b16 %v291
      %v611 = vunpack.c.l.b16 %v292
      %v612 = vunpack.c.h.b16 %v292
      %v613 = vunpack.c.l.b16 %v293
      %v614 = vunpack.c.h.b16 %v293
      %v615 = vunpack.c.l.b16 %v294
      %v616 = vunpack.c.h.b16 %v294
      %v617 = vunpack.c.l.b16 %v295
      %v618 = vunpack.c.h.b16 %v295
      %v619 = vunpack.c.l.b16 %v296
      %v620 = vunpack.c.l.b16 %v297
      %v621 = vunpack.c.h.b16 %v297
      %v622 = vunpack.c.l.b16 %v298
      %v623 = vunpack.c.h.b16 %v298
      %v624 = vunpack.c.l.b16 %v299
      %v625 = vunpack.c.h.b16 %v299
      %v626 = vunpack.c.l.b16 %v300
      %v627 = vunpack.c.h.b16 %v300
      %v628 = vunpack.c.l.b16 %v301
      %v629 = vunpack.c.l.b16 %v302
      %v630 = vunpack.c.h.b16 %v302
      %v631 = vunpack.c.l.b16 %v303
      %v632 = vunpack.c.h.b16 %v303
      %v633 = vunpack.c.l.b16 %v304
      %v634 = vunpack.c.h.b16 %v304
      %v635 = vunpack.c.l.b16 %v305
      %v636 = vunpack.c.h.b16 %v305
      %v637 = vunpack.c.l.b16 %v306
      %v638 = vunpack.c.l.b16 %v307
      %v639 = vunpack.c.h.b16 %v307
      %v640 = vunpack.c.l.b16 %v308
      %v641 = vunpack.c.h.b16 %v308
      %v642 = vunpack.c.l.b16 %v309
      %v643 = vunpack.c.h.b16 %v309
      %v644 = vunpack.c.l.b16 %v310
      %v645 = vunpack.c.h.b16 %v310
      %v646 = vunpack.c.l.b16 %v311
      %v647 = vunpack.c.l.b16 %v312
      %v648 = vunpack.c.h.b16 %v312
      %v649 = vunpack.c.l.b16 %v313
      %v650 = vunpack.c.h.b16 %v313
      %v651 = vunpack.c.l.b16 %v314
      %v652 = vunpack.c.h.b16 %v314
      %v653 = vunpack.c.l.b16 %v315
      %v654 = vunpack.c.h.b16 %v315
      %v655 = vunpack.c.l.b16 %v316
      %v656 = vunpack.c.l.b16 %v317
      %v657 = vunpack.c.h.b16 %v317
      %v658 = vunpack.c.l.b16 %v318
      %v659 = vunpack.c.h.b16 %v318
      %v660 = vunpack.c.l.b16 %v319
      %v661 = vunpack.c.h.b16 %v319
      %v662 = vunpack.c.l.b16 %v320
      %v663 = vunpack.c.h.b16 %v320
      %v664 = vunpack.c.l.b16 %v321
      %v665 = vunpack.c.l.b16 %v322
      %v666 = vunpack.c.h.b16 %v322
      %v667 = vunpack.c.l.b16 %v323
      %v668 = vunpack.c.h.b16 %v323
      %v669 = vunpack.c.l.b16 %v324
      %v670 = vunpack.c.h.b16 %v324
      %v671 = vunpack.c.l.b16 %v325
      %v672 = vunpack.c.h.b16 %v325
      %v673 = vunpack.c.l.b16 %v326
      %v674 = vunpack.c.l.b16 %v327
      %v675 = vunpack.c.h.b16 %v327
      %v676 = vunpack.c.l.b16 %v328
      %v677 = vunpack.c.h.b16 %v328
      %v678 = vunpack.c.l.b16 %v329
      %v679 = vunpack.c.h.b16 %v329
      %v680 = vunpack.c.l.b16 %v330
      %v681 = vunpack.c.h.b16 %v330
      %v682 = vunpack.c.l.b16 %v331
      %v683 = vunpack.c.l.b16 %v332
      %v684 = vunpack.c.h.b16 %v332
      %v685 = vunpack.c.l.b16 %v333
      %v686 = vunpack.c.h.b16 %v333
      %v687 = vunpack.c.l.b16 %v334
      %v688 = vunpack.c.h.b16 %v334
      %v689 = vunpack.c.l.b16 %v335
      %v690 = vunpack.c.h.b16 %v335
      %v691 = vunpack.c.l.b16 %v336
      %v692 = vunpack.c.l.b16 %v337
      %v693 = vunpack.c.h.b16 %v337
      %v694 = vunpack.c.l.b16 %v338
      %v695 = vunpack.c.h.b16 %v338
      %v696 = vunpack.c.l.b16 %v339
      %v697 = vunpack.c.h.b16 %v339
      %v698 = vunpack.c.l.b16 %v340
      %v699 = vunpack.c.h.b16 %v340
      %v700 = vunpack.c.l.b16 %v341
      %v701 = vunpack.c.l.b16 %v342
      %v702 = vunpack.c.h.b16 %v342
      %v703 = vunpack.c.l.b16 %v343
      %v704 = vunpack.c.h.b16 %v343
      %v705 = vunpack.c.l.b16 %v344
      %v706 = vunpack.c.h.b16 %v344
      %v707 = vunpack.c.l.b16 %v345
      %v708 = vunpack.c.h.b16 %v345
      %v709 = vunpack.c.l.b16 %v346
      %v710 = vunpack.c.l.b16 %v347
      %v711 = vunpack.c.h.b16 %v347
      %v712 = vunpack.c.l.b16 %v348
      %v713 = vunpack.c.h.b16 %v348
      %v714 = vunpack.c.l.b16 %v349
      %v715 = vunpack.c.h.b16 %v349
      %v716 = vunpack.c.l.b16 %v350
      %v717 = vunpack.c.h.b16 %v350
      %v718 = vunpack.c.l.b16 %v351
      %v719 = vunpack.c.l.b16 %v352
      %v720 = vunpack.c.h.b16 %v352
      %v721 = vunpack.c.l.b16 %v353
      %v722 = vunpack.c.h.b16 %v353
      %v723 = vunpack.c.l.b16 %v354
      %v724 = vunpack.c.h.b16 %v354
      %v725 = vunpack.c.l.b16 %v355
      %v726 = vunpack.c.h.b16 %v355
      %v727 = vunpack.c.l.b16 %v356
      %v728 = vunpack.c.l.b16 %v357
      %v729 = vunpack.c.h.b16 %v357
      %v730 = vunpack.c.l.b16 %v358
      %v731 = vunpack.c.h.b16 %v358
      %v732 = vunpack.c.l.b16 %v359
      %v733 = vunpack.c.h.b16 %v359
      %v734 = vunpack.c.l.b16 %v360
      %v735 = vunpack.c.h.b16 %v360
      %v736 = vunpack.c.l.b16 %v361
      %v737 = vpack.c.b16 %v602, %v593
      %v738 = vpack.c.b16 %v603, %v594
      %v739 = vpack.c.b16 %v604, %v595
      %v740 = vpack.c.b16 %v605, %v596
      %v741 = vpack.c.b16 %v606, %v597
      %v742 = vpack.c.b16 %v607, %v598
      %v743 = vpack.c.b16 %v608, %v599
      %v744 = vpack.c.b16 %v609, %v600
      %v745 = vpack.c.b16 %v610, %v601
      %v746 = vpack.c.b16 %v620, %v611
      %v747 = vpack.c.b16 %v621, %v612
      %v748 = vpack.c.b16 %v622, %v613
      %v749 = vpack.c.b16 %v623, %v614
      %v750 = vpack.c.b16 %v624, %v615
      %v751 = vpack.c.b16 %v625, %v616
      %v752 = vpack.c.b16 %v626, %v617
      %v753 = vpack.c.b16 %v627, %v618
      %v754 = vpack.c.b16 %v628, %v619
      %v755 = vpack.c.b16 %v638, %v629
      %v756 = vpack.c.b16 %v639, %v630
      %v757 = vpack.c.b16 %v640, %v631
      %v758 = vpack.c.b16 %v641, %v632
      %v759 = vpack.c.b16 %v642, %v633
      %v760 = vpack.c.b16 %v643, %v634
      %v761 = vpack.c.b16 %v644, %v635
      %v762 = vpack.c.b16 %v645, %v636
      %v763 = vpack.c.b16 %v646, %v637
      %v764 = vpack.c.b16 %v656, %v647
      %v765 = vpack.c.b16 %v657, %v648
      %v766 = vpack.c.b16 %v658, %v649
      %v767 = vpack.c.b16 %v659, %v650
      %v768 = vpack.c.b16 %v660, %v651
      %v769 = vpack.c.b16 %v661, %v652
      %v770 = vpack.c.b16 %v662, %v653
      %v771 = vpack.c.b16 %v663, %v654
      %v772 = vpack.c.b16 %v664, %v655
      %v773 = vpack.c.b16 %v674, %v665
      %v774 = vpack.c.b16 %v675, %v666
      %v775 = vpack.c.b16 %v676, %v667
      %v776 = vpack.c.b16 %v677, %v668
      %v777 = vpack.c.b16 %v678, %v669
      %v778 = vpack.c.b16 %v679, %v670
      %v779 = vpack.c.b16 %v680, %v671
      %v780 = vpack.c.b16 %v681, %v672
      %v781 = vpack.c.b16 %v682, %v673
      %v782 = vpack.c.b16 %v692, %v683
      %v783 = vpack.c.b16 %v693, %v684
      %v784 = vpack.c.b16 %v694, %v685
      %v785 = vpack.c.b16 %v695, %v686
      %v786 = vpack.c.b16 %v696, %v687
      %v787 = vpack.c.b16 %v697, %v688
      %v788 = vpack.c.b16 %v698, %v689
      %v789 = vpack.c.b16 %v699, %v690
      %v790 = vpack.c.b16 %v700, %v691
      %v791 = vpack.c.b16 %v710, %v701
      %v792 = vpack.c.b16 %v711, %v702
      %v793 = vpack.c.b16 %v712, %v703
      %v794 = vpack.c.b16 %v713, %v704
      %v795 = vpack.c.b16 %v714, %v705
      %v796 = vpack.c.b16 %v715, %v706
      %v797 = vpack.c.b16 %v716, %v707
      %v798 = vpack.c.b16 %v717, %v708
      %v799 = vpack.c.b16 %v718, %v709
      %v800 = vpack.c.b16 %v728, %v719
      %v801 = vpack.c.b16 %v729, %v720
      %v802 = vpack.c.b16 %v730, %v721
      %v803 = vpack.c.b16 %v731, %v722
      %v804 = vpack.c.b16 %v732, %v723
      %v805 = vpack.c.b16 %v733, %v724
      %v806 = vpack.c.b16 %v734, %v725
      %v807 = vpack.c.b16 %v735, %v726
      %v808 = vpack.c.b16 %v736, %v727
      %v1025 = vunpack.c.l.b16 %v362
      %v1026 = vunpack.c.l.b16 %v363
      %v1027 = vunpack.c.l.b16 %v364
      %v1028 = vunpack.c.l.b16 %v365
      %v1029 = vunpack.c.l.b16 %v366
      %v1030 = vunpack.c.l.b16 %v367
      %v1031 = vunpack.c.l.b16 %v368
      %v1032 = vunpack.c.l.b16 %v369
      %v1033 = vunpack.c.l.b16 %v370
      %v1034 = vunpack.c.l.b16 %v371
      %v1035 = vunpack.c.l.b16 %v372
      %v1036 = vunpack.c.l.b16 %v373
      %v1037 = vunpack.c.l.b16 %v374
      %v1038 = vunpack.c.l.b16 %v375
      %v1039 = vunpack.c.l.b16 %v376
      %v1040 = vunpack.c.l.b16 %v377
      %v1041 = vunpack.c.l.b16 %v378
      %v1042 = vunpack.c.l.b16 %v379
      %v1043 = vunpack.c.l.b16 %v380
      %v1044 = vunpack.c.l.b16 %v381
      %v1045 = vunpack.c.l.b16 %v382
      %v1046 = vunpack.c.l.b16 %v383
      %v1047 = vunpack.c.l.b16 %v384
      %v1048 = vunpack.c.l.b16 %v385
      %v1049 = vunpack.c.l.b16 %v386
      %v1050 = vunpack.c.l.b16 %v387
      %v1051 = vunpack.c.l.b16 %v388
      %v1052 = vunpack.c.l.b16 %v389
      %v1053 = vunpack.c.l.b16 %v390
      %v1054 = vunpack.c.l.b16 %v391
      %v1055 = vunpack.c.l.b16 %v392
      %v1056 = vunpack.c.l.b16 %v393
      %v1057 = vunpack.c.l.b16 %v394
      %v1058 = vunpack.c.l.b16 %v395
      %v1059 = vunpack.c.l.b16 %v396
      %v1060 = vunpack.c.l.b16 %v397
      %v1061 = vunpack.c.l.b16 %v398
      %v1062 = vunpack.c.l.b16 %v399
      %v1063 = vunpack.c.l.b16 %v400
      %v1064 = vunpack.c.l.b16 %v401
      %v1065 = vunpack.c.l.b16 %v402
      %v1066 = vunpack.c.l.b16 %v403
      %v1067 = vunpack.c.l.b16 %v404
      %v1068 = vunpack.c.l.b16 %v405
      %v1069 = vunpack.c.l.b16 %v406
      %v1070 = vunpack.c.l.b16 %v407
      %v1071 = vunpack.c.l.b16 %v408
      %v1072 = vunpack.c.l.b16 %v409
      %v1073 = vunpack.c.l.b16 %v410
      %v1074 = vunpack.c.l.b16 %v411
      %v1075 = vunpack.c.l.b16 %v412
      %v1076 = vunpack.c.l.b16 %v413
      %v1077 = vunpack.c.l.b16 %v414
      %v1078 = vunpack.c.l.b16 %v415
      %v1079 = vunpack.c.l.b16 %v416
      %v1080 = vunpack.c.l.b16 %v417
      %v1081 = vunpack.c.l.b16 %v418
      %v1082 = vunpack.c.l.b16 %v419
      %v1083 = vunpack.c.l.b16 %v420
      %v1084 = vunpack.c.l.b16 %v421
      %v1085 = vunpack.c.l.b16 %v422
      %v1086 = vunpack.c.l.b16 %v423
      %v1087 = vunpack.c.l.b16 %v424
      %v1088 = vunpack.c.l.b16 %v425
      %v1089 = vunpack.c.l.b16 %v426
      %v1090 = vunpack.c.l.b16 %v427
      %v1091 = vunpack.c.l.b16 %v428
      %v1092 = vunpack.c.l.b16 %v429
      %v1093 = vunpack.c.l.b16 %v430
      %v1094 = vunpack.c.l.b16 %v431
      %v1095 = vunpack.c.l.b16 %v432
      %v1096 = vunpack.c.l.b16 %v433
      %v1097 = vunpack.c.l.b16 %v434
      %v1098 = vunpack.c.l.b16 %v435
      %v1099 = vunpack.c.l.b16 %v436
      %v1100 = vunpack.c.l.b16 %v437
      %v1101 = vunpack.c.l.b16 %v438
      %v1102 = vunpack.c.l.b16 %v439
      %v1103 = vunpack.c.l.b16 %v440
      %v1104 = vunpack.c.l.b16 %v441
      %v1105 = vunpack.c.l.b16 %v442
      %v1106 = vunpack.c.l.b16 %v443
      %v1107 = vunpack.c.l.b16 %v444
      %v1108 = vunpack.c.l.b16 %v445
      %v1109 = vunpack.c.l.b16 %v446
      %v1110 = vunpack.c.l.b16 %v447
      %v1111 = vunpack.c.l.b16 %v448
      %v1112 = vunpack.c.l.b16 %v449
      %v1113 = vunpack.c.l.b16 %v450
      %v1114 = vunpack.c.l.b16 %v451
      %v1115 = vunpack.c.l.b16 %v452
      %v1116 = vunpack.c.l.b16 %v453
      %v1117 = vunpack.c.l.b16 %v454
      %v1118 = vunpack.c.l.b16 %v455
      %v1119 = vunpack.c.l.b16 %v456
      %v1120 = vunpack.c.l.b16 %v457
      %v1121 = vunpack.c.l.b16 %v458
      %v1122 = vunpack.c.l.b16 %v459
      %v1123 = vunpack.c.l.b16 %v460
      %v1124 = vunpack.c.l.b16 %v461
      %v1125 = vunpack.c.l.b16 %v462
      %v1126 = vunpack.c.l.b16 %v463
      %v1127 = vunpack.c.l.b16 %v464
      %v1128 = vunpack.c.l.b16 %v465
      %v1129 = vunpack.c.l.b16 %v466
      %v1130 = vunpack.c.l.b16 %v467
      %v1131 = vunpack.c.l.b16 %v468
      %v1132 = vunpack.c.l.b16 %v469
      %v1133 = vunpack.c.l.b16 %v470
      %v1134 = vunpack.c.l.b16 %v471
      %v1135 = vunpack.c.l.b16 %v472
      %v1136 = vunpack.c.l.b16 %v473
      %v1137 = vunpack.c.l.b16 %v474
      %v1138 = vunpack.c.l.b16 %v475
      %v1139 = vunpack.c.l.b16 %v476
      %v1140 = vunpack.c.l.b16 %v477
      %v1141 = vunpack.c.l.b16 %v478
      %v1142 = vunpack.c.l.b16 %v479
      %v1143 = vunpack.c.l.b16 %v480
      %v1144 = vunpack.c.l.b16 %v481
      %v1145 = vunpack.c.l.b16 %v482
      %v1146 = vunpack.c.l.b16 %v483
      %v1147 = vunpack.c.l.b16 %v484
      %v1148 = vunpack.c.l.b16 %v485
      %v1149 = vunpack.c.l.b16 %v486
      %v1150 = vunpack.c.l.b16 %v487
      %v1151 = vunpack.c.l.b16 %v488
      %v1152 = vunpack.c.l.b16 %v489
      %v1153 = vunpack.c.l.b16 %v490
      %v1154 = vunpack.c.l.b16 %v491
      %v1155 = vunpack.c.l.b16 %v492
      %v1156 = vunpack.c.l.b16 %v493
      %v1157 = vunpack.c.l.b16 %v494
      %v1158 = vunpack.c.l.b16 %v495
      %v1159 = vunpack.c.l.b16 %v496
      %v1160 = vunpack.c.l.b16 %v497
      %v1161 = vunpack.c.l.b16 %v498
      %v1162 = vunpack.c.l.b16 %v499
      %v1163 = vunpack.c.l.b16 %v500
      %v1164 = vunpack.c.l.b16 %v501
      %v1165 = vunpack.c.l.b16 %v502
      %v1166 = vunpack.c.l.b16 %v503
      %v1167 = vunpack.c.l.b16 %v504
      %v1168 = vunpack.c.l.b16 %v505
      %v1169 = vpack.c.b16 %v1026, %v1025
      %v1170 = vpack.c.b16 %v1028, %v1027
      %v1171 = vpack.c.b16 %v1030, %v1029
      %v1172 = vpack.c.b16 %v1032, %v1031
      %v1173 = vpack.c.b16 %v1034, %v1033
      %v1174 = vpack.c.b16 %v1036, %v1035
      %v1175 = vpack.c.b16 %v1038, %v1037
      %v1176 = vpack.c.b16 %v1040, %v1039
      %v1177 = vpack.c.b16 %v1042, %v1041
      %v1178 = vpack.c.b16 %v1044, %v1043
      %v1179 = vpack.c.b16 %v1046, %v1045
      %v1180 = vpack.c.b16 %v1048, %v1047
      %v1181 = vpack.c.b16 %v1050, %v1049
      %v1182 = vpack.c.b16 %v1052, %v1051
      %v1183 = vpack.c.b16 %v1054, %v1053
      %v1184 = vpack.c.b16 %v1056, %v1055
      %v1185 = vpack.c.b16 %v1058, %v1057
      %v1186 = vpack.c.b16 %v1060, %v1059
      %v1187 = vpack.c.b16 %v1062, %v1061
      %v1188 = vpack.c.b16 %v1064, %v1063
      %v1189 = vpack.c.b16 %v1066, %v1065
      %v1190 = vpack.c.b16 %v1068, %v1067
      %v1191 = vpack.c.b16 %v1070, %v1069
      %v1192 = vpack.c.b16 %v1072, %v1071
      %v1193 = vpack.c.b16 %v1074, %v1073
      %v1194 = vpack.c.b16 %v1076, %v1075
      %v1195 = vpack.c.b16 %v1078, %v1077
      %v1196 = vpack.c.b16 %v1080, %v1079
      %v1197 = vpack.c.b16 %v1082, %v1081
      %v1198 = vpack.c.b16 %v1084, %v1083
      %v1199 = vpack.c.b16 %v1086, %v1085
      %v1200 = vpack.c.b16 %v1088, %v1087
      %v1201 = vpack.c.b16 %v1090, %v1089
      %v1202 = vpack.c.b16 %v1092, %v1091
      %v1203 = vpack.c.b16 %v1094, %v1093
      %v1204 = vpack.c.b16 %v1096, %v1095
      %v1205 = vpack.c.b16 %v1098, %v1097
      %v1206 = vpack.c.b16 %v1100, %v1099
      %v1207 = vpack.c.b16 %v1102, %v1101
      %v1208 = vpack.c.b16 %v1104, %v1103
      %v1209 = vpack.c.b16 %v1106, %v1105
      %v1210 = vpack.c.b16 %v1108, %v1107
      %v1211 = vpack.c.b16 %v1110, %v1109
      %v1212 = vpack.c.b16 %v1112, %v1111
      %v1213 = vpack.c.b16 %v1114, %v1113
      %v1214 = vpack.c.b16 %v1116, %v1115
      %v1215 = vpack.c.b16 %v1118, %v1117
      %v1216 = vpack.c.b16 %v1120, %v1119
      %v1217 = vpack.c.b16 %v1122, %v1121
      %v1218 = vpack.c.b16 %v1124, %v1123
      %v1219 = vpack.c.b16 %v1126, %v1125
      %v1220 = vpack.c.b16 %v1128, %v1127
      %v1221 = vpack.c.b16 %v1130, %v1129
      %v1222 = vpack.c.b16 %v1132, %v1131
      %v1223 = vpack.c.b16 %v1134, %v1133
      %v1224 = vpack.c.b16 %v1136, %v1135
      %v1225 = vpack.c.b16 %v1138, %v1137
      %v1226 = vpack.c.b16 %v1140, %v1139
      %v1227 = vpack.c.b16 %v1142, %v1141
      %v1228 = vpack.c.b16 %v1144, %v1143
      %v1229 = vpack.c.b16 %v1146, %v1145
      %v1230 = vpack.c.b16 %v1148, %v1147
      %v1231 = vpack.c.b16 %v1150, %v1149
      %v1232 = vpack.c.b16 %v1152, %v1151
      %v1233 = vpack.c.b16 %v1154, %v1153
      %v1234 = vpack.c.b16 %v1156, %v1155
      %v1235 = vpack.c.b16 %v1158, %v1157
      %v1236 = vpack.c.b16 %v1160, %v1159
      %v1237 = vpack.c.b16 %v1162, %v1161
      %v1238 = vpack.c.b16 %v1164, %v1163
      %v1239 = vpack.c.b16 %v1166, %v1165
      %v1240 = vpack.c.b16 %v1168, %v1167
      %1313 = vmatprep.subr.bf16.mxu0 0
      %1314 = vmatpush1.bf16.msra.mxu0 %v1169
      %1315 = vmatprep.subr.bf16.mxu0 0
      %1316 = vmatpush1.bf16.msra.mxu0 %v1170
      %1317 = vmatprep.subr.bf16.mxu0 0
      %1318 = vmatpush1.bf16.msra.mxu0 %v1171
      %1319 = vmatprep.subr.bf16.mxu0 0
      %1320 = vmatpush1.bf16.msra.mxu0 %v1172
      %1321 = vmatprep.subr.bf16.mxu0 0
      %1322 = vmatpush1.bf16.msra.mxu0 %v1173
      %1323 = vmatprep.subr.bf16.mxu0 0
      %1324 = vmatpush1.bf16.msra.mxu0 %v1174
      %1325 = vmatprep.subr.bf16.mxu0 0
      %1326 = vmatpush1.bf16.msra.mxu0 %v1175
      %1327 = vmatprep.subr.bf16.mxu0 0
      %1328 = vmatpush1.bf16.msra.mxu0 %v1176
      %1329 = vmatprep.subr.bf16.mxu0 0
      %1330 = vmatpush1.bf16.msra.mxu0 %v1177
      %1331 = vmatprep.subr.bf16.mxu0 0
      %1332 = vmatpush1.bf16.msra.mxu0 %v1178
      %1333 = vmatprep.subr.bf16.mxu0 0
      %1334 = vmatpush1.bf16.msra.mxu0 %v1179
      %1335 = vmatprep.subr.bf16.mxu0 0
      %1336 = vmatpush1.bf16.msra.mxu0 %v1180
      %1337 = vmatprep.subr.bf16.mxu0 0
      %1338 = vmatpush1.bf16.msra.mxu0 %v1181
      %1339 = vmatprep.subr.bf16.mxu0 0
      %1340 = vmatpush1.bf16.msra.mxu0 %v1182
      %1341 = vmatprep.subr.bf16.mxu0 0
      %1342 = vmatpush1.bf16.msra.mxu0 %v1183
      %1343 = vmatprep.subr.bf16.mxu0 0
      %1344 = vmatpush1.bf16.msra.mxu0 %v1184
      %1345 = vmatprep.mubr.bf16.mxu0 %v738
      %1346 = vmatmul.mubr.bf16.gmra.mrb[0].mxu0 %v737
      %v1347 = vpop.f32.mrb[0].mxu0
      %v1348 = vadd.f32 %v511, %v1347
      %v1349 = vpop.f32.mrb[0].mxu0
      %v1350 = vpop.f32.mrb[0].mxu0
      %v1351 = vadd.f32 %v511, %v1350
      %v1352 = vpop.f32.mrb[0].mxu0
      %1353 = vmatprep.mubr.bf16.mxu0 %v747
      %1354 = vmatmul.mubr.bf16.gmra.mrb[0].mxu0 %v746
      %v1355 = vpop.f32.mrb[0].mxu0
      %v1356 = vadd.f32 %v511, %v1355
      %v1357 = vpop.f32.mrb[0].mxu0
      %v1358 = vpop.f32.mrb[0].mxu0
      %v1359 = vadd.f32 %v511, %v1358
      %v1360 = vpop.f32.mrb[0].mxu0
      %1361 = vmatprep.mubr.bf16.mxu0 %v756
      %1362 = vmatmul.mubr.bf16.gmra.mrb[0].mxu0 %v755
      %v1363 = vpop.f32.mrb[0].mxu0
      %v1364 = vadd.f32 %v511, %v1363
      %v1365 = vpop.f32.mrb[0].mxu0
      %v1366 = vpop.f32.mrb[0].mxu0
      %v1367 = vadd.f32 %v511, %v1366
      %v1368 = vpop.f32.mrb[0].mxu0
      %1369 = vmatprep.mubr.bf16.mxu0 %v765
      %1370 = vmatmul.mubr.bf16.gmra.mrb[0].mxu0 %v764
      %v1371 = vpop.f32.mrb[0].mxu0
      %v1372 = vadd.f32 %v511, %v1371
      %v1373 = vpop.f32.mrb[0].mxu0
      %v1374 = vpop.f32.mrb[0].mxu0
      %v1375 = vadd.f32 %v511, %v1374
      %v1376 = vpop.f32.mrb[0].mxu0
      %1377 = vmatprep.mubr.bf16.mxu0 %v774
      %1378 = vmatmul.mubr.bf16.gmra.mrb[0].mxu0 %v773
      %v1379 = vpop.f32.mrb[0].mxu0
      %v1380 = vadd.f32 %v511, %v1379
      %v1381 = vpop.f32.mrb[0].mxu0
      %v1382 = vpop.f32.mrb[0].mxu0
      %v1383 = vadd.f32 %v511, %v1382
      %v1384 = vpop.f32.mrb[0].mxu0
      %1385 = vmatprep.mubr.bf16.mxu0 %v783
      %1386 = vmatmul.mubr.bf16.gmra.mrb[0].mxu0 %v782
      %v1387 = vpop.f32.mrb[0].mxu0
      %v1388 = vadd.f32 %v511, %v1387
      %v1389 = vpop.f32.mrb[0].mxu0
      %v1390 = vpop.f32.mrb[0].mxu0
      %v1391 = vadd.f32 %v511, %v1390
      %v1392 = vpop.f32.mrb[0].mxu0
      %1393 = vmatprep.mubr.bf16.mxu0 %v792
      %1394 = vmatmul.mubr.bf16.gmra.mrb[0].mxu0 %v791
      %v1395 = vpop.f32.mrb[0].mxu0
      %v1396 = vadd.f32 %v511, %v1395
      %v1397 = vpop.f32.mrb[0].mxu0
      %v1398 = vpop.f32.mrb[0].mxu0
      %v1399 = vadd.f32 %v511, %v1398
      %v1400 = vpop.f32.mrb[0].mxu0
      %1401 = vmatprep.mubr.bf16.mxu0 %v801
      %1402 = vmatmul.mubr.bf16.gmra.mrb[0].mxu0 %v800
      %v1403 = vpop.f32.mrb[0].mxu0
      %v1404 = vadd.f32 %v511, %v1403
      %v1405 = vpop.f32.mrb[0].mxu0
      %v1406 = vpop.f32.mrb[0].mxu0
      %v1407 = vadd.f32 %v511, %v1406
      %v1408 = vpop.f32.mrb[0].mxu0
      %1409 = vdwg.mxu0
      %1410 = vmatprep.subr.bf16.mxu0 0
      %1411 = vmatpush1.bf16.msra.mxu0 %v1185
      %1412 = vmatprep.subr.bf16.mxu0 0
      %1413 = vmatpush1.bf16.msra.mxu0 %v1186
      %1414 = vmatprep.subr.bf16.mxu0 0
      %1415 = vmatpush1.bf16.msra.mxu0 %v1187
      %1416 = vmatprep.subr.bf16.mxu0 0
      %1417 = vmatpush1.bf16.msra.mxu0 %v1188
      %1418 = vmatprep.subr.bf16.mxu0 0
      %1419 = vmatpush1.bf16.msra.mxu0 %v1189
      %1420 = vmatprep.subr.bf16.mxu0 0
      %1421 = vmatpush1.bf16.msra.mxu0 %v1190
      %1422 = vmatprep.subr.bf16.mxu0 0
      %1423 = vmatpush1.bf16.msra.mxu0 %v1191
      %1424 = vmatprep.subr.bf16.mxu0 0
      %1425 = vmatpush1.bf16.msra.mxu0 %v1192
      %1426 = vmatprep.subr.bf16.mxu0 0
      %1427 = vmatpush1.bf16.msra.mxu0 %v1193
      %1428 = vmatprep.subr.bf16.mxu0 0
      %1429 = vmatpush1.bf16.msra.mxu0 %v1194
      %1430 = vmatprep.subr.bf16.mxu0 0
      %1431 = vmatpush1.bf16.msra.mxu0 %v1195
      %1432 = vmatprep.subr.bf16.mxu0 0
      %1433 = vmatpush1.bf16.msra.mxu0 %v1196
      %1434 = vmatprep.subr.bf16.mxu0 0
      %1435 = vmatpush1.bf16.msra.mxu0 %v1197
      %1436 = vmatprep.subr.bf16.mxu0 0
      %1437 = vmatpush1.bf16.msra.mxu0 %v1198
      %1438 = vmatprep.subr.bf16.mxu0 0
      %1439 = vmatpush1.bf16.msra.mxu0 %v1199
      %1440 = vmatprep.subr.bf16.mxu0 0
      %1441 = vmatpush1.bf16.msra.mxu0 %v1200
      %1442 = vmatprep.mubr.bf16.mxu0 %v740
      %1443 = vmatmul.mubr.bf16.gmra.mrb[0].mxu0 %v739
      %v1444 = vpop.f32.mrb[0].mxu0
      %v1445 = vadd.f32 %v1348, %v1444
      %v1446 = vpop.f32.mrb[0].mxu0
      %v1447 = vpop.f32.mrb[0].mxu0
      %v1448 = vadd.f32 %v1351, %v1447
      %v1449 = vpop.f32.mrb[0].mxu0
      %1450 = vmatprep.mubr.bf16.mxu0 %v749
      %1451 = vmatmul.mubr.bf16.gmra.mrb[0].mxu0 %v748
      %v1452 = vpop.f32.mrb[0].mxu0
      %v1453 = vadd.f32 %v1356, %v1452
      %v1454 = vpop.f32.mrb[0].mxu0
      %v1455 = vpop.f32.mrb[0].mxu0
      %v1456 = vadd.f32 %v1359, %v1455
      %v1457 = vpop.f32.mrb[0].mxu0
      %1458 = vmatprep.mubr.bf16.mxu0 %v758
      %1459 = vmatmul.mubr.bf16.gmra.mrb[0].mxu0 %v757
      %v1460 = vpop.f32.mrb[0].mxu0
      %v1461 = vadd.f32 %v1364, %v1460
      %v1462 = vpop.f32.mrb[0].mxu0
      %v1463 = vpop.f32.mrb[0].mxu0
      %v1464 = vadd.f32 %v1367, %v1463
      %v1465 = vpop.f32.mrb[0].mxu0
      %1466 = vmatprep.mubr.bf16.mxu0 %v767
      %1467 = vmatmul.mubr.bf16.gmra.mrb[0].mxu0 %v766
      %v1468 = vpop.f32.mrb[0].mxu0
      %v1469 = vadd.f32 %v1372, %v1468
      %v1470 = vpop.f32.mrb[0].mxu0
      %v1471 = vpop.f32.mrb[0].mxu0
      %v1472 = vadd.f32 %v1375, %v1471
      %v1473 = vpop.f32.mrb[0].mxu0
      %1474 = vmatprep.mubr.bf16.mxu0 %v776
      %1475 = vmatmul.mubr.bf16.gmra.mrb[0].mxu0 %v775
      %v1476 = vpop.f32.mrb[0].mxu0
      %v1477 = vadd.f32 %v1380, %v1476
      %v1478 = vpop.f32.mrb[0].mxu0
      %v1479 = vpop.f32.mrb[0].mxu0
      %v1480 = vadd.f32 %v1383, %v1479
      %v1481 = vpop.f32.mrb[0].mxu0
      %1482 = vmatprep.mubr.bf16.mxu0 %v785
      %1483 = vmatmul.mubr.bf16.gmra.mrb[0].mxu0 %v784
      %v1484 = vpop.f32.mrb[0].mxu0
      %v1485 = vadd.f32 %v1388, %v1484
      %v1486 = vpop.f32.mrb[0].mxu0
      %v1487 = vpop.f32.mrb[0].mxu0
      %v1488 = vadd.f32 %v1391, %v1487
      %v1489 = vpop.f32.mrb[0].mxu0
      %1490 = vmatprep.mubr.bf16.mxu0 %v794
      %1491 = vmatmul.mubr.bf16.gmra.mrb[0].mxu0 %v793
      %v1492 = vpop.f32.mrb[0].mxu0
      %v1493 = vadd.f32 %v1396, %v1492
      %v1494 = vpop.f32.mrb[0].mxu0
      %v1495 = vpop.f32.mrb[0].mxu0
      %v1496 = vadd.f32 %v1399, %v1495
      %v1497 = vpop.f32.mrb[0].mxu0
      %1498 = vmatprep.mubr.bf16.mxu0 %v803
      %1499 = vmatmul.mubr.bf16.gmra.mrb[0].mxu0 %v802
      %v1500 = vpop.f32.mrb[0].mxu0
      %v1501 = vadd.f32 %v1404, %v1500
      %v1502 = vpop.f32.mrb[0].mxu0
      %v1503 = vpop.f32.mrb[0].mxu0
      %v1504 = vadd.f32 %v1407, %v1503
      %v1505 = vpop.f32.mrb[0].mxu0
      %1506 = vdwg.mxu0
      %1507 = vmatprep.subr.bf16.mxu0 0
      %1508 = vmatpush1.bf16.msra.mxu0 %v1201
      %1509 = vmatprep.subr.bf16.mxu0 0
      %1510 = vmatpush1.bf16.msra.mxu0 %v1202
      %1511 = vmatprep.subr.bf16.mxu0 0
      %1512 = vmatpush1.bf16.msra.mxu0 %v1203
      %1513 = vmatprep.subr.bf16.mxu0 0
      %1514 = vmatpush1.bf16.msra.mxu0 %v1204
      %1515 = vmatprep.subr.bf16.mxu0 0
      %1516 = vmatpush1.bf16.msra.mxu0 %v1205
      %1517 = vmatprep.subr.bf16.mxu0 0
      %1518 = vmatpush1.bf16.msra.mxu0 %v1206
      %1519 = vmatprep.subr.bf16.mxu0 0
      %1520 = vmatpush1.bf16.msra.mxu0 %v1207
      %1521 = vmatprep.subr.bf16.mxu0 0
      %1522 = vmatpush1.bf16.msra.mxu0 %v1208
      %1523 = vmatprep.subr.bf16.mxu0 0
      %1524 = vmatpush1.bf16.msra.mxu0 %v1209
      %1525 = vmatprep.subr.bf16.mxu0 0
      %1526 = vmatpush1.bf16.msra.mxu0 %v1210
      %1527 = vmatprep.subr.bf16.mxu0 0
      %1528 = vmatpush1.bf16.msra.mxu0 %v1211
      %1529 = vmatprep.subr.bf16.mxu0 0
      %1530 = vmatpush1.bf16.msra.mxu0 %v1212
      %1531 = vmatprep.subr.bf16.mxu0 0
      %1532 = vmatpush1.bf16.msra.mxu0 %v1213
      %1533 = vmatprep.subr.bf16.mxu0 0
      %1534 = vmatpush1.bf16.msra.mxu0 %v1214
      %1535 = vmatprep.subr.bf16.mxu0 0
      %1536 = vmatpush1.bf16.msra.mxu0 %v1215
      %1537 = vmatprep.subr.bf16.mxu0 0
      %1538 = vmatpush1.bf16.msra.mxu0 %v1216
      %1539 = vmatprep.mubr.bf16.mxu0 %v742
      %1540 = vmatmul.mubr.bf16.gmra.mrb[0].mxu0 %v741
      %v1541 = vpop.f32.mrb[0].mxu0
      %v1542 = vadd.f32 %v1445, %v1541
      %v1543 = vpop.f32.mrb[0].mxu0
      %v1544 = vpop.f32.mrb[0].mxu0
      %v1545 = vadd.f32 %v1448, %v1544
      %v1546 = vpop.f32.mrb[0].mxu0
      %1547 = vmatprep.mubr.bf16.mxu0 %v751
      %1548 = vmatmul.mubr.bf16.gmra.mrb[0].mxu0 %v750
      %v1549 = vpop.f32.mrb[0].mxu0
      %v1550 = vadd.f32 %v1453, %v1549
      %v1551 = vpop.f32.mrb[0].mxu0
      %v1552 = vpop.f32.mrb[0].mxu0
      %v1553 = vadd.f32 %v1456, %v1552
      %v1554 = vpop.f32.mrb[0].mxu0
      %1555 = vmatprep.mubr.bf16.mxu0 %v760
      %1556 = vmatmul.mubr.bf16.gmra.mrb[0].mxu0 %v759
      %v1557 = vpop.f32.mrb[0].mxu0
      %v1558 = vadd.f32 %v1461, %v1557
      %v1559 = vpop.f32.mrb[0].mxu0
      %v1560 = vpop.f32.mrb[0].mxu0
      %v1561 = vadd.f32 %v1464, %v1560
      %v1562 = vpop.f32.mrb[0].mxu0
      %1563 = vmatprep.mubr.bf16.mxu0 %v769
      %1564 = vmatmul.mubr.bf16.gmra.mrb[0].mxu0 %v768
      %v1565 = vpop.f32.mrb[0].mxu0
      %v1566 = vadd.f32 %v1469, %v1565
      %v1567 = vpop.f32.mrb[0].mxu0
      %v1568 = vpop.f32.mrb[0].mxu0
      %v1569 = vadd.f32 %v1472, %v1568
      %v1570 = vpop.f32.mrb[0].mxu0
      %1571 = vmatprep.mubr.bf16.mxu0 %v778
      %1572 = vmatmul.mubr.bf16.gmra.mrb[0].mxu0 %v777
      %v1573 = vpop.f32.mrb[0].mxu0
      %v1574 = vadd.f32 %v1477, %v1573
      %v1575 = vpop.f32.mrb[0].mxu0
      %v1576 = vpop.f32.mrb[0].mxu0
      %v1577 = vadd.f32 %v1480, %v1576
      %v1578 = vpop.f32.mrb[0].mxu0
      %1579 = vmatprep.mubr.bf16.mxu0 %v787
      %1580 = vmatmul.mubr.bf16.gmra.mrb[0].mxu0 %v786
      %v1581 = vpop.f32.mrb[0].mxu0
      %v1582 = vadd.f32 %v1485, %v1581
      %v1583 = vpop.f32.mrb[0].mxu0
      %v1584 = vpop.f32.mrb[0].mxu0
      %v1585 = vadd.f32 %v1488, %v1584
      %v1586 = vpop.f32.mrb[0].mxu0
      %1587 = vmatprep.mubr.bf16.mxu0 %v796
      %1588 = vmatmul.mubr.bf16.gmra.mrb[0].mxu0 %v795
      %v1589 = vpop.f32.mrb[0].mxu0
      %v1590 = vadd.f32 %v1493, %v1589
      %v1591 = vpop.f32.mrb[0].mxu0
      %v1592 = vpop.f32.mrb[0].mxu0
      %v1593 = vadd.f32 %v1496, %v1592
      %v1594 = vpop.f32.mrb[0].mxu0
      %1595 = vmatprep.mubr.bf16.mxu0 %v805
      %1596 = vmatmul.mubr.bf16.gmra.mrb[0].mxu0 %v804
      %v1597 = vpop.f32.mrb[0].mxu0
      %v1598 = vadd.f32 %v1501, %v1597
      %v1599 = vpop.f32.mrb[0].mxu0
      %v1600 = vpop.f32.mrb[0].mxu0
      %v1601 = vadd.f32 %v1504, %v1600
      %v1602 = vpop.f32.mrb[0].mxu0
      %1603 = vdwg.mxu0
      %1604 = vmatprep.subr.bf16.mxu0 0
      %1605 = vmatpush1.bf16.msra.mxu0 %v1217
      %1606 = vmatprep.subr.bf16.mxu0 0
      %1607 = vmatpush1.bf16.msra.mxu0 %v1218
      %1608 = vmatprep.subr.bf16.mxu0 0
      %1609 = vmatpush1.bf16.msra.mxu0 %v1219
      %1610 = vmatprep.subr.bf16.mxu0 0
      %1611 = vmatpush1.bf16.msra.mxu0 %v1220
      %1612 = vmatprep.subr.bf16.mxu0 0
      %1613 = vmatpush1.bf16.msra.mxu0 %v1221
      %1614 = vmatprep.subr.bf16.mxu0 0
      %1615 = vmatpush1.bf16.msra.mxu0 %v1222
      %1616 = vmatprep.subr.bf16.mxu0 0
      %1617 = vmatpush1.bf16.msra.mxu0 %v1223
      %1618 = vmatprep.subr.bf16.mxu0 0
      %1619 = vmatpush1.bf16.msra.mxu0 %v1224
      %1620 = vmatprep.subr.bf16.mxu0 0
      %1621 = vmatpush1.bf16.msra.mxu0 %v1225
      %1622 = vmatprep.subr.bf16.mxu0 0
      %1623 = vmatpush1.bf16.msra.mxu0 %v1226
      %1624 = vmatprep.subr.bf16.mxu0 0
      %1625 = vmatpush1.bf16.msra.mxu0 %v1227
      %1626 = vmatprep.subr.bf16.mxu0 0
      %1627 = vmatpush1.bf16.msra.mxu0 %v1228
      %1628 = vmatprep.subr.bf16.mxu0 0
      %1629 = vmatpush1.bf16.msra.mxu0 %v1229
      %1630 = vmatprep.subr.bf16.mxu0 0
      %1631 = vmatpush1.bf16.msra.mxu0 %v1230
      %1632 = vmatprep.subr.bf16.mxu0 0
      %1633 = vmatpush1.bf16.msra.mxu0 %v1231
      %1634 = vmatprep.subr.bf16.mxu0 0
      %1635 = vmatpush1.bf16.msra.mxu0 %v1232
      %1636 = vmatprep.mubr.bf16.mxu0 %v744
      %1637 = vmatmul.mubr.bf16.gmra.mrb[0].mxu0 %v743
      %v1638 = vpop.f32.mrb[0].mxu0
      %v1639 = vadd.f32 %v1542, %v1638
      %v1640 = vpop.f32.mrb[0].mxu0
      %v1641 = vpop.f32.mrb[0].mxu0
      %v1642 = vadd.f32 %v1545, %v1641
      %v1643 = vpop.f32.mrb[0].mxu0
      %1644 = vmatprep.mubr.bf16.mxu0 %v753
      %1645 = vmatmul.mubr.bf16.gmra.mrb[0].mxu0 %v752
      %v1646 = vpop.f32.mrb[0].mxu0
      %v1647 = vadd.f32 %v1550, %v1646
      %v1648 = vpop.f32.mrb[0].mxu0
      %v1649 = vpop.f32.mrb[0].mxu0
      %v1650 = vadd.f32 %v1553, %v1649
      %v1651 = vpop.f32.mrb[0].mxu0
      %1652 = vmatprep.mubr.bf16.mxu0 %v762
      %1653 = vmatmul.mubr.bf16.gmra.mrb[0].mxu0 %v761
      %v1654 = vpop.f32.mrb[0].mxu0
      %v1655 = vadd.f32 %v1558, %v1654
      %v1656 = vpop.f32.mrb[0].mxu0
      %v1657 = vpop.f32.mrb[0].mxu0
      %v1658 = vadd.f32 %v1561, %v1657
      %v1659 = vpop.f32.mrb[0].mxu0
      %1660 = vmatprep.mubr.bf16.mxu0 %v771
      %1661 = vmatmul.mubr.bf16.gmra.mrb[0].mxu0 %v770
      %v1662 = vpop.f32.mrb[0].mxu0
      %v1663 = vadd.f32 %v1566, %v1662
      %v1664 = vpop.f32.mrb[0].mxu0
      %v1665 = vpop.f32.mrb[0].mxu0
      %v1666 = vadd.f32 %v1569, %v1665
      %v1667 = vpop.f32.mrb[0].mxu0
      %1668 = vmatprep.mubr.bf16.mxu0 %v780
      %1669 = vmatmul.mubr.bf16.gmra.mrb[0].mxu0 %v779
      %v1670 = vpop.f32.mrb[0].mxu0
      %v1671 = vadd.f32 %v1574, %v1670
      %v1672 = vpop.f32.mrb[0].mxu0
      %v1673 = vpop.f32.mrb[0].mxu0
      %v1674 = vadd.f32 %v1577, %v1673
      %v1675 = vpop.f32.mrb[0].mxu0
      %1676 = vmatprep.mubr.bf16.mxu0 %v789
      %1677 = vmatmul.mubr.bf16.gmra.mrb[0].mxu0 %v788
      %v1678 = vpop.f32.mrb[0].mxu0
      %v1679 = vadd.f32 %v1582, %v1678
      %v1680 = vpop.f32.mrb[0].mxu0
      %v1681 = vpop.f32.mrb[0].mxu0
      %v1682 = vadd.f32 %v1585, %v1681
      %v1683 = vpop.f32.mrb[0].mxu0
      %1684 = vmatprep.mubr.bf16.mxu0 %v798
      %1685 = vmatmul.mubr.bf16.gmra.mrb[0].mxu0 %v797
      %v1686 = vpop.f32.mrb[0].mxu0
      %v1687 = vadd.f32 %v1590, %v1686
      %v1688 = vpop.f32.mrb[0].mxu0
      %v1689 = vpop.f32.mrb[0].mxu0
      %v1690 = vadd.f32 %v1593, %v1689
      %v1691 = vpop.f32.mrb[0].mxu0
      %1692 = vmatprep.mubr.bf16.mxu0 %v807
      %1693 = vmatmul.mubr.bf16.gmra.mrb[0].mxu0 %v806
      %v1694 = vpop.f32.mrb[0].mxu0
      %v1695 = vadd.f32 %v1598, %v1694
      %v1696 = vpop.f32.mrb[0].mxu0
      %v1697 = vpop.f32.mrb[0].mxu0
      %v1698 = vadd.f32 %v1601, %v1697
      %v1699 = vpop.f32.mrb[0].mxu0
      %1700 = vdwg.mxu0
      %1701 = vmatprep.subr.bf16.mxu0 0
      %1702 = vmatpush1.bf16.msra.mxu0 %v1233
      %1703 = vmatprep.subr.bf16.mxu0 0
      %1704 = vmatpush1.bf16.msra.mxu0 %v1234
      %1705 = vmatprep.subr.bf16.mxu0 0
      %1706 = vmatpush1.bf16.msra.mxu0 %v1235
      %1707 = vmatprep.subr.bf16.mxu0 0
      %1708 = vmatpush1.bf16.msra.mxu0 %v1236
      %1709 = vmatprep.subr.bf16.mxu0 0
      %1710 = vmatpush1.bf16.msra.mxu0 %v1237
      %1711 = vmatprep.subr.bf16.mxu0 0
      %1712 = vmatpush1.bf16.msra.mxu0 %v1238
      %1713 = vmatprep.subr.bf16.mxu0 0
      %1714 = vmatpush1.bf16.msra.mxu0 %v1239
      %1715 = vmatprep.subr.bf16.mxu0 0
      %1716 = vmatpush1.bf16.msra.mxu0 %v1240
      %1717 = vmatprep.subr.bf16.mxu0 0
      %1718 = vmatpush1.bf16.msra.mxu0 0
      %1719 = vmatprep.subr.bf16.mxu0 0
      %1720 = vmatpush1.bf16.msra.mxu0 0
      %1721 = vmatprep.subr.bf16.mxu0 0
      %1722 = vmatpush1.bf16.msra.mxu0 0
      %1723 = vmatprep.subr.bf16.mxu0 0
      %1724 = vmatpush1.bf16.msra.mxu0 0
      %1725 = vmatprep.subr.bf16.mxu0 0
      %1726 = vmatpush1.bf16.msra.mxu0 0
      %1727 = vmatprep.subr.bf16.mxu0 0
      %1728 = vmatpush1.bf16.msra.mxu0 0
      %1729 = vmatprep.subr.bf16.mxu0 0
      %1730 = vmatpush1.bf16.msra.mxu0 0
      %1731 = vmatprep.subr.bf16.mxu0 0
      %1732 = vmatpush1.bf16.msra.mxu0 0
      %1733 = vmatprep.mubr.bf16.mxu0 0
      %1734 = vmatmul.mubr.bf16.gmra.mrb[0].mxu0 %v745
      %v1735 = vpop.f32.mrb[0].mxu0
      %v1736 = vadd.f32 %v1639, %v1735
      %v1737 = vpop.f32.mrb[0].mxu0
      %v1738 = vpop.f32.mrb[0].mxu0
      %v1739 = vadd.f32 %v1642, %v1738
      %v1740 = vpop.f32.mrb[0].mxu0
      %1741 = vmatprep.mubr.bf16.mxu0 0
      %1742 = vmatmul.mubr.bf16.gmra.mrb[0].mxu0 %v754
      %v1743 = vpop.f32.mrb[0].mxu0
      %v1744 = vadd.f32 %v1647, %v1743
      %v1745 = vpop.f32.mrb[0].mxu0
      %v1746 = vpop.f32.mrb[0].mxu0
      %v1747 = vadd.f32 %v1650, %v1746
      %v1748 = vpop.f32.mrb[0].mxu0
      %1749 = vmatprep.mubr.bf16.mxu0 0
      %1750 = vmatmul.mubr.bf16.gmra.mrb[0].mxu0 %v763
      %v1751 = vpop.f32.mrb[0].mxu0
      %v1752 = vadd.f32 %v1655, %v1751
      %v1753 = vpop.f32.mrb[0].mxu0
      %v1754 = vpop.f32.mrb[0].mxu0
      %v1755 = vadd.f32 %v1658, %v1754
      %v1756 = vpop.f32.mrb[0].mxu0
      %1757 = vmatprep.mubr.bf16.mxu0 0
      %1758 = vmatmul.mubr.bf16.gmra.mrb[0].mxu0 %v772
      %v1759 = vpop.f32.mrb[0].mxu0
      %v1760 = vadd.f32 %v1663, %v1759
      %v1761 = vpop.f32.mrb[0].mxu0
      %v1762 = vpop.f32.mrb[0].mxu0
      %v1763 = vadd.f32 %v1666, %v1762
      %v1764 = vpop.f32.mrb[0].mxu0
      %1765 = vmatprep.mubr.bf16.mxu0 0
      %1766 = vmatmul.mubr.bf16.gmra.mrb[0].mxu0 %v781
      %v1767 = vpop.f32.mrb[0].mxu0
      %v1768 = vadd.f32 %v1671, %v1767
      %v1769 = vpop.f32.mrb[0].mxu0
      %v1770 = vpop.f32.mrb[0].mxu0
      %v1771 = vadd.f32 %v1674, %v1770
      %v1772 = vpop.f32.mrb[0].mxu0
      %1773 = vmatprep.mubr.bf16.mxu0 0
      %1774 = vmatmul.mubr.bf16.gmra.mrb[0].mxu0 %v790
      %v1775 = vpop.f32.mrb[0].mxu0
      %v1776 = vadd.f32 %v1679, %v1775
      %v1777 = vpop.f32.mrb[0].mxu0
      %v1778 = vpop.f32.mrb[0].mxu0
      %v1779 = vadd.f32 %v1682, %v1778
      %v1780 = vpop.f32.mrb[0].mxu0
      %1781 = vmatprep.mubr.bf16.mxu0 0
      %1782 = vmatmul.mubr.bf16.gmra.mrb[0].mxu0 %v799
      %v1783 = vpop.f32.mrb[0].mxu0
      %v1784 = vadd.f32 %v1687, %v1783
      %v1785 = vpop.f32.mrb[0].mxu0
      %v1786 = vpop.f32.mrb[0].mxu0
      %v1787 = vadd.f32 %v1690, %v1786
      %v1788 = vpop.f32.mrb[0].mxu0
      %1789 = vmatprep.mubr.bf16.mxu0 0
      %1790 = vmatmul.mubr.bf16.gmra.mrb[0].mxu0 %v808
      %v1791 = vpop.f32.mrb[0].mxu0
      %v1792 = vadd.f32 %v1695, %v1791
      %v1793 = vpop.f32.mrb[0].mxu0
      %v1794 = vpop.f32.mrb[0].mxu0
      %v1795 = vadd.f32 %v1698, %v1794
      %v1796 = vpop.f32.mrb[0].mxu0
      %1797 = vdwg.mxu0
      %v1798 = vld [vmem:[%s267] sm:$0xff]
      %v1799 = vld [vmem:[%s267 + $0x8] sm:$0xff]
      %v1800 = vld [vmem:[%s267 + $0x10] sm:$0xff]
      %v1801 = vld [vmem:[%s267 + $0x18] sm:$0xff]
      %v1802 = vld [vmem:[%s267 + $0x20] sm:$0xff]
      %v1803 = vld [vmem:[%s267 + $0x28] sm:$0xff]
      %v1804 = vld [vmem:[%s267 + $0x30] sm:$0xff]
      %v1805 = vld [vmem:[%s267 + $0x38] sm:$0xff]
      %v1806 = vld [vmem:[%s267 + $0x40] sm:$0xff]
      %v1807 = vld [vmem:[%s267 + $0x48] sm:$0xff]
      %v1808 = vld [vmem:[%s267 + $0x50] sm:$0xff]
      %v1809 = vld [vmem:[%s267 + $0x58] sm:$0xff]
      %v1810 = vld [vmem:[%s267 + $0x60] sm:$0xff]
      %v1811 = vld [vmem:[%s267 + $0x68] sm:$0xff]
      %v1812 = vld [vmem:[%s267 + $0x70] sm:$0xff]
      %v1813 = vld [vmem:[%s267 + $0x78] sm:$0xff]
      %v1814 = vadd.f32 %v1736, %v1798
      %v1815 = vadd.f32 %v1739, %v1799
      %v1816 = vadd.f32 %v1744, %v1800
      %v1817 = vadd.f32 %v1747, %v1801
      %v1818 = vadd.f32 %v1752, %v1802
      %v1819 = vadd.f32 %v1755, %v1803
      %v1820 = vadd.f32 %v1760, %v1804
      %v1821 = vadd.f32 %v1763, %v1805
      %v1822 = vadd.f32 %v1768, %v1806
      %v1823 = vadd.f32 %v1771, %v1807
      %v1824 = vadd.f32 %v1776, %v1808
      %v1825 = vadd.f32 %v1779, %v1809
      %v1826 = vadd.f32 %v1784, %v1810
      %v1827 = vadd.f32 %v1787, %v1811
      %v1828 = vadd.f32 %v1792, %v1812
      %v1829 = vadd.f32 %v1795, %v1813
      %v1830 = vmax.f32 %v1814, 0.0
      %v1831 = vmax.f32 %v1815, 0.0
      %v1832 = vmax.f32 %v1816, 0.0
      %v1833 = vmax.f32 %v1817, 0.0
      %v1834 = vmax.f32 %v1818, 0.0
      %v1835 = vmax.f32 %v1819, 0.0
      %v1836 = vmax.f32 %v1820, 0.0
      %v1837 = vmax.f32 %v1821, 0.0
      %v1838 = vmax.f32 %v1822, 0.0
      %v1839 = vmax.f32 %v1823, 0.0
      %v1840 = vmax.f32 %v1824, 0.0
      %v1841 = vmax.f32 %v1825, 0.0
      %v1842 = vmax.f32 %v1826, 0.0
      %v1843 = vmax.f32 %v1827, 0.0
      %v1844 = vmax.f32 %v1828, 0.0
      %v1845 = vmax.f32 %v1829, 0.0
      %v1846 = vld [vmem:[%s276] sm:$0xff]
      %1847 = vmatprep.subr.mxu0 0.0
      %1848 = vmatpush1.msra.mxu0 %v1830
      %1849 = vmatprep.subr.mxu0 0.0
      %1850 = vmatpush1.msra.mxu0 %v1831
      %1851 = vmatprep.subr.mxu0 0.0
      %1852 = vmatpush1.msra.mxu0 %v1832
      %1853 = vmatprep.subr.mxu0 0.0
      %1854 = vmatpush1.msra.mxu0 %v1833
      %1855 = vmatprep.subr.mxu0 0.0
      %1856 = vmatpush1.msra.mxu0 %v1834
      %1857 = vmatprep.subr.mxu0 0.0
      %1858 = vmatpush1.msra.mxu0 %v1835
      %1859 = vmatprep.subr.mxu0 0.0
      %1860 = vmatpush1.msra.mxu0 %v1836
      %1861 = vmatprep.subr.mxu0 0.0
      %1862 = vmatpush1.msra.mxu0 %v1837
      %1863 = vmatprep.subr.mxu0 0.0
      %1864 = vmatpush1.msra.mxu0 %v1838
      %1865 = vmatprep.subr.mxu0 0.0
      %1866 = vmatpush1.msra.mxu0 %v1839
      %1867 = vmatprep.subr.mxu0 0.0
      %1868 = vmatpush1.msra.mxu0 %v1840
      %1869 = vmatprep.subr.mxu0 0.0
      %1870 = vmatpush1.msra.mxu0 %v1841
      %1871 = vmatprep.subr.mxu0 0.0
      %1872 = vmatpush1.msra.mxu0 %v1842
      %1873 = vmatprep.subr.mxu0 0.0
      %1874 = vmatpush1.msra.mxu0 %v1843
      %1875 = vmatprep.subr.mxu0 0.0
      %1876 = vmatpush1.msra.mxu0 %v1844
      %1877 = vmatprep.subr.mxu0 0.0
      %1878 = vmatpush1.msra.mxu0 %v1845
      %1879 = vmatprep.subr.mxu0 0.0
      %1880 = vmatpush1.msra.mxu0 0.0
      %1881 = vmatprep.subr.mxu0 0.0
      %1882 = vmatpush1.msra.mxu0 0.0
      %1883 = vmatprep.subr.mxu0 0.0
      %1884 = vmatpush1.msra.mxu0 0.0
      %1885 = vmatprep.subr.mxu0 0.0
      %1886 = vmatpush1.msra.mxu0 0.0
      %1887 = vmatprep.subr.mxu0 0.0
      %1888 = vmatpush1.msra.mxu0 0.0
      %1889 = vmatprep.subr.mxu0 0.0
      %1890 = vmatpush1.msra.mxu0 0.0
      %1891 = vmatprep.subr.mxu0 0.0
      %1892 = vmatpush1.msra.mxu0 0.0
      %1893 = vmatprep.subr.mxu0 0.0
      %1894 = vmatpush1.msra.mxu0 0.0
      %1895 = vmatprep.subr.mxu0 0.0
      %1896 = vmatpush1.msra.mxu0 0.0
      %1897 = vmatprep.subr.mxu0 0.0
      %1898 = vmatpush1.msra.mxu0 0.0
      %1899 = vmatprep.subr.mxu0 0.0
      %1900 = vmatpush1.msra.mxu0 0.0
      %1901 = vmatprep.subr.mxu0 0.0
      %1902 = vmatpush1.msra.mxu0 0.0
      %1903 = vmatprep.subr.mxu0 0.0
      %1904 = vmatpush1.msra.mxu0 0.0
      %1905 = vmatprep.subr.mxu0 0.0
      %1906 = vmatpush1.msra.mxu0 0.0
      %1907 = vmatprep.subr.mxu0 0.0
      %1908 = vmatpush1.msra.mxu0 0.0
      %1909 = vmatprep.subr.mxu0 0.0
      %1910 = vmatpush1.msra.mxu0 0.0
      %1911 = vmatprep.mubr.f32.mxu0 0.0
      %1912 = vmatmul.mubr.f32.gmra.mrb[0].mxu0 %v1846
      %v1913 = vpop.f32.mrb[0].mxu0
      %v1914 = vadd.f32 0.0, %v1913
      %v1915 = vpop.f32.mrb[0].mxu0
      %1916 = vdwg.mxu0
      %1917 = vst [vmem:[%s280] sm:$0xff] %v1914
      %p1918 = scmp.lt.s32.totalorder %s16, 1
      %s1919 = scalar_select %p1918, %s16, 1
      %s1920 = smul.addr %s1919, 8
      %s1921 = scalar_lea.vmem %s5, %s1920
      // Predicated region
      $region41: #{baseline_forward.8} parent=39 // pred_check
        %p1922 = pneg %p156
      $region42: #{baseline_forward.8} parent=39 // pred_check_branch
        %1924 = sbr.rel (%p1922) target = $region44
      $region43: #{baseline_forward.8} parent=39 // pred_region
        _
      $region44: #{baseline_forward.8} parent=39 // pred_fallthru
        _
    $region40: #{baseline_forward.8} parent=5 // pred_fallthru
      _
    %p1925 = scmp.le.s32.totalorder 2, %s11
    // Predicated region
    $region45: #{baseline_forward.8} parent=5 // pred_check
      %p1926 = pneg %p1925
    $region46: #{baseline_forward.8} parent=5 // pred_check_branch
      %1928 = sbr.rel (%p1926) target = $region48
    $region47: #{baseline_forward.8} parent=5 // pred_region
      %s1929 = ssub.s32 %s11, 2
      // Predicated region
      $region49: #{baseline_forward.8} parent=47 // pred_check
        %p1930 = pneg %p162
      $region50: #{baseline_forward.8} parent=47 // pred_check_branch
        %1932 = sbr.rel (%p1930) target = $region52
      $region51: #{baseline_forward.8} parent=47 // pred_region
        %p1933 = scmp.lt.s32.totalorder %s17, 1
        %s1934 = scalar_select %p1933, %s17, 1
        %s1935 = smul.addr %s1934, 8
        %s1936 = scalar_lea.vmem %s5, %s1935
      $region52: #{baseline_forward.8} parent=47 // pred_fallthru
        _
    $region48: #{baseline_forward.8} parent=5 // pred_fallthru
      _
  $region6: #{baseline_forward.8} parent=0 // loop_footer
    %s15 = sadd.s32 1, %s11
  $region7: #{baseline_forward.8} parent=0 // loop_footer_branch
    %10 = sbr.rel target = $region3
  $region8: #{baseline_forward.8} parent=0 // loop_exit
    _

// kernel: baseline_forward.9
$region0: #{baseline_forward.9}
  #allocation0 [shape = 'u32[]', space=smem, size = 0x4, offset = 0x4, fixed_abs, tag = 'smem constant byte address 0x4 - core index']
  #allocation1 [shape = 'u32[144,128]{1,0:T(1,128)}', space=vmem, size = 0x12000, scoped, tag = 'internal scratch']
  %s0 = inlined_call_operand.vmem [shape: f32[2,9,128], index: 0, kind: input, shape index: {}]
  %s1 = inlined_call_operand.vmem [shape: bf16[128,384], index: 1, kind: input, shape index: {}]
  %s2 = inlined_call_operand.vmem [shape: f32[1,384], index: 2, kind: input, shape index: {}]
  %s3 = inlined_call_operand.vmem [shape: bf16[128,128], index: 3, kind: input, shape index: {}]
  %s4 = inlined_call_operand.vmem [shape: f32[1,128], index: 4, kind: input, shape index: {}]
  %s5 = inlined_call_operand.vmem [shape: f32[128,8], index: 5, kind: input, shape index: {}]
  %s6 = inlined_call_operand.vmem [shape: f32[8,128], index: 6, kind: input, shape index: {}]
  %s7 = inlined_call_operand.vmem [shape: f32[1,128], index: 7, kind: input, shape index: {}]
  %s8 = inlined_call_operand.vmem [shape: f32[1,128], index: 8, kind: input, shape index: {}]
  %s9 = inlined_call_operand.vmem [shape: bf16[128,256], index: 9, kind: input, shape index: {}]
  %s10 = inlined_call_operand.vmem [shape: f32[1,256], index: 10, kind: input, shape index: {}]
  %s11 = inlined_call_operand.vmem [shape: bf16[256,128], index: 11, kind: input, shape index: {}]
  %s12 = inlined_call_operand.vmem [shape: f32[1,128], index: 12, kind: input, shape index: {}]
  %s13 = inlined_call_operand.vmem [shape: f32[1,128], index: 13, kind: input, shape index: {}]
  %s14 = inlined_call_operand.vmem [shape: f32[1,128], index: 14, kind: input, shape index: {}]
  %s15 = inlined_call_operand.vmem [shape: bf16[128,5], index: 15, kind: input, shape index: {}]
  %s16 = inlined_call_operand.vmem [shape: f32[1,5], index: 16, kind: input, shape index: {}]
  %s17 = inlined_call_operand.hbm [shape: f32[2,1,5], index: 17, kind: output, shape index: {}]
  %s18 = sld [smem:[#allocation0]]
  $region78: #{baseline_forward.9} parent=0
    _
  %s20 = ssub.s32 1, %s18
  %s21 = scalar_select 0, %s20, %s18
  $region1: #{baseline_forward.9} parent=0
    #allocation2 [shape = 'u8[1024]{0}', space=vmem, size = 0x400, scoped, tag = 'output window, operand 0, single buffered']
    #allocation3 [shape = 's32[1]{0}', space=sflag, size = 0x4, scoped, tag = 'scoped memory for baseline_forward.9']
    %22 = vsyncpa [#allocation3], 0
    // Predicated region
    $region2: #{baseline_forward.9} parent=1 // pred_check
      _
    $region3: #{baseline_forward.9} parent=1 // pred_check_branch
      %24 = sbr.rel (0) target = $region5
    $region4: #{baseline_forward.9} parent=1 // pred_region
      _
    $region5: #{baseline_forward.9} parent=1 // pred_fallthru
      _
    // Predicated region
    $region6: #{baseline_forward.9} parent=1 // pred_check
      _
    $region7: #{baseline_forward.9} parent=1 // pred_check_branch
      %26 = sbr.rel (0) target = $region9
    $region8: #{baseline_forward.9} parent=1 // pred_region
      _
    $region9: #{baseline_forward.9} parent=1 // pred_fallthru
      _
    // Predicated region
    $region10: #{baseline_forward.9} parent=1 // pred_check
      _
    $region11: #{baseline_forward.9} parent=1 // pred_check_branch
      %28 = sbr.rel (0) target = $region13
    $region12: #{baseline_forward.9} parent=1 // pred_region
      _
    $region13: #{baseline_forward.9} parent=1 // pred_fallthru
      _
    // Predicated region
    $region14: #{baseline_forward.9} parent=1 // pred_check
      _
    $region15: #{baseline_forward.9} parent=1 // pred_check_branch
      %30 = sbr.rel (0) target = $region17
    $region16: #{baseline_forward.9} parent=1 // pred_region
      _
    $region17: #{baseline_forward.9} parent=1 // pred_fallthru
      _
    // Predicated region
    $region18: #{baseline_forward.9} parent=1 // pred_check
      _
    $region19: #{baseline_forward.9} parent=1 // pred_check_branch
      %32 = sbr.rel (0) target = $region21
    $region20: #{baseline_forward.9} parent=1 // pred_region
      _
    $region21: #{baseline_forward.9} parent=1 // pred_fallthru
      _
    // Predicated region
    $region22: #{baseline_forward.9} parent=1 // pred_check
      _
    $region23: #{baseline_forward.9} parent=1 // pred_check_branch
      %34 = sbr.rel (0) target = $region25
    $region24: #{baseline_forward.9} parent=1 // pred_region
      _
    $region25: #{baseline_forward.9} parent=1 // pred_fallthru
      _
    // Predicated region
    $region26: #{baseline_forward.9} parent=1 // pred_check
      _
    $region27: #{baseline_forward.9} parent=1 // pred_check_branch
      %36 = sbr.rel (0) target = $region29
    $region28: #{baseline_forward.9} parent=1 // pred_region
      _
    $region29: #{baseline_forward.9} parent=1 // pred_fallthru
      _
    // Predicated region
    $region30: #{baseline_forward.9} parent=1 // pred_check
      _
    $region31: #{baseline_forward.9} parent=1 // pred_check_branch
      %38 = sbr.rel (0) target = $region33
    $region32: #{baseline_forward.9} parent=1 // pred_region
      _
    $region33: #{baseline_forward.9} parent=1 // pred_fallthru
      _
    // Predicated region
    $region34: #{baseline_forward.9} parent=1 // pred_check
      _
    $region35: #{baseline_forward.9} parent=1 // pred_check_branch
      %40 = sbr.rel (0) target = $region37
    $region36: #{baseline_forward.9} parent=1 // pred_region
      _
    $region37: #{baseline_forward.9} parent=1 // pred_fallthru
      _
    // Predicated region
    $region38: #{baseline_forward.9} parent=1 // pred_check
      _
    $region39: #{baseline_forward.9} parent=1 // pred_check_branch
      %42 = sbr.rel (0) target = $region41
    $region40: #{baseline_forward.9} parent=1 // pred_region
      _
    $region41: #{baseline_forward.9} parent=1 // pred_fallthru
      _
    // Predicated region
    $region42: #{baseline_forward.9} parent=1 // pred_check
      _
    $region43: #{baseline_forward.9} parent=1 // pred_check_branch
      %44 = sbr.rel (0) target = $region45
    $region44: #{baseline_forward.9} parent=1 // pred_region
      _
    $region45: #{baseline_forward.9} parent=1 // pred_fallthru
      _
    // Predicated region
    $region46: #{baseline_forward.9} parent=1 // pred_check
      _
    $region47: #{baseline_forward.9} parent=1 // pred_check_branch
      %46 = sbr.rel (0) target = $region49
    $region48: #{baseline_forward.9} parent=1 // pred_region
      _
    $region49: #{baseline_forward.9} parent=1 // pred_fallthru
      _
    // Predicated region
    $region50: #{baseline_forward.9} parent=1 // pred_check
      _
    $region51: #{baseline_forward.9} parent=1 // pred_check_branch
      %48 = sbr.rel (0) target = $region53
    $region52: #{baseline_forward.9} parent=1 // pred_region
      _
    $region53: #{baseline_forward.9} parent=1 // pred_fallthru
      _
    // Predicated region
    $region54: #{baseline_forward.9} parent=1 // pred_check
      _
    $region55: #{baseline_forward.9} parent=1 // pred_check_branch
      %50 = sbr.rel (0) target = $region57
    $region56: #{baseline_forward.9} parent=1 // pred_region
      _
    $region57: #{baseline_forward.9} parent=1 // pred_fallthru
      _
    // Predicated region
    $region58: #{baseline_forward.9} parent=1 // pred_check
      _
    $region59: #{baseline_forward.9} parent=1 // pred_check_branch
      %52 = sbr.rel (0) target = $region61
    $region60: #{baseline_forward.9} parent=1 // pred_region
      _
    $region61: #{baseline_forward.9} parent=1 // pred_fallthru
      _
    // Predicated region
    $region62: #{baseline_forward.9} parent=1 // pred_check
      _
    $region63: #{baseline_forward.9} parent=1 // pred_check_branch
      %54 = sbr.rel (0) target = $region65
    $region64: #{baseline_forward.9} parent=1 // pred_region
      _
    $region65: #{baseline_forward.9} parent=1 // pred_fallthru
      _
    // Predicated region
    $region66: #{baseline_forward.9} parent=1 // pred_check
      _
    $region67: #{baseline_forward.9} parent=1 // pred_check_branch
      %56 = sbr.rel (0) target = $region69
    $region68: #{baseline_forward.9} parent=1 // pred_region
      _
    $region69: #{baseline_forward.9} parent=1 // pred_fallthru
      _
    %v58 = vld [vmem:[%s1] sm:$0xff]
    %v59 = vld [vmem:[%s1 + $0x8] sm:$0xf]
    %v60 = vld [vmem:[%s1 + $0xc] sm:$0xff]
    %v61 = vld [vmem:[%s1 + $0x14] sm:$0xf]
    %v62 = vld [vmem:[%s1 + $0x18] sm:$0xff]
    %v63 = vld [vmem:[%s1 + $0x20] sm:$0xf]
    %v64 = vld [vmem:[%s1 + $0x24] sm:$0xff]
    %v65 = vld [vmem:[%s1 + $0x2c] sm:$0xf]
    %v66 = vld [vmem:[%s1 + $0x30] sm:$0xff]
    %v67 = vld [vmem:[%s1 + $0x38] sm:$0xf]
    %v68 = vld [vmem:[%s1 + $0x3c] sm:$0xff]
    %v69 = vld [vmem:[%s1 + $0x44] sm:$0xf]
    %v70 = vld [vmem:[%s1 + $0x48] sm:$0xff]
    %v71 = vld [vmem:[%s1 + $0x50] sm:$0xf]
    %v72 = vld [vmem:[%s1 + $0x54] sm:$0xff]
    %v73 = vld [vmem:[%s1 + $0x5c] sm:$0xf]
    %v74 = vld [vmem:[%s1 + $0x60] sm:$0xff]
    %v75 = vld [vmem:[%s1 + $0x68] sm:$0xf]
    %v76 = vld [vmem:[%s1 + $0x6c] sm:$0xff]
    %v77 = vld [vmem:[%s1 + $0x74] sm:$0xf]
    %v78 = vld [vmem:[%s1 + $0x78] sm:$0xff]
    %v79 = vld [vmem:[%s1 + $0x80] sm:$0xf]
    %v80 = vld [vmem:[%s1 + $0x84] sm:$0xff]
    %v81 = vld [vmem:[%s1 + $0x8c] sm:$0xf]
    %v82 = vld [vmem:[%s1 + $0x90] sm:$0xff]
    %v83 = vld [vmem:[%s1 + $0x98] sm:$0xf]
    %v84 = vld [vmem:[%s1 + $0x9c] sm:$0xff]
    %v85 = vld [vmem:[%s1 + $0xa4] sm:$0xf]
    %v86 = vld [vmem:[%s1 + $0xa8] sm:$0xff]
    %v87 = vld [vmem:[%s1 + $0xb0] sm:$0xf]
    %v88 = vld [vmem:[%s1 + $0xb4] sm:$0xff]
    %v89 = vld [vmem:[%s1 + $0xbc] sm:$0xf]
    %v90 = vld [vmem:[%s2] sm:$0x7]
    %v91 = vld [vmem:[%s5] sm:$0xff]
    %v92 = vld [vmem:[%s5 + $0x8] sm:$0xff]
    %v93 = vld [vmem:[%s5 + $0x10] sm:$0xff]
    %v94 = vld [vmem:[%s5 + $0x18] sm:$0xff]
    %v95 = vld [vmem:[%s5 + $0x20] sm:$0xff]
    %v96 = vld [vmem:[%s5 + $0x28] sm:$0xff]
    %v97 = vld [vmem:[%s5 + $0x30] sm:$0xff]
    %v98 = vld [vmem:[%s5 + $0x38] sm:$0xff]
    %v99 = vld [vmem:[%s5 + $0x40] sm:$0xff]
    %v100 = vld [vmem:[%s5 + $0x48] sm:$0xff]
    %v101 = vld [vmem:[%s5 + $0x50] sm:$0xff]
    %v102 = vld [vmem:[%s5 + $0x58] sm:$0xff]
    %v103 = vld [vmem:[%s5 + $0x60] sm:$0xff]
    %v104 = vld [vmem:[%s5 + $0x68] sm:$0xff]
    %v105 = vld [vmem:[%s5 + $0x70] sm:$0xff]
    %v106 = vld [vmem:[%s5 + $0x78] sm:$0xff]
    %v107 = vld [vmem:[%s6] sm:$0xff]
    %v108 = vld [vmem:[%s3] sm:$0xf]
    %v109 = vld [vmem:[%s3 + $0x4] sm:$0xf]
    %v110 = vld [vmem:[%s3 + $0x8] sm:$0xf]
    %v111 = vld [vmem:[%s3 + $0xc] sm:$0xf]
    %v112 = vld [vmem:[%s3 + $0x10] sm:$0xf]
    %v113 = vld [vmem:[%s3 + $0x14] sm:$0xf]
    %v114 = vld [vmem:[%s3 + $0x18] sm:$0xf]
    %v115 = vld [vmem:[%s3 + $0x1c] sm:$0xf]
    %v116 = vld [vmem:[%s3 + $0x20] sm:$0xf]
    %v117 = vld [vmem:[%s3 + $0x24] sm:$0xf]
    %v118 = vld [vmem:[%s3 + $0x28] sm:$0xf]
    %v119 = vld [vmem:[%s3 + $0x2c] sm:$0xf]
    %v120 = vld [vmem:[%s3 + $0x30] sm:$0xf]
    %v121 = vld [vmem:[%s3 + $0x34] sm:$0xf]
    %v122 = vld [vmem:[%s3 + $0x38] sm:$0xf]
    %v123 = vld [vmem:[%s3 + $0x3c] sm:$0xf]
    %v124 = vld [vmem:[%s4] sm:$0x1]
    %v125 = vld [vmem:[%s7] sm:$0x1]
    %v126 = vld [vmem:[%s8] sm:$0x1]
    %v127 = vld [vmem:[%s9] sm:$0xff]
    %v128 = vld [vmem:[%s9 + $0x8] sm:$0xff]
    %v129 = vld [vmem:[%s9 + $0x10] sm:$0xff]
    %v130 = vld [vmem:[%s9 + $0x18] sm:$0xff]
    %v131 = vld [vmem:[%s9 + $0x20] sm:$0xff]
    %v132 = vld [vmem:[%s9 + $0x28] sm:$0xff]
    %v133 = vld [vmem:[%s9 + $0x30] sm:$0xff]
    %v134 = vld [vmem:[%s9 + $0x38] sm:$0xff]
    %v135 = vld [vmem:[%s9 + $0x40] sm:$0xff]
    %v136 = vld [vmem:[%s9 + $0x48] sm:$0xff]
    %v137 = vld [vmem:[%s9 + $0x50] sm:$0xff]
    %v138 = vld [vmem:[%s9 + $0x58] sm:$0xff]
    %v139 = vld [vmem:[%s9 + $0x60] sm:$0xff]
    %v140 = vld [vmem:[%s9 + $0x68] sm:$0xff]
    %v141 = vld [vmem:[%s9 + $0x70] sm:$0xff]
    %v142 = vld [vmem:[%s9 + $0x78] sm:$0xff]
    %v143 = vld [vmem:[%s10] sm:$0x3]
    %v144 = vld [vmem:[%s11] sm:$0xf]
    %v145 = vld [vmem:[%s11 + $0x4] sm:$0xf]
    %v146 = vld [vmem:[%s11 + $0x8] sm:$0xf]
    %v147 = vld [vmem:[%s11 + $0xc] sm:$0xf]
    %v148 = vld [vmem:[%s11 + $0x10] sm:$0xf]
    %v149 = vld [vmem:[%s11 + $0x14] sm:$0xf]
    %v150 = vld [vmem:[%s11 + $0x18] sm:$0xf]
    %v151 = vld [vmem:[%s11 + $0x1c] sm:$0xf]
    %v152 = vld [vmem:[%s11 + $0x20] sm:$0xf]
    %v153 = vld [vmem:[%s11 + $0x24] sm:$0xf]
    %v154 = vld [vmem:[%s11 + $0x28] sm:$0xf]
    %v155 = vld [vmem:[%s11 + $0x2c] sm:$0xf]
    %v156 = vld [vmem:[%s11 + $0x30] sm:$0xf]
    %v157 = vld [vmem:[%s11 + $0x34] sm:$0xf]
    %v158 = vld [vmem:[%s11 + $0x38] sm:$0xf]
    %v159 = vld [vmem:[%s11 + $0x3c] sm:$0xf]
    %v160 = vld [vmem:[%s11 + $0x40] sm:$0xf]
    %v161 = vld [vmem:[%s11 + $0x44] sm:$0xf]
    %v162 = vld [vmem:[%s11 + $0x48] sm:$0xf]
    %v163 = vld [vmem:[%s11 + $0x4c] sm:$0xf]
    %v164 = vld [vmem:[%s11 + $0x50] sm:$0xf]
    %v165 = vld [vmem:[%s11 + $0x54] sm:$0xf]
    %v166 = vld [vmem:[%s11 + $0x58] sm:$0xf]
    %v167 = vld [vmem:[%s11 + $0x5c] sm:$0xf]
    %v168 = vld [vmem:[%s11 + $0x60] sm:$0xf]
    %v169 = vld [vmem:[%s11 + $0x64] sm:$0xf]
    %v170 = vld [vmem:[%s11 + $0x68] sm:$0xf]
    %v171 = vld [vmem:[%s11 + $0x6c] sm:$0xf]
    %v172 = vld [vmem:[%s11 + $0x70] sm:$0xf]
    %v173 = vld [vmem:[%s11 + $0x74] sm:$0xf]
    %v174 = vld [vmem:[%s11 + $0x78] sm:$0xf]
    %v175 = vld [vmem:[%s11 + $0x7c] sm:$0xf]
    %v176 = vld [vmem:[%s12] sm:$0x1]
    %v177 = vld [vmem:[%s13] sm:$0x1]
    %v178 = vld [vmem:[%s14] sm:$0x1]
    %v179 = vld [vmem:[%s15] sm:$0xf]
    %v180 = vld [vmem:[%s15 + $0x4] sm:$0xf]
    %v181 = vld [vmem:[%s15 + $0x8] sm:$0xf]
    %v182 = vld [vmem:[%s15 + $0xc] sm:$0xf]
    %v183 = vld [vmem:[%s15 + $0x10] sm:$0xf]
    %v184 = vld [vmem:[%s15 + $0x14] sm:$0xf]
    %v185 = vld [vmem:[%s15 + $0x18] sm:$0xf]
    %v186 = vld [vmem:[%s15 + $0x1c] sm:$0xf]
    %v187 = vld [vmem:[%s15 + $0x20] sm:$0xf]
    %v188 = vld [vmem:[%s15 + $0x24] sm:$0xf]
    %v189 = vld [vmem:[%s15 + $0x28] sm:$0xf]
    %v190 = vld [vmem:[%s15 + $0x2c] sm:$0xf]
    %v191 = vld [vmem:[%s15 + $0x30] sm:$0xf]
    %v192 = vld [vmem:[%s15 + $0x34] sm:$0xf]
    %v193 = vld [vmem:[%s15 + $0x38] sm:$0xf]
    %v194 = vld [vmem:[%s15 + $0x3c] sm:$0xf]
    %v195 = vld [vmem:[%s16] sm:$0x1]
    %v196 = vld [vmem:[%s0] sm:$0xff]
    %v197 = vld [vmem:[%s0 + $0x8] sm:$0x1]
    %v198 = vpack.c.bf16 %v197, %v196
    %v200 = vlaneseq
    %v201 = vshrl.u32 %v200, 7
    %v202 = vsub.s32 0, %v201
    %v203 = vrot.slane %v90, %v202
    %v204 = vlaneseq
    %v205 = vshrl.u32 %v204, 7
    %v206 = vsub.s32 1, %v205
    %v207 = vrot.slane %v90, %v206
    %v208 = vlaneseq
    %v209 = vshrl.u32 %v208, 7
    %v210 = vsub.s32 2, %v209
    %v211 = vrot.slane %v90, %v210
    %v247 = vunpack.c.l.b16 %v58
    %v248 = vunpack.c.h.b16 %v58
    %v249 = vunpack.c.l.b16 %v59
    %v250 = vunpack.c.l.b16 %v60
    %v251 = vunpack.c.h.b16 %v60
    %v252 = vunpack.c.l.b16 %v61
    %v253 = vunpack.c.l.b16 %v62
    %v254 = vunpack.c.h.b16 %v62
    %v255 = vunpack.c.l.b16 %v63
    %v256 = vunpack.c.l.b16 %v64
    %v257 = vunpack.c.h.b16 %v64
    %v258 = vunpack.c.l.b16 %v65
    %v259 = vunpack.c.l.b16 %v66
    %v260 = vunpack.c.h.b16 %v66
    %v261 = vunpack.c.l.b16 %v67
    %v262 = vunpack.c.l.b16 %v68
    %v263 = vunpack.c.h.b16 %v68
    %v264 = vunpack.c.l.b16 %v69
    %v265 = vunpack.c.l.b16 %v70
    %v266 = vunpack.c.h.b16 %v70
    %v267 = vunpack.c.l.b16 %v71
    %v268 = vunpack.c.l.b16 %v72
    %v269 = vunpack.c.h.b16 %v72
    %v270 = vunpack.c.l.b16 %v73
    %v271 = vunpack.c.l.b16 %v74
    %v272 = vunpack.c.h.b16 %v74
    %v273 = vunpack.c.l.b16 %v75
    %v274 = vunpack.c.l.b16 %v76
    %v275 = vunpack.c.h.b16 %v76
    %v276 = vunpack.c.l.b16 %v77
    %v277 = vunpack.c.l.b16 %v78
    %v278 = vunpack.c.h.b16 %v78
    %v279 = vunpack.c.l.b16 %v79
    %v280 = vunpack.c.l.b16 %v80
    %v281 = vunpack.c.h.b16 %v80
    %v282 = vunpack.c.l.b16 %v81
    %v283 = vunpack.c.l.b16 %v82
    %v284 = vunpack.c.h.b16 %v82
    %v285 = vunpack.c.l.b16 %v83
    %v286 = vunpack.c.l.b16 %v84
    %v287 = vunpack.c.h.b16 %v84
    %v288 = vunpack.c.l.b16 %v85
    %v289 = vunpack.c.l.b16 %v86
    %v290 = vunpack.c.h.b16 %v86
    %v291 = vunpack.c.l.b16 %v87
    %v292 = vunpack.c.l.b16 %v88
    %v293 = vunpack.c.h.b16 %v88
    %v294 = vunpack.c.l.b16 %v89
    %v295 = vpack.c.b16 %v250, %v247
    %v296 = vpack.c.b16 %v251, %v248
    %v297 = vpack.c.b16 %v252, %v249
    %v298 = vpack.c.b16 %v256, %v253
    %v299 = vpack.c.b16 %v257, %v254
    %v300 = vpack.c.b16 %v258, %v255
    %v301 = vpack.c.b16 %v262, %v259
    %v302 = vpack.c.b16 %v263, %v260
    %v303 = vpack.c.b16 %v264, %v261
    %v304 = vpack.c.b16 %v268, %v265
    %v305 = vpack.c.b16 %v269, %v266
    %v306 = vpack.c.b16 %v270, %v267
    %v307 = vpack.c.b16 %v274, %v271
    %v308 = vpack.c.b16 %v275, %v272
    %v309 = vpack.c.b16 %v276, %v273
    %v310 = vpack.c.b16 %v280, %v277
    %v311 = vpack.c.b16 %v281, %v278
    %v312 = vpack.c.b16 %v282, %v279
    %v313 = vpack.c.b16 %v286, %v283
    %v314 = vpack.c.b16 %v287, %v284
    %v315 = vpack.c.b16 %v288, %v285
    %v316 = vpack.c.b16 %v292, %v289
    %v317 = vpack.c.b16 %v293, %v290
    %v318 = vpack.c.b16 %v294, %v291
    %343 = vmatprep.subr.bf16.mxu0 %v296
    %344 = vmatpush1.bf16.msra.mxu0 %v295
    %345 = vmatprep.subr.bf16.mxu0 %v299
    %346 = vmatpush1.bf16.msra.mxu0 %v298
    %347 = vmatprep.subr.bf16.mxu0 %v302
    %348 = vmatpush1.bf16.msra.mxu0 %v301
    %349 = vmatprep.subr.bf16.mxu0 %v305
    %350 = vmatpush1.bf16.msra.mxu0 %v304
    %351 = vmatprep.subr.bf16.mxu0 %v308
    %352 = vmatpush1.bf16.msra.mxu0 %v307
    %353 = vmatprep.subr.bf16.mxu0 %v311
    %354 = vmatpush1.bf16.msra.mxu0 %v310
    %355 = vmatprep.subr.bf16.mxu0 %v314
    %356 = vmatpush1.bf16.msra.mxu0 %v313
    %357 = vmatprep.subr.bf16.mxu0 %v317
    %358 = vmatpush1.bf16.msra.mxu0 %v316
    %359 = vmatprep.subr.bf16.mxu0 0
    %360 = vmatpush1.bf16.msra.mxu0 0
    %361 = vmatprep.subr.bf16.mxu0 0
    %362 = vmatpush1.bf16.msra.mxu0 0
    %363 = vmatprep.subr.bf16.mxu0 0
    %364 = vmatpush1.bf16.msra.mxu0 0
    %365 = vmatprep.subr.bf16.mxu0 0
    %366 = vmatpush1.bf16.msra.mxu0 0
    %367 = vmatprep.subr.bf16.mxu0 0
    %368 = vmatpush1.bf16.msra.mxu0 0
    %369 = vmatprep.subr.bf16.mxu0 0
    %370 = vmatpush1.bf16.msra.mxu0 0
    %371 = vmatprep.subr.bf16.mxu0 0
    %372 = vmatpush1.bf16.msra.mxu0 0
    %373 = vmatprep.subr.bf16.mxu0 0
    %374 = vmatpush1.bf16.msra.mxu0 0
    %375 = vmatprep.mubr.bf16.mxu0 0
    %376 = vmatmul.mubr.bf16.gmra.mrb[0].mxu0 %v198
    %v377 = vpop.f32.mrb[0].mxu0
    %v378 = vadd.f32 %v203, %v377
    %v379 = vpop.f32.mrb[0].mxu0
    %v380 = vadd.f32 %v207, %v379
    %v381 = vpop.f32.mrb[0].mxu0
    %v382 = vadd.f32 %v203, %v381
    %v383 = vpop.f32.mrb[0].mxu0
    %v384 = vadd.f32 %v207, %v383
    %385 = vdwg.mxu0
    %386 = vmatprep.subr.bf16.mxu0 0
    %387 = vmatpush1.bf16.msra.mxu0 %v297
    %388 = vmatprep.subr.bf16.mxu0 0
    %389 = vmatpush1.bf16.msra.mxu0 %v300
    %390 = vmatprep.subr.bf16.mxu0 0
    %391 = vmatpush1.bf16.msra.mxu0 %v303
    %392 = vmatprep.subr.bf16.mxu0 0
    %393 = vmatpush1.bf16.msra.mxu0 %v306
    %394 = vmatprep.subr.bf16.mxu0 0
    %395 = vmatpush1.bf16.msra.mxu0 %v309
    %396 = vmatprep.subr.bf16.mxu0 0
    %397 = vmatpush1.bf16.msra.mxu0 %v312
    %398 = vmatprep.subr.bf16.mxu0 0
    %399 = vmatpush1.bf16.msra.mxu0 %v315
    %400 = vmatprep.subr.bf16.mxu0 0
    %401 = vmatpush1.bf16.msra.mxu0 %v318
    %402 = vmatprep.subr.bf16.mxu0 0
    %403 = vmatpush1.bf16.msra.mxu0 0
    %404 = vmatprep.subr.bf16.mxu0 0
    %405 = vmatpush1.bf16.msra.mxu0 0
    %406 = vmatprep.subr.bf16.mxu0 0
    %407 = vmatpush1.bf16.msra.mxu0 0
    %408 = vmatprep.subr.bf16.mxu0 0
    %409 = vmatpush1.bf16.msra.mxu0 0
    %410 = vmatprep.subr.bf16.mxu0 0
    %411 = vmatpush1.bf16.msra.mxu0 0
    %412 = vmatprep.subr.bf16.mxu0 0
    %413 = vmatpush1.bf16.msra.mxu0 0
    %414 = vmatprep.subr.bf16.mxu0 0
    %415 = vmatpush1.bf16.msra.mxu0 0
    %416 = vmatprep.subr.bf16.mxu0 0
    %417 = vmatpush1.bf16.msra.mxu0 0
    %418 = vmatprep.mubr.bf16.mxu0 0
    %419 = vmatmul.mubr.bf16.gmra.mrb[0].mxu0 %v198
    %v420 = vpop.f32.mrb[0].mxu0
    %v421 = vadd.f32 %v211, %v420
    %v422 = vpop.f32.mrb[0].mxu0
    %v423 = vpop.f32.mrb[0].mxu0
    %v424 = vadd.f32 %v211, %v423
    %v425 = vpop.f32.mrb[0].mxu0
    %426 = vdwg.mxu0
    %s427 = scalar_lea.vmem %s0, 16
    %v428 = vld [vmem:[%s427] sm:$0xff]
    %v429 = vld [vmem:[%s427 + $0x8] sm:$0x1]
    %v430 = vpack.c.bf16 %v429, %v428
    %431 = vmatprep.subr.bf16.mxu0 %v296
    %432 = vmatpush1.bf16.msra.mxu0 %v295
    %433 = vmatprep.subr.bf16.mxu0 %v299
    %434 = vmatpush1.bf16.msra.mxu0 %v298
    %435 = vmatprep.subr.bf16.mxu0 %v302
    %436 = vmatpush1.bf16.msra.mxu0 %v301
    %437 = vmatprep.subr.bf16.mxu0 %v305
    %438 = vmatpush1.bf16.msra.mxu0 %v304
    %439 = vmatprep.subr.bf16.mxu0 %v308
    %440 = vmatpush1.bf16.msra.mxu0 %v307
    %441 = vmatprep.subr.bf16.mxu0 %v311
    %442 = vmatpush1.bf16.msra.mxu0 %v310
    %443 = vmatprep.subr.bf16.mxu0 %v314
    %444 = vmatpush1.bf16.msra.mxu0 %v313
    %445 = vmatprep.subr.bf16.mxu0 %v317
    %446 = vmatpush1.bf16.msra.mxu0 %v316
    %447 = vmatprep.subr.bf16.mxu0 0
    %448 = vmatpush1.bf16.msra.mxu0 0
    %449 = vmatprep.subr.bf16.mxu0 0
    %450 = vmatpush1.bf16.msra.mxu0 0
    %451 = vmatprep.subr.bf16.mxu0 0
    %452 = vmatpush1.bf16.msra.mxu0 0
    %453 = vmatprep.subr.bf16.mxu0 0
    %454 = vmatpush1.bf16.msra.mxu0 0
    %455 = vmatprep.subr.bf16.mxu0 0
    %456 = vmatpush1.bf16.msra.mxu0 0
    %457 = vmatprep.subr.bf16.mxu0 0
    %458 = vmatpush1.bf16.msra.mxu0 0
    %459 = vmatprep.subr.bf16.mxu0 0
    %460 = vmatpush1.bf16.msra.mxu0 0
    %461 = vmatprep.subr.bf16.mxu0 0
    %462 = vmatpush1.bf16.msra.mxu0 0
    %463 = vmatprep.mubr.bf16.mxu0 0
    %464 = vmatmul.mubr.bf16.gmra.mrb[0].mxu0 %v430
    %v465 = vpop.f32.mrb[0].mxu0
    %v466 = vadd.f32 %v203, %v465
    %v467 = vpop.f32.mrb[0].mxu0
    %v468 = vadd.f32 %v207, %v467
    %v469 = vpop.f32.mrb[0].mxu0
    %v470 = vadd.f32 %v203, %v469
    %v471 = vpop.f32.mrb[0].mxu0
    %v472 = vadd.f32 %v207, %v471
    %473 = vdwg.mxu0
    %474 = vmatprep.subr.bf16.mxu0 0
    %475 = vmatpush1.bf16.msra.mxu0 %v297
    %476 = vmatprep.subr.bf16.mxu0 0
    %477 = vmatpush1.bf16.msra.mxu0 %v300
    %478 = vmatprep.subr.bf16.mxu0 0
    %479 = vmatpush1.bf16.msra.mxu0 %v303
    %480 = vmatprep.subr.bf16.mxu0 0
    %481 = vmatpush1.bf16.msra.mxu0 %v306
    %482 = vmatprep.subr.bf16.mxu0 0
    %483 = vmatpush1.bf16.msra.mxu0 %v309
    %484 = vmatprep.subr.bf16.mxu0 0
    %485 = vmatpush1.bf16.msra.mxu0 %v312
    %486 = vmatprep.subr.bf16.mxu0 0
    %487 = vmatpush1.bf16.msra.mxu0 %v315
    %488 = vmatprep.subr.bf16.mxu0 0
    %489 = vmatpush1.bf16.msra.mxu0 %v318
    %490 = vmatprep.subr.bf16.mxu0 0
    %491 = vmatpush1.bf16.msra.mxu0 0
    %492 = vmatprep.subr.bf16.mxu0 0
    %493 = vmatpush1.bf16.msra.mxu0 0
    %494 = vmatprep.subr.bf16.mxu0 0
    %495 = vmatpush1.bf16.msra.mxu0 0
    %496 = vmatprep.subr.bf16.mxu0 0
    %497 = vmatpush1.bf16.msra.mxu0 0
    %498 = vmatprep.subr.bf16.mxu0 0
    %499 = vmatpush1.bf16.msra.mxu0 0
    %500 = vmatprep.subr.bf16.mxu0 0
    %501 = vmatpush1.bf16.msra.mxu0 0
    %502 = vmatprep.subr.bf16.mxu0 0
    %503 = vmatpush1.bf16.msra.mxu0 0
    %504 = vmatprep.subr.bf16.mxu0 0
    %505 = vmatpush1.bf16.msra.mxu0 0
    %506 = vmatprep.mubr.bf16.mxu0 0
    %507 = vmatmul.mubr.bf16.gmra.mrb[0].mxu0 %v430
    %v508 = vpop.f32.mrb[0].mxu0
    %v509 = vadd.f32 %v211, %v508
    %v510 = vpop.f32.mrb[0].mxu0
    %v511 = vpop.f32.mrb[0].mxu0
    %v512 = vadd.f32 %v211, %v511
    %v513 = vpop.f32.mrb[0].mxu0
    %514 = vdwg.mxu0
    %v515 = vmul.f32 %v378, %v380
    %v516 = vmul.f32 %v382, %v384
    %517 = vmatprep.subr.mxu0 0.0
    %518 = vmatpush1.msra.mxu0 %v91
    %519 = vmatprep.subr.mxu0 0.0
    %520 = vmatpush1.msra.mxu0 %v92
    %521 = vmatprep.subr.mxu0 0.0
    %522 = vmatpush1.msra.mxu0 %v93
    %523 = vmatprep.subr.mxu0 0.0
    %524 = vmatpush1.msra.mxu0 %v94
    %525 = vmatprep.subr.mxu0 0.0
    %526 = vmatpush1.msra.mxu0 %v95
    %527 = vmatprep.subr.mxu0 0.0
    %528 = vmatpush1.msra.mxu0 %v96
    %529 = vmatprep.subr.mxu0 0.0
    %530 = vmatpush1.msra.mxu0 %v97
    %531 = vmatprep.subr.mxu0 0.0
    %532 = vmatpush1.msra.mxu0 %v98
    %533 = vmatprep.subr.mxu0 0.0
    %534 = vmatpush1.msra.mxu0 %v99
    %535 = vmatprep.subr.mxu0 0.0
    %536 = vmatpush1.msra.mxu0 %v100
    %537 = vmatprep.subr.mxu0 0.0
    %538 = vmatpush1.msra.mxu0 %v101
    %539 = vmatprep.subr.mxu0 0.0
    %540 = vmatpush1.msra.mxu0 %v102
    %541 = vmatprep.subr.mxu0 0.0
    %542 = vmatpush1.msra.mxu0 %v103
    %543 = vmatprep.subr.mxu0 0.0
    %544 = vmatpush1.msra.mxu0 %v104
    %545 = vmatprep.subr.mxu0 0.0
    %546 = vmatpush1.msra.mxu0 %v105
    %547 = vmatprep.subr.mxu0 0.0
    %548 = vmatpush1.msra.mxu0 %v106
    %549 = vmatprep.subr.mxu0 0.0
    %550 = vmatpush1.msra.mxu0 0.0
    %551 = vmatprep.subr.mxu0 0.0
    %552 = vmatpush1.msra.mxu0 0.0
    %553 = vmatprep.subr.mxu0 0.0
    %554 = vmatpush1.msra.mxu0 0.0
    %555 = vmatprep.subr.mxu0 0.0
    %556 = vmatpush1.msra.mxu0 0.0
    %557 = vmatprep.subr.mxu0 0.0
    %558 = vmatpush1.msra.mxu0 0.0
    %559 = vmatprep.subr.mxu0 0.0
    %560 = vmatpush1.msra.mxu0 0.0
    %561 = vmatprep.subr.mxu0 0.0
    %562 = vmatpush1.msra.mxu0 0.0
    %563 = vmatprep.subr.mxu0 0.0
    %564 = vmatpush1.msra.mxu0 0.0
    %565 = vmatprep.subr.mxu0 0.0
    %566 = vmatpush1.msra.mxu0 0.0
    %567 = vmatprep.subr.mxu0 0.0
    %568 = vmatpush1.msra.mxu0 0.0
    %569 = vmatprep.subr.mxu0 0.0
    %570 = vmatpush1.msra.mxu0 0.0
    %571 = vmatprep.subr.mxu0 0.0
    %572 = vmatpush1.msra.mxu0 0.0
    %573 = vmatprep.subr.mxu0 0.0
    %574 = vmatpush1.msra.mxu0 0.0
    %575 = vmatprep.subr.mxu0 0.0
    %576 = vmatpush1.msra.mxu0 0.0
    %577 = vmatprep.subr.mxu0 0.0
    %578 = vmatpush1.msra.mxu0 0.0
    %579 = vmatprep.subr.mxu0 0.0
    %580 = vmatpush1.msra.mxu0 0.0
    %581 = vmatprep.mubr.f32.mxu0 0.0
    %582 = vmatmul.mubr.f32.gmra.mrb[0].mxu0 %v515
    %v583 = vpop.f32.mrb[0].mxu0
    %v584 = vadd.f32 0.0, %v583
    %v585 = vpop.f32.mrb[0].mxu0
    %586 = vmatprep.mubr.f32.mxu0 0.0
    %587 = vmatmul.mubr.f32.gmra.mrb[0].mxu0 %v516
    %v588 = vpop.f32.mrb[0].mxu0
    %v589 = vadd.f32 0.0, %v588
    %v590 = vpop.f32.mrb[0].mxu0
    %591 = vdwg.mxu0
    %v592 = vmul.f32 %v584, 0.17677669
    %v593 = vmul.f32 %v589, 0.17677669
    %v594 = vmul.f32 %v378, %v468
    %v595 = vmul.f32 %v382, %v472
    %596 = vmatprep.subr.mxu0 0.0
    %597 = vmatpush1.msra.mxu0 %v91
    %598 = vmatprep.subr.mxu0 0.0
    %599 = vmatpush1.msra.mxu0 %v92
    %600 = vmatprep.subr.mxu0 0.0
    %601 = vmatpush1.msra.mxu0 %v93
    %602 = vmatprep.subr.mxu0 0.0
    %603 = vmatpush1.msra.mxu0 %v94
    %604 = vmatprep.subr.mxu0 0.0
    %605 = vmatpush1.msra.mxu0 %v95
    %606 = vmatprep.subr.mxu0 0.0
    %607 = vmatpush1.msra.mxu0 %v96
    %608 = vmatprep.subr.mxu0 0.0
    %609 = vmatpush1.msra.mxu0 %v97
    %610 = vmatprep.subr.mxu0 0.0
    %611 = vmatpush1.msra.mxu0 %v98
    %612 = vmatprep.subr.mxu0 0.0
    %613 = vmatpush1.msra.mxu0 %v99
    %614 = vmatprep.subr.mxu0 0.0
    %615 = vmatpush1.msra.mxu0 %v100
    %616 = vmatprep.subr.mxu0 0.0
    %617 = vmatpush1.msra.mxu0 %v101
    %618 = vmatprep.subr.mxu0 0.0
    %619 = vmatpush1.msra.mxu0 %v102
    %620 = vmatprep.subr.mxu0 0.0
    %621 = vmatpush1.msra.mxu0 %v103
    %622 = vmatprep.subr.mxu0 0.0
    %623 = vmatpush1.msra.mxu0 %v104
    %624 = vmatprep.subr.mxu0 0.0
    %625 = vmatpush1.msra.mxu0 %v105
    %626 = vmatprep.subr.mxu0 0.0
    %627 = vmatpush1.msra.mxu0 %v106
    %628 = vmatprep.subr.mxu0 0.0
    %629 = vmatpush1.msra.mxu0 0.0
    %630 = vmatprep.subr.mxu0 0.0
    %631 = vmatpush1.msra.mxu0 0.0
    %632 = vmatprep.subr.mxu0 0.0
    %633 = vmatpush1.msra.mxu0 0.0
    %634 = vmatprep.subr.mxu0 0.0
    %635 = vmatpush1.msra.mxu0 0.0
    %636 = vmatprep.subr.mxu0 0.0
    %637 = vmatpush1.msra.mxu0 0.0
    %638 = vmatprep.subr.mxu0 0.0
    %639 = vmatpush1.msra.mxu0 0.0
    %640 = vmatprep.subr.mxu0 0.0
    %641 = vmatpush1.msra.mxu0 0.0
    %642 = vmatprep.subr.mxu0 0.0
    %643 = vmatpush1.msra.mxu0 0.0
    %644 = vmatprep.subr.mxu0 0.0
    %645 = vmatpush1.msra.mxu0 0.0
    %646 = vmatprep.subr.mxu0 0.0
    %647 = vmatpush1.msra.mxu0 0.0
    %648 = vmatprep.subr.mxu0 0.0
    %649 = vmatpush1.msra.mxu0 0.0
    %650 = vmatprep.subr.mxu0 0.0
    %651 = vmatpush1.msra.mxu0 0.0
    %652 = vmatprep.subr.mxu0 0.0
    %653 = vmatpush1.msra.mxu0 0.0
    %654 = vmatprep.subr.mxu0 0.0
    %655 = vmatpush1.msra.mxu0 0.0
    %656 = vmatprep.subr.mxu0 0.0
    %657 = vmatpush1.msra.mxu0 0.0
    %658 = vmatprep.subr.mxu0 0.0
    %659 = vmatpush1.msra.mxu0 0.0
    %660 = vmatprep.mubr.f32.mxu0 0.0
    %661 = vmatmul.mubr.f32.gmra.mrb[0].mxu0 %v594
    %v662 = vpop.f32.mrb[0].mxu0
    %v663 = vadd.f32 0.0, %v662
    %v664 = vpop.f32.mrb[0].mxu0
    %665 = vmatprep.mubr.f32.mxu0 0.0
    %666 = vmatmul.mubr.f32.gmra.mrb[0].mxu0 %v595
    %v667 = vpop.f32.mrb[0].mxu0
    %v668 = vadd.f32 0.0, %v667
    %v669 = vpop.f32.mrb[0].mxu0
    %670 = vdwg.mxu0
    %v671 = vmul.f32 %v663, 0.17677669
    %v672 = vmul.f32 %v668, 0.17677669
    %v673 = vmax.f32 %v592, %v671
    %v674 = vmax.f32 %v593, %v672
    %v675 = vsub.f32 %v592, %v673
    %v676 = vsub.f32 %v593, %v674
    %v677 = vmul.f32 %v675, 1.442695
    %v678 = vpow.pop %v677
    %v679 = vmul.f32 %v676, 1.442695
    %v680 = vpow.pop %v679
    %v681 = vsub.f32 %v671, %v673
    %v682 = vsub.f32 %v672, %v674
    %v683 = vmul.f32 %v681, 1.442695
    %v684 = vpow.pop %v683
    %v685 = vmul.f32 %v682, 1.442695
    %v686 = vpow.pop %v685
    %v687 = vadd.f32 %v678, %v684
    %v688 = vadd.f32 %v680, %v686
    %v689 = vrcp.pop %v687
    %v690 = vmul.f32 1.0, %v689
    %v691 = vrcp.pop %v688
    %v692 = vmul.f32 1.0, %v691
    %v693 = vmul.f32 %v678, %v690
    %v694 = vmul.f32 %v680, %v692
    %vm695 = vcmask 64512
    %v697 = vsel %vm695, %v693, 0
    %v700 = vsel %vm695, %v694, 0
    %702 = vmatprep.subr.mxu0 0.0
    %703 = vmatpush1.msra.mxu0 %v107
    %704 = vmatprep.subr.mxu0 0.0
    %705 = vmatpush1.msra.mxu0 0.0
    %706 = vmatprep.subr.mxu0 0.0
    %707 = vmatpush1.msra.mxu0 0.0
    %708 = vmatprep.subr.mxu0 0.0
    %709 = vmatpush1.msra.mxu0 0.0
    %710 = vmatprep.subr.mxu0 0.0
    %711 = vmatpush1.msra.mxu0 0.0
    %712 = vmatprep.subr.mxu0 0.0
    %713 = vmatpush1.msra.mxu0 0.0
    %714 = vmatprep.subr.mxu0 0.0
    %715 = vmatpush1.msra.mxu0 0.0
    %716 = vmatprep.subr.mxu0 0.0
    %717 = vmatpush1.msra.mxu0 0.0
    %718 = vmatprep.subr.mxu0 0.0
    %719 = vmatpush1.msra.mxu0 0.0
    %720 = vmatprep.subr.mxu0 0.0
    %721 = vmatpush1.msra.mxu0 0.0
    %722 = vmatprep.subr.mxu0 0.0
    %723 = vmatpush1.msra.mxu0 0.0
    %724 = vmatprep.subr.mxu0 0.0
    %725 = vmatpush1.msra.mxu0 0.0
    %726 = vmatprep.subr.mxu0 0.0
    %727 = vmatpush1.msra.mxu0 0.0
    %728 = vmatprep.subr.mxu0 0.0
    %729 = vmatpush1.msra.mxu0 0.0
    %730 = vmatprep.subr.mxu0 0.0
    %731 = vmatpush1.msra.mxu0 0.0
    %732 = vmatprep.subr.mxu0 0.0
    %733 = vmatpush1.msra.mxu0 0.0
    %734 = vmatprep.subr.mxu0 0.0
    %735 = vmatpush1.msra.mxu0 0.0
    %736 = vmatprep.subr.mxu0 0.0
    %737 = vmatpush1.msra.mxu0 0.0
    %738 = vmatprep.subr.mxu0 0.0
    %739 = vmatpush1.msra.mxu0 0.0
    %740 = vmatprep.subr.mxu0 0.0
    %741 = vmatpush1.msra.mxu0 0.0
    %742 = vmatprep.subr.mxu0 0.0
    %743 = vmatpush1.msra.mxu0 0.0
    %744 = vmatprep.subr.mxu0 0.0
    %745 = vmatpush1.msra.mxu0 0.0
    %746 = vmatprep.subr.mxu0 0.0
    %747 = vmatpush1.msra.mxu0 0.0
    %748 = vmatprep.subr.mxu0 0.0
    %749 = vmatpush1.msra.mxu0 0.0
    %750 = vmatprep.subr.mxu0 0.0
    %751 = vmatpush1.msra.mxu0 0.0
    %752 = vmatprep.subr.mxu0 0.0
    %753 = vmatpush1.msra.mxu0 0.0
    %754 = vmatprep.subr.mxu0 0.0
    %755 = vmatpush1.msra.mxu0 0.0
    %756 = vmatprep.subr.mxu0 0.0
    %757 = vmatpush1.msra.mxu0 0.0
    %758 = vmatprep.subr.mxu0 0.0
    %759 = vmatpush1.msra.mxu0 0.0
    %760 = vmatprep.subr.mxu0 0.0
    %761 = vmatpush1.msra.mxu0 0.0
    %762 = vmatprep.subr.mxu0 0.0
    %763 = vmatpush1.msra.mxu0 0.0
    %764 = vmatprep.subr.mxu0 0.0
    %765 = vmatpush1.msra.mxu0 0.0
    %766 = vmatprep.mubr.f32.mxu0 0.0
    %767 = vmatmul.mubr.f32.gmra.mrb[0].mxu0 %v697
    %v768 = vpop.f32.mrb[0].mxu0
    %v769 = vadd.f32 0.0, %v768
    %v770 = vpop.f32.mrb[0].mxu0
    %771 = vmatprep.mubr.f32.mxu0 0.0
    %772 = vmatmul.mubr.f32.gmra.mrb[0].mxu0 %v700
    %v773 = vpop.f32.mrb[0].mxu0
    %v774 = vadd.f32 0.0, %v773
    %v775 = vpop.f32.mrb[0].mxu0
    %776 = vdwg.mxu0
    %v777 = vmul.f32 %v769, %v421
    %v778 = vmul.f32 %v774, %v424
    %v779 = vmul.f32 %v684, %v690
    %v780 = vmul.f32 %v686, %v692
    %v782 = vsel %vm695, %v779, 0
    %v785 = vsel %vm695, %v780, 0
    %787 = vmatprep.subr.mxu0 0.0
    %788 = vmatpush1.msra.mxu0 %v107
    %789 = vmatprep.subr.mxu0 0.0
    %790 = vmatpush1.msra.mxu0 0.0
    %791 = vmatprep.subr.mxu0 0.0
    %792 = vmatpush1.msra.mxu0 0.0
    %793 = vmatprep.subr.mxu0 0.0
    %794 = vmatpush1.msra.mxu0 0.0
    %795 = vmatprep.subr.mxu0 0.0
    %796 = vmatpush1.msra.mxu0 0.0
    %797 = vmatprep.subr.mxu0 0.0
    %798 = vmatpush1.msra.mxu0 0.0
    %799 = vmatprep.subr.mxu0 0.0
    %800 = vmatpush1.msra.mxu0 0.0
    %801 = vmatprep.subr.mxu0 0.0
    %802 = vmatpush1.msra.mxu0 0.0
    %803 = vmatprep.subr.mxu0 0.0
    %804 = vmatpush1.msra.mxu0 0.0
    %805 = vmatprep.subr.mxu0 0.0
    %806 = vmatpush1.msra.mxu0 0.0
    %807 = vmatprep.subr.mxu0 0.0
    %808 = vmatpush1.msra.mxu0 0.0
    %809 = vmatprep.subr.mxu0 0.0
    %810 = vmatpush1.msra.mxu0 0.0
    %811 = vmatprep.subr.mxu0 0.0
    %812 = vmatpush1.msra.mxu0 0.0
    %813 = vmatprep.subr.mxu0 0.0
    %814 = vmatpush1.msra.mxu0 0.0
    %815 = vmatprep.subr.mxu0 0.0
    %816 = vmatpush1.msra.mxu0 0.0
    %817 = vmatprep.subr.mxu0 0.0
    %818 = vmatpush1.msra.mxu0 0.0
    %819 = vmatprep.subr.mxu0 0.0
    %820 = vmatpush1.msra.mxu0 0.0
    %821 = vmatprep.subr.mxu0 0.0
    %822 = vmatpush1.msra.mxu0 0.0
    %823 = vmatprep.subr.mxu0 0.0
    %824 = vmatpush1.msra.mxu0 0.0
    %825 = vmatprep.subr.mxu0 0.0
    %826 = vmatpush1.msra.mxu0 0.0
    %827 = vmatprep.subr.mxu0 0.0
    %828 = vmatpush1.msra.mxu0 0.0
    %829 = vmatprep.subr.mxu0 0.0
    %830 = vmatpush1.msra.mxu0 0.0
    %831 = vmatprep.subr.mxu0 0.0
    %832 = vmatpush1.msra.mxu0 0.0
    %833 = vmatprep.subr.mxu0 0.0
    %834 = vmatpush1.msra.mxu0 0.0
    %835 = vmatprep.subr.mxu0 0.0
    %836 = vmatpush1.msra.mxu0 0.0
    %837 = vmatprep.subr.mxu0 0.0
    %838 = vmatpush1.msra.mxu0 0.0
    %839 = vmatprep.subr.mxu0 0.0
    %840 = vmatpush1.msra.mxu0 0.0
    %841 = vmatprep.subr.mxu0 0.0
    %842 = vmatpush1.msra.mxu0 0.0
    %843 = vmatprep.subr.mxu0 0.0
    %844 = vmatpush1.msra.mxu0 0.0
    %845 = vmatprep.subr.mxu0 0.0
    %846 = vmatpush1.msra.mxu0 0.0
    %847 = vmatprep.subr.mxu0 0.0
    %848 = vmatpush1.msra.mxu0 0.0
    %849 = vmatprep.subr.mxu0 0.0
    %850 = vmatpush1.msra.mxu0 0.0
    %851 = vmatprep.mubr.f32.mxu0 0.0
    %852 = vmatmul.mubr.f32.gmra.mrb[0].mxu0 %v782
    %v853 = vpop.f32.mrb[0].mxu0
    %v854 = vadd.f32 0.0, %v853
    %v855 = vpop.f32.mrb[0].mxu0
    %856 = vmatprep.mubr.f32.mxu0 0.0
    %857 = vmatmul.mubr.f32.gmra.mrb[0].mxu0 %v785
    %v858 = vpop.f32.mrb[0].mxu0
    %v859 = vadd.f32 0.0, %v858
    %v860 = vpop.f32.mrb[0].mxu0
    %861 = vdwg.mxu0
    %v862 = vmul.f32 %v854, %v509
    %v863 = vmul.f32 %v859, %v512
    %v864 = vadd.f32 %v777, %v862
    %v865 = vadd.f32 %v778, %v863
    %v866 = vpack.c.bf16 %v865, %v864
    %v868 = vlaneseq
    %v869 = vshrl.u32 %v868, 7
    %v870 = vsub.s32 0, %v869
    %v871 = vrot.slane %v124, %v870
    %v889 = vunpack.c.l.b16 %v108
    %v890 = vunpack.c.l.b16 %v109
    %v891 = vunpack.c.l.b16 %v110
    %v892 = vunpack.c.l.b16 %v111
    %v893 = vunpack.c.l.b16 %v112
    %v894 = vunpack.c.l.b16 %v113
    %v895 = vunpack.c.l.b16 %v114
    %v896 = vunpack.c.l.b16 %v115
    %v897 = vunpack.c.l.b16 %v116
    %v898 = vunpack.c.l.b16 %v117
    %v899 = vunpack.c.l.b16 %v118
    %v900 = vunpack.c.l.b16 %v119
    %v901 = vunpack.c.l.b16 %v120
    %v902 = vunpack.c.l.b16 %v121
    %v903 = vunpack.c.l.b16 %v122
    %v904 = vunpack.c.l.b16 %v123
    %v905 = vpack.c.b16 %v890, %v889
    %v906 = vpack.c.b16 %v892, %v891
    %v907 = vpack.c.b16 %v894, %v893
    %v908 = vpack.c.b16 %v896, %v895
    %v909 = vpack.c.b16 %v898, %v897
    %v910 = vpack.c.b16 %v900, %v899
    %v911 = vpack.c.b16 %v902, %v901
    %v912 = vpack.c.b16 %v904, %v903
    %921 = vmatprep.subr.bf16.mxu0 0
    %922 = vmatpush1.bf16.msra.mxu0 %v905
    %923 = vmatprep.subr.bf16.mxu0 0
    %924 = vmatpush1.bf16.msra.mxu0 %v906
    %925 = vmatprep.subr.bf16.mxu0 0
    %926 = vmatpush1.bf16.msra.mxu0 %v907
    %927 = vmatprep.subr.bf16.mxu0 0
    %928 = vmatpush1.bf16.msra.mxu0 %v908
    %929 = vmatprep.subr.bf16.mxu0 0
    %930 = vmatpush1.bf16.msra.mxu0 %v909
    %931 = vmatprep.subr.bf16.mxu0 0
    %932 = vmatpush1.bf16.msra.mxu0 %v910
    %933 = vmatprep.subr.bf16.mxu0 0
    %934 = vmatpush1.bf16.msra.mxu0 %v911
    %935 = vmatprep.subr.bf16.mxu0 0
    %936 = vmatpush1.bf16.msra.mxu0 %v912
    %937 = vmatprep.subr.bf16.mxu0 0
    %938 = vmatpush1.bf16.msra.mxu0 0
    %939 = vmatprep.subr.bf16.mxu0 0
    %940 = vmatpush1.bf16.msra.mxu0 0
    %941 = vmatprep.subr.bf16.mxu0 0
    %942 = vmatpush1.bf16.msra.mxu0 0
    %943 = vmatprep.subr.bf16.mxu0 0
    %944 = vmatpush1.bf16.msra.mxu0 0
    %945 = vmatprep.subr.bf16.mxu0 0
    %946 = vmatpush1.bf16.msra.mxu0 0
    %947 = vmatprep.subr.bf16.mxu0 0
    %948 = vmatpush1.bf16.msra.mxu0 0
    %949 = vmatprep.subr.bf16.mxu0 0
    %950 = vmatpush1.bf16.msra.mxu0 0
    %951 = vmatprep.subr.bf16.mxu0 0
    %952 = vmatpush1.bf16.msra.mxu0 0
    %953 = vmatprep.mubr.bf16.mxu0 0
    %954 = vmatmul.mubr.bf16.gmra.mrb[0].mxu0 %v866
    %v955 = vpop.f32.mrb[0].mxu0
    %v956 = vadd.f32 %v871, %v955
    %v957 = vpop.f32.mrb[0].mxu0
    %v958 = vpop.f32.mrb[0].mxu0
    %v959 = vadd.f32 %v871, %v958
    %v960 = vpop.f32.mrb[0].mxu0
    %961 = vdwg.mxu0
    %v962 = vadd.f32 %v196, %v956
    %v963 = vadd.f32 %v197, %v959
    %964 = vadd.xlane.f32.xlu0 %v962
    %v965 = vpop.xlane.xlu0 %964
    %vm966 = vcmask 1040384
    %v967 = vsel %vm966, %v963, 0.0
    %968 = vadd.xlane.f32.xlu0 %v967
    %v969 = vpop.xlane.xlu0 %968
    %v970 = vrcp.pop 128.0
    %v971 = vmul.f32 %v965, %v970
    %v972 = vmul.f32 %v969, %v970
    %v973 = vsub.f32 %v962, %v971
    %v974 = vsub.f32 %v963, %v972
    %v975 = vmul.f32 %v973, %v973
    %v976 = vmul.f32 %v974, %v974
    %977 = vadd.xlane.f32.xlu0 %v975
    %v978 = vpop.xlane.xlu0 %977
    %v979 = vsel %vm966, %v976, 0.0
    %980 = vadd.xlane.f32.xlu0 %v979
    %v981 = vpop.xlane.xlu0 %980
    %v982 = vmul.f32 %v978, %v970
    %v983 = vmul.f32 %v981, %v970
    %v984 = vadd.f32 %v982, 1e-05
    %v985 = vadd.f32 %v983, 1e-05
    %v986 = vrsqrt.pop %v984
    %v987 = vrsqrt.pop %v985
    %v988 = vmul.f32 %v973, %v986
    %v989 = vmul.f32 %v974, %v987
    %v991 = vlaneseq
    %v992 = vshrl.u32 %v991, 7
    %v993 = vsub.s32 0, %v992
    %v994 = vrot.slane %v125, %v993
    %v996 = vmul.f32 %v988, %v994
    %v997 = vmul.f32 %v989, %v994
    %v999 = vlaneseq
    %v1000 = vshrl.u32 %v999, 7
    %v1001 = vsub.s32 0, %v1000
    %v1002 = vrot.slane %v126, %v1001
    %v1004 = vadd.f32 %v996, %v1002
    %v1005 = vadd.f32 %v997, %v1002
    %v1006 = vpack.c.bf16 %v1005, %v1004
    %v1008 = vlaneseq
    %v1009 = vshrl.u32 %v1008, 7
    %v1010 = vsub.s32 0, %v1009
    %v1011 = vrot.slane %v143, %v1010
    %v1012 = vlaneseq
    %v1013 = vshrl.u32 %v1012, 7
    %v1014 = vsub.s32 1, %v1013
    %v1015 = vrot.slane %v143, %v1014
    %v1034 = vunpack.c.l.b16 %v127
    %v1035 = vunpack.c.h.b16 %v127
    %v1036 = vunpack.c.l.b16 %v128
    %v1037 = vunpack.c.h.b16 %v128
    %v1038 = vunpack.c.l.b16 %v129
    %v1039 = vunpack.c.h.b16 %v129
    %v1040 = vunpack.c.l.b16 %v130
    %v1041 = vunpack.c.h.b16 %v130
    %v1042 = vunpack.c.l.b16 %v131
    %v1043 = vunpack.c.h.b16 %v131
    %v1044 = vunpack.c.l.b16 %v132
    %v1045 = vunpack.c.h.b16 %v132
    %v1046 = vunpack.c.l.b16 %v133
    %v1047 = vunpack.c.h.b16 %v133
    %v1048 = vunpack.c.l.b16 %v134
    %v1049 = vunpack.c.h.b16 %v134
    %v1050 = vunpack.c.l.b16 %v135
    %v1051 = vunpack.c.h.b16 %v135
    %v1052 = vunpack.c.l.b16 %v136
    %v1053 = vunpack.c.h.b16 %v136
    %v1054 = vunpack.c.l.b16 %v137
    %v1055 = vunpack.c.h.b16 %v137
    %v1056 = vunpack.c.l.b16 %v138
    %v1057 = vunpack.c.h.b16 %v138
    %v1058 = vunpack.c.l.b16 %v139
    %v1059 = vunpack.c.h.b16 %v139
    %v1060 = vunpack.c.l.b16 %v140
    %v1061 = vunpack.c.h.b16 %v140
    %v1062 = vunpack.c.l.b16 %v141
    %v1063 = vunpack.c.h.b16 %v141
    %v1064 = vunpack.c.l.b16 %v142
    %v1065 = vunpack.c.h.b16 %v142
    %v1066 = vpack.c.b16 %v1036, %v1034
    %v1067 = vpack.c.b16 %v1037, %v1035
    %v1068 = vpack.c.b16 %v1040, %v1038
    %v1069 = vpack.c.b16 %v1041, %v1039
    %v1070 = vpack.c.b16 %v1044, %v1042
    %v1071 = vpack.c.b16 %v1045, %v1043
    %v1072 = vpack.c.b16 %v1048, %v1046
    %v1073 = vpack.c.b16 %v1049, %v1047
    %v1074 = vpack.c.b16 %v1052, %v1050
    %v1075 = vpack.c.b16 %v1053, %v1051
    %v1076 = vpack.c.b16 %v1056, %v1054
    %v1077 = vpack.c.b16 %v1057, %v1055
    %v1078 = vpack.c.b16 %v1060, %v1058
    %v1079 = vpack.c.b16 %v1061, %v1059
    %v1080 = vpack.c.b16 %v1064, %v1062
    %v1081 = vpack.c.b16 %v1065, %v1063
    %1098 = vmatprep.subr.bf16.mxu0 %v1067
    %1099 = vmatpush1.bf16.msra.mxu0 %v1066
    %1100 = vmatprep.subr.bf16.mxu0 %v1069
    %1101 = vmatpush1.bf16.msra.mxu0 %v1068
    %1102 = vmatprep.subr.bf16.mxu0 %v1071
    %1103 = vmatpush1.bf16.msra.mxu0 %v1070
    %1104 = vmatprep.subr.bf16.mxu0 %v1073
    %1105 = vmatpush1.bf16.msra.mxu0 %v1072
    %1106 = vmatprep.subr.bf16.mxu0 %v1075
    %1107 = vmatpush1.bf16.msra.mxu0 %v1074
    %1108 = vmatprep.subr.bf16.mxu0 %v1077
    %1109 = vmatpush1.bf16.msra.mxu0 %v1076
    %1110 = vmatprep.subr.bf16.mxu0 %v1079
    %1111 = vmatpush1.bf16.msra.mxu0 %v1078
    %1112 = vmatprep.subr.bf16.mxu0 %v1081
    %1113 = vmatpush1.bf16.msra.mxu0 %v1080
    %1114 = vmatprep.subr.bf16.mxu0 0
    %1115 = vmatpush1.bf16.msra.mxu0 0
    %1116 = vmatprep.subr.bf16.mxu0 0
    %1117 = vmatpush1.bf16.msra.mxu0 0
    %1118 = vmatprep.subr.bf16.mxu0 0
    %1119 = vmatpush1.bf16.msra.mxu0 0
    %1120 = vmatprep.subr.bf16.mxu0 0
    %1121 = vmatpush1.bf16.msra.mxu0 0
    %1122 = vmatprep.subr.bf16.mxu0 0
    %1123 = vmatpush1.bf16.msra.mxu0 0
    %1124 = vmatprep.subr.bf16.mxu0 0
    %1125 = vmatpush1.bf16.msra.mxu0 0
    %1126 = vmatprep.subr.bf16.mxu0 0
    %1127 = vmatpush1.bf16.msra.mxu0 0
    %1128 = vmatprep.subr.bf16.mxu0 0
    %1129 = vmatpush1.bf16.msra.mxu0 0
    %1130 = vmatprep.mubr.bf16.mxu0 0
    %1131 = vmatmul.mubr.bf16.gmra.mrb[0].mxu0 %v1006
    %v1132 = vpop.f32.mrb[0].mxu0
    %v1133 = vadd.f32 %v1011, %v1132
    %v1134 = vpop.f32.mrb[0].mxu0
    %v1135 = vadd.f32 %v1015, %v1134
    %v1136 = vpop.f32.mrb[0].mxu0
    %v1137 = vadd.f32 %v1011, %v1136
    %v1138 = vpop.f32.mrb[0].mxu0
    %v1139 = vadd.f32 %v1015, %v1138
    %1140 = vdwg.mxu0
    %v1141 = vmul.f32 %v1133, 0.5
    %v1142 = vmul.f32 %v1135, 0.5
    %v1143 = vmul.f32 %v1137, 0.5
    %v1144 = vmul.f32 %v1139, 0.5
    %v1145 = vmul.f32 %v1133, 0.70710677
    %v1146 = vmul.f32 %v1135, 0.70710677
    %v1147 = vmul.f32 %v1137, 0.70710677
    %v1148 = vmul.f32 %v1139, 0.70710677
    %v1149 = verf.f32.pop %v1145
    %v1150 = verf.f32.pop %v1146
    %v1151 = verf.f32.pop %v1147
    %v1152 = verf.f32.pop %v1148
    %v1153 = vadd.f32 %v1149, 1.0
    %v1154 = vadd.f32 %v1150, 1.0
    %v1155 = vadd.f32 %v1151, 1.0
    %v1156 = vadd.f32 %v1152, 1.0
    %v1157 = vmul.f32 %v1141, %v1153
    %v1158 = vmul.f32 %v1142, %v1154
    %v1159 = vmul.f32 %v1143, %v1155
    %v1160 = vmul.f32 %v1144, %v1156
    %v1161 = vpack.c.bf16 %v1159, %v1157
    %v1162 = vpack.c.bf16 %v1160, %v1158
    %v1164 = vlaneseq
    %v1165 = vshrl.u32 %v1164, 7
    %v1166 = vsub.s32 0, %v1165
    %v1167 = vrot.slane %v176, %v1166
    %v1201 = vunpack.c.l.b16 %v144
    %v1202 = vunpack.c.l.b16 %v145
    %v1203 = vunpack.c.l.b16 %v146
    %v1204 = vunpack.c.l.b16 %v147
    %v1205 = vunpack.c.l.b16 %v148
    %v1206 = vunpack.c.l.b16 %v149
    %v1207 = vunpack.c.l.b16 %v150
    %v1208 = vunpack.c.l.b16 %v151
    %v1209 = vunpack.c.l.b16 %v152
    %v1210 = vunpack.c.l.b16 %v153
    %v1211 = vunpack.c.l.b16 %v154
    %v1212 = vunpack.c.l.b16 %v155
    %v1213 = vunpack.c.l.b16 %v156
    %v1214 = vunpack.c.l.b16 %v157
    %v1215 = vunpack.c.l.b16 %v158
    %v1216 = vunpack.c.l.b16 %v159
    %v1217 = vunpack.c.l.b16 %v160
    %v1218 = vunpack.c.l.b16 %v161
    %v1219 = vunpack.c.l.b16 %v162
    %v1220 = vunpack.c.l.b16 %v163
    %v1221 = vunpack.c.l.b16 %v164
    %v1222 = vunpack.c.l.b16 %v165
    %v1223 = vunpack.c.l.b16 %v166
    %v1224 = vunpack.c.l.b16 %v167
    %v1225 = vunpack.c.l.b16 %v168
    %v1226 = vunpack.c.l.b16 %v169
    %v1227 = vunpack.c.l.b16 %v170
    %v1228 = vunpack.c.l.b16 %v171
    %v1229 = vunpack.c.l.b16 %v172
    %v1230 = vunpack.c.l.b16 %v173
    %v1231 = vunpack.c.l.b16 %v174
    %v1232 = vunpack.c.l.b16 %v175
    %v1233 = vpack.c.b16 %v1202, %v1201
    %v1234 = vpack.c.b16 %v1204, %v1203
    %v1235 = vpack.c.b16 %v1206, %v1205
    %v1236 = vpack.c.b16 %v1208, %v1207
    %v1237 = vpack.c.b16 %v1210, %v1209
    %v1238 = vpack.c.b16 %v1212, %v1211
    %v1239 = vpack.c.b16 %v1214, %v1213
    %v1240 = vpack.c.b16 %v1216, %v1215
    %v1241 = vpack.c.b16 %v1218, %v1217
    %v1242 = vpack.c.b16 %v1220, %v1219
    %v1243 = vpack.c.b16 %v1222, %v1221
    %v1244 = vpack.c.b16 %v1224, %v1223
    %v1245 = vpack.c.b16 %v1226, %v1225
    %v1246 = vpack.c.b16 %v1228, %v1227
    %v1247 = vpack.c.b16 %v1230, %v1229
    %v1248 = vpack.c.b16 %v1232, %v1231
    %1265 = vmatprep.subr.bf16.mxu0 0
    %1266 = vmatpush1.bf16.msra.mxu0 %v1233
    %1267 = vmatprep.subr.bf16.mxu0 0
    %1268 = vmatpush1.bf16.msra.mxu0 %v1234
    %1269 = vmatprep.subr.bf16.mxu0 0
    %1270 = vmatpush1.bf16.msra.mxu0 %v1235
    %1271 = vmatprep.subr.bf16.mxu0 0
    %1272 = vmatpush1.bf16.msra.mxu0 %v1236
    %1273 = vmatprep.subr.bf16.mxu0 0
    %1274 = vmatpush1.bf16.msra.mxu0 %v1237
    %1275 = vmatprep.subr.bf16.mxu0 0
    %1276 = vmatpush1.bf16.msra.mxu0 %v1238
    %1277 = vmatprep.subr.bf16.mxu0 0
    %1278 = vmatpush1.bf16.msra.mxu0 %v1239
    %1279 = vmatprep.subr.bf16.mxu0 0
    %1280 = vmatpush1.bf16.msra.mxu0 %v1240
    %1281 = vmatprep.subr.bf16.mxu0 0
    %1282 = vmatpush1.bf16.msra.mxu0 %v1241
    %1283 = vmatprep.subr.bf16.mxu0 0
    %1284 = vmatpush1.bf16.msra.mxu0 %v1242
    %1285 = vmatprep.subr.bf16.mxu0 0
    %1286 = vmatpush1.bf16.msra.mxu0 %v1243
    %1287 = vmatprep.subr.bf16.mxu0 0
    %1288 = vmatpush1.bf16.msra.mxu0 %v1244
    %1289 = vmatprep.subr.bf16.mxu0 0
    %1290 = vmatpush1.bf16.msra.mxu0 %v1245
    %1291 = vmatprep.subr.bf16.mxu0 0
    %1292 = vmatpush1.bf16.msra.mxu0 %v1246
    %1293 = vmatprep.subr.bf16.mxu0 0
    %1294 = vmatpush1.bf16.msra.mxu0 %v1247
    %1295 = vmatprep.subr.bf16.mxu0 0
    %1296 = vmatpush1.bf16.msra.mxu0 %v1248
    %1297 = vmatprep.mubr.bf16.mxu0 %v1162
    %1298 = vmatmul.mubr.bf16.gmra.mrb[0].mxu0 %v1161
    %v1299 = vpop.f32.mrb[0].mxu0
    %v1300 = vadd.f32 %v1167, %v1299
    %v1301 = vpop.f32.mrb[0].mxu0
    %v1302 = vpop.f32.mrb[0].mxu0
    %v1303 = vadd.f32 %v1167, %v1302
    %v1304 = vpop.f32.mrb[0].mxu0
    %1305 = vdwg.mxu0
    %v1306 = vadd.f32 %v1004, %v1300
    %v1307 = vadd.f32 %v1005, %v1303
    %1308 = vadd.xlane.f32.xlu0 %v1306
    %v1309 = vpop.xlane.xlu0 %1308
    %v1310 = vsel %vm966, %v1307, 0.0
    %1311 = vadd.xlane.f32.xlu0 %v1310
    %v1312 = vpop.xlane.xlu0 %1311
    %v1313 = vmul.f32 %v1309, %v970
    %v1314 = vmul.f32 %v1312, %v970
    %v1315 = vsub.f32 %v1306, %v1313
    %v1316 = vsub.f32 %v1307, %v1314
    %v1317 = vmul.f32 %v1315, %v1315
    %v1318 = vmul.f32 %v1316, %v1316
    %1319 = vadd.xlane.f32.xlu0 %v1317
    %v1320 = vpop.xlane.xlu0 %1319
    %v1321 = vsel %vm966, %v1318, 0.0
    %1322 = vadd.xlane.f32.xlu0 %v1321
    %v1323 = vpop.xlane.xlu0 %1322
    %v1324 = vmul.f32 %v1320, %v970
    %v1325 = vmul.f32 %v1323, %v970
    %v1326 = vadd.f32 %v1324, 1e-05
    %v1327 = vadd.f32 %v1325, 1e-05
    %v1328 = vrsqrt.pop %v1326
    %v1329 = vrsqrt.pop %v1327
    %v1330 = vmul.f32 %v1315, %v1328
    %v1331 = vmul.f32 %v1316, %v1329
    %v1333 = vlaneseq
    %v1334 = vshrl.u32 %v1333, 7
    %v1335 = vsub.s32 0, %v1334
    %v1336 = vrot.slane %v177, %v1335
    %v1338 = vmul.f32 %v1330, %v1336
    %v1339 = vmul.f32 %v1331, %v1336
    %v1341 = vlaneseq
    %v1342 = vshrl.u32 %v1341, 7
    %v1343 = vsub.s32 0, %v1342
    %v1344 = vrot.slane %v178, %v1343
    %v1346 = vadd.f32 %v1338, %v1344
    %v1347 = vadd.f32 %v1339, %v1344
    %v1348 = vpack.c.bf16 %v1347, %v1346
    %v1350 = vlaneseq
    %v1351 = vshrl.u32 %v1350, 7
    %v1352 = vsub.s32 0, %v1351
    %v1353 = vrot.slane %v195, %v1352
    %v1371 = vunpack.c.l.b16 %v179
    %v1372 = vunpack.c.l.b16 %v180
    %v1373 = vunpack.c.l.b16 %v181
    %v1374 = vunpack.c.l.b16 %v182
    %v1375 = vunpack.c.l.b16 %v183
    %v1376 = vunpack.c.l.b16 %v184
    %v1377 = vunpack.c.l.b16 %v185
    %v1378 = vunpack.c.l.b16 %v186
    %v1379 = vunpack.c.l.b16 %v187
    %v1380 = vunpack.c.l.b16 %v188
    %v1381 = vunpack.c.l.b16 %v189
    %v1382 = vunpack.c.l.b16 %v190
    %v1383 = vunpack.c.l.b16 %v191
    %v1384 = vunpack.c.l.b16 %v192
    %v1385 = vunpack.c.l.b16 %v193
    %v1386 = vunpack.c.l.b16 %v194
    %v1387 = vpack.c.b16 %v1372, %v1371
    %v1388 = vpack.c.b16 %v1374, %v1373
    %v1389 = vpack.c.b16 %v1376, %v1375
    %v1390 = vpack.c.b16 %v1378, %v1377
    %v1391 = vpack.c.b16 %v1380, %v1379
    %v1392 = vpack.c.b16 %v1382, %v1381
    %v1393 = vpack.c.b16 %v1384, %v1383
    %v1394 = vpack.c.b16 %v1386, %v1385
    %1403 = vmatprep.subr.bf16.mxu0 0
    %1404 = vmatpush1.bf16.msra.mxu0 %v1387
    %1405 = vmatprep.subr.bf16.mxu0 0
    %1406 = vmatpush1.bf16.msra.mxu0 %v1388
    %1407 = vmatprep.subr.bf16.mxu0 0
    %1408 = vmatpush1.bf16.msra.mxu0 %v1389
    %1409 = vmatprep.subr.bf16.mxu0 0
    %1410 = vmatpush1.bf16.msra.mxu0 %v1390
    %1411 = vmatprep.subr.bf16.mxu0 0
    %1412 = vmatpush1.bf16.msra.mxu0 %v1391
    %1413 = vmatprep.subr.bf16.mxu0 0
    %1414 = vmatpush1.bf16.msra.mxu0 %v1392
    %1415 = vmatprep.subr.bf16.mxu0 0
    %1416 = vmatpush1.bf16.msra.mxu0 %v1393
    %1417 = vmatprep.subr.bf16.mxu0 0
    %1418 = vmatpush1.bf16.msra.mxu0 %v1394
    %1419 = vmatprep.subr.bf16.mxu0 0
    %1420 = vmatpush1.bf16.msra.mxu0 0
    %1421 = vmatprep.subr.bf16.mxu0 0
    %1422 = vmatpush1.bf16.msra.mxu0 0
    %1423 = vmatprep.subr.bf16.mxu0 0
    %1424 = vmatpush1.bf16.msra.mxu0 0
    %1425 = vmatprep.subr.bf16.mxu0 0
    %1426 = vmatpush1.bf16.msra.mxu0 0
    %1427 = vmatprep.subr.bf16.mxu0 0
    %1428 = vmatpush1.bf16.msra.mxu0 0
    %1429 = vmatprep.subr.bf16.mxu0 0
    %1430 = vmatpush1.bf16.msra.mxu0 0
    %1431 = vmatprep.subr.bf16.mxu0 0
    %1432 = vmatpush1.bf16.msra.mxu0 0
    %1433 = vmatprep.subr.bf16.mxu0 0
    %1434 = vmatpush1.bf16.msra.mxu0 0
    %1435 = vmatprep.mubr.bf16.mxu0 0
    %1436 = vmatmul.mubr.bf16.gmra.mrb[0].mxu0 %v1348
    %v1437 = vpop.f32.mrb[0].mxu0
    %v1438 = vadd.f32 %v1353, %v1437
    %v1439 = vpop.f32.mrb[0].mxu0
    %v1440 = vpop.f32.mrb[0].mxu0
    %v1441 = vpop.f32.mrb[0].mxu0
    %1442 = vdwg.mxu0
    %vm1443 = vcmask 32768
    %1444 = vst.msk [vmem:[#allocation2] sm:$0x1] %vm1443, %v1438
    %v1445 = vmul.f32 %v466, %v380
    %v1446 = vmul.f32 %v470, %v384
    %1447 = vmatprep.subr.mxu0 0.0
    %1448 = vmatpush1.msra.mxu0 %v91
    %1449 = vmatprep.subr.mxu0 0.0
    %1450 = vmatpush1.msra.mxu0 %v92
    %1451 = vmatprep.subr.mxu0 0.0
    %1452 = vmatpush1.msra.mxu0 %v93
    %1453 = vmatprep.subr.mxu0 0.0
    %1454 = vmatpush1.msra.mxu0 %v94
    %1455 = vmatprep.subr.mxu0 0.0
    %1456 = vmatpush1.msra.mxu0 %v95
    %1457 = vmatprep.subr.mxu0 0.0
    %1458 = vmatpush1.msra.mxu0 %v96
    %1459 = vmatprep.subr.mxu0 0.0
    %1460 = vmatpush1.msra.mxu0 %v97
    %1461 = vmatprep.subr.mxu0 0.0
    %1462 = vmatpush1.msra.mxu0 %v98
    %1463 = vmatprep.subr.mxu0 0.0
    %1464 = vmatpush1.msra.mxu0 %v99
    %1465 = vmatprep.subr.mxu0 0.0
    %1466 = vmatpush1.msra.mxu0 %v100
    %1467 = vmatprep.subr.mxu0 0.0
    %1468 = vmatpush1.msra.mxu0 %v101
    %1469 = vmatprep.subr.mxu0 0.0
    %1470 = vmatpush1.msra.mxu0 %v102
    %1471 = vmatprep.subr.mxu0 0.0
    %1472 = vmatpush1.msra.mxu0 %v103
    %1473 = vmatprep.subr.mxu0 0.0
    %1474 = vmatpush1.msra.mxu0 %v104
    %1475 = vmatprep.subr.mxu0 0.0
    %1476 = vmatpush1.msra.mxu0 %v105
    %1477 = vmatprep.subr.mxu0 0.0
    %1478 = vmatpush1.msra.mxu0 %v106
    %1479 = vmatprep.subr.mxu0 0.0
    %1480 = vmatpush1.msra.mxu0 0.0
    %1481 = vmatprep.subr.mxu0 0.0
    %1482 = vmatpush1.msra.mxu0 0.0
    %1483 = vmatprep.subr.mxu0 0.0
    %1484 = vmatpush1.msra.mxu0 0.0
    %1485 = vmatprep.subr.mxu0 0.0
    %1486 = vmatpush1.msra.mxu0 0.0
    %1487 = vmatprep.subr.mxu0 0.0
    %1488 = vmatpush1.msra.mxu0 0.0
    %1489 = vmatprep.subr.mxu0 0.0
    %1490 = vmatpush1.msra.mxu0 0.0
    %1491 = vmatprep.subr.mxu0 0.0
    %1492 = vmatpush1.msra.mxu0 0.0
    %1493 = vmatprep.subr.mxu0 0.0
    %1494 = vmatpush1.msra.mxu0 0.0
    %1495 = vmatprep.subr.mxu0 0.0
    %1496 = vmatpush1.msra.mxu0 0.0
    %1497 = vmatprep.subr.mxu0 0.0
    %1498 = vmatpush1.msra.mxu0 0.0
    %1499 = vmatprep.subr.mxu0 0.0
    %1500 = vmatpush1.msra.mxu0 0.0
    %1501 = vmatprep.subr.mxu0 0.0
    %1502 = vmatpush1.msra.mxu0 0.0
    %1503 = vmatprep.subr.mxu0 0.0
    %1504 = vmatpush1.msra.mxu0 0.0
    %1505 = vmatprep.subr.mxu0 0.0
    %1506 = vmatpush1.msra.mxu0 0.0
    %1507 = vmatprep.subr.mxu0 0.0
    %1508 = vmatpush1.msra.mxu0 0.0
    %1509 = vmatprep.subr.mxu0 0.0
    %1510 = vmatpush1.msra.mxu0 0.0
    %1511 = vmatprep.mubr.f32.mxu0 0.0
    %1512 = vmatmul.mubr.f32.gmra.mrb[0].mxu0 %v1445
    %v1513 = vpop.f32.mrb[0].mxu0
    %v1514 = vadd.f32 0.0, %v1513
    %v1515 = vpop.f32.mrb[0].mxu0
    %1516 = vmatprep.mubr.f32.mxu0 0.0
    %1517 = vmatmul.mubr.f32.gmra.mrb[0].mxu0 %v1446
    %v1518 = vpop.f32.mrb[0].mxu0
    %v1519 = vadd.f32 0.0, %v1518
    %v1520 = vpop.f32.mrb[0].mxu0
    %1521 = vdwg.mxu0
    %v1522 = vmul.f32 %v1514, 0.17677669
    %v1523 = vmul.f32 %v1519, 0.17677669
    %v1524 = vmul.f32 %v466, %v468
    %v1525 = vmul.f32 %v470, %v472
    %1526 = vmatprep.subr.mxu0 0.0
    %1527 = vmatpush1.msra.mxu0 %v91
    %1528 = vmatprep.subr.mxu0 0.0
    %1529 = vmatpush1.msra.mxu0 %v92
    %1530 = vmatprep.subr.mxu0 0.0
    %1531 = vmatpush1.msra.mxu0 %v93
    %1532 = vmatprep.subr.mxu0 0.0
    %1533 = vmatpush1.msra.mxu0 %v94
    %1534 = vmatprep.subr.mxu0 0.0
    %1535 = vmatpush1.msra.mxu0 %v95
    %1536 = vmatprep.subr.mxu0 0.0
    %1537 = vmatpush1.msra.mxu0 %v96
    %1538 = vmatprep.subr.mxu0 0.0
    %1539 = vmatpush1.msra.mxu0 %v97
    %1540 = vmatprep.subr.mxu0 0.0
    %1541 = vmatpush1.msra.mxu0 %v98
    %1542 = vmatprep.subr.mxu0 0.0
    %1543 = vmatpush1.msra.mxu0 %v99
    %1544 = vmatprep.subr.mxu0 0.0
    %1545 = vmatpush1.msra.mxu0 %v100
    %1546 = vmatprep.subr.mxu0 0.0
    %1547 = vmatpush1.msra.mxu0 %v101
    %1548 = vmatprep.subr.mxu0 0.0
    %1549 = vmatpush1.msra.mxu0 %v102
    %1550 = vmatprep.subr.mxu0 0.0
    %1551 = vmatpush1.msra.mxu0 %v103
    %1552 = vmatprep.subr.mxu0 0.0
    %1553 = vmatpush1.msra.mxu0 %v104
    %1554 = vmatprep.subr.mxu0 0.0
    %1555 = vmatpush1.msra.mxu0 %v105
    %1556 = vmatprep.subr.mxu0 0.0
    %1557 = vmatpush1.msra.mxu0 %v106
    %1558 = vmatprep.subr.mxu0 0.0
    %1559 = vmatpush1.msra.mxu0 0.0
    %1560 = vmatprep.subr.mxu0 0.0
    %1561 = vmatpush1.msra.mxu0 0.0
    %1562 = vmatprep.subr.mxu0 0.0
    %1563 = vmatpush1.msra.mxu0 0.0
    %1564 = vmatprep.subr.mxu0 0.0
    %1565 = vmatpush1.msra.mxu0 0.0
    %1566 = vmatprep.subr.mxu0 0.0
    %1567 = vmatpush1.msra.mxu0 0.0
    %1568 = vmatprep.subr.mxu0 0.0
    %1569 = vmatpush1.msra.mxu0 0.0
    %1570 = vmatprep.subr.mxu0 0.0
    %1571 = vmatpush1.msra.mxu0 0.0
    %1572 = vmatprep.subr.mxu0 0.0
    %1573 = vmatpush1.msra.mxu0 0.0
    %1574 = vmatprep.subr.mxu0 0.0
    %1575 = vmatpush1.msra.mxu0 0.0
    %1576 = vmatprep.subr.mxu0 0.0
    %1577 = vmatpush1.msra.mxu0 0.0
    %1578 = vmatprep.subr.mxu0 0.0
    %1579 = vmatpush1.msra.mxu0 0.0
    %1580 = vmatprep.subr.mxu0 0.0
    %1581 = vmatpush1.msra.mxu0 0.0
    %1582 = vmatprep.subr.mxu0 0.0
    %1583 = vmatpush1.msra.mxu0 0.0
    %1584 = vmatprep.subr.mxu0 0.0
    %1585 = vmatpush1.msra.mxu0 0.0
    %1586 = vmatprep.subr.mxu0 0.0
    %1587 = vmatpush1.msra.mxu0 0.0
    %1588 = vmatprep.subr.mxu0 0.0
    %1589 = vmatpush1.msra.mxu0 0.0
    %1590 = vmatprep.mubr.f32.mxu0 0.0
    %1591 = vmatmul.mubr.f32.gmra.mrb[0].mxu0 %v1524
    %v1592 = vpop.f32.mrb[0].mxu0
    %v1593 = vadd.f32 0.0, %v1592
    %v1594 = vpop.f32.mrb[0].mxu0
    %1595 = vmatprep.mubr.f32.mxu0 0.0
    %1596 = vmatmul.mubr.f32.gmra.mrb[0].mxu0 %v1525
    %v1597 = vpop.f32.mrb[0].mxu0
    %v1598 = vadd.f32 0.0, %v1597
    %v1599 = vpop.f32.mrb[0].mxu0
    %1600 = vdwg.mxu0
    %v1601 = vmul.f32 %v1593, 0.17677669
    %v1602 = vmul.f32 %v1598, 0.17677669
    %v1603 = vmax.f32 %v1522, %v1601
    %v1604 = vmax.f32 %v1523, %v1602
    %v1605 = vsub.f32 %v1522, %v1603
    %v1606 = vsub.f32 %v1523, %v1604
    %v1607 = vmul.f32 %v1605, 1.442695
    %v1608 = vpow.pop %v1607
    %v1609 = vmul.f32 %v1606, 1.442695
    %v1610 = vpow.pop %v1609
    %v1611 = vsub.f32 %v1601, %v1603
    %v1612 = vsub.f32 %v1602, %v1604
    %v1613 = vmul.f32 %v1611, 1.442695
    %v1614 = vpow.pop %v1613
    %v1615 = vmul.f32 %v1612, 1.442695
    %v1616 = vpow.pop %v1615
    %v1617 = vadd.f32 %v1608, %v1614
    %v1618 = vadd.f32 %v1610, %v1616
    %v1619 = vrcp.pop %v1617
    %v1620 = vmul.f32 1.0, %v1619
    %v1621 = vrcp.pop %v1618
    %v1622 = vmul.f32 1.0, %v1621
    %v1623 = vmul.f32 %v1608, %v1620
    %v1624 = vmul.f32 %v1610, %v1622
    %v1626 = vsel %vm695, %v1623, 0
    %v1629 = vsel %vm695, %v1624, 0
    %1631 = vmatprep.subr.mxu0 0.0
    %1632 = vmatpush1.msra.mxu0 %v107
    %1633 = vmatprep.subr.mxu0 0.0
    %1634 = vmatpush1.msra.mxu0 0.0
    %1635 = vmatprep.subr.mxu0 0.0
    %1636 = vmatpush1.msra.mxu0 0.0
    %1637 = vmatprep.subr.mxu0 0.0
    %1638 = vmatpush1.msra.mxu0 0.0
    %1639 = vmatprep.subr.mxu0 0.0
    %1640 = vmatpush1.msra.mxu0 0.0
    %1641 = vmatprep.subr.mxu0 0.0
    %1642 = vmatpush1.msra.mxu0 0.0
    %1643 = vmatprep.subr.mxu0 0.0
    %1644 = vmatpush1.msra.mxu0 0.0
    %1645 = vmatprep.subr.mxu0 0.0
    %1646 = vmatpush1.msra.mxu0 0.0
    %1647 = vmatprep.subr.mxu0 0.0
    %1648 = vmatpush1.msra.mxu0 0.0
    %1649 = vmatprep.subr.mxu0 0.0
    %1650 = vmatpush1.msra.mxu0 0.0
    %1651 = vmatprep.subr.mxu0 0.0
    %1652 = vmatpush1.msra.mxu0 0.0
    %1653 = vmatprep.subr.mxu0 0.0
    %1654 = vmatpush1.msra.mxu0 0.0
    %1655 = vmatprep.subr.mxu0 0.0
    %1656 = vmatpush1.msra.mxu0 0.0
    %1657 = vmatprep.subr.mxu0 0.0
    %1658 = vmatpush1.msra.mxu0 0.0
    %1659 = vmatprep.subr.mxu0 0.0
    %1660 = vmatpush1.msra.mxu0 0.0
    %1661 = vmatprep.subr.mxu0 0.0
    %1662 = vmatpush1.msra.mxu0 0.0
    %1663 = vmatprep.subr.mxu0 0.0
    %1664 = vmatpush1.msra.mxu0 0.0
    %1665 = vmatprep.subr.mxu0 0.0
    %1666 = vmatpush1.msra.mxu0 0.0
    %1667 = vmatprep.subr.mxu0 0.0
    %1668 = vmatpush1.msra.mxu0 0.0
    %1669 = vmatprep.subr.mxu0 0.0
    %1670 = vmatpush1.msra.mxu0 0.0
    %1671 = vmatprep.subr.mxu0 0.0
    %1672 = vmatpush1.msra.mxu0 0.0
    %1673 = vmatprep.subr.mxu0 0.0
    %1674 = vmatpush1.msra.mxu0 0.0
    %1675 = vmatprep.subr.mxu0 0.0
    %1676 = vmatpush1.msra.mxu0 0.0
    %1677 = vmatprep.subr.mxu0 0.0
    %1678 = vmatpush1.msra.mxu0 0.0
    %1679 = vmatprep.subr.mxu0 0.0
    %1680 = vmatpush1.msra.mxu0 0.0
    %1681 = vmatprep.subr.mxu0 0.0
    %1682 = vmatpush1.msra.mxu0 0.0
    %1683 = vmatprep.subr.mxu0 0.0
    %1684 = vmatpush1.msra.mxu0 0.0
    %1685 = vmatprep.subr.mxu0 0.0
    %1686 = vmatpush1.msra.mxu0 0.0
    %1687 = vmatprep.subr.mxu0 0.0
    %1688 = vmatpush1.msra.mxu0 0.0
    %1689 = vmatprep.subr.mxu0 0.0
    %1690 = vmatpush1.msra.mxu0 0.0
    %1691 = vmatprep.subr.mxu0 0.0
    %1692 = vmatpush1.msra.mxu0 0.0
    %1693 = vmatprep.subr.mxu0 0.0
    %1694 = vmatpush1.msra.mxu0 0.0
    %1695 = vmatprep.mubr.f32.mxu0 0.0
    %1696 = vmatmul.mubr.f32.gmra.mrb[0].mxu0 %v1626
    %v1697 = vpop.f32.mrb[0].mxu0
    %v1698 = vadd.f32 0.0, %v1697
    %v1699 = vpop.f32.mrb[0].mxu0
    %1700 = vmatprep.mubr.f32.mxu0 0.0
    %1701 = vmatmul.mubr.f32.gmra.mrb[0].mxu0 %v1629
    %v1702 = vpop.f32.mrb[0].mxu0
    %v1703 = vadd.f32 0.0, %v1702
    %v1704 = vpop.f32.mrb[0].mxu0
    %1705 = vdwg.mxu0
    %v1706 = vmul.f32 %v1698, %v421
    %v1707 = vmul.f32 %v1703, %v424
    %v1708 = vmul.f32 %v1614, %v1620
    %v1709 = vmul.f32 %v1616, %v1622
    %v1711 = vsel %vm695, %v1708, 0
    %v1714 = vsel %vm695, %v1709, 0
    %1716 = vmatprep.subr.mxu0 0.0
    %1717 = vmatpush1.msra.mxu0 %v107
    %1718 = vmatprep.subr.mxu0 0.0
    %1719 = vmatpush1.msra.mxu0 0.0
    %1720 = vmatprep.subr.mxu0 0.0
    %1721 = vmatpush1.msra.mxu0 0.0
    %1722 = vmatprep.subr.mxu0 0.0
    %1723 = vmatpush1.msra.mxu0 0.0
    %1724 = vmatprep.subr.mxu0 0.0
    %1725 = vmatpush1.msra.mxu0 0.0
    %1726 = vmatprep.subr.mxu0 0.0
    %1727 = vmatpush1.msra.mxu0 0.0
    %1728 = vmatprep.subr.mxu0 0.0
    %1729 = vmatpush1.msra.mxu0 0.0
    %1730 = vmatprep.subr.mxu0 0.0
    %1731 = vmatpush1.msra.mxu0 0.0
    %1732 = vmatprep.subr.mxu0 0.0
    %1733 = vmatpush1.msra.mxu0 0.0
    %1734 = vmatprep.subr.mxu0 0.0
    %1735 = vmatpush1.msra.mxu0 0.0
    %1736 = vmatprep.subr.mxu0 0.0
    %1737 = vmatpush1.msra.mxu0 0.0
    %1738 = vmatprep.subr.mxu0 0.0
    %1739 = vmatpush1.msra.mxu0 0.0
    %1740 = vmatprep.subr.mxu0 0.0
    %1741 = vmatpush1.msra.mxu0 0.0
    %1742 = vmatprep.subr.mxu0 0.0
    %1743 = vmatpush1.msra.mxu0 0.0
    %1744 = vmatprep.subr.mxu0 0.0
    %1745 = vmatpush1.msra.mxu0 0.0
    %1746 = vmatprep.subr.mxu0 0.0
    %1747 = vmatpush1.msra.mxu0 0.0
    %1748 = vmatprep.subr.mxu0 0.0
    %1749 = vmatpush1.msra.mxu0 0.0
    %1750 = vmatprep.subr.mxu0 0.0
    %1751 = vmatpush1.msra.mxu0 0.0
    %1752 = vmatprep.subr.mxu0 0.0
    %1753 = vmatpush1.msra.mxu0 0.0
    %1754 = vmatprep.subr.mxu0 0.0
    %1755 = vmatpush1.msra.mxu0 0.0
    %1756 = vmatprep.subr.mxu0 0.0
    %1757 = vmatpush1.msra.mxu0 0.0
    %1758 = vmatprep.subr.mxu0 0.0
    %1759 = vmatpush1.msra.mxu0 0.0
    %1760 = vmatprep.subr.mxu0 0.0
    %1761 = vmatpush1.msra.mxu0 0.0
    %1762 = vmatprep.subr.mxu0 0.0
    %1763 = vmatpush1.msra.mxu0 0.0
    %1764 = vmatprep.subr.mxu0 0.0
    %1765 = vmatpush1.msra.mxu0 0.0
    %1766 = vmatprep.subr.mxu0 0.0
    %1767 = vmatpush1.msra.mxu0 0.0
    %1768 = vmatprep.subr.mxu0 0.0
    %1769 = vmatpush1.msra.mxu0 0.0
    %1770 = vmatprep.subr.mxu0 0.0
    %1771 = vmatpush1.msra.mxu0 0.0
    %1772 = vmatprep.subr.mxu0 0.0
    %1773 = vmatpush1.msra.mxu0 0.0
    %1774 = vmatprep.subr.mxu0 0.0
    %1775 = vmatpush1.msra.mxu0 0.0
    %1776 = vmatprep.subr.mxu0 0.0
    %1777 = vmatpush1.msra.mxu0 0.0
    %1778 = vmatprep.subr.mxu0 0.0
    %1779 = vmatpush1.msra.mxu0 0.0
    %1780 = vmatprep.mubr.f32.mxu0 0.0
    %1781 = vmatmul.mubr.f32.gmra.mrb[0].mxu0 %v1711
    %v1782 = vpop.f32.mrb[0].mxu0
    %v1783 = vadd.f32 0.0, %v1782
    %v1784 = vpop.f32.mrb[0].mxu0
    %1785 = vmatprep.mubr.f32.mxu0 0.0
    %1786 = vmatmul.mubr.f32.gmra.mrb[0].mxu0 %v1714
    %v1787 = vpop.f32.mrb[0].mxu0
    %v1788 = vadd.f32 0.0, %v1787
    %v1789 = vpop.f32.mrb[0].mxu0
    %1790 = vdwg.mxu0
    %v1791 = vmul.f32 %v1783, %v509
    %v1792 = vmul.f32 %v1788, %v512
    %v1793 = vadd.f32 %v1706, %v1791
    %v1794 = vadd.f32 %v1707, %v1792
    %v1795 = vpack.c.bf16 %v1794, %v1793
    %1796 = vmatprep.subr.bf16.mxu0 0
    %1797 = vmatpush1.bf16.msra.mxu0 %v905
    %1798 = vmatprep.subr.bf16.mxu0 0
    %1799 = vmatpush1.bf16.msra.mxu0 %v906
    %1800 = vmatprep.subr.bf16.mxu0 0
    %1801 = vmatpush1.bf16.msra.mxu0 %v907
    %1802 = vmatprep.subr.bf16.mxu0 0
    %1803 = vmatpush1.bf16.msra.mxu0 %v908
    %1804 = vmatprep.subr.bf16.mxu0 0
    %1805 = vmatpush1.bf16.msra.mxu0 %v909
    %1806 = vmatprep.subr.bf16.mxu0 0
    %1807 = vmatpush1.bf16.msra.mxu0 %v910
    %1808 = vmatprep.subr.bf16.mxu0 0
    %1809 = vmatpush1.bf16.msra.mxu0 %v911
    %1810 = vmatprep.subr.bf16.mxu0 0
    %1811 = vmatpush1.bf16.msra.mxu0 %v912
    %1812 = vmatprep.subr.bf16.mxu0 0
    %1813 = vmatpush1.bf16.msra.mxu0 0
    %1814 = vmatprep.subr.bf16.mxu0 0
    %1815 = vmatpush1.bf16.msra.mxu0 0
    %1816 = vmatprep.subr.bf16.mxu0 0
    %1817 = vmatpush1.bf16.msra.mxu0 0
    %1818 = vmatprep.subr.bf16.mxu0 0
    %1819 = vmatpush1.bf16.msra.mxu0 0
    %1820 = vmatprep.subr.bf16.mxu0 0
    %1821 = vmatpush1.bf16.msra.mxu0 0
    %1822 = vmatprep.subr.bf16.mxu0 0
    %1823 = vmatpush1.bf16.msra.mxu0 0
    %1824 = vmatprep.subr.bf16.mxu0 0
    %1825 = vmatpush1.bf16.msra.mxu0 0
    %1826 = vmatprep.subr.bf16.mxu0 0
    %1827 = vmatpush1.bf16.msra.mxu0 0
    %1828 = vmatprep.mubr.bf16.mxu0 0
    %1829 = vmatmul.mubr.bf16.gmra.mrb[0].mxu0 %v1795
    %v1830 = vpop.f32.mrb[0].mxu0
    %v1831 = vadd.f32 %v871, %v1830
    %v1832 = vpop.f32.mrb[0].mxu0
    %v1833 = vpop.f32.mrb[0].mxu0
    %v1834 = vadd.f32 %v871, %v1833
    %v1835 = vpop.f32.mrb[0].mxu0
    %1836 = vdwg.mxu0
    %v1837 = vadd.f32 %v428, %v1831
    %v1838 = vadd.f32 %v429, %v1834
    %1839 = vadd.xlane.f32.xlu0 %v1837
    %v1840 = vpop.xlane.xlu0 %1839
    %v1841 = vsel %vm966, %v1838, 0.0
    %1842 = vadd.xlane.f32.xlu0 %v1841
    %v1843 = vpop.xlane.xlu0 %1842
    %v1844 = vmul.f32 %v1840, %v970
    %v1845 = vmul.f32 %v1843, %v970
    %v1846 = vsub.f32 %v1837, %v1844
    %v1847 = vsub.f32 %v1838, %v1845
    %v1848 = vmul.f32 %v1846, %v1846
    %v1849 = vmul.f32 %v1847, %v1847
    %1850 = vadd.xlane.f32.xlu0 %v1848
    %v1851 = vpop.xlane.xlu0 %1850
    %v1852 = vsel %vm966, %v1849, 0.0
    %1853 = vadd.xlane.f32.xlu0 %v1852
    %v1854 = vpop.xlane.xlu0 %1853
    %v1855 = vmul.f32 %v1851, %v970
    %v1856 = vmul.f32 %v1854, %v970
    %v1857 = vadd.f32 %v1855, 1e-05
    %v1858 = vadd.f32 %v1856, 1e-05
    %v1859 = vrsqrt.pop %v1857
    %v1860 = vrsqrt.pop %v1858
    %v1861 = vmul.f32 %v1846, %v1859
    %v1862 = vmul.f32 %v1847, %v1860
    %v1863 = vmul.f32 %v1861, %v994
    %v1864 = vmul.f32 %v1862, %v994
    %v1865 = vadd.f32 %v1863, %v1002
    %v1866 = vadd.f32 %v1864, %v1002
    %v1867 = vpack.c.bf16 %v1866, %v1865
    %1868 = vmatprep.subr.bf16.mxu0 %v1067
    %1869 = vmatpush1.bf16.msra.mxu0 %v1066
    %1870 = vmatprep.subr.bf16.mxu0 %v1069
    %1871 = vmatpush1.bf16.msra.mxu0 %v1068
    %1872 = vmatprep.subr.bf16.mxu0 %v1071
    %1873 = vmatpush1.bf16.msra.mxu0 %v1070
    %1874 = vmatprep.subr.bf16.mxu0 %v1073
    %1875 = vmatpush1.bf16.msra.mxu0 %v1072
    %1876 = vmatprep.subr.bf16.mxu0 %v1075
    %1877 = vmatpush1.bf16.msra.mxu0 %v1074
    %1878 = vmatprep.subr.bf16.mxu0 %v1077
    %1879 = vmatpush1.bf16.msra.mxu0 %v1076
    %1880 = vmatprep.subr.bf16.mxu0 %v1079
    %1881 = vmatpush1.bf16.msra.mxu0 %v1078
    %1882 = vmatprep.subr.bf16.mxu0 %v1081
    %1883 = vmatpush1.bf16.msra.mxu0 %v1080
    %1884 = vmatprep.subr.bf16.mxu0 0
    %1885 = vmatpush1.bf16.msra.mxu0 0
    %1886 = vmatprep.subr.bf16.mxu0 0
    %1887 = vmatpush1.bf16.msra.mxu0 0
    %1888 = vmatprep.subr.bf16.mxu0 0
    %1889 = vmatpush1.bf16.msra.mxu0 0
    %1890 = vmatprep.subr.bf16.mxu0 0
    %1891 = vmatpush1.bf16.msra.mxu0 0
    %1892 = vmatprep.subr.bf16.mxu0 0
    %1893 = vmatpush1.bf16.msra.mxu0 0
    %1894 = vmatprep.subr.bf16.mxu0 0
    %1895 = vmatpush1.bf16.msra.mxu0 0
    %1896 = vmatprep.subr.bf16.mxu0 0
    %1897 = vmatpush1.bf16.msra.mxu0 0
    %1898 = vmatprep.subr.bf16.mxu0 0
    %1899 = vmatpush1.bf16.msra.mxu0 0
    %1900 = vmatprep.mubr.bf16.mxu0 0
    %1901 = vmatmul.mubr.bf16.gmra.mrb[0].mxu0 %v1867
    %v1902 = vpop.f32.mrb[0].mxu0
    %v1903 = vadd.f32 %v1011, %v1902
    %v1904 = vpop.f32.mrb[0].mxu0
    %v1905 = vadd.f32 %v1015, %v1904
    %v1906 = vpop.f32.mrb[0].mxu0
    %v1907 = vadd.f32 %v1011, %v1906
    %v1908 = vpop.f32.mrb[0].mxu0
    %v1909 = vadd.f32 %v1015, %v1908
    %1910 = vdwg.mxu0
    %v1911 = vmul.f32 %v1903, 0.5
    %v1912 = vmul.f32 %v1905, 0.5
    %v1913 = vmul.f32 %v1907, 0.5
    %v1914 = vmul.f32 %v1909, 0.5
    %v1915 = vmul.f32 %v1903, 0.70710677
    %v1916 = vmul.f32 %v1905, 0.70710677
    %v1917 = vmul.f32 %v1907, 0.70710677
    %v1918 = vmul.f32 %v1909, 0.70710677
    %v1919 = verf.f32.pop %v1915
    %v1920 = verf.f32.pop %v1916
    %v1921 = verf.f32.pop %v1917
    %v1922 = verf.f32.pop %v1918
    %v1923 = vadd.f32 %v1919, 1.0
    %v1924 = vadd.f32 %v1920, 1.0
    %v1925 = vadd.f32 %v1921, 1.0
    %v1926 = vadd.f32 %v1922, 1.0
    %v1927 = vmul.f32 %v1911, %v1923
    %v1928 = vmul.f32 %v1912, %v1924
    %v1929 = vmul.f32 %v1913, %v1925
    %v1930 = vmul.f32 %v1914, %v1926
    %v1931 = vpack.c.bf16 %v1929, %v1927
    %v1932 = vpack.c.bf16 %v1930, %v1928
    %1933 = vmatprep.subr.bf16.mxu0 0
    %1934 = vmatpush1.bf16.msra.mxu0 %v1233
    %1935 = vmatprep.subr.bf16.mxu0 0
    %1936 = vmatpush1.bf16.msra.mxu0 %v1234
    %1937 = vmatprep.subr.bf16.mxu0 0
    %1938 = vmatpush1.bf16.msra.mxu0 %v1235
    %1939 = vmatprep.subr.bf16.mxu0 0
    %1940 = vmatpush1.bf16.msra.mxu0 %v1236
    %1941 = vmatprep.subr.bf16.mxu0 0
    %1942 = vmatpush1.bf16.msra.mxu0 %v1237
    %1943 = vmatprep.subr.bf16.mxu0 0
    %1944 = vmatpush1.bf16.msra.mxu0 %v1238
    %1945 = vmatprep.subr.bf16.mxu0 0
    %1946 = vmatpush1.bf16.msra.mxu0 %v1239
    %1947 = vmatprep.subr.bf16.mxu0 0
    %1948 = vmatpush1.bf16.msra.mxu0 %v1240
    %1949 = vmatprep.subr.bf16.mxu0 0
    %1950 = vmatpush1.bf16.msra.mxu0 %v1241
    %1951 = vmatprep.subr.bf16.mxu0 0
    %1952 = vmatpush1.bf16.msra.mxu0 %v1242
    %1953 = vmatprep.subr.bf16.mxu0 0
    %1954 = vmatpush1.bf16.msra.mxu0 %v1243
    %1955 = vmatprep.subr.bf16.mxu0 0
    %1956 = vmatpush1.bf16.msra.mxu0 %v1244
    %1957 = vmatprep.subr.bf16.mxu0 0
    %1958 = vmatpush1.bf16.msra.mxu0 %v1245
    %1959 = vmatprep.subr.bf16.mxu0 0
    %1960 = vmatpush1.bf16.msra.mxu0 %v1246
    %1961 = vmatprep.subr.bf16.mxu0 0
    %1962 = vmatpush1.bf16.msra.mxu0 %v1247
    %1963 = vmatprep.subr.bf16.mxu0 0
    %1964 = vmatpush1.bf16.msra.mxu0 %v1248
    %1965 = vmatprep.mubr.bf16.mxu0 %v1932
    %1966 = vmatmul.mubr.bf16.gmra.mrb[0].mxu0 %v1931
    %v1967 = vpop.f32.mrb[0].mxu0
    %v1968 = vadd.f32 %v1167, %v1967
    %v1969 = vpop.f32.mrb[0].mxu0
    %v1970 = vpop.f32.mrb[0].mxu0
    %v1971 = vadd.f32 %v1167, %v1970
    %v1972 = vpop.f32.mrb[0].mxu0
    %1973 = vdwg.mxu0
    %v1974 = vadd.f32 %v1865, %v1968
    %v1975 = vadd.f32 %v1866, %v1971
    %1976 = vadd.xlane.f32.xlu0 %v1974
    %v1977 = vpop.xlane.xlu0 %1976
    %v1978 = vsel %vm966, %v1975, 0.0
    %1979 = vadd.xlane.f32.xlu0 %v1978
    %v1980 = vpop.xlane.xlu0 %1979
    %v1981 = vmul.f32 %v1977, %v970
    %v1982 = vmul.f32 %v1980, %v970
    %v1983 = vsub.f32 %v1974, %v1981
    %v1984 = vsub.f32 %v1975, %v1982
    %v1985 = vmul.f32 %v1983, %v1983
    %v1986 = vmul.f32 %v1984, %v1984
    %1987 = vadd.xlane.f32.xlu0 %v1985
    %v1988 = vpop.xlane.xlu0 %1987
    %v1989 = vsel %vm966, %v1986, 0.0
    %1990 = vadd.xlane.f32.xlu0 %v1989
    %v1991 = vpop.xlane.xlu0 %1990
    %v1992 = vmul.f32 %v1988, %v970
    %v1993 = vmul.f32 %v1991, %v970
    %v1994 = vadd.f32 %v1992, 1e-05
    %v1995 = vadd.f32 %v1993, 1e-05
    %v1996 = vrsqrt.pop %v1994
    %v1997 = vrsqrt.pop %v1995
    %v1998 = vmul.f32 %v1983, %v1996
    %v1999 = vmul.f32 %v1984, %v1997
    %v2000 = vmul.f32 %v1998, %v1336
    %v2001 = vmul.f32 %v1999, %v1336
    %v2002 = vadd.f32 %v2000, %v1344
    %v2003 = vadd.f32 %v2001, %v1344
    %v2004 = vpack.c.bf16 %v2003, %v2002
    %2005 = vmatprep.subr.bf16.mxu0 0
    %2006 = vmatpush1.bf16.msra.mxu0 %v1387
    %2007 = vmatprep.subr.bf16.mxu0 0
    %2008 = vmatpush1.bf16.msra.mxu0 %v1388
    %2009 = vmatprep.subr.bf16.mxu0 0
    %2010 = vmatpush1.bf16.msra.mxu0 %v1389
    %2011 = vmatprep.subr.bf16.mxu0 0
    %2012 = vmatpush1.bf16.msra.mxu0 %v1390
    %2013 = vmatprep.subr.bf16.mxu0 0
    %2014 = vmatpush1.bf16.msra.mxu0 %v1391
    %2015 = vmatprep.subr.bf16.mxu0 0
    %2016 = vmatpush1.bf16.msra.mxu0 %v1392
    %2017 = vmatprep.subr.bf16.mxu0 0
    %2018 = vmatpush1.bf16.msra.mxu0 %v1393
    %2019 = vmatprep.subr.bf16.mxu0 0
    %2020 = vmatpush1.bf16.msra.mxu0 %v1394
    %2021 = vmatprep.subr.bf16.mxu0 0
    %2022 = vmatpush1.bf16.msra.mxu0 0
    %2023 = vmatprep.subr.bf16.mxu0 0
    %2024 = vmatpush1.bf16.msra.mxu0 0
    %2025 = vmatprep.subr.bf16.mxu0 0
    %2026 = vmatpush1.bf16.msra.mxu0 0
    %2027 = vmatprep.subr.bf16.mxu0 0
    %2028 = vmatpush1.bf16.msra.mxu0 0
    %2029 = vmatprep.subr.bf16.mxu0 0
    %2030 = vmatpush1.bf16.msra.mxu0 0
    %2031 = vmatprep.subr.bf16.mxu0 0
    %2032 = vmatpush1.bf16.msra.mxu0 0
    %2033 = vmatprep.subr.bf16.mxu0 0
    %2034 = vmatpush1.bf16.msra.mxu0 0
    %2035 = vmatprep.subr.bf16.mxu0 0
    %2036 = vmatpush1.bf16.msra.mxu0 0
    %2037 = vmatprep.mubr.bf16.mxu0 0
    %2038 = vmatmul.mubr.bf16.gmra.mrb[0].mxu0 %v2004
    %v2039 = vpop.f32.mrb[0].mxu0
    %v2040 = vadd.f32 %v1353, %v2039
    %v2041 = vpop.f32.mrb[0].mxu0
    %v2042 = vpop.f32.mrb[0].mxu0
    %v2043 = vpop.f32.mrb[0].mxu0
    %2044 = vdwg.mxu0
    %s2045 = scalar_lea.vmem [#allocation2], 1
    %2046 = vst.msk [vmem:[%s2045] sm:$0x1] %vm1443, %v2040
    // Predicated region
    $region70: #{baseline_forward.9} parent=1 // pred_check
      _
    $region71: #{baseline_forward.9} parent=1 // pred_check_branch
      %2048 = sbr.rel (0) target = $region73
    $region72: #{baseline_forward.9} parent=1 // pred_region
      %s2050 = ssub.s32 32, 32
      %2051 = vsyncadd [#allocation3], %s2050
      %s2052 = sshll.u32 [#allocation2], 4
      %s2053 = int_to_ptr.vmem [resolvable:$true] %s2052
      %2058 = dma.vmem_to_hbm [thread:$0]  %s2053, 32, %s17, [#allocation3], 16, 16, 1
    $region73: #{baseline_forward.9} parent=1 // pred_fallthru
      _
    // Predicated region
    $region74: #{baseline_forward.9} parent=1 // pred_check
      _
    $region75: #{baseline_forward.9} parent=1 // pred_check_branch
      %2060 = sbr.rel (0) target = $region77
    $region76: #{baseline_forward.9} parent=1 // pred_region
      %2061 = dma.done [#allocation3], 32
    $region77: #{baseline_forward.9} parent=1 // pred_fallthru
      _
    %2062 = vsyncpa [#allocation3], 1

</llo_original>
